<compile_context>
chip_gen: v6e
topology: v6e:2x2x1
jax: 0.10.0
libtpu: 0.0.40
codegen_flags: <defaults>
</compile_context>

<pallas_src>
import functools

import jax
import jax.numpy as jnp
from jax.experimental import pallas as pl
from jax.experimental.pallas import tpu as pltpu

_EPS = 1e-5


def _round_up(x, m):
    return (x + m - 1) // m * m


# ---------------------------------------------------------------------------
# Pallas kernel: batched tiled matmul with int8-weight dequant + bias + ReLU
#   grid = (batch-group, M-tile, N-tile, K-tile); K is the reduction axis.
#   LHS panel (tm, Kp) stays resident in VMEM across the N/K tiles.
# ---------------------------------------------------------------------------
def _bmm_bias_kernel(x_ref, w_ref, s_ref, b_ref, o_ref, acc_ref, *,
                     apply_relu, tk):
    k = pl.program_id(3)

    @pl.when(k == 0)
    def _():
        acc_ref[...] = jnp.zeros_like(acc_ref)

    start = pl.multiple_of(k * tk, 128)
    x_chunk = x_ref[:, pl.ds(start, tk)]                      # (tm, tk) bf16
    acc_ref[...] += jnp.dot(x_chunk, w_ref[...].astype(jnp.bfloat16),
                            preferred_element_type=jnp.float32)

    @pl.when(k == pl.num_programs(3) - 1)
    def _():
        # per-output-column int8 dequant scale, then BN-folded bias.
        y = acc_ref[...] * s_ref[...] + b_ref[...]
        if apply_relu:
            y = jnp.maximum(y, 0.0)
        o_ref[...] = y.astype(o_ref.dtype)


def fused_matmul_bias_relu(x, w, s, b, *, tm=128, tk=None,
                           apply_relu=True, out_dtype=jnp.bfloat16):
    """out[g] = relu((x[g] @ dequant(w[g])) + b[g]) on the MXU.

    x : (B, M, K)        any float dtype; cast to bf16, padded M->tm, K->Kp.
    w : (B, NJ, Kp, tn)  int8, tile-major (each (Kp, tn) N-tile contiguous).
    s : (B, 1, NJ*tn)    f32 per-column dequant scale (1.0 in padded columns).
    b : (B, 1, NJ*tn)    f32 fused bias (BN folded), 0 in padded columns.
    returns (B, M, NJ*tn) in out_dtype (caller slices off padded N columns).
    """
    B, M, K = x.shape
    Bw, NJ, Kp, tn = w.shape
    Np = NJ * tn
    assert B == Bw and Kp >= K
    if tk is None:
        tk = Kp
    assert Kp % tk == 0 and tk % 128 == 0 and tm % 8 == 0

    Mp = _round_up(M, tm)
    xp = jnp.pad(x.astype(jnp.bfloat16), ((0, 0), (0, Mp - M), (0, Kp - K)))

    grid = (B, Mp // tm, NJ, Kp // tk)

    out = pl.pallas_call(
        functools.partial(_bmm_bias_kernel, apply_relu=apply_relu, tk=tk),
        out_shape=jax.ShapeDtypeStruct((B, Mp, Np), out_dtype),
        grid_spec=pltpu.PrefetchScalarGridSpec(
            num_scalar_prefetch=0,
            grid=grid,
            in_specs=[
                # Full-K LHS panel, resident across N- and K-tiles.
                pl.BlockSpec((None, tm, Kp), lambda g, i, j, k: (g, i, 0)),
                # Tile-major int8 weights: one contiguous DMA per block.
                pl.BlockSpec((None, None, tk, tn),
                             lambda g, i, j, k: (g, j, k, 0)),
                pl.BlockSpec((None, 1, tn), lambda g, i, j, k: (g, 0, j)),
                pl.BlockSpec((None, 1, tn), lambda g, i, j, k: (g, 0, j)),
            ],
            out_specs=pl.BlockSpec((None, tm, tn),
                                   lambda g, i, j, k: (g, i, j)),
            scratch_shapes=[pltpu.VMEM((tm, tn), jnp.float32)],
        ),
        compiler_params=pltpu.CompilerParams(
            dimension_semantics=("parallel", "parallel", "parallel",
                                 "arbitrary"),
            vmem_limit_bytes=32 * 1024 * 1024,
        ),
    )(xp, w, s, b)
    return out[:, :M, :]


# ---------------------------------------------------------------------------
# Glue: im2col for (possibly dilated) 3x3 "same" convs
# ---------------------------------------------------------------------------
def _im2col_3x3(x, dilation):
    # x: (N,H,W,C) -> (N*H*W, 9*C); column order (ky, kx, cin); padding=dilation.
    N, H, W, C = x.shape
    p = dilation
    xp = jnp.pad(x, ((0, 0), (p, p), (p, p), (0, 0)))
    cols = []
    for ky in range(3):
        for kx in range(3):
            oy, ox = ky * dilation, kx * dilation
            cols.append(xp[:, oy:oy + H, ox:ox + W, :])
    return jnp.concatenate(cols, axis=-1).reshape(N * H * W, 9 * C)


# ---------------------------------------------------------------------------
# Deterministic synthetic parameters (shapes dictated by PLNpred.__init__)
# ---------------------------------------------------------------------------
def init_params(key, channels):
    keys = iter(jax.random.split(key, 64))

    def w(shape, std=0.03):
        return jax.random.normal(next(keys), shape, jnp.float32) * std

    def bn(c):
        gamma = 1.0 + 0.1 * jax.random.normal(next(keys), (c,), jnp.float32)
        beta = 0.1 * jax.random.normal(next(keys), (c,), jnp.float32)
        mean = 0.1 * jax.random.normal(next(keys), (c,), jnp.float32)
        var = jnp.abs(jax.random.normal(next(keys), (c,), jnp.float32)) + 0.5
        return (gamma, beta, mean, var)

    p = {}
    # PLNpred.conv : Conv(1536->1536,3x3,bias) BN ReLU ; Conv(1536->ch,3x3,bias) BN ReLU
    p['conv_a_w'] = w((3, 3, 1536, 1536))       # (kh, kw, cin, cout)
    p['conv_a_b'] = w((1536,))
    p['bn_a'] = bn(1536)
    p['conv_b_w'] = w((3, 3, 1536, channels))
    p['conv_b_b'] = w((channels,))
    p['bn_b'] = bn(channels)
    # ASPP (in=channels, output_stride=8 -> dilations [1,12,24,36]), bias=False
    p['aspp1_w'] = w((channels, 204))
    p['aspp1_bn'] = bn(204)
    for name in ('aspp2', 'aspp3', 'aspp4'):
        p[f'{name}_w'] = w((3, 3, channels, 204))
        p[f'{name}_bn'] = bn(204)
    p['pool_w'] = w((channels, 204))
    p['pool_bn'] = bn(204)
    p['proj_w'] = w((5 * 204, 204))
    p['proj_bn'] = bn(204)
    return p


# ---------------------------------------------------------------------------
# One-time weight preparation: fold BN, int8-quantize per output column,
# pad, and lay out tile-major for contiguous weight DMAs.
# ---------------------------------------------------------------------------
def prepare_params(params):
    def fold_mat(wmat, bnkey, conv_bias=None):
        gamma, beta, mean, var = params[bnkey]
        s = gamma / jnp.sqrt(var + _EPS)
        b = beta - mean * s
        if conv_bias is not None:
            b = b + conv_bias * s
        return wmat.astype(jnp.float32) * s[None, :], b   # BN scale into cols

    def fold(wkey, bnkey, conv_bias=None):
        w = params[wkey].astype(jnp.float32)
        return fold_mat(w.reshape(-1, w.shape[-1]), bnkey, conv_bias)

    def quant_pad(wmat, bias, tn):
        K, N = wmat.shape
        Kp, Np = _round_up(K, 128), _round_up(N, tn)
        amax = jnp.max(jnp.abs(wmat), axis=0)
        qs = jnp.where(amax > 0, amax / 127.0, 1.0).astype(jnp.float32)
        wq = jnp.clip(jnp.round(wmat / qs[None, :]), -127, 127).astype(jnp.int8)
        wq = jnp.pad(wq, ((0, Kp - K), (0, Np - N)))
        # tile-major: (Np//tn, Kp, tn) -> each (tk, tn) block contiguous in HBM
        wq = wq.reshape(Kp, Np // tn, tn).transpose(1, 0, 2)
        qs = jnp.pad(qs, (0, Np - N), constant_values=1.0).reshape(1, Np)
        bp = jnp.pad(bias.astype(jnp.float32), (0, Np - N)).reshape(1, Np)
        return wq, qs, bp

    def single(wmat, bias, tn):
        wq, qs, bp = quant_pad(wmat, bias, tn)
        return wq[None], qs[None], bp[None]

    prep = {}
    # conv_a: tn=256 -> 6 N-tiles (even split across v7x's 2 TensorCores).
    prep['conv_a'] = single(*fold('conv_a_w', 'bn_a', params['conv_a_b']),
                            tn=256)
    prep['conv_b'] = single(*fold('conv_b_w', 'bn_b', params['conv_b_b']),
                            tn=128)

    # ASPP 1x1 branch + center taps of the dilated branches, fused into one
    # (channels -> 4*204) matmul (valid when dilation >= feature-map size).
    w1, b1 = fold_mat(params['aspp1_w'], 'aspp1_bn')
    centers = [fold_mat(params[f'{n}_w'][1, 1], f'{n}_bn')
               for n in ('aspp2', 'aspp3', 'aspp4')]
    wf = jnp.concatenate([w1] + [w for w, _ in centers], axis=1)
    bf = jnp.concatenate([b1] + [b for _, b in centers], axis=0)
    prep['aspp_1x1_fused'] = single(wf, bf, tn=128)

    # General fallback (feature map larger than the dilation): full 3x3
    # dilated branches, batched into one pallas_call.
    prep['aspp1'] = single(w1, b1, tn=128)
    ws, ss, bs = zip(*(quant_pad(*fold(f'{n}_w', f'{n}_bn'), tn=128)
                       for n in ('aspp2', 'aspp3', 'aspp4')))
    prep['aspp_dil'] = (jnp.stack(ws, 0), jnp.stack(ss, 0), jnp.stack(bs, 0))

    # Global-pool branch stays plain-JAX f32 (2x204 @ 204x204 is tiny).
    prep['pool'] = fold_mat(params['pool_w'], 'pool_bn')
    prep['proj'] = single(*fold_mat(params['proj_w'], 'proj_bn'), tn=128)
    return prep


# ---------------------------------------------------------------------------
# Forward pass (PLNpred.forward), jitted end-to-end
# ---------------------------------------------------------------------------
def make_plnpred_forward(channels):
    ch_out = 204   # fixed by the ASPP definition
    dilations = (12, 24, 36)

    @jax.jit
    def forward(x_nchw, prep):
        x = jnp.transpose(x_nchw, (0, 2, 3, 1)).astype(jnp.bfloat16)  # NHWC
        N, H, W, _ = x.shape
        M = N * H * W

        def run(x2d, key, *, tk=None, out_dtype=jnp.bfloat16):
            w, s, b = prep[key]
            return fused_matmul_bias_relu(x2d[None], w, s, b, tk=tk,
                                          out_dtype=out_dtype)[0]

        # --- PLNpred.conv : two 3x3 conv + BN + ReLU blocks ---
        cols = _im2col_3x3(x, 1)                                  # (M, 13824)
        x = run(cols, 'conv_a', tk=3456).reshape(N, H, W, 1536)
        cols = _im2col_3x3(x, 1)
        xb = run(cols, 'conv_b', tk=3456)[:, :channels]           # (M, ch)
        x = xb.reshape(N, H, W, channels)

        # --- ASPP ---
        if min(dilations) >= max(H, W):
            # Every non-center tap of the dilated 3x3 branches reads only zero
            # padding, so aspp2/3/4 are exact 1x1 convs; all four branches run
            # as ONE fused matmul (channels -> 4*204).
            aspp = run(xb, 'aspp_1x1_fused')[:, :4 * ch_out]      # (M, 816)
        else:
            x1 = run(xb, 'aspp1')[:, :ch_out]
            cols3 = jnp.stack([_im2col_3x3(x, d) for d in dilations], 0)
            wd, sd, bd = prep['aspp_dil']
            xd = fused_matmul_bias_relu(cols3, wd, sd, bd)[:, :, :ch_out]
            aspp = jnp.concatenate([x1, xd[0], xd[1], xd[2]], axis=-1)

        # Global-average-pool branch; bilinear upsample from (1,1) with
        # align_corners=True is exactly a spatial broadcast.  Tiny -> plain JAX.
        pooled = jnp.mean(x.astype(jnp.float32), axis=(1, 2))     # (N, ch)
        pw, pb = prep['pool']
        x5v = jnp.maximum(pooled @ pw + pb, 0.0).astype(jnp.bfloat16)
        x5 = jnp.broadcast_to(x5v[:, None, None, :],
                              (N, H, W, ch_out)).reshape(M, ch_out)

        cat = jnp.concatenate([aspp, x5], axis=-1)                # (M, 1020)
        y = run(cat, 'proj', out_dtype=jnp.float32)[:, :ch_out]
        y = y.reshape(N, H, W, ch_out)
        # Dropout(0.5): inference mode -> identity.
        return jnp.transpose(y, (0, 3, 1, 2))                     # NCHW

    return forward


if __name__ == "__main__":
    # args.B = 2, args.S = 14  =>  channels = 2*2*(1 + 20 + 2 + 2*14) = 204
    B_anchor, S_grid = 2, 14
    channels = 2 * B_anchor * (1 + 20 + 2 + 2 * S_grid)
    assert channels == 204

    key = jax.random.PRNGKey(0)
    pkey, xkey = jax.random.split(key)
    params = init_params(pkey, channels)
    prep = prepare_params(params)            # one-time: fold/quantize/pad
    forward = make_plnpred_forward(channels)

    x = jax.random.normal(xkey, (2, 1536, 8, 8), jnp.float32)  # NCHW
    out = forward(x, prep)
    out = jax.block_until_ready(out)
    assert out.shape == (2, 204, 8, 8), out.shape
    assert jnp.all(jnp.isfinite(out))
    print("KERNEL_OK")
</pallas_src>

<mosaic_0001>
module attributes {stable_mosaic.version = 11 : i64} {
  func.func @_bmm_bias_kernel(%arg0: i32, %arg1: i32, %arg2: i32, %arg3: i32, %arg4: memref<1x128x13824xbf16, #tpu.memory_space<vmem>>, %arg5: memref<1x1x3456x256xi8, #tpu.memory_space<vmem>>, %arg6: memref<1x1x256xf32, #tpu.memory_space<vmem>>, %arg7: memref<1x1x256xf32, #tpu.memory_space<vmem>>, %arg8: memref<1x128x256xbf16, #tpu.memory_space<vmem>>, %arg9: memref<128x256xf32, #tpu.memory_space<vmem>>) attributes {dimension_semantics = [#tpu.dimension_semantics<parallel>, #tpu.dimension_semantics<parallel>, #tpu.dimension_semantics<parallel>, #tpu.dimension_semantics<arbitrary>], iteration_bounds = array<i64: 1, 1, 6, 4>, scalar_prefetch = 0 : i64, scratch_operands = 1 : i64, tpu.core_type = #tpu.core_type<tc>, window_params = [{transform_indices = @transform_0, window_bounds = array<i64: 1, 128, 13824>}, {transform_indices = @transform_1, window_bounds = array<i64: 1, 1, 3456, 256>}, {transform_indices = @transform_2, window_bounds = array<i64: 1, 1, 256>}, {transform_indices = @transform_3, window_bounds = array<i64: 1, 1, 256>}, {transform_indices = @transform_4, window_bounds = array<i64: 1, 128, 256>}]} {
    %c0_i32 = arith.constant 0 : i32
    %0 = arith.cmpi eq, %arg3, %c0_i32 : i32
    %1 = arith.extui %0 : i1 to i32
    %c0_i32_0 = arith.constant 0 : i32
    %2 = arith.cmpi ne, %1, %c0_i32_0 : i32
    scf.if %2 {
      %cst_11 = arith.constant 0.000000e+00 : f32
      %18 = vector.broadcast %cst_11 : f32 to vector<128x256xf32>
      %c0_12 = arith.constant 0 : index
      %c0_13 = arith.constant 0 : index
      %19 = vector.load %arg9[%c0_12, %c0_13] : memref<128x256xf32, #tpu.memory_space<vmem>>, vector<128x256xf32>
      tpu.vector_store %arg9[%c0_12, %c0_13], %18 {strides = array<i32>} : memref<128x256xf32, #tpu.memory_space<vmem>>, vector<128x256xf32>,
    } else {
    }
    %c3456_i32 = arith.constant 3456 : i32
    %3 = arith.muli %arg3, %c3456_i32 : i32
    %4 = tpu.assume_multiple %3, 128 : i32
    %c0 = arith.constant 0 : index
    %c0_1 = arith.constant 0 : index
    %5 = arith.index_cast %4 : i32 to index
    %6 = vector.load %arg4[%c0, %c0_1, %5] : memref<1x128x13824xbf16, #tpu.memory_space<vmem>>, vector<1x128x3456xbf16>
    %7 = vector.shape_cast %6 : vector<1x128x3456xbf16> to vector<128x3456xbf16>
    %c0_2 = arith.constant 0 : index
    %c0_3 = arith.constant 0 : index
    %8 = vector.load %arg9[%c0_2, %c0_3] : memref<128x256xf32, #tpu.memory_space<vmem>>, vector<128x256xf32>
    %c0_4 = arith.constant 0 : index
    %c0_5 = arith.constant 0 : index
    %c0_6 = arith.constant 0 : index
    %c0_7 = arith.constant 0 : index
    %9 = vector.load %arg5[%c0_4, %c0_5, %c0_6, %c0_7] : memref<1x1x3456x256xi8, #tpu.memory_space<vmem>>, vector<1x1x3456x256xi8>
    %10 = vector.shape_cast %9 : vector<1x1x3456x256xi8> to vector<3456x256xi8>
    %11 = arith.sitofp %10 : vector<3456x256xi8> to vector<3456x256xbf16>
    %cst = arith.constant dense<0.000000e+00> : vector<128x256xf32>
    %12 = tpu.matmul %7, %11, %cst {dimension_numbers = #tpu.dot_dimension_numbers<[1], [0], [0], [1], [0, 0, 1, 1], [], []>} : vector<128x3456xbf16>, vector<3456x256xbf16>, vector<128x256xf32> -> vector<128x256xf32>
    %13 = arith.addf %8, %12 : vector<128x256xf32>
    %c0_8 = arith.constant 0 : index
    %c0_9 = arith.constant 0 : index
    %14 = vector.load %arg9[%c0_8, %c0_9] : memref<128x256xf32, #tpu.memory_space<vmem>>, vector<128x256xf32>
    tpu.vector_store %arg9[%c0_8, %c0_9], %13 {strides = array<i32>} : memref<128x256xf32, #tpu.memory_space<vmem>>, vector<128x256xf32>,
    %c3_i32 = arith.constant 3 : i32
    %15 = arith.cmpi eq, %arg3, %c3_i32 : i32
    %16 = arith.extui %15 : i1 to i32
    %c0_i32_10 = arith.constant 0 : i32
    %17 = arith.cmpi ne, %16, %c0_i32_10 : i32
    scf.if %17 {
      %c0_11 = arith.constant 0 : index
      %c0_12 = arith.constant 0 : index
      %18 = vector.load %arg9[%c0_11, %c0_12] : memref<128x256xf32, #tpu.memory_space<vmem>>, vector<128x256xf32>
      %c0_13 = arith.constant 0 : index
      %c0_14 = arith.constant 0 : index
      %c0_15 = arith.constant 0 : index
      %19 = vector.load %arg6[%c0_13, %c0_14, %c0_15] : memref<1x1x256xf32, #tpu.memory_space<vmem>>, vector<1x1x256xf32>
      %20 = vector.shape_cast %19 : vector<1x1x256xf32> to vector<1x256xf32>
      %21 = vector.broadcast %20 : vector<1x256xf32> to vector<128x256xf32>
      %22 = arith.mulf %18, %21 : vector<128x256xf32>
      %c0_16 = arith.constant 0 : index
      %c0_17 = arith.constant 0 : index
      %c0_18 = arith.constant 0 : index
      %23 = vector.load %arg7[%c0_16, %c0_17, %c0_18] : memref<1x1x256xf32, #tpu.memory_space<vmem>>, vector<1x1x256xf32>
      %24 = vector.shape_cast %23 : vector<1x1x256xf32> to vector<1x256xf32>
      %25 = vector.broadcast %24 : vector<1x256xf32> to vector<128x256xf32>
      %26 = arith.addf %22, %25 : vector<128x256xf32>
      %cst_19 = arith.constant 0.000000e+00 : f32
      %27 = vector.broadcast %cst_19 : f32 to vector<128x256xf32>
      %28 = arith.maximumf %26, %27 : vector<128x256xf32>
      %29 = arith.truncf %28 : vector<128x256xf32> to vector<128x256xbf16>
      %c0_20 = arith.constant 0 : index
      %c0_21 = arith.constant 0 : index
      %c0_22 = arith.constant 0 : index
      %30 = vector.load %arg8[%c0_20, %c0_21, %c0_22] : memref<1x128x256xbf16, #tpu.memory_space<vmem>>, vector<1x128x256xbf16>
      %31 = vector.shape_cast %30 : vector<1x128x256xbf16> to vector<128x256xbf16>
      %32 = vector.shape_cast %29 : vector<128x256xbf16> to vector<1x128x256xbf16>
      tpu.vector_store %arg8[%c0_20, %c0_21, %c0_22], %32 {strides = array<i32>} : memref<1x128x256xbf16, #tpu.memory_space<vmem>>, vector<1x128x256xbf16>,
    } else {
    }
    return
  }
  func.func @transform_0(%arg0: i32, %arg1: i32, %arg2: i32, %arg3: i32) -> (i32, i32, i32) {
    %c0_i32 = arith.constant 0 : i32
    %c0_i32_0 = arith.constant 0 : i32
    return %arg0, %arg1, %c0_i32 : i32, i32, i32
  }
  func.func @transform_1(%arg0: i32, %arg1: i32, %arg2: i32, %arg3: i32) -> (i32, i32, i32, i32) {
    %c0_i32 = arith.constant 0 : i32
    %c0_i32_0 = arith.constant 0 : i32
    return %arg0, %arg2, %arg3, %c0_i32 : i32, i32, i32, i32
  }
  func.func @transform_2(%arg0: i32, %arg1: i32, %arg2: i32, %arg3: i32) -> (i32, i32, i32) {
    %c0_i32 = arith.constant 0 : i32
    %c0_i32_0 = arith.constant 0 : i32
    return %arg0, %c0_i32, %arg2 : i32, i32, i32
  }
  func.func @transform_3(%arg0: i32, %arg1: i32, %arg2: i32, %arg3: i32) -> (i32, i32, i32) {
    %c0_i32 = arith.constant 0 : i32
    %c0_i32_0 = arith.constant 0 : i32
    return %arg0, %c0_i32, %arg2 : i32, i32, i32
  }
  func.func @transform_4(%arg0: i32, %arg1: i32, %arg2: i32, %arg3: i32) -> (i32, i32, i32) {
    %c0_i32 = arith.constant 0 : i32
    return %arg0, %arg1, %arg2 : i32, i32, i32
  }
}

module attributes {stable_mosaic.version = 11 : i64} {
  func.func @_bmm_bias_kernel(%arg0: i32, %arg1: i32, %arg2: i32, %arg3: i32, %arg4: memref<1x128x13824xbf16, #tpu.memory_space<vmem>>, %arg5: memref<1x1x3456x128xi8, #tpu.memory_space<vmem>>, %arg6: memref<1x1x128xf32, #tpu.memory_space<vmem>>, %arg7: memref<1x1x128xf32, #tpu.memory_space<vmem>>, %arg8: memref<1x128x128xbf16, #tpu.memory_space<vmem>>, %arg9: memref<128x128xf32, #tpu.memory_space<vmem>>) attributes {dimension_semantics = [#tpu.dimension_semantics<parallel>, #tpu.dimension_semantics<parallel>, #tpu.dimension_semantics<parallel>, #tpu.dimension_semantics<arbitrary>], iteration_bounds = array<i64: 1, 1, 2, 4>, scalar_prefetch = 0 : i64, scratch_operands = 1 : i64, tpu.core_type = #tpu.core_type<tc>, window_params = [{transform_indices = @transform_0, window_bounds = array<i64: 1, 128, 13824>}, {transform_indices = @transform_1, window_bounds = array<i64: 1, 1, 3456, 128>}, {transform_indices = @transform_2, window_bounds = array<i64: 1, 1, 128>}, {transform_indices = @transform_3, window_bounds = array<i64: 1, 1, 128>}, {transform_indices = @transform_4, window_bounds = array<i64: 1, 128, 128>}]} {
    %c0_i32 = arith.constant 0 : i32
    %0 = arith.cmpi eq, %arg3, %c0_i32 : i32
    %1 = arith.extui %0 : i1 to i32
    %c0_i32_0 = arith.constant 0 : i32
    %2 = arith.cmpi ne, %1, %c0_i32_0 : i32
    scf.if %2 {
      %cst_11 = arith.constant 0.000000e+00 : f32
      %18 = vector.broadcast %cst_11 : f32 to vector<128x128xf32>
      %c0_12 = arith.constant 0 : index
      %c0_13 = arith.constant 0 : index
      %19 = vector.load %arg9[%c0_12, %c0_13] : memref<128x128xf32, #tpu.memory_space<vmem>>, vector<128x128xf32>
      tpu.vector_store %arg9[%c0_12, %c0_13], %18 {strides = array<i32>} : memref<128x128xf32, #tpu.memory_space<vmem>>, vector<128x128xf32>,
    } else {
    }
    %c3456_i32 = arith.constant 3456 : i32
    %3 = arith.muli %arg3, %c3456_i32 : i32
    %4 = tpu.assume_multiple %3, 128 : i32
    %c0 = arith.constant 0 : index
    %c0_1 = arith.constant 0 : index
    %5 = arith.index_cast %4 : i32 to index
    %6 = vector.load %arg4[%c0, %c0_1, %5] : memref<1x128x13824xbf16, #tpu.memory_space<vmem>>, vector<1x128x3456xbf16>
    %7 = vector.shape_cast %6 : vector<1x128x3456xbf16> to vector<128x3456xbf16>
    %c0_2 = arith.constant 0 : index
    %c0_3 = arith.constant 0 : index
    %8 = vector.load %arg9[%c0_2, %c0_3] : memref<128x128xf32, #tpu.memory_space<vmem>>, vector<128x128xf32>
    %c0_4 = arith.constant 0 : index
    %c0_5 = arith.constant 0 : index
    %c0_6 = arith.constant 0 : index
    %c0_7 = arith.constant 0 : index
    %9 = vector.load %arg5[%c0_4, %c0_5, %c0_6, %c0_7] : memref<1x1x3456x128xi8, #tpu.memory_space<vmem>>, vector<1x1x3456x128xi8>
    %10 = vector.shape_cast %9 : vector<1x1x3456x128xi8> to vector<3456x128xi8>
    %11 = arith.sitofp %10 : vector<3456x128xi8> to vector<3456x128xbf16>
    %cst = arith.constant dense<0.000000e+00> : vector<128x128xf32>
    %12 = tpu.matmul %7, %11, %cst {dimension_numbers = #tpu.dot_dimension_numbers<[1], [0], [0], [1], [0, 0, 1, 1], [], []>} : vector<128x3456xbf16>, vector<3456x128xbf16>, vector<128x128xf32> -> vector<128x128xf32>
    %13 = arith.addf %8, %12 : vector<128x128xf32>
    %c0_8 = arith.constant 0 : index
    %c0_9 = arith.constant 0 : index
    %14 = vector.load %arg9[%c0_8, %c0_9] : memref<128x128xf32, #tpu.memory_space<vmem>>, vector<128x128xf32>
    tpu.vector_store %arg9[%c0_8, %c0_9], %13 {strides = array<i32>} : memref<128x128xf32, #tpu.memory_space<vmem>>, vector<128x128xf32>,
    %c3_i32 = arith.constant 3 : i32
    %15 = arith.cmpi eq, %arg3, %c3_i32 : i32
    %16 = arith.extui %15 : i1 to i32
    %c0_i32_10 = arith.constant 0 : i32
    %17 = arith.cmpi ne, %16, %c0_i32_10 : i32
    scf.if %17 {
      %c0_11 = arith.constant 0 : index
      %c0_12 = arith.constant 0 : index
      %18 = vector.load %arg9[%c0_11, %c0_12] : memref<128x128xf32, #tpu.memory_space<vmem>>, vector<128x128xf32>
      %c0_13 = arith.constant 0 : index
      %c0_14 = arith.constant 0 : index
      %c0_15 = arith.constant 0 : index
      %19 = vector.load %arg6[%c0_13, %c0_14, %c0_15] : memref<1x1x128xf32, #tpu.memory_space<vmem>>, vector<1x1x128xf32>
      %20 = vector.shape_cast %19 : vector<1x1x128xf32> to vector<1x128xf32>
      %21 = vector.broadcast %20 : vector<1x128xf32> to vector<128x128xf32>
      %22 = arith.mulf %18, %21 : vector<128x128xf32>
      %c0_16 = arith.constant 0 : index
      %c0_17 = arith.constant 0 : index
      %c0_18 = arith.constant 0 : index
      %23 = vector.load %arg7[%c0_16, %c0_17, %c0_18] : memref<1x1x128xf32, #tpu.memory_space<vmem>>, vector<1x1x128xf32>
      %24 = vector.shape_cast %23 : vector<1x1x128xf32> to vector<1x128xf32>
      %25 = vector.broadcast %24 : vector<1x128xf32> to vector<128x128xf32>
      %26 = arith.addf %22, %25 : vector<128x128xf32>
      %cst_19 = arith.constant 0.000000e+00 : f32
      %27 = vector.broadcast %cst_19 : f32 to vector<128x128xf32>
      %28 = arith.maximumf %26, %27 : vector<128x128xf32>
      %29 = arith.truncf %28 : vector<128x128xf32> to vector<128x128xbf16>
      %c0_20 = arith.constant 0 : index
      %c0_21 = arith.constant 0 : index
      %c0_22 = arith.constant 0 : index
      %30 = vector.load %arg8[%c0_20, %c0_21, %c0_22] : memref<1x128x128xbf16, #tpu.memory_space<vmem>>, vector<1x128x128xbf16>
      %31 = vector.shape_cast %30 : vector<1x128x128xbf16> to vector<128x128xbf16>
      %32 = vector.shape_cast %29 : vector<128x128xbf16> to vector<1x128x128xbf16>
      tpu.vector_store %arg8[%c0_20, %c0_21, %c0_22], %32 {strides = array<i32>} : memref<1x128x128xbf16, #tpu.memory_space<vmem>>, vector<1x128x128xbf16>,
    } else {
    }
    return
  }
  func.func @transform_0(%arg0: i32, %arg1: i32, %arg2: i32, %arg3: i32) -> (i32, i32, i32) {
    %c0_i32 = arith.constant 0 : i32
    %c0_i32_0 = arith.constant 0 : i32
    return %arg0, %arg1, %c0_i32 : i32, i32, i32
  }
  func.func @transform_1(%arg0: i32, %arg1: i32, %arg2: i32, %arg3: i32) -> (i32, i32, i32, i32) {
    %c0_i32 = arith.constant 0 : i32
    %c0_i32_0 = arith.constant 0 : i32
    return %arg0, %arg2, %arg3, %c0_i32 : i32, i32, i32, i32
  }
  func.func @transform_2(%arg0: i32, %arg1: i32, %arg2: i32, %arg3: i32) -> (i32, i32, i32) {
    %c0_i32 = arith.constant 0 : i32
    %c0_i32_0 = arith.constant 0 : i32
    return %arg0, %c0_i32, %arg2 : i32, i32, i32
  }
  func.func @transform_3(%arg0: i32, %arg1: i32, %arg2: i32, %arg3: i32) -> (i32, i32, i32) {
    %c0_i32 = arith.constant 0 : i32
    %c0_i32_0 = arith.constant 0 : i32
    return %arg0, %c0_i32, %arg2 : i32, i32, i32
  }
  func.func @transform_4(%arg0: i32, %arg1: i32, %arg2: i32, %arg3: i32) -> (i32, i32, i32) {
    %c0_i32 = arith.constant 0 : i32
    return %arg0, %arg1, %arg2 : i32, i32, i32
  }
}

module attributes {stable_mosaic.version = 11 : i64} {
  func.func @_bmm_bias_kernel(%arg0: i32, %arg1: i32, %arg2: i32, %arg3: i32, %arg4: memref<1x128x256xbf16, #tpu.memory_space<vmem>>, %arg5: memref<1x1x256x128xi8, #tpu.memory_space<vmem>>, %arg6: memref<1x1x128xf32, #tpu.memory_space<vmem>>, %arg7: memref<1x1x128xf32, #tpu.memory_space<vmem>>, %arg8: memref<1x128x128xbf16, #tpu.memory_space<vmem>>, %arg9: memref<128x128xf32, #tpu.memory_space<vmem>>) attributes {dimension_semantics = [#tpu.dimension_semantics<parallel>, #tpu.dimension_semantics<parallel>, #tpu.dimension_semantics<parallel>, #tpu.dimension_semantics<arbitrary>], iteration_bounds = array<i64: 1, 1, 7, 1>, scalar_prefetch = 0 : i64, scratch_operands = 1 : i64, tpu.core_type = #tpu.core_type<tc>, window_params = [{transform_indices = @transform_0, window_bounds = array<i64: 1, 128, 256>}, {transform_indices = @transform_1, window_bounds = array<i64: 1, 1, 256, 128>}, {transform_indices = @transform_2, window_bounds = array<i64: 1, 1, 128>}, {transform_indices = @transform_3, window_bounds = array<i64: 1, 1, 128>}, {transform_indices = @transform_4, window_bounds = array<i64: 1, 128, 128>}]} {
    %c0_i32 = arith.constant 0 : i32
    %0 = arith.cmpi eq, %arg3, %c0_i32 : i32
    %1 = arith.extui %0 : i1 to i32
    %c0_i32_0 = arith.constant 0 : i32
    %2 = arith.cmpi ne, %1, %c0_i32_0 : i32
    scf.if %2 {
      %cst_12 = arith.constant 0.000000e+00 : f32
      %18 = vector.broadcast %cst_12 : f32 to vector<128x128xf32>
      %c0_13 = arith.constant 0 : index
      %c0_14 = arith.constant 0 : index
      %19 = vector.load %arg9[%c0_13, %c0_14] : memref<128x128xf32, #tpu.memory_space<vmem>>, vector<128x128xf32>
      tpu.vector_store %arg9[%c0_13, %c0_14], %18 {strides = array<i32>} : memref<128x128xf32, #tpu.memory_space<vmem>>, vector<128x128xf32>,
    } else {
    }
    %c256_i32 = arith.constant 256 : i32
    %3 = arith.muli %arg3, %c256_i32 : i32
    %4 = tpu.assume_multiple %3, 128 : i32
    %c0 = arith.constant 0 : index
    %c0_1 = arith.constant 0 : index
    %5 = arith.index_cast %4 : i32 to index
    %6 = vector.load %arg4[%c0, %c0_1, %5] : memref<1x128x256xbf16, #tpu.memory_space<vmem>>, vector<1x128x256xbf16>
    %7 = vector.shape_cast %6 : vector<1x128x256xbf16> to vector<128x256xbf16>
    %c0_2 = arith.constant 0 : index
    %c0_3 = arith.constant 0 : index
    %8 = vector.load %arg9[%c0_2, %c0_3] : memref<128x128xf32, #tpu.memory_space<vmem>>, vector<128x128xf32>
    %c0_4 = arith.constant 0 : index
    %c0_5 = arith.constant 0 : index
    %c0_6 = arith.constant 0 : index
    %c0_7 = arith.constant 0 : index
    %9 = vector.load %arg5[%c0_4, %c0_5, %c0_6, %c0_7] : memref<1x1x256x128xi8, #tpu.memory_space<vmem>>, vector<1x1x256x128xi8>
    %10 = vector.shape_cast %9 : vector<1x1x256x128xi8> to vector<256x128xi8>
    %11 = arith.sitofp %10 : vector<256x128xi8> to vector<256x128xbf16>
    %cst = arith.constant dense<0.000000e+00> : vector<128x128xf32>
    %12 = tpu.matmul %7, %11, %cst {dimension_numbers = #tpu.dot_dimension_numbers<[1], [0], [0], [1], [0, 0, 1, 1], [], []>} : vector<128x256xbf16>, vector<256x128xbf16>, vector<128x128xf32> -> vector<128x128xf32>
    %13 = arith.addf %8, %12 : vector<128x128xf32>
    %c0_8 = arith.constant 0 : index
    %c0_9 = arith.constant 0 : index
    %14 = vector.load %arg9[%c0_8, %c0_9] : memref<128x128xf32, #tpu.memory_space<vmem>>, vector<128x128xf32>
    tpu.vector_store %arg9[%c0_8, %c0_9], %13 {strides = array<i32>} : memref<128x128xf32, #tpu.memory_space<vmem>>, vector<128x128xf32>,
    %c0_i32_10 = arith.constant 0 : i32
    %15 = arith.cmpi eq, %arg3, %c0_i32_10 : i32
    %16 = arith.extui %15 : i1 to i32
    %c0_i32_11 = arith.constant 0 : i32
    %17 = arith.cmpi ne, %16, %c0_i32_11 : i32
    scf.if %17 {
      %c0_12 = arith.constant 0 : index
      %c0_13 = arith.constant 0 : index
      %18 = vector.load %arg9[%c0_12, %c0_13] : memref<128x128xf32, #tpu.memory_space<vmem>>, vector<128x128xf32>
      %c0_14 = arith.constant 0 : index
      %c0_15 = arith.constant 0 : index
      %c0_16 = arith.constant 0 : index
      %19 = vector.load %arg6[%c0_14, %c0_15, %c0_16] : memref<1x1x128xf32, #tpu.memory_space<vmem>>, vector<1x1x128xf32>
      %20 = vector.shape_cast %19 : vector<1x1x128xf32> to vector<1x128xf32>
      %21 = vector.broadcast %20 : vector<1x128xf32> to vector<128x128xf32>
      %22 = arith.mulf %18, %21 : vector<128x128xf32>
      %c0_17 = arith.constant 0 : index
      %c0_18 = arith.constant 0 : index
      %c0_19 = arith.constant 0 : index
      %23 = vector.load %arg7[%c0_17, %c0_18, %c0_19] : memref<1x1x128xf32, #tpu.memory_space<vmem>>, vector<1x1x128xf32>
      %24 = vector.shape_cast %23 : vector<1x1x128xf32> to vector<1x128xf32>
      %25 = vector.broadcast %24 : vector<1x128xf32> to vector<128x128xf32>
      %26 = arith.addf %22, %25 : vector<128x128xf32>
      %cst_20 = arith.constant 0.000000e+00 : f32
      %27 = vector.broadcast %cst_20 : f32 to vector<128x128xf32>
      %28 = arith.maximumf %26, %27 : vector<128x128xf32>
      %29 = arith.truncf %28 : vector<128x128xf32> to vector<128x128xbf16>
      %c0_21 = arith.constant 0 : index
      %c0_22 = arith.constant 0 : index
      %c0_23 = arith.constant 0 : index
      %30 = vector.load %arg8[%c0_21, %c0_22, %c0_23] : memref<1x128x128xbf16, #tpu.memory_space<vmem>>, vector<1x128x128xbf16>
      %31 = vector.shape_cast %30 : vector<1x128x128xbf16> to vector<128x128xbf16>
      %32 = vector.shape_cast %29 : vector<128x128xbf16> to vector<1x128x128xbf16>
      tpu.vector_store %arg8[%c0_21, %c0_22, %c0_23], %32 {strides = array<i32>} : memref<1x128x128xbf16, #tpu.memory_space<vmem>>, vector<1x128x128xbf16>,
    } else {
    }
    return
  }
  func.func @transform_0(%arg0: i32, %arg1: i32, %arg2: i32, %arg3: i32) -> (i32, i32, i32) {
    %c0_i32 = arith.constant 0 : i32
    %c0_i32_0 = arith.constant 0 : i32
    return %arg0, %arg1, %c0_i32 : i32, i32, i32
  }
  func.func @transform_1(%arg0: i32, %arg1: i32, %arg2: i32, %arg3: i32) -> (i32, i32, i32, i32) {
    %c0_i32 = arith.constant 0 : i32
    %c0_i32_0 = arith.constant 0 : i32
    return %arg0, %arg2, %arg3, %c0_i32 : i32, i32, i32, i32
  }
  func.func @transform_2(%arg0: i32, %arg1: i32, %arg2: i32, %arg3: i32) -> (i32, i32, i32) {
    %c0_i32 = arith.constant 0 : i32
    %c0_i32_0 = arith.constant 0 : i32
    return %arg0, %c0_i32, %arg2 : i32, i32, i32
  }
  func.func @transform_3(%arg0: i32, %arg1: i32, %arg2: i32, %arg3: i32) -> (i32, i32, i32) {
    %c0_i32 = arith.constant 0 : i32
    %c0_i32_0 = arith.constant 0 : i32
    return %arg0, %c0_i32, %arg2 : i32, i32, i32
  }
  func.func @transform_4(%arg0: i32, %arg1: i32, %arg2: i32, %arg3: i32) -> (i32, i32, i32) {
    %c0_i32 = arith.constant 0 : i32
    return %arg0, %arg1, %arg2 : i32, i32, i32
  }
}

module attributes {stable_mosaic.version = 11 : i64} {
  func.func @_bmm_bias_kernel(%arg0: i32, %arg1: i32, %arg2: i32, %arg3: i32, %arg4: memref<1x128x1024xbf16, #tpu.memory_space<vmem>>, %arg5: memref<1x1x1024x128xi8, #tpu.memory_space<vmem>>, %arg6: memref<1x1x128xf32, #tpu.memory_space<vmem>>, %arg7: memref<1x1x128xf32, #tpu.memory_space<vmem>>, %arg8: memref<1x128x128xf32, #tpu.memory_space<vmem>>, %arg9: memref<128x128xf32, #tpu.memory_space<vmem>>) attributes {dimension_semantics = [#tpu.dimension_semantics<parallel>, #tpu.dimension_semantics<parallel>, #tpu.dimension_semantics<parallel>, #tpu.dimension_semantics<arbitrary>], iteration_bounds = array<i64: 1, 1, 2, 1>, scalar_prefetch = 0 : i64, scratch_operands = 1 : i64, tpu.core_type = #tpu.core_type<tc>, window_params = [{transform_indices = @transform_0, window_bounds = array<i64: 1, 128, 1024>}, {transform_indices = @transform_1, window_bounds = array<i64: 1, 1, 1024, 128>}, {transform_indices = @transform_2, window_bounds = array<i64: 1, 1, 128>}, {transform_indices = @transform_3, window_bounds = array<i64: 1, 1, 128>}, {transform_indices = @transform_4, window_bounds = array<i64: 1, 128, 128>}]} {
    %c0_i32 = arith.constant 0 : i32
    %0 = arith.cmpi eq, %arg3, %c0_i32 : i32
    %1 = arith.extui %0 : i1 to i32
    %c0_i32_0 = arith.constant 0 : i32
    %2 = arith.cmpi ne, %1, %c0_i32_0 : i32
    scf.if %2 {
      %cst_12 = arith.constant 0.000000e+00 : f32
      %18 = vector.broadcast %cst_12 : f32 to vector<128x128xf32>
      %c0_13 = arith.constant 0 : index
      %c0_14 = arith.constant 0 : index
      %19 = vector.load %arg9[%c0_13, %c0_14] : memref<128x128xf32, #tpu.memory_space<vmem>>, vector<128x128xf32>
      tpu.vector_store %arg9[%c0_13, %c0_14], %18 {strides = array<i32>} : memref<128x128xf32, #tpu.memory_space<vmem>>, vector<128x128xf32>,
    } else {
    }
    %c1024_i32 = arith.constant 1024 : i32
    %3 = arith.muli %arg3, %c1024_i32 : i32
    %4 = tpu.assume_multiple %3, 128 : i32
    %c0 = arith.constant 0 : index
    %c0_1 = arith.constant 0 : index
    %5 = arith.index_cast %4 : i32 to index
    %6 = vector.load %arg4[%c0, %c0_1, %5] : memref<1x128x1024xbf16, #tpu.memory_space<vmem>>, vector<1x128x1024xbf16>
    %7 = vector.shape_cast %6 : vector<1x128x1024xbf16> to vector<128x1024xbf16>
    %c0_2 = arith.constant 0 : index
    %c0_3 = arith.constant 0 : index
    %8 = vector.load %arg9[%c0_2, %c0_3] : memref<128x128xf32, #tpu.memory_space<vmem>>, vector<128x128xf32>
    %c0_4 = arith.constant 0 : index
    %c0_5 = arith.constant 0 : index
    %c0_6 = arith.constant 0 : index
    %c0_7 = arith.constant 0 : index
    %9 = vector.load %arg5[%c0_4, %c0_5, %c0_6, %c0_7] : memref<1x1x1024x128xi8, #tpu.memory_space<vmem>>, vector<1x1x1024x128xi8>
    %10 = vector.shape_cast %9 : vector<1x1x1024x128xi8> to vector<1024x128xi8>
    %11 = arith.sitofp %10 : vector<1024x128xi8> to vector<1024x128xbf16>
    %cst = arith.constant dense<0.000000e+00> : vector<128x128xf32>
    %12 = tpu.matmul %7, %11, %cst {dimension_numbers = #tpu.dot_dimension_numbers<[1], [0], [0], [1], [0, 0, 1, 1], [], []>} : vector<128x1024xbf16>, vector<1024x128xbf16>, vector<128x128xf32> -> vector<128x128xf32>
    %13 = arith.addf %8, %12 : vector<128x128xf32>
    %c0_8 = arith.constant 0 : index
    %c0_9 = arith.constant 0 : index
    %14 = vector.load %arg9[%c0_8, %c0_9] : memref<128x128xf32, #tpu.memory_space<vmem>>, vector<128x128xf32>
    tpu.vector_store %arg9[%c0_8, %c0_9], %13 {strides = array<i32>} : memref<128x128xf32, #tpu.memory_space<vmem>>, vector<128x128xf32>,
    %c0_i32_10 = arith.constant 0 : i32
    %15 = arith.cmpi eq, %arg3, %c0_i32_10 : i32
    %16 = arith.extui %15 : i1 to i32
    %c0_i32_11 = arith.constant 0 : i32
    %17 = arith.cmpi ne, %16, %c0_i32_11 : i32
    scf.if %17 {
      %c0_12 = arith.constant 0 : index
      %c0_13 = arith.constant 0 : index
      %18 = vector.load %arg9[%c0_12, %c0_13] : memref<128x128xf32, #tpu.memory_space<vmem>>, vector<128x128xf32>
      %c0_14 = arith.constant 0 : index
      %c0_15 = arith.constant 0 : index
      %c0_16 = arith.constant 0 : index
      %19 = vector.load %arg6[%c0_14, %c0_15, %c0_16] : memref<1x1x128xf32, #tpu.memory_space<vmem>>, vector<1x1x128xf32>
      %20 = vector.shape_cast %19 : vector<1x1x128xf32> to vector<1x128xf32>
      %21 = vector.broadcast %20 : vector<1x128xf32> to vector<128x128xf32>
      %22 = arith.mulf %18, %21 : vector<128x128xf32>
      %c0_17 = arith.constant 0 : index
      %c0_18 = arith.constant 0 : index
      %c0_19 = arith.constant 0 : index
      %23 = vector.load %arg7[%c0_17, %c0_18, %c0_19] : memref<1x1x128xf32, #tpu.memory_space<vmem>>, vector<1x1x128xf32>
      %24 = vector.shape_cast %23 : vector<1x1x128xf32> to vector<1x128xf32>
      %25 = vector.broadcast %24 : vector<1x128xf32> to vector<128x128xf32>
      %26 = arith.addf %22, %25 : vector<128x128xf32>
      %cst_20 = arith.constant 0.000000e+00 : f32
      %27 = vector.broadcast %cst_20 : f32 to vector<128x128xf32>
      %28 = arith.maximumf %26, %27 : vector<128x128xf32>
      %c0_21 = arith.constant 0 : index
      %c0_22 = arith.constant 0 : index
      %c0_23 = arith.constant 0 : index
      %29 = vector.load %arg8[%c0_21, %c0_22, %c0_23] : memref<1x128x128xf32, #tpu.memory_space<vmem>>, vector<1x128x128xf32>
      %30 = vector.shape_cast %29 : vector<1x128x128xf32> to vector<128x128xf32>
      %31 = vector.shape_cast %28 : vector<128x128xf32> to vector<1x128x128xf32>
      tpu.vector_store %arg8[%c0_21, %c0_22, %c0_23], %31 {strides = array<i32>} : memref<1x128x128xf32, #tpu.memory_space<vmem>>, vector<1x128x128xf32>,
    } else {
    }
    return
  }
  func.func @transform_0(%arg0: i32, %arg1: i32, %arg2: i32, %arg3: i32) -> (i32, i32, i32) {
    %c0_i32 = arith.constant 0 : i32
    %c0_i32_0 = arith.constant 0 : i32
    return %arg0, %arg1, %c0_i32 : i32, i32, i32
  }
  func.func @transform_1(%arg0: i32, %arg1: i32, %arg2: i32, %arg3: i32) -> (i32, i32, i32, i32) {
    %c0_i32 = arith.constant 0 : i32
    %c0_i32_0 = arith.constant 0 : i32
    return %arg0, %arg2, %arg3, %c0_i32 : i32, i32, i32, i32
  }
  func.func @transform_2(%arg0: i32, %arg1: i32, %arg2: i32, %arg3: i32) -> (i32, i32, i32) {
    %c0_i32 = arith.constant 0 : i32
    %c0_i32_0 = arith.constant 0 : i32
    return %arg0, %c0_i32, %arg2 : i32, i32, i32
  }
  func.func @transform_3(%arg0: i32, %arg1: i32, %arg2: i32, %arg3: i32) -> (i32, i32, i32) {
    %c0_i32 = arith.constant 0 : i32
    %c0_i32_0 = arith.constant 0 : i32
    return %arg0, %c0_i32, %arg2 : i32, i32, i32
  }
  func.func @transform_4(%arg0: i32, %arg1: i32, %arg2: i32, %arg3: i32) -> (i32, i32, i32) {
    %c0_i32 = arith.constant 0 : i32
    return %arg0, %arg1, %arg2 : i32, i32, i32
  }
}

</mosaic_0001>

<llo_original>
// kernel: forward.4
$region0: #{forward.4}
  #allocation0 [shape = 'u32[]', space=smem, size = 0x4, offset = 0x4, fixed_abs, tag = 'smem constant byte address 0x4 - core index']
  #allocation1 [shape = 'u32[144,128]{1,0:T(1,128)}', space=vmem, size = 0x12000, scoped, tag = 'internal scratch']
  #allocation2 [shape = 'f32[128,256]{1,0:T(8,128)}', space=vmem, size = 0x20000, scoped, tag = 'scratch operand']
  %s0 = inlined_call_operand.vmem [shape: bf16[1,128,13824], index: 0, kind: input, shape index: {}]
  %s1 = inlined_call_operand.hbm [shape: s8[1,6,13824,256], index: 1, kind: input, shape index: {}]
  %s2 = inlined_call_operand.vmem [shape: f32[1,1,1536], index: 2, kind: input, shape index: {}]
  %s3 = inlined_call_operand.vmem [shape: f32[1,1,1536], index: 3, kind: input, shape index: {}]
  %s4 = inlined_call_operand.vmem [shape: bf16[1,128,1536], index: 4, kind: output, shape index: {}]
  %s5 = sld [smem:[#allocation0]]
  $region95: #{forward.4} parent=0
    _
  %s7 = ssub.s32 1, %s5
  %s8 = scalar_select 0, %s7, %s5
  $region1: #{forward.4} parent=0
    #allocation3 [shape = 'u8[1769472]{0}', space=vmem, size = 0x1b0000, scoped, tag = 'input window, operand 1']
    #allocation4 [shape = 's32[2]{0}', space=sflag, size = 0x8, scoped, tag = 'scoped memory for forward.4']
    #allocation5 [shape = 'u8[131072]{0}', space=vmem, size = 0x20000, scoped, tag = 'output window, operand 0']
    %9 = vsyncpa [#allocation4], 0
    %s10 = scalar_lea.sflag [#allocation4], 1
    %11 = vsyncpa %s10, 0
    loop: start=0, step=1, limit=26
    $region2: #{forward.4} parent=1 // loop_pre_header
      _
    $region3: #{forward.4} parent=1 // loop_header
      %s13 = sphi 0, %s17
      %p14 = scmp.ge.s32.totalorder %s13, 26
      %s20 = sphi 0, %s46
      %s21 = sphi 0, %s42
      %s22 = sphi 0, %s38
      %s23 = sphi 0, %s34
      %s24 = sphi 0, %s20
      %s25 = sphi 0, %s21
      %s26 = sphi 0, %s22
      %s27 = sphi 0, %s23
      %s28 = sphi 0, %s24
      %s29 = sphi 0, %s25
      %s30 = sphi 0, %s26
      %s31 = sphi 0, %s27
      %s51 = sphi 0, %s53
      %s54 = sphi 0, %s51
      %s55 = sphi 0, %s54
      %s71 = sphi 0, %s55
      %s81 = sphi 0, %s83
      %s84 = sphi 0, %s81
      %s85 = sphi 0, %s84
      %s101 = sphi 0, %s85
      %s109 = sphi 0, %s111
      %s112 = sphi 0, %s109
      %s113 = sphi 0, %s112
      %s129 = sphi 0, %s113
      %s137 = sphi 0, %s139
      %s140 = sphi 0, %s137
      %s141 = sphi 0, %s140
      %s157 = sphi 0, %s141
      %s167 = sphi 0, %s169
      %s170 = sphi 0, %s167
      %s171 = sphi 0, %s170
      %s187 = sphi 0, %s171
    $region4: #{forward.4} parent=1 // loop_header_branch
      %16 = sbr.rel (%p14) target = $region8
    $region5: #{forward.4} parent=1 // loop_body
      %s18 = ssub.s32 %s13, 1
      %s19 = ssub.s32 %s13, 2
      %s32 = sadd.s32 1, %s23
      %p33 = scmp.ge.s32.totalorder %s32, 4
      %s34 = scalar_select %p33, 0, %s32
      %s35 = sadd.s32 1, %s22
      %s36 = scalar_select %p33, %s35, %s22
      %p37 = scmp.ge.s32.totalorder %s36, 6
      %s38 = scalar_select %p37, 0, %s36
      %s39 = sadd.s32 1, %s21
      %s40 = scalar_select %p37, %s39, %s21
      %p41 = scmp.ge.s32.totalorder %s40, 1
      %s42 = scalar_select %p41, 0, %s40
      %s43 = sadd.s32 1, %s20
      %s44 = scalar_select %p41, %s43, %s20
      %p45 = scmp.ge.s32.totalorder %s44, 1
      %s46 = scalar_select %p45, 0, %s44
      %s47 = ssub.s32 %s20, %s46
      %s48 = ssub.s32 %s21, %s42
      %s49 = sor.u32 %s47, %s48
      %p50 = scmp.eq.s32.totalorder %s49, 0
      %s52 = sadd.s32 %s51, 1
      %s53 = scalar_select %p50, %s51, %s52
      %p56 = pneg %p50
      %p57 = scmp.eq.s32.totalorder %s13, 23
      %p58 = por %p56, %p57
      %p59 = scmp.ne.s32.totalorder %s51, %s54
      %p60 = scmp.eq.s32.totalorder %s13, 0
      %p61 = por %p59, %p60
      %p62 = scmp.ne.s32.totalorder %s51, %s54
      %p63 = scmp.eq.s32.totalorder %s18, 23
      %p64 = por %p62, %p63
      %p65 = scmp.ne.s32.totalorder %s54, %s55
      %p66 = scmp.eq.s32.totalorder %s18, 0
      %p67 = por %p65, %p66
      %p68 = scmp.ne.s32.totalorder %s54, %s55
      %p69 = scmp.eq.s32.totalorder %s19, 23
      %p70 = por %p68, %p69
      %p72 = scmp.ne.s32.totalorder %s55, %s71
      %p73 = scmp.eq.s32.totalorder %s19, 0
      %p74 = por %p72, %p73
      %s75 = ssub.s32 %s20, %s46
      %s76 = ssub.s32 %s22, %s38
      %s77 = sor.u32 %s75, %s76
      %s78 = ssub.s32 %s23, %s34
      %s79 = sor.u32 %s77, %s78
      %p80 = scmp.eq.s32.totalorder %s79, 0
      %s82 = sadd.s32 %s81, 1
      %s83 = scalar_select %p80, %s81, %s82
      %p86 = pneg %p80
      %p87 = scmp.eq.s32.totalorder %s13, 23
      %p88 = por %p86, %p87
      %p89 = scmp.ne.s32.totalorder %s81, %s84
      %p90 = scmp.eq.s32.totalorder %s13, 0
      %p91 = por %p89, %p90
      %p92 = scmp.ne.s32.totalorder %s81, %s84
      %p93 = scmp.eq.s32.totalorder %s18, 23
      %p94 = por %p92, %p93
      %p95 = scmp.ne.s32.totalorder %s84, %s85
      %p96 = scmp.eq.s32.totalorder %s18, 0
      %p97 = por %p95, %p96
      %p98 = scmp.ne.s32.totalorder %s84, %s85
      %p99 = scmp.eq.s32.totalorder %s19, 23
      %p100 = por %p98, %p99
      %p102 = scmp.ne.s32.totalorder %s85, %s101
      %p103 = scmp.eq.s32.totalorder %s19, 0
      %p104 = por %p102, %p103
      %s105 = ssub.s32 %s20, %s46
      %s106 = ssub.s32 %s22, %s38
      %s107 = sor.u32 %s105, %s106
      %p108 = scmp.eq.s32.totalorder %s107, 0
      %s110 = sadd.s32 %s109, 1
      %s111 = scalar_select %p108, %s109, %s110
      %p114 = pneg %p108
      %p115 = scmp.eq.s32.totalorder %s13, 23
      %p116 = por %p114, %p115
      %p117 = scmp.ne.s32.totalorder %s109, %s112
      %p118 = scmp.eq.s32.totalorder %s13, 0
      %p119 = por %p117, %p118
      %p120 = scmp.ne.s32.totalorder %s109, %s112
      %p121 = scmp.eq.s32.totalorder %s18, 23
      %p122 = por %p120, %p121
      %p123 = scmp.ne.s32.totalorder %s112, %s113
      %p124 = scmp.eq.s32.totalorder %s18, 0
      %p125 = por %p123, %p124
      %p126 = scmp.ne.s32.totalorder %s112, %s113
      %p127 = scmp.eq.s32.totalorder %s19, 23
      %p128 = por %p126, %p127
      %p130 = scmp.ne.s32.totalorder %s113, %s129
      %p131 = scmp.eq.s32.totalorder %s19, 0
      %p132 = por %p130, %p131
      %s133 = ssub.s32 %s20, %s46
      %s134 = ssub.s32 %s22, %s38
      %s135 = sor.u32 %s133, %s134
      %p136 = scmp.eq.s32.totalorder %s135, 0
      %s138 = sadd.s32 %s137, 1
      %s139 = scalar_select %p136, %s137, %s138
      %p142 = pneg %p136
      %p143 = scmp.eq.s32.totalorder %s13, 23
      %p144 = por %p142, %p143
      %p145 = scmp.ne.s32.totalorder %s137, %s140
      %p146 = scmp.eq.s32.totalorder %s13, 0
      %p147 = por %p145, %p146
      %p148 = scmp.ne.s32.totalorder %s137, %s140
      %p149 = scmp.eq.s32.totalorder %s18, 23
      %p150 = por %p148, %p149
      %p151 = scmp.ne.s32.totalorder %s140, %s141
      %p152 = scmp.eq.s32.totalorder %s18, 0
      %p153 = por %p151, %p152
      %p154 = scmp.ne.s32.totalorder %s140, %s141
      %p155 = scmp.eq.s32.totalorder %s19, 23
      %p156 = por %p154, %p155
      %p158 = scmp.ne.s32.totalorder %s141, %s157
      %p159 = scmp.eq.s32.totalorder %s19, 0
      %p160 = por %p158, %p159
      %s161 = ssub.s32 %s20, %s46
      %s162 = ssub.s32 %s21, %s42
      %s163 = sor.u32 %s161, %s162
      %s164 = ssub.s32 %s22, %s38
      %s165 = sor.u32 %s163, %s164
      %p166 = scmp.eq.s32.totalorder %s165, 0
      %s168 = sadd.s32 %s167, 1
      %s169 = scalar_select %p166, %s167, %s168
      %p172 = pneg %p166
      %p173 = scmp.eq.s32.totalorder %s13, 23
      %p174 = por %p172, %p173
      %p175 = scmp.ne.s32.totalorder %s167, %s170
      %p176 = scmp.eq.s32.totalorder %s13, 0
      %p177 = por %p175, %p176
      %p178 = scmp.ne.s32.totalorder %s167, %s170
      %p179 = scmp.eq.s32.totalorder %s18, 23
      %p180 = por %p178, %p179
      %p181 = scmp.ne.s32.totalorder %s170, %s171
      %p182 = scmp.eq.s32.totalorder %s18, 0
      %p183 = por %p181, %p182
      %p184 = scmp.ne.s32.totalorder %s170, %s171
      %p185 = scmp.eq.s32.totalorder %s19, 23
      %p186 = por %p184, %p185
      %p188 = scmp.ne.s32.totalorder %s171, %s187
      %p189 = scmp.eq.s32.totalorder %s19, 0
      %p190 = por %p188, %p189
      %p191 = scmp.le.s32.totalorder 1, %s13
      %p192 = scmp.lt.s32.totalorder %s13, 25
      %p193 = pnand %p191, %p192
      %p194 = pneg %p193
      // Predicated region
      $region9: #{forward.4} parent=5 // pred_check
        _
      $region10: #{forward.4} parent=5 // pred_check_branch
        %196 = sbr.rel (%p193) target = $region12
      $region11: #{forward.4} parent=5 // pred_region
        %s197 = ssub.s32 %s13, 1
        // Predicated region
        $region13: #{forward.4} parent=11 // pred_check
          %p198 = pneg %p67
        $region14: #{forward.4} parent=11 // pred_check_branch
          %200 = sbr.rel (%p198) target = $region16
        $region15: #{forward.4} parent=11 // pred_region
          %s201 = smul.u32 16, %s25
          %p202 = scmp.lt.s32.totalorder %s24, 0
          %s203 = scalar_select %p202, %s24, 0
          %p204 = scmp.lt.s32.totalorder %s201, 15
          %s205 = scalar_select %p204, %s201, 15
          %s206 = smul.addr %s205, 108
          %s207 = smul.addr %s203, 1728
          %s208 = sadd.s32 %s206, %s207
          %s209 = smul.addr %s208, 4
          %s210 = scalar_lea.vmem %s0, %s209
          %s211 = smul.u32 16, %s25
        $region16: #{forward.4} parent=11 // pred_fallthru
          _
      $region12: #{forward.4} parent=5 // pred_fallthru
        _
      %p212 = scmp.lt.s32.totalorder %s13, 24
      // Predicated region
      $region17: #{forward.4} parent=5 // pred_check
        %p213 = pneg %p212
      $region18: #{forward.4} parent=5 // pred_check_branch
        %215 = sbr.rel (%p213) target = $region20
      $region19: #{forward.4} parent=5 // pred_region
        // Predicated region
        $region21: #{forward.4} parent=19 // pred_check
          %p216 = pneg %p91
        $region22: #{forward.4} parent=19 // pred_check_branch
          %218 = sbr.rel (%p216) target = $region24
        $region23: #{forward.4} parent=19 // pred_region
          %s219 = sand.u32 %s81, 1
          %s220 = scalar_lea.sflag [#allocation4], %s219
          %s221 = sand.u32 %s81, 1
          %s222 = smul.addr %s221, 1728
          %s223 = scalar_lea.vmem [#allocation3], %s222
          %s224 = smul.u32 108, %s23
          %s226 = ssub.s32 27648, 27648
          %227 = vsyncadd %s220, %s226
          %s228 = smul.addr %s224, 2
          %s229 = smul.addr %s22, 864
          %s230 = sadd.s32 %s228, %s229
          %s231 = smul.addr %s20, 5184
          %s232 = sadd.s32 %s230, %s231
          %s233 = smul.addr %s232, 128
          %s234 = scalar_lea.hbm %s1, %s233
          %s235 = sshll.u32 %s223, 4
          %s236 = int_to_ptr.vmem [resolvable:$true] %s235
          %241 = dma.hbm_to_vmem [thread:$0]  %s234, 27648, %s236, %s220, 256, 256, 16
        $region24: #{forward.4} parent=19 // pred_fallthru
          _
        // Predicated region
        $region25: #{forward.4} parent=19 // pred_check
          %p242 = pneg %p119
        $region26: #{forward.4} parent=19 // pred_check_branch
          %244 = sbr.rel (%p242) target = $region28
        $region27: #{forward.4} parent=19 // pred_region
          %s245 = smul.u32 2, %s22
          %p246 = scmp.lt.s32.totalorder %s20, 0
          %s247 = scalar_select %p246, %s20, 0
          %p248 = scmp.lt.s32.totalorder %s245, 11
          %s249 = scalar_select %p248, %s245, 11
          %s250 = smul.addr %s247, 12
          %s251 = sadd.s32 %s249, %s250
          %s252 = scalar_lea.vmem %s2, %s251
          %s253 = smul.u32 2, %s22
        $region28: #{forward.4} parent=19 // pred_fallthru
          _
        // Predicated region
        $region29: #{forward.4} parent=19 // pred_check
          %p254 = pneg %p147
        $region30: #{forward.4} parent=19 // pred_check_branch
          %256 = sbr.rel (%p254) target = $region32
        $region31: #{forward.4} parent=19 // pred_region
          %s257 = smul.u32 2, %s22
          %p258 = scmp.lt.s32.totalorder %s20, 0
          %s259 = scalar_select %p258, %s20, 0
          %p260 = scmp.lt.s32.totalorder %s257, 11
          %s261 = scalar_select %p260, %s257, 11
          %s262 = smul.addr %s259, 12
          %s263 = sadd.s32 %s261, %s262
          %s264 = scalar_lea.vmem %s3, %s263
          %s265 = smul.u32 2, %s22
        $region32: #{forward.4} parent=19 // pred_fallthru
          _
      $region20: #{forward.4} parent=5 // pred_fallthru
        _
      %p266 = scmp.le.s32.totalorder 1, %s13
      %p267 = scmp.lt.s32.totalorder %s13, 25
      %p268 = pnand %p266, %p267
      %p269 = pneg %p268
      // Predicated region
      $region33: #{forward.4} parent=5 // pred_check
        _
      $region34: #{forward.4} parent=5 // pred_check_branch
        %271 = sbr.rel (%p268) target = $region36
      $region35: #{forward.4} parent=5 // pred_region
        %s272 = ssub.s32 %s13, 1
        %s273 = sand.u32 %s84, 1
        %s274 = scalar_lea.sflag [#allocation4], %s273
        %s275 = sand.u32 %s84, 1
        %s276 = smul.addr %s275, 1728
        %s277 = scalar_lea.vmem [#allocation3], %s276
        // Predicated region
        $region37: #{forward.4} parent=35 // pred_check
          %p278 = pneg %p97
        $region38: #{forward.4} parent=35 // pred_check_branch
          %280 = sbr.rel (%p278) target = $region40
        $region39: #{forward.4} parent=35 // pred_region
          %281 = dma.done %s274, 27648
        $region40: #{forward.4} parent=35 // pred_fallthru
          _
        %s282 = smul.u32 16, %s25
        %p283 = scmp.lt.s32.totalorder %s24, 0
        %s284 = scalar_select %p283, %s24, 0
        %p285 = scmp.lt.s32.totalorder %s282, 15
        %s286 = scalar_select %p285, %s282, 15
        %s287 = smul.addr %s286, 108
        %s288 = smul.addr %s284, 1728
        %s289 = sadd.s32 %s287, %s288
        %s290 = smul.addr %s289, 4
        %s291 = scalar_lea.vmem %s0, %s290
        %p292 = pneg %p67
        %p293 = pneg %p64
        %s294 = sand.u32 %s84, 1
        %s295 = scalar_lea.sflag [#allocation4], %s294
        %s296 = sand.u32 %s84, 1
        %s297 = smul.addr %s296, 1728
        %s298 = scalar_lea.vmem [#allocation3], %s297
        %p299 = pneg %p97
        %p300 = pneg %p94
        %s301 = smul.u32 2, %s26
        %p302 = scmp.lt.s32.totalorder %s24, 0
        %s303 = scalar_select %p302, %s24, 0
        %p304 = scmp.lt.s32.totalorder %s301, 11
        %s305 = scalar_select %p304, %s301, 11
        %s306 = smul.addr %s303, 12
        %s307 = sadd.s32 %s305, %s306
        %s308 = scalar_lea.vmem %s2, %s307
        %p309 = pneg %p125
        %p310 = pneg %p122
        %s311 = smul.u32 2, %s26
        %p312 = scmp.lt.s32.totalorder %s24, 0
        %s313 = scalar_select %p312, %s24, 0
        %p314 = scmp.lt.s32.totalorder %s311, 11
        %s315 = scalar_select %p314, %s311, 11
        %s316 = smul.addr %s313, 12
        %s317 = sadd.s32 %s315, %s316
        %s318 = scalar_lea.vmem %s3, %s317
        %p319 = pneg %p153
        %p320 = pneg %p150
        %p321 = pneg %p183
        %p322 = pneg %p180
        %s323 = sand.u32 %s170, 1
        %s324 = sand.u32 %s170, 1
        %s325 = smul.addr %s324, 128
        %s326 = scalar_lea.vmem [#allocation5], %s325
        %s327 = smul.u32 16, %s25
        %p328 = scmp.lt.s32.totalorder %s24, 0
        %s329 = scalar_select %p328, %s24, 0
        %p330 = scmp.lt.s32.totalorder %s327, 15
        %s331 = scalar_select %p330, %s327, 15
        %s332 = smul.addr %s331, 108
        %s333 = smul.addr %s329, 1728
        %s334 = sadd.s32 %s332, %s333
        %s335 = smul.addr %s334, 4
        %s336 = scalar_lea.vmem %s0, %s335
        %s337 = smul.u32 16, %s25
        %s338 = smul.u32 108, %s27
        %s339 = smul.u32 2, %s26
        %p340 = scmp.lt.s32.totalorder %s24, 0
        %s341 = scalar_select %p340, %s24, 0
        %p342 = scmp.lt.s32.totalorder %s339, 11
        %s343 = scalar_select %p342, %s339, 11
        %s344 = smul.addr %s341, 12
        %s345 = sadd.s32 %s343, %s344
        %s346 = scalar_lea.vmem %s2, %s345
        %s347 = smul.u32 2, %s26
        %s348 = smul.u32 2, %s26
        %p349 = scmp.lt.s32.totalorder %s24, 0
        %s350 = scalar_select %p349, %s24, 0
        %p351 = scmp.lt.s32.totalorder %s348, 11
        %s352 = scalar_select %p351, %s348, 11
        %s353 = smul.addr %s350, 12
        %s354 = sadd.s32 %s352, %s353
        %s355 = scalar_lea.vmem %s3, %s354
        %s356 = smul.u32 2, %s26
        %s357 = smul.u32 16, %s25
        %s358 = smul.u32 2, %s26
        %p360 = scmp.eq.s32.totalorder %s27, 0
        // Predicated region
        $region41: #{forward.4} parent=35 // pred_check
          %p361 = pneg %p360
        $region42: #{forward.4} parent=35 // pred_check_branch
          %363 = sbr.rel (%p361) target = $region44
        $region43: #{forward.4} parent=35 // pred_region
          %364 = vst [vmem:[#allocation2] sm:$0xff] 0.0
          %365 = vst [vmem:[#allocation2 + $0x8] sm:$0xff] 0.0
          %366 = vst [vmem:[#allocation2 + $0x10] sm:$0xff] 0.0
          %367 = vst [vmem:[#allocation2 + $0x18] sm:$0xff] 0.0
          %368 = vst [vmem:[#allocation2 + $0x20] sm:$0xff] 0.0
          %369 = vst [vmem:[#allocation2 + $0x28] sm:$0xff] 0.0
          %370 = vst [vmem:[#allocation2 + $0x30] sm:$0xff] 0.0
          %371 = vst [vmem:[#allocation2 + $0x38] sm:$0xff] 0.0
          %372 = vst [vmem:[#allocation2 + $0x40] sm:$0xff] 0.0
          %373 = vst [vmem:[#allocation2 + $0x48] sm:$0xff] 0.0
          %374 = vst [vmem:[#allocation2 + $0x50] sm:$0xff] 0.0
          %375 = vst [vmem:[#allocation2 + $0x58] sm:$0xff] 0.0
          %376 = vst [vmem:[#allocation2 + $0x60] sm:$0xff] 0.0
          %377 = vst [vmem:[#allocation2 + $0x68] sm:$0xff] 0.0
          %378 = vst [vmem:[#allocation2 + $0x70] sm:$0xff] 0.0
          %379 = vst [vmem:[#allocation2 + $0x78] sm:$0xff] 0.0
          %380 = vst [vmem:[#allocation2 + $0x80] sm:$0xff] 0.0
          %381 = vst [vmem:[#allocation2 + $0x88] sm:$0xff] 0.0
          %382 = vst [vmem:[#allocation2 + $0x90] sm:$0xff] 0.0
          %383 = vst [vmem:[#allocation2 + $0x98] sm:$0xff] 0.0
          %384 = vst [vmem:[#allocation2 + $0xa0] sm:$0xff] 0.0
          %385 = vst [vmem:[#allocation2 + $0xa8] sm:$0xff] 0.0
          %386 = vst [vmem:[#allocation2 + $0xb0] sm:$0xff] 0.0
          %387 = vst [vmem:[#allocation2 + $0xb8] sm:$0xff] 0.0
          %388 = vst [vmem:[#allocation2 + $0xc0] sm:$0xff] 0.0
          %389 = vst [vmem:[#allocation2 + $0xc8] sm:$0xff] 0.0
          %390 = vst [vmem:[#allocation2 + $0xd0] sm:$0xff] 0.0
          %391 = vst [vmem:[#allocation2 + $0xd8] sm:$0xff] 0.0
          %392 = vst [vmem:[#allocation2 + $0xe0] sm:$0xff] 0.0
          %393 = vst [vmem:[#allocation2 + $0xe8] sm:$0xff] 0.0
          %394 = vst [vmem:[#allocation2 + $0xf0] sm:$0xff] 0.0
          %395 = vst [vmem:[#allocation2 + $0xf8] sm:$0xff] 0.0
        $region44: #{forward.4} parent=35 // pred_fallthru
          _
        %s396 = smul.u32 %s27, 3456
        %s397 = sshra.s32 %s396, 7
        %s398 = sand.u32 %s396, 127
        %s399 = smul.addr %s397, 4
        %s400 = scalar_lea.vmem %s336, %s399
        %v401 = vld [vmem:[%s400] sm:$0xff]
        %v402 = vld [vmem:[%s400 + $0x8] sm:$0xff]
        %v403 = vld [vmem:[%s400 + $0x10] sm:$0xff]
        %v404 = vld [vmem:[%s400 + $0x18] sm:$0xff]
        %v405 = vld [vmem:[%s400 + $0x20] sm:$0xff]
        %v406 = vld [vmem:[%s400 + $0x28] sm:$0xff]
        %v407 = vld [vmem:[%s400 + $0x30] sm:$0xff]
        %v408 = vld [vmem:[%s400 + $0x38] sm:$0xff]
        %v409 = vld [vmem:[%s400 + $0x40] sm:$0xff]
        %v410 = vld [vmem:[%s400 + $0x48] sm:$0xff]
        %v411 = vld [vmem:[%s400 + $0x50] sm:$0xff]
        %v412 = vld [vmem:[%s400 + $0x58] sm:$0xff]
        %v413 = vld [vmem:[%s400 + $0x60] sm:$0xff]
        %v414 = vld [vmem:[%s400 + $0x68] sm:$0xf]
        %v415 = vld [vmem:[%s400 + $0x1b0] sm:$0xff]
        %v416 = vld [vmem:[%s400 + $0x1b8] sm:$0xff]
        %v417 = vld [vmem:[%s400 + $0x1c0] sm:$0xff]
        %v418 = vld [vmem:[%s400 + $0x1c8] sm:$0xff]
        %v419 = vld [vmem:[%s400 + $0x1d0] sm:$0xff]
        %v420 = vld [vmem:[%s400 + $0x1d8] sm:$0xff]
        %v421 = vld [vmem:[%s400 + $0x1e0] sm:$0xff]
        %v422 = vld [vmem:[%s400 + $0x1e8] sm:$0xff]
        %v423 = vld [vmem:[%s400 + $0x1f0] sm:$0xff]
        %v424 = vld [vmem:[%s400 + $0x1f8] sm:$0xff]
        %v425 = vld [vmem:[%s400 + $0x200] sm:$0xff]
        %v426 = vld [vmem:[%s400 + $0x208] sm:$0xff]
        %v427 = vld [vmem:[%s400 + $0x210] sm:$0xff]
        %v428 = vld [vmem:[%s400 + $0x218] sm:$0xf]
        %v429 = vld [vmem:[%s400 + $0x360] sm:$0xff]
        %v430 = vld [vmem:[%s400 + $0x368] sm:$0xff]
        %v431 = vld [vmem:[%s400 + $0x370] sm:$0xff]
        %v432 = vld [vmem:[%s400 + $0x378] sm:$0xff]
        %v433 = vld [vmem:[%s400 + $0x380] sm:$0xff]
        %v434 = vld [vmem:[%s400 + $0x388] sm:$0xff]
        %v435 = vld [vmem:[%s400 + $0x390] sm:$0xff]
        %v436 = vld [vmem:[%s400 + $0x398] sm:$0xff]
        %v437 = vld [vmem:[%s400 + $0x3a0] sm:$0xff]
        %v438 = vld [vmem:[%s400 + $0x3a8] sm:$0xff]
        %v439 = vld [vmem:[%s400 + $0x3b0] sm:$0xff]
        %v440 = vld [vmem:[%s400 + $0x3b8] sm:$0xff]
        %v441 = vld [vmem:[%s400 + $0x3c0] sm:$0xff]
        %v442 = vld [vmem:[%s400 + $0x3c8] sm:$0xf]
        %v443 = vld [vmem:[%s400 + $0x510] sm:$0xff]
        %v444 = vld [vmem:[%s400 + $0x518] sm:$0xff]
        %v445 = vld [vmem:[%s400 + $0x520] sm:$0xff]
        %v446 = vld [vmem:[%s400 + $0x528] sm:$0xff]
        %v447 = vld [vmem:[%s400 + $0x530] sm:$0xff]
        %v448 = vld [vmem:[%s400 + $0x538] sm:$0xff]
        %v449 = vld [vmem:[%s400 + $0x540] sm:$0xff]
        %v450 = vld [vmem:[%s400 + $0x548] sm:$0xff]
        %v451 = vld [vmem:[%s400 + $0x550] sm:$0xff]
        %v452 = vld [vmem:[%s400 + $0x558] sm:$0xff]
        %v453 = vld [vmem:[%s400 + $0x560] sm:$0xff]
        %v454 = vld [vmem:[%s400 + $0x568] sm:$0xff]
        %v455 = vld [vmem:[%s400 + $0x570] sm:$0xff]
        %v456 = vld [vmem:[%s400 + $0x578] sm:$0xf]
        %v457 = vld [vmem:[%s400 + $0x6c0] sm:$0xff]
        %v458 = vld [vmem:[%s400 + $0x6c8] sm:$0xff]
        %v459 = vld [vmem:[%s400 + $0x6d0] sm:$0xff]
        %v460 = vld [vmem:[%s400 + $0x6d8] sm:$0xff]
        %v461 = vld [vmem:[%s400 + $0x6e0] sm:$0xff]
        %v462 = vld [vmem:[%s400 + $0x6e8] sm:$0xff]
        %v463 = vld [vmem:[%s400 + $0x6f0] sm:$0xff]
        %v464 = vld [vmem:[%s400 + $0x6f8] sm:$0xff]
        %v465 = vld [vmem:[%s400 + $0x700] sm:$0xff]
        %v466 = vld [vmem:[%s400 + $0x708] sm:$0xff]
        %v467 = vld [vmem:[%s400 + $0x710] sm:$0xff]
        %v468 = vld [vmem:[%s400 + $0x718] sm:$0xff]
        %v469 = vld [vmem:[%s400 + $0x720] sm:$0xff]
        %v470 = vld [vmem:[%s400 + $0x728] sm:$0xf]
        %v471 = vld [vmem:[%s400 + $0x870] sm:$0xff]
        %v472 = vld [vmem:[%s400 + $0x878] sm:$0xff]
        %v473 = vld [vmem:[%s400 + $0x880] sm:$0xff]
        %v474 = vld [vmem:[%s400 + $0x888] sm:$0xff]
        %v475 = vld [vmem:[%s400 + $0x890] sm:$0xff]
        %v476 = vld [vmem:[%s400 + $0x898] sm:$0xff]
        %v477 = vld [vmem:[%s400 + $0x8a0] sm:$0xff]
        %v478 = vld [vmem:[%s400 + $0x8a8] sm:$0xff]
        %v479 = vld [vmem:[%s400 + $0x8b0] sm:$0xff]
        %v480 = vld [vmem:[%s400 + $0x8b8] sm:$0xff]
        %v481 = vld [vmem:[%s400 + $0x8c0] sm:$0xff]
        %v482 = vld [vmem:[%s400 + $0x8c8] sm:$0xff]
        %v483 = vld [vmem:[%s400 + $0x8d0] sm:$0xff]
        %v484 = vld [vmem:[%s400 + $0x8d8] sm:$0xf]
        %v485 = vld [vmem:[%s400 + $0xa20] sm:$0xff]
        %v486 = vld [vmem:[%s400 + $0xa28] sm:$0xff]
        %v487 = vld [vmem:[%s400 + $0xa30] sm:$0xff]
        %v488 = vld [vmem:[%s400 + $0xa38] sm:$0xff]
        %v489 = vld [vmem:[%s400 + $0xa40] sm:$0xff]
        %v490 = vld [vmem:[%s400 + $0xa48] sm:$0xff]
        %v491 = vld [vmem:[%s400 + $0xa50] sm:$0xff]
        %v492 = vld [vmem:[%s400 + $0xa58] sm:$0xff]
        %v493 = vld [vmem:[%s400 + $0xa60] sm:$0xff]
        %v494 = vld [vmem:[%s400 + $0xa68] sm:$0xff]
        %v495 = vld [vmem:[%s400 + $0xa70] sm:$0xff]
        %v496 = vld [vmem:[%s400 + $0xa78] sm:$0xff]
        %v497 = vld [vmem:[%s400 + $0xa80] sm:$0xff]
        %v498 = vld [vmem:[%s400 + $0xa88] sm:$0xf]
        %v499 = vld [vmem:[%s400 + $0xbd0] sm:$0xff]
        %v500 = vld [vmem:[%s400 + $0xbd8] sm:$0xff]
        %v501 = vld [vmem:[%s400 + $0xbe0] sm:$0xff]
        %v502 = vld [vmem:[%s400 + $0xbe8] sm:$0xff]
        %v503 = vld [vmem:[%s400 + $0xbf0] sm:$0xff]
        %v504 = vld [vmem:[%s400 + $0xbf8] sm:$0xff]
        %v505 = vld [vmem:[%s400 + $0xc00] sm:$0xff]
        %v506 = vld [vmem:[%s400 + $0xc08] sm:$0xff]
        %v507 = vld [vmem:[%s400 + $0xc10] sm:$0xff]
        %v508 = vld [vmem:[%s400 + $0xc18] sm:$0xff]
        %v509 = vld [vmem:[%s400 + $0xc20] sm:$0xff]
        %v510 = vld [vmem:[%s400 + $0xc28] sm:$0xff]
        %v511 = vld [vmem:[%s400 + $0xc30] sm:$0xff]
        %v512 = vld [vmem:[%s400 + $0xc38] sm:$0xf]
        %v513 = vld [vmem:[%s400 + $0xd80] sm:$0xff]
        %v514 = vld [vmem:[%s400 + $0xd88] sm:$0xff]
        %v515 = vld [vmem:[%s400 + $0xd90] sm:$0xff]
        %v516 = vld [vmem:[%s400 + $0xd98] sm:$0xff]
        %v517 = vld [vmem:[%s400 + $0xda0] sm:$0xff]
        %v518 = vld [vmem:[%s400 + $0xda8] sm:$0xff]
        %v519 = vld [vmem:[%s400 + $0xdb0] sm:$0xff]
        %v520 = vld [vmem:[%s400 + $0xdb8] sm:$0xff]
        %v521 = vld [vmem:[%s400 + $0xdc0] sm:$0xff]
        %v522 = vld [vmem:[%s400 + $0xdc8] sm:$0xff]
        %v523 = vld [vmem:[%s400 + $0xdd0] sm:$0xff]
        %v524 = vld [vmem:[%s400 + $0xdd8] sm:$0xff]
        %v525 = vld [vmem:[%s400 + $0xde0] sm:$0xff]
        %v526 = vld [vmem:[%s400 + $0xde8] sm:$0xf]
        %v527 = vld [vmem:[%s400 + $0xf30] sm:$0xff]
        %v528 = vld [vmem:[%s400 + $0xf38] sm:$0xff]
        %v529 = vld [vmem:[%s400 + $0xf40] sm:$0xff]
        %v530 = vld [vmem:[%s400 + $0xf48] sm:$0xff]
        %v531 = vld [vmem:[%s400 + $0xf50] sm:$0xff]
        %v532 = vld [vmem:[%s400 + $0xf58] sm:$0xff]
        %v533 = vld [vmem:[%s400 + $0xf60] sm:$0xff]
        %v534 = vld [vmem:[%s400 + $0xf68] sm:$0xff]
        %v535 = vld [vmem:[%s400 + $0xf70] sm:$0xff]
        %v536 = vld [vmem:[%s400 + $0xf78] sm:$0xff]
        %v537 = vld [vmem:[%s400 + $0xf80] sm:$0xff]
        %v538 = vld [vmem:[%s400 + $0xf88] sm:$0xff]
        %v539 = vld [vmem:[%s400 + $0xf90] sm:$0xff]
        %v540 = vld [vmem:[%s400 + $0xf98] sm:$0xf]
        %v541 = vld [vmem:[%s400 + $0x10e0] sm:$0xff]
        %v542 = vld [vmem:[%s400 + $0x10e8] sm:$0xff]
        %v543 = vld [vmem:[%s400 + $0x10f0] sm:$0xff]
        %v544 = vld [vmem:[%s400 + $0x10f8] sm:$0xff]
        %v545 = vld [vmem:[%s400 + $0x1100] sm:$0xff]
        %v546 = vld [vmem:[%s400 + $0x1108] sm:$0xff]
        %v547 = vld [vmem:[%s400 + $0x1110] sm:$0xff]
        %v548 = vld [vmem:[%s400 + $0x1118] sm:$0xff]
        %v549 = vld [vmem:[%s400 + $0x1120] sm:$0xff]
        %v550 = vld [vmem:[%s400 + $0x1128] sm:$0xff]
        %v551 = vld [vmem:[%s400 + $0x1130] sm:$0xff]
        %v552 = vld [vmem:[%s400 + $0x1138] sm:$0xff]
        %v553 = vld [vmem:[%s400 + $0x1140] sm:$0xff]
        %v554 = vld [vmem:[%s400 + $0x1148] sm:$0xf]
        %v555 = vld [vmem:[%s400 + $0x1290] sm:$0xff]
        %v556 = vld [vmem:[%s400 + $0x1298] sm:$0xff]
        %v557 = vld [vmem:[%s400 + $0x12a0] sm:$0xff]
        %v558 = vld [vmem:[%s400 + $0x12a8] sm:$0xff]
        %v559 = vld [vmem:[%s400 + $0x12b0] sm:$0xff]
        %v560 = vld [vmem:[%s400 + $0x12b8] sm:$0xff]
        %v561 = vld [vmem:[%s400 + $0x12c0] sm:$0xff]
        %v562 = vld [vmem:[%s400 + $0x12c8] sm:$0xff]
        %v563 = vld [vmem:[%s400 + $0x12d0] sm:$0xff]
        %v564 = vld [vmem:[%s400 + $0x12d8] sm:$0xff]
        %v565 = vld [vmem:[%s400 + $0x12e0] sm:$0xff]
        %v566 = vld [vmem:[%s400 + $0x12e8] sm:$0xff]
        %v567 = vld [vmem:[%s400 + $0x12f0] sm:$0xff]
        %v568 = vld [vmem:[%s400 + $0x12f8] sm:$0xf]
        %v569 = vld [vmem:[%s400 + $0x1440] sm:$0xff]
        %v570 = vld [vmem:[%s400 + $0x1448] sm:$0xff]
        %v571 = vld [vmem:[%s400 + $0x1450] sm:$0xff]
        %v572 = vld [vmem:[%s400 + $0x1458] sm:$0xff]
        %v573 = vld [vmem:[%s400 + $0x1460] sm:$0xff]
        %v574 = vld [vmem:[%s400 + $0x1468] sm:$0xff]
        %v575 = vld [vmem:[%s400 + $0x1470] sm:$0xff]
        %v576 = vld [vmem:[%s400 + $0x1478] sm:$0xff]
        %v577 = vld [vmem:[%s400 + $0x1480] sm:$0xff]
        %v578 = vld [vmem:[%s400 + $0x1488] sm:$0xff]
        %v579 = vld [vmem:[%s400 + $0x1490] sm:$0xff]
        %v580 = vld [vmem:[%s400 + $0x1498] sm:$0xff]
        %v581 = vld [vmem:[%s400 + $0x14a0] sm:$0xff]
        %v582 = vld [vmem:[%s400 + $0x14a8] sm:$0xf]
        %v583 = vld [vmem:[%s400 + $0x15f0] sm:$0xff]
        %v584 = vld [vmem:[%s400 + $0x15f8] sm:$0xff]
        %v585 = vld [vmem:[%s400 + $0x1600] sm:$0xff]
        %v586 = vld [vmem:[%s400 + $0x1608] sm:$0xff]
        %v587 = vld [vmem:[%s400 + $0x1610] sm:$0xff]
        %v588 = vld [vmem:[%s400 + $0x1618] sm:$0xff]
        %v589 = vld [vmem:[%s400 + $0x1620] sm:$0xff]
        %v590 = vld [vmem:[%s400 + $0x1628] sm:$0xff]
        %v591 = vld [vmem:[%s400 + $0x1630] sm:$0xff]
        %v592 = vld [vmem:[%s400 + $0x1638] sm:$0xff]
        %v593 = vld [vmem:[%s400 + $0x1640] sm:$0xff]
        %v594 = vld [vmem:[%s400 + $0x1648] sm:$0xff]
        %v595 = vld [vmem:[%s400 + $0x1650] sm:$0xff]
        %v596 = vld [vmem:[%s400 + $0x1658] sm:$0xf]
        %v597 = vld [vmem:[%s400 + $0x17a0] sm:$0xff]
        %v598 = vld [vmem:[%s400 + $0x17a8] sm:$0xff]
        %v599 = vld [vmem:[%s400 + $0x17b0] sm:$0xff]
        %v600 = vld [vmem:[%s400 + $0x17b8] sm:$0xff]
        %v601 = vld [vmem:[%s400 + $0x17c0] sm:$0xff]
        %v602 = vld [vmem:[%s400 + $0x17c8] sm:$0xff]
        %v603 = vld [vmem:[%s400 + $0x17d0] sm:$0xff]
        %v604 = vld [vmem:[%s400 + $0x17d8] sm:$0xff]
        %v605 = vld [vmem:[%s400 + $0x17e0] sm:$0xff]
        %v606 = vld [vmem:[%s400 + $0x17e8] sm:$0xff]
        %v607 = vld [vmem:[%s400 + $0x17f0] sm:$0xff]
        %v608 = vld [vmem:[%s400 + $0x17f8] sm:$0xff]
        %v609 = vld [vmem:[%s400 + $0x1800] sm:$0xff]
        %v610 = vld [vmem:[%s400 + $0x1808] sm:$0xf]
        %v611 = vld [vmem:[%s400 + $0x1950] sm:$0xff]
        %v612 = vld [vmem:[%s400 + $0x1958] sm:$0xff]
        %v613 = vld [vmem:[%s400 + $0x1960] sm:$0xff]
        %v614 = vld [vmem:[%s400 + $0x1968] sm:$0xff]
        %v615 = vld [vmem:[%s400 + $0x1970] sm:$0xff]
        %v616 = vld [vmem:[%s400 + $0x1978] sm:$0xff]
        %v617 = vld [vmem:[%s400 + $0x1980] sm:$0xff]
        %v618 = vld [vmem:[%s400 + $0x1988] sm:$0xff]
        %v619 = vld [vmem:[%s400 + $0x1990] sm:$0xff]
        %v620 = vld [vmem:[%s400 + $0x1998] sm:$0xff]
        %v621 = vld [vmem:[%s400 + $0x19a0] sm:$0xff]
        %v622 = vld [vmem:[%s400 + $0x19a8] sm:$0xff]
        %v623 = vld [vmem:[%s400 + $0x19b0] sm:$0xff]
        %v624 = vld [vmem:[%s400 + $0x19b8] sm:$0xf]
        %v625 = vld [vmem:[#allocation2] sm:$0xff]
        %v626 = vld [vmem:[#allocation2 + $0x8] sm:$0xff]
        %v627 = vld [vmem:[#allocation2 + $0x10] sm:$0xff]
        %v628 = vld [vmem:[#allocation2 + $0x18] sm:$0xff]
        %v629 = vld [vmem:[#allocation2 + $0x20] sm:$0xff]
        %v630 = vld [vmem:[#allocation2 + $0x28] sm:$0xff]
        %v631 = vld [vmem:[#allocation2 + $0x30] sm:$0xff]
        %v632 = vld [vmem:[#allocation2 + $0x38] sm:$0xff]
        %v633 = vld [vmem:[#allocation2 + $0x40] sm:$0xff]
        %v634 = vld [vmem:[#allocation2 + $0x48] sm:$0xff]
        %v635 = vld [vmem:[#allocation2 + $0x50] sm:$0xff]
        %v636 = vld [vmem:[#allocation2 + $0x58] sm:$0xff]
        %v637 = vld [vmem:[#allocation2 + $0x60] sm:$0xff]
        %v638 = vld [vmem:[#allocation2 + $0x68] sm:$0xff]
        %v639 = vld [vmem:[#allocation2 + $0x70] sm:$0xff]
        %v640 = vld [vmem:[#allocation2 + $0x78] sm:$0xff]
        %v641 = vld [vmem:[#allocation2 + $0x80] sm:$0xff]
        %v642 = vld [vmem:[#allocation2 + $0x88] sm:$0xff]
        %v643 = vld [vmem:[#allocation2 + $0x90] sm:$0xff]
        %v644 = vld [vmem:[#allocation2 + $0x98] sm:$0xff]
        %v645 = vld [vmem:[#allocation2 + $0xa0] sm:$0xff]
        %v646 = vld [vmem:[#allocation2 + $0xa8] sm:$0xff]
        %v647 = vld [vmem:[#allocation2 + $0xb0] sm:$0xff]
        %v648 = vld [vmem:[#allocation2 + $0xb8] sm:$0xff]
        %v649 = vld [vmem:[#allocation2 + $0xc0] sm:$0xff]
        %v650 = vld [vmem:[#allocation2 + $0xc8] sm:$0xff]
        %v651 = vld [vmem:[#allocation2 + $0xd0] sm:$0xff]
        %v652 = vld [vmem:[#allocation2 + $0xd8] sm:$0xff]
        %v653 = vld [vmem:[#allocation2 + $0xe0] sm:$0xff]
        %v654 = vld [vmem:[#allocation2 + $0xe8] sm:$0xff]
        %v655 = vld [vmem:[#allocation2 + $0xf0] sm:$0xff]
        %v656 = vld [vmem:[#allocation2 + $0xf8] sm:$0xff]
        %v657 = vld [vmem:[%s277] sm:$0xff]
        %v658 = vld [vmem:[%s277 + $0x8] sm:$0xff]
        %v659 = vld [vmem:[%s277 + $0x10] sm:$0xff]
        %v660 = vld [vmem:[%s277 + $0x18] sm:$0xff]
        %v661 = vld [vmem:[%s277 + $0x20] sm:$0xff]
        %v662 = vld [vmem:[%s277 + $0x28] sm:$0xff]
        %v663 = vld [vmem:[%s277 + $0x30] sm:$0xff]
        %v664 = vld [vmem:[%s277 + $0x38] sm:$0xff]
        %v665 = vld [vmem:[%s277 + $0x40] sm:$0xff]
        %v666 = vld [vmem:[%s277 + $0x48] sm:$0xff]
        %v667 = vld [vmem:[%s277 + $0x50] sm:$0xff]
        %v668 = vld [vmem:[%s277 + $0x58] sm:$0xff]
        %v669 = vld [vmem:[%s277 + $0x60] sm:$0xff]
        %v670 = vld [vmem:[%s277 + $0x68] sm:$0xff]
        %v671 = vld [vmem:[%s277 + $0x70] sm:$0xff]
        %v672 = vld [vmem:[%s277 + $0x78] sm:$0xff]
        %v673 = vld [vmem:[%s277 + $0x80] sm:$0xff]
        %v674 = vld [vmem:[%s277 + $0x88] sm:$0xff]
        %v675 = vld [vmem:[%s277 + $0x90] sm:$0xff]
        %v676 = vld [vmem:[%s277 + $0x98] sm:$0xff]
        %v677 = vld [vmem:[%s277 + $0xa0] sm:$0xff]
        %v678 = vld [vmem:[%s277 + $0xa8] sm:$0xff]
        %v679 = vld [vmem:[%s277 + $0xb0] sm:$0xff]
        %v680 = vld [vmem:[%s277 + $0xb8] sm:$0xff]
        %v681 = vld [vmem:[%s277 + $0xc0] sm:$0xff]
        %v682 = vld [vmem:[%s277 + $0xc8] sm:$0xff]
        %v683 = vld [vmem:[%s277 + $0xd0] sm:$0xff]
        %v684 = vld [vmem:[%s277 + $0xd8] sm:$0xff]
        %v685 = vld [vmem:[%s277 + $0xe0] sm:$0xff]
        %v686 = vld [vmem:[%s277 + $0xe8] sm:$0xff]
        %v687 = vld [vmem:[%s277 + $0xf0] sm:$0xff]
        %v688 = vld [vmem:[%s277 + $0xf8] sm:$0xff]
        %v689 = vld [vmem:[%s277 + $0x100] sm:$0xff]
        %v690 = vld [vmem:[%s277 + $0x108] sm:$0xff]
        %v691 = vld [vmem:[%s277 + $0x110] sm:$0xff]
        %v692 = vld [vmem:[%s277 + $0x118] sm:$0xff]
        %v693 = vld [vmem:[%s277 + $0x120] sm:$0xff]
        %v694 = vld [vmem:[%s277 + $0x128] sm:$0xff]
        %v695 = vld [vmem:[%s277 + $0x130] sm:$0xff]
        %v696 = vld [vmem:[%s277 + $0x138] sm:$0xff]
        %v697 = vld [vmem:[%s277 + $0x140] sm:$0xff]
        %v698 = vld [vmem:[%s277 + $0x148] sm:$0xff]
        %v699 = vld [vmem:[%s277 + $0x150] sm:$0xff]
        %v700 = vld [vmem:[%s277 + $0x158] sm:$0xff]
        %v701 = vld [vmem:[%s277 + $0x160] sm:$0xff]
        %v702 = vld [vmem:[%s277 + $0x168] sm:$0xff]
        %v703 = vld [vmem:[%s277 + $0x170] sm:$0xff]
        %v704 = vld [vmem:[%s277 + $0x178] sm:$0xff]
        %v705 = vld [vmem:[%s277 + $0x180] sm:$0xff]
        %v706 = vld [vmem:[%s277 + $0x188] sm:$0xff]
        %v707 = vld [vmem:[%s277 + $0x190] sm:$0xff]
        %v708 = vld [vmem:[%s277 + $0x198] sm:$0xff]
        %v709 = vld [vmem:[%s277 + $0x1a0] sm:$0xff]
        %v710 = vld [vmem:[%s277 + $0x1a8] sm:$0xff]
        %v711 = vld [vmem:[%s277 + $0x1b0] sm:$0xff]
        %v712 = vld [vmem:[%s277 + $0x1b8] sm:$0xff]
        %v713 = vld [vmem:[%s277 + $0x1c0] sm:$0xff]
        %v714 = vld [vmem:[%s277 + $0x1c8] sm:$0xff]
        %v715 = vld [vmem:[%s277 + $0x1d0] sm:$0xff]
        %v716 = vld [vmem:[%s277 + $0x1d8] sm:$0xff]
        %v717 = vld [vmem:[%s277 + $0x1e0] sm:$0xff]
        %v718 = vld [vmem:[%s277 + $0x1e8] sm:$0xff]
        %v719 = vld [vmem:[%s277 + $0x1f0] sm:$0xff]
        %v720 = vld [vmem:[%s277 + $0x1f8] sm:$0xff]
        %v721 = vld [vmem:[%s277 + $0x200] sm:$0xff]
        %v722 = vld [vmem:[%s277 + $0x208] sm:$0xff]
        %v723 = vld [vmem:[%s277 + $0x210] sm:$0xff]
        %v724 = vld [vmem:[%s277 + $0x218] sm:$0xff]
        %v725 = vld [vmem:[%s277 + $0x220] sm:$0xff]
        %v726 = vld [vmem:[%s277 + $0x228] sm:$0xff]
        %v727 = vld [vmem:[%s277 + $0x230] sm:$0xff]
        %v728 = vld [vmem:[%s277 + $0x238] sm:$0xff]
        %v729 = vld [vmem:[%s277 + $0x240] sm:$0xff]
        %v730 = vld [vmem:[%s277 + $0x248] sm:$0xff]
        %v731 = vld [vmem:[%s277 + $0x250] sm:$0xff]
        %v732 = vld [vmem:[%s277 + $0x258] sm:$0xff]
        %v733 = vld [vmem:[%s277 + $0x260] sm:$0xff]
        %v734 = vld [vmem:[%s277 + $0x268] sm:$0xff]
        %v735 = vld [vmem:[%s277 + $0x270] sm:$0xff]
        %v736 = vld [vmem:[%s277 + $0x278] sm:$0xff]
        %v737 = vld [vmem:[%s277 + $0x280] sm:$0xff]
        %v738 = vld [vmem:[%s277 + $0x288] sm:$0xff]
        %v739 = vld [vmem:[%s277 + $0x290] sm:$0xff]
        %v740 = vld [vmem:[%s277 + $0x298] sm:$0xff]
        %v741 = vld [vmem:[%s277 + $0x2a0] sm:$0xff]
        %v742 = vld [vmem:[%s277 + $0x2a8] sm:$0xff]
        %v743 = vld [vmem:[%s277 + $0x2b0] sm:$0xff]
        %v744 = vld [vmem:[%s277 + $0x2b8] sm:$0xff]
        %v745 = vld [vmem:[%s277 + $0x2c0] sm:$0xff]
        %v746 = vld [vmem:[%s277 + $0x2c8] sm:$0xff]
        %v747 = vld [vmem:[%s277 + $0x2d0] sm:$0xff]
        %v748 = vld [vmem:[%s277 + $0x2d8] sm:$0xff]
        %v749 = vld [vmem:[%s277 + $0x2e0] sm:$0xff]
        %v750 = vld [vmem:[%s277 + $0x2e8] sm:$0xff]
        %v751 = vld [vmem:[%s277 + $0x2f0] sm:$0xff]
        %v752 = vld [vmem:[%s277 + $0x2f8] sm:$0xff]
        %v753 = vld [vmem:[%s277 + $0x300] sm:$0xff]
        %v754 = vld [vmem:[%s277 + $0x308] sm:$0xff]
        %v755 = vld [vmem:[%s277 + $0x310] sm:$0xff]
        %v756 = vld [vmem:[%s277 + $0x318] sm:$0xff]
        %v757 = vld [vmem:[%s277 + $0x320] sm:$0xff]
        %v758 = vld [vmem:[%s277 + $0x328] sm:$0xff]
        %v759 = vld [vmem:[%s277 + $0x330] sm:$0xff]
        %v760 = vld [vmem:[%s277 + $0x338] sm:$0xff]
        %v761 = vld [vmem:[%s277 + $0x340] sm:$0xff]
        %v762 = vld [vmem:[%s277 + $0x348] sm:$0xff]
        %v763 = vld [vmem:[%s277 + $0x350] sm:$0xff]
        %v764 = vld [vmem:[%s277 + $0x358] sm:$0xff]
        %v765 = vld [vmem:[%s277 + $0x360] sm:$0xff]
        %v766 = vld [vmem:[%s277 + $0x368] sm:$0xff]
        %v767 = vld [vmem:[%s277 + $0x370] sm:$0xff]
        %v768 = vld [vmem:[%s277 + $0x378] sm:$0xff]
        %v769 = vld [vmem:[%s277 + $0x380] sm:$0xff]
        %v770 = vld [vmem:[%s277 + $0x388] sm:$0xff]
        %v771 = vld [vmem:[%s277 + $0x390] sm:$0xff]
        %v772 = vld [vmem:[%s277 + $0x398] sm:$0xff]
        %v773 = vld [vmem:[%s277 + $0x3a0] sm:$0xff]
        %v774 = vld [vmem:[%s277 + $0x3a8] sm:$0xff]
        %v775 = vld [vmem:[%s277 + $0x3b0] sm:$0xff]
        %v776 = vld [vmem:[%s277 + $0x3b8] sm:$0xff]
        %v777 = vld [vmem:[%s277 + $0x3c0] sm:$0xff]
        %v778 = vld [vmem:[%s277 + $0x3c8] sm:$0xff]
        %v779 = vld [vmem:[%s277 + $0x3d0] sm:$0xff]
        %v780 = vld [vmem:[%s277 + $0x3d8] sm:$0xff]
        %v781 = vld [vmem:[%s277 + $0x3e0] sm:$0xff]
        %v782 = vld [vmem:[%s277 + $0x3e8] sm:$0xff]
        %v783 = vld [vmem:[%s277 + $0x3f0] sm:$0xff]
        %v784 = vld [vmem:[%s277 + $0x3f8] sm:$0xff]
        %v785 = vld [vmem:[%s277 + $0x400] sm:$0xff]
        %v786 = vld [vmem:[%s277 + $0x408] sm:$0xff]
        %v787 = vld [vmem:[%s277 + $0x410] sm:$0xff]
        %v788 = vld [vmem:[%s277 + $0x418] sm:$0xff]
        %v789 = vld [vmem:[%s277 + $0x420] sm:$0xff]
        %v790 = vld [vmem:[%s277 + $0x428] sm:$0xff]
        %v791 = vld [vmem:[%s277 + $0x430] sm:$0xff]
        %v792 = vld [vmem:[%s277 + $0x438] sm:$0xff]
        %v793 = vld [vmem:[%s277 + $0x440] sm:$0xff]
        %v794 = vld [vmem:[%s277 + $0x448] sm:$0xff]
        %v795 = vld [vmem:[%s277 + $0x450] sm:$0xff]
        %v796 = vld [vmem:[%s277 + $0x458] sm:$0xff]
        %v797 = vld [vmem:[%s277 + $0x460] sm:$0xff]
        %v798 = vld [vmem:[%s277 + $0x468] sm:$0xff]
        %v799 = vld [vmem:[%s277 + $0x470] sm:$0xff]
        %v800 = vld [vmem:[%s277 + $0x478] sm:$0xff]
        %v801 = vld [vmem:[%s277 + $0x480] sm:$0xff]
        %v802 = vld [vmem:[%s277 + $0x488] sm:$0xff]
        %v803 = vld [vmem:[%s277 + $0x490] sm:$0xff]
        %v804 = vld [vmem:[%s277 + $0x498] sm:$0xff]
        %v805 = vld [vmem:[%s277 + $0x4a0] sm:$0xff]
        %v806 = vld [vmem:[%s277 + $0x4a8] sm:$0xff]
        %v807 = vld [vmem:[%s277 + $0x4b0] sm:$0xff]
        %v808 = vld [vmem:[%s277 + $0x4b8] sm:$0xff]
        %v809 = vld [vmem:[%s277 + $0x4c0] sm:$0xff]
        %v810 = vld [vmem:[%s277 + $0x4c8] sm:$0xff]
        %v811 = vld [vmem:[%s277 + $0x4d0] sm:$0xff]
        %v812 = vld [vmem:[%s277 + $0x4d8] sm:$0xff]
        %v813 = vld [vmem:[%s277 + $0x4e0] sm:$0xff]
        %v814 = vld [vmem:[%s277 + $0x4e8] sm:$0xff]
        %v815 = vld [vmem:[%s277 + $0x4f0] sm:$0xff]
        %v816 = vld [vmem:[%s277 + $0x4f8] sm:$0xff]
        %v817 = vld [vmem:[%s277 + $0x500] sm:$0xff]
        %v818 = vld [vmem:[%s277 + $0x508] sm:$0xff]
        %v819 = vld [vmem:[%s277 + $0x510] sm:$0xff]
        %v820 = vld [vmem:[%s277 + $0x518] sm:$0xff]
        %v821 = vld [vmem:[%s277 + $0x520] sm:$0xff]
        %v822 = vld [vmem:[%s277 + $0x528] sm:$0xff]
        %v823 = vld [vmem:[%s277 + $0x530] sm:$0xff]
        %v824 = vld [vmem:[%s277 + $0x538] sm:$0xff]
        %v825 = vld [vmem:[%s277 + $0x540] sm:$0xff]
        %v826 = vld [vmem:[%s277 + $0x548] sm:$0xff]
        %v827 = vld [vmem:[%s277 + $0x550] sm:$0xff]
        %v828 = vld [vmem:[%s277 + $0x558] sm:$0xff]
        %v829 = vld [vmem:[%s277 + $0x560] sm:$0xff]
        %v830 = vld [vmem:[%s277 + $0x568] sm:$0xff]
        %v831 = vld [vmem:[%s277 + $0x570] sm:$0xff]
        %v832 = vld [vmem:[%s277 + $0x578] sm:$0xff]
        %v833 = vld [vmem:[%s277 + $0x580] sm:$0xff]
        %v834 = vld [vmem:[%s277 + $0x588] sm:$0xff]
        %v835 = vld [vmem:[%s277 + $0x590] sm:$0xff]
        %v836 = vld [vmem:[%s277 + $0x598] sm:$0xff]
        %v837 = vld [vmem:[%s277 + $0x5a0] sm:$0xff]
        %v838 = vld [vmem:[%s277 + $0x5a8] sm:$0xff]
        %v839 = vld [vmem:[%s277 + $0x5b0] sm:$0xff]
        %v840 = vld [vmem:[%s277 + $0x5b8] sm:$0xff]
        %v841 = vld [vmem:[%s277 + $0x5c0] sm:$0xff]
        %v842 = vld [vmem:[%s277 + $0x5c8] sm:$0xff]
        %v843 = vld [vmem:[%s277 + $0x5d0] sm:$0xff]
        %v844 = vld [vmem:[%s277 + $0x5d8] sm:$0xff]
        %v845 = vld [vmem:[%s277 + $0x5e0] sm:$0xff]
        %v846 = vld [vmem:[%s277 + $0x5e8] sm:$0xff]
        %v847 = vld [vmem:[%s277 + $0x5f0] sm:$0xff]
        %v848 = vld [vmem:[%s277 + $0x5f8] sm:$0xff]
        %v849 = vld [vmem:[%s277 + $0x600] sm:$0xff]
        %v850 = vld [vmem:[%s277 + $0x608] sm:$0xff]
        %v851 = vld [vmem:[%s277 + $0x610] sm:$0xff]
        %v852 = vld [vmem:[%s277 + $0x618] sm:$0xff]
        %v853 = vld [vmem:[%s277 + $0x620] sm:$0xff]
        %v854 = vld [vmem:[%s277 + $0x628] sm:$0xff]
        %v855 = vld [vmem:[%s277 + $0x630] sm:$0xff]
        %v856 = vld [vmem:[%s277 + $0x638] sm:$0xff]
        %v857 = vld [vmem:[%s277 + $0x640] sm:$0xff]
        %v858 = vld [vmem:[%s277 + $0x648] sm:$0xff]
        %v859 = vld [vmem:[%s277 + $0x650] sm:$0xff]
        %v860 = vld [vmem:[%s277 + $0x658] sm:$0xff]
        %v861 = vld [vmem:[%s277 + $0x660] sm:$0xff]
        %v862 = vld [vmem:[%s277 + $0x668] sm:$0xff]
        %v863 = vld [vmem:[%s277 + $0x670] sm:$0xff]
        %v864 = vld [vmem:[%s277 + $0x678] sm:$0xff]
        %v865 = vld [vmem:[%s277 + $0x680] sm:$0xff]
        %v866 = vld [vmem:[%s277 + $0x688] sm:$0xff]
        %v867 = vld [vmem:[%s277 + $0x690] sm:$0xff]
        %v868 = vld [vmem:[%s277 + $0x698] sm:$0xff]
        %v869 = vld [vmem:[%s277 + $0x6a0] sm:$0xff]
        %v870 = vld [vmem:[%s277 + $0x6a8] sm:$0xff]
        %v871 = vld [vmem:[%s277 + $0x6b0] sm:$0xff]
        %v872 = vld [vmem:[%s277 + $0x6b8] sm:$0xff]
        %v873 = vunpack.c.l.s8.bf16 %v657
        %v874 = vunpack.c.l.s8.bf16 %v658
        %v875 = vunpack.c.h.s8.bf16 %v657
        %v876 = vunpack.c.h.s8.bf16 %v658
        %v877 = vunpack.c.l.s8.bf16 %v659
        %v878 = vunpack.c.l.s8.bf16 %v660
        %v879 = vunpack.c.h.s8.bf16 %v659
        %v880 = vunpack.c.h.s8.bf16 %v660
        %v881 = vunpack.c.l.s8.bf16 %v661
        %v882 = vunpack.c.l.s8.bf16 %v662
        %v883 = vunpack.c.h.s8.bf16 %v661
        %v884 = vunpack.c.h.s8.bf16 %v662
        %v885 = vunpack.c.l.s8.bf16 %v663
        %v886 = vunpack.c.l.s8.bf16 %v664
        %v887 = vunpack.c.h.s8.bf16 %v663
        %v888 = vunpack.c.h.s8.bf16 %v664
        %v889 = vunpack.c.l.s8.bf16 %v665
        %v890 = vunpack.c.l.s8.bf16 %v666
        %v891 = vunpack.c.h.s8.bf16 %v665
        %v892 = vunpack.c.h.s8.bf16 %v666
        %v893 = vunpack.c.l.s8.bf16 %v667
        %v894 = vunpack.c.l.s8.bf16 %v668
        %v895 = vunpack.c.h.s8.bf16 %v667
        %v896 = vunpack.c.h.s8.bf16 %v668
        %v897 = vunpack.c.l.s8.bf16 %v669
        %v898 = vunpack.c.l.s8.bf16 %v670
        %v899 = vunpack.c.h.s8.bf16 %v669
        %v900 = vunpack.c.h.s8.bf16 %v670
        %v901 = vunpack.c.l.s8.bf16 %v671
        %v902 = vunpack.c.l.s8.bf16 %v672
        %v903 = vunpack.c.h.s8.bf16 %v671
        %v904 = vunpack.c.h.s8.bf16 %v672
        %v905 = vunpack.c.l.s8.bf16 %v673
        %v906 = vunpack.c.l.s8.bf16 %v674
        %v907 = vunpack.c.h.s8.bf16 %v673
        %v908 = vunpack.c.h.s8.bf16 %v674
        %v909 = vunpack.c.l.s8.bf16 %v675
        %v910 = vunpack.c.l.s8.bf16 %v676
        %v911 = vunpack.c.h.s8.bf16 %v675
        %v912 = vunpack.c.h.s8.bf16 %v676
        %v913 = vunpack.c.l.s8.bf16 %v677
        %v914 = vunpack.c.l.s8.bf16 %v678
        %v915 = vunpack.c.h.s8.bf16 %v677
        %v916 = vunpack.c.h.s8.bf16 %v678
        %v917 = vunpack.c.l.s8.bf16 %v679
        %v918 = vunpack.c.l.s8.bf16 %v680
        %v919 = vunpack.c.h.s8.bf16 %v679
        %v920 = vunpack.c.h.s8.bf16 %v680
        %v921 = vunpack.c.l.s8.bf16 %v681
        %v922 = vunpack.c.l.s8.bf16 %v682
        %v923 = vunpack.c.h.s8.bf16 %v681
        %v924 = vunpack.c.h.s8.bf16 %v682
        %v925 = vunpack.c.l.s8.bf16 %v683
        %v926 = vunpack.c.l.s8.bf16 %v684
        %v927 = vunpack.c.h.s8.bf16 %v683
        %v928 = vunpack.c.h.s8.bf16 %v684
        %v929 = vunpack.c.l.s8.bf16 %v685
        %v930 = vunpack.c.l.s8.bf16 %v686
        %v931 = vunpack.c.h.s8.bf16 %v685
        %v932 = vunpack.c.h.s8.bf16 %v686
        %v933 = vunpack.c.l.s8.bf16 %v687
        %v934 = vunpack.c.l.s8.bf16 %v688
        %v935 = vunpack.c.h.s8.bf16 %v687
        %v936 = vunpack.c.h.s8.bf16 %v688
        %v937 = vunpack.c.l.s8.bf16 %v689
        %v938 = vunpack.c.l.s8.bf16 %v690
        %v939 = vunpack.c.h.s8.bf16 %v689
        %v940 = vunpack.c.h.s8.bf16 %v690
        %v941 = vunpack.c.l.s8.bf16 %v691
        %v942 = vunpack.c.l.s8.bf16 %v692
        %v943 = vunpack.c.h.s8.bf16 %v691
        %v944 = vunpack.c.h.s8.bf16 %v692
        %v945 = vunpack.c.l.s8.bf16 %v693
        %v946 = vunpack.c.l.s8.bf16 %v694
        %v947 = vunpack.c.h.s8.bf16 %v693
        %v948 = vunpack.c.h.s8.bf16 %v694
        %v949 = vunpack.c.l.s8.bf16 %v695
        %v950 = vunpack.c.l.s8.bf16 %v696
        %v951 = vunpack.c.h.s8.bf16 %v695
        %v952 = vunpack.c.h.s8.bf16 %v696
        %v953 = vunpack.c.l.s8.bf16 %v697
        %v954 = vunpack.c.l.s8.bf16 %v698
        %v955 = vunpack.c.h.s8.bf16 %v697
        %v956 = vunpack.c.h.s8.bf16 %v698
        %v957 = vunpack.c.l.s8.bf16 %v699
        %v958 = vunpack.c.l.s8.bf16 %v700
        %v959 = vunpack.c.h.s8.bf16 %v699
        %v960 = vunpack.c.h.s8.bf16 %v700
        %v961 = vunpack.c.l.s8.bf16 %v701
        %v962 = vunpack.c.l.s8.bf16 %v702
        %v963 = vunpack.c.h.s8.bf16 %v701
        %v964 = vunpack.c.h.s8.bf16 %v702
        %v965 = vunpack.c.l.s8.bf16 %v703
        %v966 = vunpack.c.l.s8.bf16 %v704
        %v967 = vunpack.c.h.s8.bf16 %v703
        %v968 = vunpack.c.h.s8.bf16 %v704
        %v969 = vunpack.c.l.s8.bf16 %v705
        %v970 = vunpack.c.l.s8.bf16 %v706
        %v971 = vunpack.c.h.s8.bf16 %v705
        %v972 = vunpack.c.h.s8.bf16 %v706
        %v973 = vunpack.c.l.s8.bf16 %v707
        %v974 = vunpack.c.l.s8.bf16 %v708
        %v975 = vunpack.c.h.s8.bf16 %v707
        %v976 = vunpack.c.h.s8.bf16 %v708
        %v977 = vunpack.c.l.s8.bf16 %v709
        %v978 = vunpack.c.l.s8.bf16 %v710
        %v979 = vunpack.c.h.s8.bf16 %v709
        %v980 = vunpack.c.h.s8.bf16 %v710
        %v981 = vunpack.c.l.s8.bf16 %v711
        %v982 = vunpack.c.l.s8.bf16 %v712
        %v983 = vunpack.c.h.s8.bf16 %v711
        %v984 = vunpack.c.h.s8.bf16 %v712
        %v985 = vunpack.c.l.s8.bf16 %v713
        %v986 = vunpack.c.l.s8.bf16 %v714
        %v987 = vunpack.c.h.s8.bf16 %v713
        %v988 = vunpack.c.h.s8.bf16 %v714
        %v989 = vunpack.c.l.s8.bf16 %v715
        %v990 = vunpack.c.l.s8.bf16 %v716
        %v991 = vunpack.c.h.s8.bf16 %v715
        %v992 = vunpack.c.h.s8.bf16 %v716
        %v993 = vunpack.c.l.s8.bf16 %v717
        %v994 = vunpack.c.l.s8.bf16 %v718
        %v995 = vunpack.c.h.s8.bf16 %v717
        %v996 = vunpack.c.h.s8.bf16 %v718
        %v997 = vunpack.c.l.s8.bf16 %v719
        %v998 = vunpack.c.l.s8.bf16 %v720
        %v999 = vunpack.c.h.s8.bf16 %v719
        %v1000 = vunpack.c.h.s8.bf16 %v720
        %v1001 = vunpack.c.l.s8.bf16 %v721
        %v1002 = vunpack.c.l.s8.bf16 %v722
        %v1003 = vunpack.c.h.s8.bf16 %v721
        %v1004 = vunpack.c.h.s8.bf16 %v722
        %v1005 = vunpack.c.l.s8.bf16 %v723
        %v1006 = vunpack.c.l.s8.bf16 %v724
        %v1007 = vunpack.c.h.s8.bf16 %v723
        %v1008 = vunpack.c.h.s8.bf16 %v724
        %v1009 = vunpack.c.l.s8.bf16 %v725
        %v1010 = vunpack.c.l.s8.bf16 %v726
        %v1011 = vunpack.c.h.s8.bf16 %v725
        %v1012 = vunpack.c.h.s8.bf16 %v726
        %v1013 = vunpack.c.l.s8.bf16 %v727
        %v1014 = vunpack.c.l.s8.bf16 %v728
        %v1015 = vunpack.c.h.s8.bf16 %v727
        %v1016 = vunpack.c.h.s8.bf16 %v728
        %v1017 = vunpack.c.l.s8.bf16 %v729
        %v1018 = vunpack.c.l.s8.bf16 %v730
        %v1019 = vunpack.c.h.s8.bf16 %v729
        %v1020 = vunpack.c.h.s8.bf16 %v730
        %v1021 = vunpack.c.l.s8.bf16 %v731
        %v1022 = vunpack.c.l.s8.bf16 %v732
        %v1023 = vunpack.c.h.s8.bf16 %v731
        %v1024 = vunpack.c.h.s8.bf16 %v732
        %v1025 = vunpack.c.l.s8.bf16 %v733
        %v1026 = vunpack.c.l.s8.bf16 %v734
        %v1027 = vunpack.c.h.s8.bf16 %v733
        %v1028 = vunpack.c.h.s8.bf16 %v734
        %v1029 = vunpack.c.l.s8.bf16 %v735
        %v1030 = vunpack.c.l.s8.bf16 %v736
        %v1031 = vunpack.c.h.s8.bf16 %v735
        %v1032 = vunpack.c.h.s8.bf16 %v736
        %v1033 = vunpack.c.l.s8.bf16 %v737
        %v1034 = vunpack.c.l.s8.bf16 %v738
        %v1035 = vunpack.c.h.s8.bf16 %v737
        %v1036 = vunpack.c.h.s8.bf16 %v738
        %v1037 = vunpack.c.l.s8.bf16 %v739
        %v1038 = vunpack.c.l.s8.bf16 %v740
        %v1039 = vunpack.c.h.s8.bf16 %v739
        %v1040 = vunpack.c.h.s8.bf16 %v740
        %v1041 = vunpack.c.l.s8.bf16 %v741
        %v1042 = vunpack.c.l.s8.bf16 %v742
        %v1043 = vunpack.c.h.s8.bf16 %v741
        %v1044 = vunpack.c.h.s8.bf16 %v742
        %v1045 = vunpack.c.l.s8.bf16 %v743
        %v1046 = vunpack.c.l.s8.bf16 %v744
        %v1047 = vunpack.c.h.s8.bf16 %v743
        %v1048 = vunpack.c.h.s8.bf16 %v744
        %v1049 = vunpack.c.l.s8.bf16 %v745
        %v1050 = vunpack.c.l.s8.bf16 %v746
        %v1051 = vunpack.c.h.s8.bf16 %v745
        %v1052 = vunpack.c.h.s8.bf16 %v746
        %v1053 = vunpack.c.l.s8.bf16 %v747
        %v1054 = vunpack.c.l.s8.bf16 %v748
        %v1055 = vunpack.c.h.s8.bf16 %v747
        %v1056 = vunpack.c.h.s8.bf16 %v748
        %v1057 = vunpack.c.l.s8.bf16 %v749
        %v1058 = vunpack.c.l.s8.bf16 %v750
        %v1059 = vunpack.c.h.s8.bf16 %v749
        %v1060 = vunpack.c.h.s8.bf16 %v750
        %v1061 = vunpack.c.l.s8.bf16 %v751
        %v1062 = vunpack.c.l.s8.bf16 %v752
        %v1063 = vunpack.c.h.s8.bf16 %v751
        %v1064 = vunpack.c.h.s8.bf16 %v752
        %v1065 = vunpack.c.l.s8.bf16 %v753
        %v1066 = vunpack.c.l.s8.bf16 %v754
        %v1067 = vunpack.c.h.s8.bf16 %v753
        %v1068 = vunpack.c.h.s8.bf16 %v754
        %v1069 = vunpack.c.l.s8.bf16 %v755
        %v1070 = vunpack.c.l.s8.bf16 %v756
        %v1071 = vunpack.c.h.s8.bf16 %v755
        %v1072 = vunpack.c.h.s8.bf16 %v756
        %v1073 = vunpack.c.l.s8.bf16 %v757
        %v1074 = vunpack.c.l.s8.bf16 %v758
        %v1075 = vunpack.c.h.s8.bf16 %v757
        %v1076 = vunpack.c.h.s8.bf16 %v758
        %v1077 = vunpack.c.l.s8.bf16 %v759
        %v1078 = vunpack.c.l.s8.bf16 %v760
        %v1079 = vunpack.c.h.s8.bf16 %v759
        %v1080 = vunpack.c.h.s8.bf16 %v760
        %v1081 = vunpack.c.l.s8.bf16 %v761
        %v1082 = vunpack.c.l.s8.bf16 %v762
        %v1083 = vunpack.c.h.s8.bf16 %v761
        %v1084 = vunpack.c.h.s8.bf16 %v762
        %v1085 = vunpack.c.l.s8.bf16 %v763
        %v1086 = vunpack.c.l.s8.bf16 %v764
        %v1087 = vunpack.c.h.s8.bf16 %v763
        %v1088 = vunpack.c.h.s8.bf16 %v764
        %v1089 = vunpack.c.l.s8.bf16 %v765
        %v1090 = vunpack.c.l.s8.bf16 %v766
        %v1091 = vunpack.c.h.s8.bf16 %v765
        %v1092 = vunpack.c.h.s8.bf16 %v766
        %v1093 = vunpack.c.l.s8.bf16 %v767
        %v1094 = vunpack.c.l.s8.bf16 %v768
        %v1095 = vunpack.c.h.s8.bf16 %v767
        %v1096 = vunpack.c.h.s8.bf16 %v768
        %v1097 = vunpack.c.l.s8.bf16 %v769
        %v1098 = vunpack.c.l.s8.bf16 %v770
        %v1099 = vunpack.c.h.s8.bf16 %v769
        %v1100 = vunpack.c.h.s8.bf16 %v770
        %v1101 = vunpack.c.l.s8.bf16 %v771
        %v1102 = vunpack.c.l.s8.bf16 %v772
        %v1103 = vunpack.c.h.s8.bf16 %v771
        %v1104 = vunpack.c.h.s8.bf16 %v772
        %v1105 = vunpack.c.l.s8.bf16 %v773
        %v1106 = vunpack.c.l.s8.bf16 %v774
        %v1107 = vunpack.c.h.s8.bf16 %v773
        %v1108 = vunpack.c.h.s8.bf16 %v774
        %v1109 = vunpack.c.l.s8.bf16 %v775
        %v1110 = vunpack.c.l.s8.bf16 %v776
        %v1111 = vunpack.c.h.s8.bf16 %v775
        %v1112 = vunpack.c.h.s8.bf16 %v776
        %v1113 = vunpack.c.l.s8.bf16 %v777
        %v1114 = vunpack.c.l.s8.bf16 %v778
        %v1115 = vunpack.c.h.s8.bf16 %v777
        %v1116 = vunpack.c.h.s8.bf16 %v778
        %v1117 = vunpack.c.l.s8.bf16 %v779
        %v1118 = vunpack.c.l.s8.bf16 %v780
        %v1119 = vunpack.c.h.s8.bf16 %v779
        %v1120 = vunpack.c.h.s8.bf16 %v780
        %v1121 = vunpack.c.l.s8.bf16 %v781
        %v1122 = vunpack.c.l.s8.bf16 %v782
        %v1123 = vunpack.c.h.s8.bf16 %v781
        %v1124 = vunpack.c.h.s8.bf16 %v782
        %v1125 = vunpack.c.l.s8.bf16 %v783
        %v1126 = vunpack.c.l.s8.bf16 %v784
        %v1127 = vunpack.c.h.s8.bf16 %v783
        %v1128 = vunpack.c.h.s8.bf16 %v784
        %v1129 = vunpack.c.l.s8.bf16 %v785
        %v1130 = vunpack.c.l.s8.bf16 %v786
        %v1131 = vunpack.c.h.s8.bf16 %v785
        %v1132 = vunpack.c.h.s8.bf16 %v786
        %v1133 = vunpack.c.l.s8.bf16 %v787
        %v1134 = vunpack.c.l.s8.bf16 %v788
        %v1135 = vunpack.c.h.s8.bf16 %v787
        %v1136 = vunpack.c.h.s8.bf16 %v788
        %v1137 = vunpack.c.l.s8.bf16 %v789
        %v1138 = vunpack.c.l.s8.bf16 %v790
        %v1139 = vunpack.c.h.s8.bf16 %v789
        %v1140 = vunpack.c.h.s8.bf16 %v790
        %v1141 = vunpack.c.l.s8.bf16 %v791
        %v1142 = vunpack.c.l.s8.bf16 %v792
        %v1143 = vunpack.c.h.s8.bf16 %v791
        %v1144 = vunpack.c.h.s8.bf16 %v792
        %v1145 = vunpack.c.l.s8.bf16 %v793
        %v1146 = vunpack.c.l.s8.bf16 %v794
        %v1147 = vunpack.c.h.s8.bf16 %v793
        %v1148 = vunpack.c.h.s8.bf16 %v794
        %v1149 = vunpack.c.l.s8.bf16 %v795
        %v1150 = vunpack.c.l.s8.bf16 %v796
        %v1151 = vunpack.c.h.s8.bf16 %v795
        %v1152 = vunpack.c.h.s8.bf16 %v796
        %v1153 = vunpack.c.l.s8.bf16 %v797
        %v1154 = vunpack.c.l.s8.bf16 %v798
        %v1155 = vunpack.c.h.s8.bf16 %v797
        %v1156 = vunpack.c.h.s8.bf16 %v798
        %v1157 = vunpack.c.l.s8.bf16 %v799
        %v1158 = vunpack.c.l.s8.bf16 %v800
        %v1159 = vunpack.c.h.s8.bf16 %v799
        %v1160 = vunpack.c.h.s8.bf16 %v800
        %v1161 = vunpack.c.l.s8.bf16 %v801
        %v1162 = vunpack.c.l.s8.bf16 %v802
        %v1163 = vunpack.c.h.s8.bf16 %v801
        %v1164 = vunpack.c.h.s8.bf16 %v802
        %v1165 = vunpack.c.l.s8.bf16 %v803
        %v1166 = vunpack.c.l.s8.bf16 %v804
        %v1167 = vunpack.c.h.s8.bf16 %v803
        %v1168 = vunpack.c.h.s8.bf16 %v804
        %v1169 = vunpack.c.l.s8.bf16 %v805
        %v1170 = vunpack.c.l.s8.bf16 %v806
        %v1171 = vunpack.c.h.s8.bf16 %v805
        %v1172 = vunpack.c.h.s8.bf16 %v806
        %v1173 = vunpack.c.l.s8.bf16 %v807
        %v1174 = vunpack.c.l.s8.bf16 %v808
        %v1175 = vunpack.c.h.s8.bf16 %v807
        %v1176 = vunpack.c.h.s8.bf16 %v808
        %v1177 = vunpack.c.l.s8.bf16 %v809
        %v1178 = vunpack.c.l.s8.bf16 %v810
        %v1179 = vunpack.c.h.s8.bf16 %v809
        %v1180 = vunpack.c.h.s8.bf16 %v810
        %v1181 = vunpack.c.l.s8.bf16 %v811
        %v1182 = vunpack.c.l.s8.bf16 %v812
        %v1183 = vunpack.c.h.s8.bf16 %v811
        %v1184 = vunpack.c.h.s8.bf16 %v812
        %v1185 = vunpack.c.l.s8.bf16 %v813
        %v1186 = vunpack.c.l.s8.bf16 %v814
        %v1187 = vunpack.c.h.s8.bf16 %v813
        %v1188 = vunpack.c.h.s8.bf16 %v814
        %v1189 = vunpack.c.l.s8.bf16 %v815
        %v1190 = vunpack.c.l.s8.bf16 %v816
        %v1191 = vunpack.c.h.s8.bf16 %v815
        %v1192 = vunpack.c.h.s8.bf16 %v816
        %v1193 = vunpack.c.l.s8.bf16 %v817
        %v1194 = vunpack.c.l.s8.bf16 %v818
        %v1195 = vunpack.c.h.s8.bf16 %v817
        %v1196 = vunpack.c.h.s8.bf16 %v818
        %v1197 = vunpack.c.l.s8.bf16 %v819
        %v1198 = vunpack.c.l.s8.bf16 %v820
        %v1199 = vunpack.c.h.s8.bf16 %v819
        %v1200 = vunpack.c.h.s8.bf16 %v820
        %v1201 = vunpack.c.l.s8.bf16 %v821
        %v1202 = vunpack.c.l.s8.bf16 %v822
        %v1203 = vunpack.c.h.s8.bf16 %v821
        %v1204 = vunpack.c.h.s8.bf16 %v822
        %v1205 = vunpack.c.l.s8.bf16 %v823
        %v1206 = vunpack.c.l.s8.bf16 %v824
        %v1207 = vunpack.c.h.s8.bf16 %v823
        %v1208 = vunpack.c.h.s8.bf16 %v824
        %v1209 = vunpack.c.l.s8.bf16 %v825
        %v1210 = vunpack.c.l.s8.bf16 %v826
        %v1211 = vunpack.c.h.s8.bf16 %v825
        %v1212 = vunpack.c.h.s8.bf16 %v826
        %v1213 = vunpack.c.l.s8.bf16 %v827
        %v1214 = vunpack.c.l.s8.bf16 %v828
        %v1215 = vunpack.c.h.s8.bf16 %v827
        %v1216 = vunpack.c.h.s8.bf16 %v828
        %v1217 = vunpack.c.l.s8.bf16 %v829
        %v1218 = vunpack.c.l.s8.bf16 %v830
        %v1219 = vunpack.c.h.s8.bf16 %v829
        %v1220 = vunpack.c.h.s8.bf16 %v830
        %v1221 = vunpack.c.l.s8.bf16 %v831
        %v1222 = vunpack.c.l.s8.bf16 %v832
        %v1223 = vunpack.c.h.s8.bf16 %v831
        %v1224 = vunpack.c.h.s8.bf16 %v832
        %v1225 = vunpack.c.l.s8.bf16 %v833
        %v1226 = vunpack.c.l.s8.bf16 %v834
        %v1227 = vunpack.c.h.s8.bf16 %v833
        %v1228 = vunpack.c.h.s8.bf16 %v834
        %v1229 = vunpack.c.l.s8.bf16 %v835
        %v1230 = vunpack.c.l.s8.bf16 %v836
        %v1231 = vunpack.c.h.s8.bf16 %v835
        %v1232 = vunpack.c.h.s8.bf16 %v836
        %v1233 = vunpack.c.l.s8.bf16 %v837
        %v1234 = vunpack.c.l.s8.bf16 %v838
        %v1235 = vunpack.c.h.s8.bf16 %v837
        %v1236 = vunpack.c.h.s8.bf16 %v838
        %v1237 = vunpack.c.l.s8.bf16 %v839
        %v1238 = vunpack.c.l.s8.bf16 %v840
        %v1239 = vunpack.c.h.s8.bf16 %v839
        %v1240 = vunpack.c.h.s8.bf16 %v840
        %v1241 = vunpack.c.l.s8.bf16 %v841
        %v1242 = vunpack.c.l.s8.bf16 %v842
        %v1243 = vunpack.c.h.s8.bf16 %v841
        %v1244 = vunpack.c.h.s8.bf16 %v842
        %v1245 = vunpack.c.l.s8.bf16 %v843
        %v1246 = vunpack.c.l.s8.bf16 %v844
        %v1247 = vunpack.c.h.s8.bf16 %v843
        %v1248 = vunpack.c.h.s8.bf16 %v844
        %v1249 = vunpack.c.l.s8.bf16 %v845
        %v1250 = vunpack.c.l.s8.bf16 %v846
        %v1251 = vunpack.c.h.s8.bf16 %v845
        %v1252 = vunpack.c.h.s8.bf16 %v846
        %v1253 = vunpack.c.l.s8.bf16 %v847
        %v1254 = vunpack.c.l.s8.bf16 %v848
        %v1255 = vunpack.c.h.s8.bf16 %v847
        %v1256 = vunpack.c.h.s8.bf16 %v848
        %v1257 = vunpack.c.l.s8.bf16 %v849
        %v1258 = vunpack.c.l.s8.bf16 %v850
        %v1259 = vunpack.c.h.s8.bf16 %v849
        %v1260 = vunpack.c.h.s8.bf16 %v850
        %v1261 = vunpack.c.l.s8.bf16 %v851
        %v1262 = vunpack.c.l.s8.bf16 %v852
        %v1263 = vunpack.c.h.s8.bf16 %v851
        %v1264 = vunpack.c.h.s8.bf16 %v852
        %v1265 = vunpack.c.l.s8.bf16 %v853
        %v1266 = vunpack.c.l.s8.bf16 %v854
        %v1267 = vunpack.c.h.s8.bf16 %v853
        %v1268 = vunpack.c.h.s8.bf16 %v854
        %v1269 = vunpack.c.l.s8.bf16 %v855
        %v1270 = vunpack.c.l.s8.bf16 %v856
        %v1271 = vunpack.c.h.s8.bf16 %v855
        %v1272 = vunpack.c.h.s8.bf16 %v856
        %v1273 = vunpack.c.l.s8.bf16 %v857
        %v1274 = vunpack.c.l.s8.bf16 %v858
        %v1275 = vunpack.c.h.s8.bf16 %v857
        %v1276 = vunpack.c.h.s8.bf16 %v858
        %v1277 = vunpack.c.l.s8.bf16 %v859
        %v1278 = vunpack.c.l.s8.bf16 %v860
        %v1279 = vunpack.c.h.s8.bf16 %v859
        %v1280 = vunpack.c.h.s8.bf16 %v860
        %v1281 = vunpack.c.l.s8.bf16 %v861
        %v1282 = vunpack.c.l.s8.bf16 %v862
        %v1283 = vunpack.c.h.s8.bf16 %v861
        %v1284 = vunpack.c.h.s8.bf16 %v862
        %v1285 = vunpack.c.l.s8.bf16 %v863
        %v1286 = vunpack.c.l.s8.bf16 %v864
        %v1287 = vunpack.c.h.s8.bf16 %v863
        %v1288 = vunpack.c.h.s8.bf16 %v864
        %v1289 = vunpack.c.l.s8.bf16 %v865
        %v1290 = vunpack.c.l.s8.bf16 %v866
        %v1291 = vunpack.c.h.s8.bf16 %v865
        %v1292 = vunpack.c.h.s8.bf16 %v866
        %v1293 = vunpack.c.l.s8.bf16 %v867
        %v1294 = vunpack.c.l.s8.bf16 %v868
        %v1295 = vunpack.c.h.s8.bf16 %v867
        %v1296 = vunpack.c.h.s8.bf16 %v868
        %v1297 = vunpack.c.l.s8.bf16 %v869
        %v1298 = vunpack.c.l.s8.bf16 %v870
        %v1299 = vunpack.c.h.s8.bf16 %v869
        %v1300 = vunpack.c.h.s8.bf16 %v870
        %v1301 = vunpack.c.l.s8.bf16 %v871
        %v1302 = vunpack.c.l.s8.bf16 %v872
        %v1303 = vunpack.c.h.s8.bf16 %v871
        %v1304 = vunpack.c.h.s8.bf16 %v872
        %v1529 = vunpack.c.l.b16 %v401
        %v1530 = vunpack.c.h.b16 %v401
        %v1531 = vunpack.c.l.b16 %v402
        %v1532 = vunpack.c.h.b16 %v402
        %v1533 = vunpack.c.l.b16 %v403
        %v1534 = vunpack.c.h.b16 %v403
        %v1535 = vunpack.c.l.b16 %v404
        %v1536 = vunpack.c.h.b16 %v404
        %v1537 = vunpack.c.l.b16 %v405
        %v1538 = vunpack.c.h.b16 %v405
        %v1539 = vunpack.c.l.b16 %v406
        %v1540 = vunpack.c.h.b16 %v406
        %v1541 = vunpack.c.l.b16 %v407
        %v1542 = vunpack.c.h.b16 %v407
        %v1543 = vunpack.c.l.b16 %v408
        %v1544 = vunpack.c.h.b16 %v408
        %v1545 = vunpack.c.l.b16 %v409
        %v1546 = vunpack.c.h.b16 %v409
        %v1547 = vunpack.c.l.b16 %v410
        %v1548 = vunpack.c.h.b16 %v410
        %v1549 = vunpack.c.l.b16 %v411
        %v1550 = vunpack.c.h.b16 %v411
        %v1551 = vunpack.c.l.b16 %v412
        %v1552 = vunpack.c.h.b16 %v412
        %v1553 = vunpack.c.l.b16 %v413
        %v1554 = vunpack.c.h.b16 %v413
        %v1555 = vunpack.c.l.b16 %v414
        %v1556 = vunpack.c.l.b16 %v415
        %v1557 = vunpack.c.h.b16 %v415
        %v1558 = vunpack.c.l.b16 %v416
        %v1559 = vunpack.c.h.b16 %v416
        %v1560 = vunpack.c.l.b16 %v417
        %v1561 = vunpack.c.h.b16 %v417
        %v1562 = vunpack.c.l.b16 %v418
        %v1563 = vunpack.c.h.b16 %v418
        %v1564 = vunpack.c.l.b16 %v419
        %v1565 = vunpack.c.h.b16 %v419
        %v1566 = vunpack.c.l.b16 %v420
        %v1567 = vunpack.c.h.b16 %v420
        %v1568 = vunpack.c.l.b16 %v421
        %v1569 = vunpack.c.h.b16 %v421
        %v1570 = vunpack.c.l.b16 %v422
        %v1571 = vunpack.c.h.b16 %v422
        %v1572 = vunpack.c.l.b16 %v423
        %v1573 = vunpack.c.h.b16 %v423
        %v1574 = vunpack.c.l.b16 %v424
        %v1575 = vunpack.c.h.b16 %v424
        %v1576 = vunpack.c.l.b16 %v425
        %v1577 = vunpack.c.h.b16 %v425
        %v1578 = vunpack.c.l.b16 %v426
        %v1579 = vunpack.c.h.b16 %v426
        %v1580 = vunpack.c.l.b16 %v427
        %v1581 = vunpack.c.h.b16 %v427
        %v1582 = vunpack.c.l.b16 %v428
        %v1583 = vunpack.c.l.b16 %v429
        %v1584 = vunpack.c.h.b16 %v429
        %v1585 = vunpack.c.l.b16 %v430
        %v1586 = vunpack.c.h.b16 %v430
        %v1587 = vunpack.c.l.b16 %v431
        %v1588 = vunpack.c.h.b16 %v431
        %v1589 = vunpack.c.l.b16 %v432
        %v1590 = vunpack.c.h.b16 %v432
        %v1591 = vunpack.c.l.b16 %v433
        %v1592 = vunpack.c.h.b16 %v433
        %v1593 = vunpack.c.l.b16 %v434
        %v1594 = vunpack.c.h.b16 %v434
        %v1595 = vunpack.c.l.b16 %v435
        %v1596 = vunpack.c.h.b16 %v435
        %v1597 = vunpack.c.l.b16 %v436
        %v1598 = vunpack.c.h.b16 %v436
        %v1599 = vunpack.c.l.b16 %v437
        %v1600 = vunpack.c.h.b16 %v437
        %v1601 = vunpack.c.l.b16 %v438
        %v1602 = vunpack.c.h.b16 %v438
        %v1603 = vunpack.c.l.b16 %v439
        %v1604 = vunpack.c.h.b16 %v439
        %v1605 = vunpack.c.l.b16 %v440
        %v1606 = vunpack.c.h.b16 %v440
        %v1607 = vunpack.c.l.b16 %v441
        %v1608 = vunpack.c.h.b16 %v441
        %v1609 = vunpack.c.l.b16 %v442
        %v1610 = vunpack.c.l.b16 %v443
        %v1611 = vunpack.c.h.b16 %v443
        %v1612 = vunpack.c.l.b16 %v444
        %v1613 = vunpack.c.h.b16 %v444
        %v1614 = vunpack.c.l.b16 %v445
        %v1615 = vunpack.c.h.b16 %v445
        %v1616 = vunpack.c.l.b16 %v446
        %v1617 = vunpack.c.h.b16 %v446
        %v1618 = vunpack.c.l.b16 %v447
        %v1619 = vunpack.c.h.b16 %v447
        %v1620 = vunpack.c.l.b16 %v448
        %v1621 = vunpack.c.h.b16 %v448
        %v1622 = vunpack.c.l.b16 %v449
        %v1623 = vunpack.c.h.b16 %v449
        %v1624 = vunpack.c.l.b16 %v450
        %v1625 = vunpack.c.h.b16 %v450
        %v1626 = vunpack.c.l.b16 %v451
        %v1627 = vunpack.c.h.b16 %v451
        %v1628 = vunpack.c.l.b16 %v452
        %v1629 = vunpack.c.h.b16 %v452
        %v1630 = vunpack.c.l.b16 %v453
        %v1631 = vunpack.c.h.b16 %v453
        %v1632 = vunpack.c.l.b16 %v454
        %v1633 = vunpack.c.h.b16 %v454
        %v1634 = vunpack.c.l.b16 %v455
        %v1635 = vunpack.c.h.b16 %v455
        %v1636 = vunpack.c.l.b16 %v456
        %v1637 = vunpack.c.l.b16 %v457
        %v1638 = vunpack.c.h.b16 %v457
        %v1639 = vunpack.c.l.b16 %v458
        %v1640 = vunpack.c.h.b16 %v458
        %v1641 = vunpack.c.l.b16 %v459
        %v1642 = vunpack.c.h.b16 %v459
        %v1643 = vunpack.c.l.b16 %v460
        %v1644 = vunpack.c.h.b16 %v460
        %v1645 = vunpack.c.l.b16 %v461
        %v1646 = vunpack.c.h.b16 %v461
        %v1647 = vunpack.c.l.b16 %v462
        %v1648 = vunpack.c.h.b16 %v462
        %v1649 = vunpack.c.l.b16 %v463
        %v1650 = vunpack.c.h.b16 %v463
        %v1651 = vunpack.c.l.b16 %v464
        %v1652 = vunpack.c.h.b16 %v464
        %v1653 = vunpack.c.l.b16 %v465
        %v1654 = vunpack.c.h.b16 %v465
        %v1655 = vunpack.c.l.b16 %v466
        %v1656 = vunpack.c.h.b16 %v466
        %v1657 = vunpack.c.l.b16 %v467
        %v1658 = vunpack.c.h.b16 %v467
        %v1659 = vunpack.c.l.b16 %v468
        %v1660 = vunpack.c.h.b16 %v468
        %v1661 = vunpack.c.l.b16 %v469
        %v1662 = vunpack.c.h.b16 %v469
        %v1663 = vunpack.c.l.b16 %v470
        %v1664 = vunpack.c.l.b16 %v471
        %v1665 = vunpack.c.h.b16 %v471
        %v1666 = vunpack.c.l.b16 %v472
        %v1667 = vunpack.c.h.b16 %v472
        %v1668 = vunpack.c.l.b16 %v473
        %v1669 = vunpack.c.h.b16 %v473
        %v1670 = vunpack.c.l.b16 %v474
        %v1671 = vunpack.c.h.b16 %v474
        %v1672 = vunpack.c.l.b16 %v475
        %v1673 = vunpack.c.h.b16 %v475
        %v1674 = vunpack.c.l.b16 %v476
        %v1675 = vunpack.c.h.b16 %v476
        %v1676 = vunpack.c.l.b16 %v477
        %v1677 = vunpack.c.h.b16 %v477
        %v1678 = vunpack.c.l.b16 %v478
        %v1679 = vunpack.c.h.b16 %v478
        %v1680 = vunpack.c.l.b16 %v479
        %v1681 = vunpack.c.h.b16 %v479
        %v1682 = vunpack.c.l.b16 %v480
        %v1683 = vunpack.c.h.b16 %v480
        %v1684 = vunpack.c.l.b16 %v481
        %v1685 = vunpack.c.h.b16 %v481
        %v1686 = vunpack.c.l.b16 %v482
        %v1687 = vunpack.c.h.b16 %v482
        %v1688 = vunpack.c.l.b16 %v483
        %v1689 = vunpack.c.h.b16 %v483
        %v1690 = vunpack.c.l.b16 %v484
        %v1691 = vunpack.c.l.b16 %v485
        %v1692 = vunpack.c.h.b16 %v485
        %v1693 = vunpack.c.l.b16 %v486
        %v1694 = vunpack.c.h.b16 %v486
        %v1695 = vunpack.c.l.b16 %v487
        %v1696 = vunpack.c.h.b16 %v487
        %v1697 = vunpack.c.l.b16 %v488
        %v1698 = vunpack.c.h.b16 %v488
        %v1699 = vunpack.c.l.b16 %v489
        %v1700 = vunpack.c.h.b16 %v489
        %v1701 = vunpack.c.l.b16 %v490
        %v1702 = vunpack.c.h.b16 %v490
        %v1703 = vunpack.c.l.b16 %v491
        %v1704 = vunpack.c.h.b16 %v491
        %v1705 = vunpack.c.l.b16 %v492
        %v1706 = vunpack.c.h.b16 %v492
        %v1707 = vunpack.c.l.b16 %v493
        %v1708 = vunpack.c.h.b16 %v493
        %v1709 = vunpack.c.l.b16 %v494
        %v1710 = vunpack.c.h.b16 %v494
        %v1711 = vunpack.c.l.b16 %v495
        %v1712 = vunpack.c.h.b16 %v495
        %v1713 = vunpack.c.l.b16 %v496
        %v1714 = vunpack.c.h.b16 %v496
        %v1715 = vunpack.c.l.b16 %v497
        %v1716 = vunpack.c.h.b16 %v497
        %v1717 = vunpack.c.l.b16 %v498
        %v1718 = vunpack.c.l.b16 %v499
        %v1719 = vunpack.c.h.b16 %v499
        %v1720 = vunpack.c.l.b16 %v500
        %v1721 = vunpack.c.h.b16 %v500
        %v1722 = vunpack.c.l.b16 %v501
        %v1723 = vunpack.c.h.b16 %v501
        %v1724 = vunpack.c.l.b16 %v502
        %v1725 = vunpack.c.h.b16 %v502
        %v1726 = vunpack.c.l.b16 %v503
        %v1727 = vunpack.c.h.b16 %v503
        %v1728 = vunpack.c.l.b16 %v504
        %v1729 = vunpack.c.h.b16 %v504
        %v1730 = vunpack.c.l.b16 %v505
        %v1731 = vunpack.c.h.b16 %v505
        %v1732 = vunpack.c.l.b16 %v506
        %v1733 = vunpack.c.h.b16 %v506
        %v1734 = vunpack.c.l.b16 %v507
        %v1735 = vunpack.c.h.b16 %v507
        %v1736 = vunpack.c.l.b16 %v508
        %v1737 = vunpack.c.h.b16 %v508
        %v1738 = vunpack.c.l.b16 %v509
        %v1739 = vunpack.c.h.b16 %v509
        %v1740 = vunpack.c.l.b16 %v510
        %v1741 = vunpack.c.h.b16 %v510
        %v1742 = vunpack.c.l.b16 %v511
        %v1743 = vunpack.c.h.b16 %v511
        %v1744 = vunpack.c.l.b16 %v512
        %v1745 = vunpack.c.l.b16 %v513
        %v1746 = vunpack.c.h.b16 %v513
        %v1747 = vunpack.c.l.b16 %v514
        %v1748 = vunpack.c.h.b16 %v514
        %v1749 = vunpack.c.l.b16 %v515
        %v1750 = vunpack.c.h.b16 %v515
        %v1751 = vunpack.c.l.b16 %v516
        %v1752 = vunpack.c.h.b16 %v516
        %v1753 = vunpack.c.l.b16 %v517
        %v1754 = vunpack.c.h.b16 %v517
        %v1755 = vunpack.c.l.b16 %v518
        %v1756 = vunpack.c.h.b16 %v518
        %v1757 = vunpack.c.l.b16 %v519
        %v1758 = vunpack.c.h.b16 %v519
        %v1759 = vunpack.c.l.b16 %v520
        %v1760 = vunpack.c.h.b16 %v520
        %v1761 = vunpack.c.l.b16 %v521
        %v1762 = vunpack.c.h.b16 %v521
        %v1763 = vunpack.c.l.b16 %v522
        %v1764 = vunpack.c.h.b16 %v522
        %v1765 = vunpack.c.l.b16 %v523
        %v1766 = vunpack.c.h.b16 %v523
        %v1767 = vunpack.c.l.b16 %v524
        %v1768 = vunpack.c.h.b16 %v524
        %v1769 = vunpack.c.l.b16 %v525
        %v1770 = vunpack.c.h.b16 %v525
        %v1771 = vunpack.c.l.b16 %v526
        %v1772 = vunpack.c.l.b16 %v527
        %v1773 = vunpack.c.h.b16 %v527
        %v1774 = vunpack.c.l.b16 %v528
        %v1775 = vunpack.c.h.b16 %v528
        %v1776 = vunpack.c.l.b16 %v529
        %v1777 = vunpack.c.h.b16 %v529
        %v1778 = vunpack.c.l.b16 %v530
        %v1779 = vunpack.c.h.b16 %v530
        %v1780 = vunpack.c.l.b16 %v531
        %v1781 = vunpack.c.h.b16 %v531
        %v1782 = vunpack.c.l.b16 %v532
        %v1783 = vunpack.c.h.b16 %v532
        %v1784 = vunpack.c.l.b16 %v533
        %v1785 = vunpack.c.h.b16 %v533
        %v1786 = vunpack.c.l.b16 %v534
        %v1787 = vunpack.c.h.b16 %v534
        %v1788 = vunpack.c.l.b16 %v535
        %v1789 = vunpack.c.h.b16 %v535
        %v1790 = vunpack.c.l.b16 %v536
        %v1791 = vunpack.c.h.b16 %v536
        %v1792 = vunpack.c.l.b16 %v537
        %v1793 = vunpack.c.h.b16 %v537
        %v1794 = vunpack.c.l.b16 %v538
        %v1795 = vunpack.c.h.b16 %v538
        %v1796 = vunpack.c.l.b16 %v539
        %v1797 = vunpack.c.h.b16 %v539
        %v1798 = vunpack.c.l.b16 %v540
        %v1799 = vunpack.c.l.b16 %v541
        %v1800 = vunpack.c.h.b16 %v541
        %v1801 = vunpack.c.l.b16 %v542
        %v1802 = vunpack.c.h.b16 %v542
        %v1803 = vunpack.c.l.b16 %v543
        %v1804 = vunpack.c.h.b16 %v543
        %v1805 = vunpack.c.l.b16 %v544
        %v1806 = vunpack.c.h.b16 %v544
        %v1807 = vunpack.c.l.b16 %v545
        %v1808 = vunpack.c.h.b16 %v545
        %v1809 = vunpack.c.l.b16 %v546
        %v1810 = vunpack.c.h.b16 %v546
        %v1811 = vunpack.c.l.b16 %v547
        %v1812 = vunpack.c.h.b16 %v547
        %v1813 = vunpack.c.l.b16 %v548
        %v1814 = vunpack.c.h.b16 %v548
        %v1815 = vunpack.c.l.b16 %v549
        %v1816 = vunpack.c.h.b16 %v549
        %v1817 = vunpack.c.l.b16 %v550
        %v1818 = vunpack.c.h.b16 %v550
        %v1819 = vunpack.c.l.b16 %v551
        %v1820 = vunpack.c.h.b16 %v551
        %v1821 = vunpack.c.l.b16 %v552
        %v1822 = vunpack.c.h.b16 %v552
        %v1823 = vunpack.c.l.b16 %v553
        %v1824 = vunpack.c.h.b16 %v553
        %v1825 = vunpack.c.l.b16 %v554
        %v1826 = vunpack.c.l.b16 %v555
        %v1827 = vunpack.c.h.b16 %v555
        %v1828 = vunpack.c.l.b16 %v556
        %v1829 = vunpack.c.h.b16 %v556
        %v1830 = vunpack.c.l.b16 %v557
        %v1831 = vunpack.c.h.b16 %v557
        %v1832 = vunpack.c.l.b16 %v558
        %v1833 = vunpack.c.h.b16 %v558
        %v1834 = vunpack.c.l.b16 %v559
        %v1835 = vunpack.c.h.b16 %v559
        %v1836 = vunpack.c.l.b16 %v560
        %v1837 = vunpack.c.h.b16 %v560
        %v1838 = vunpack.c.l.b16 %v561
        %v1839 = vunpack.c.h.b16 %v561
        %v1840 = vunpack.c.l.b16 %v562
        %v1841 = vunpack.c.h.b16 %v562
        %v1842 = vunpack.c.l.b16 %v563
        %v1843 = vunpack.c.h.b16 %v563
        %v1844 = vunpack.c.l.b16 %v564
        %v1845 = vunpack.c.h.b16 %v564
        %v1846 = vunpack.c.l.b16 %v565
        %v1847 = vunpack.c.h.b16 %v565
        %v1848 = vunpack.c.l.b16 %v566
        %v1849 = vunpack.c.h.b16 %v566
        %v1850 = vunpack.c.l.b16 %v567
        %v1851 = vunpack.c.h.b16 %v567
        %v1852 = vunpack.c.l.b16 %v568
        %v1853 = vunpack.c.l.b16 %v569
        %v1854 = vunpack.c.h.b16 %v569
        %v1855 = vunpack.c.l.b16 %v570
        %v1856 = vunpack.c.h.b16 %v570
        %v1857 = vunpack.c.l.b16 %v571
        %v1858 = vunpack.c.h.b16 %v571
        %v1859 = vunpack.c.l.b16 %v572
        %v1860 = vunpack.c.h.b16 %v572
        %v1861 = vunpack.c.l.b16 %v573
        %v1862 = vunpack.c.h.b16 %v573
        %v1863 = vunpack.c.l.b16 %v574
        %v1864 = vunpack.c.h.b16 %v574
        %v1865 = vunpack.c.l.b16 %v575
        %v1866 = vunpack.c.h.b16 %v575
        %v1867 = vunpack.c.l.b16 %v576
        %v1868 = vunpack.c.h.b16 %v576
        %v1869 = vunpack.c.l.b16 %v577
        %v1870 = vunpack.c.h.b16 %v577
        %v1871 = vunpack.c.l.b16 %v578
        %v1872 = vunpack.c.h.b16 %v578
        %v1873 = vunpack.c.l.b16 %v579
        %v1874 = vunpack.c.h.b16 %v579
        %v1875 = vunpack.c.l.b16 %v580
        %v1876 = vunpack.c.h.b16 %v580
        %v1877 = vunpack.c.l.b16 %v581
        %v1878 = vunpack.c.h.b16 %v581
        %v1879 = vunpack.c.l.b16 %v582
        %v1880 = vunpack.c.l.b16 %v583
        %v1881 = vunpack.c.h.b16 %v583
        %v1882 = vunpack.c.l.b16 %v584
        %v1883 = vunpack.c.h.b16 %v584
        %v1884 = vunpack.c.l.b16 %v585
        %v1885 = vunpack.c.h.b16 %v585
        %v1886 = vunpack.c.l.b16 %v586
        %v1887 = vunpack.c.h.b16 %v586
        %v1888 = vunpack.c.l.b16 %v587
        %v1889 = vunpack.c.h.b16 %v587
        %v1890 = vunpack.c.l.b16 %v588
        %v1891 = vunpack.c.h.b16 %v588
        %v1892 = vunpack.c.l.b16 %v589
        %v1893 = vunpack.c.h.b16 %v589
        %v1894 = vunpack.c.l.b16 %v590
        %v1895 = vunpack.c.h.b16 %v590
        %v1896 = vunpack.c.l.b16 %v591
        %v1897 = vunpack.c.h.b16 %v591
        %v1898 = vunpack.c.l.b16 %v592
        %v1899 = vunpack.c.h.b16 %v592
        %v1900 = vunpack.c.l.b16 %v593
        %v1901 = vunpack.c.h.b16 %v593
        %v1902 = vunpack.c.l.b16 %v594
        %v1903 = vunpack.c.h.b16 %v594
        %v1904 = vunpack.c.l.b16 %v595
        %v1905 = vunpack.c.h.b16 %v595
        %v1906 = vunpack.c.l.b16 %v596
        %v1907 = vunpack.c.l.b16 %v597
        %v1908 = vunpack.c.h.b16 %v597
        %v1909 = vunpack.c.l.b16 %v598
        %v1910 = vunpack.c.h.b16 %v598
        %v1911 = vunpack.c.l.b16 %v599
        %v1912 = vunpack.c.h.b16 %v599
        %v1913 = vunpack.c.l.b16 %v600
        %v1914 = vunpack.c.h.b16 %v600
        %v1915 = vunpack.c.l.b16 %v601
        %v1916 = vunpack.c.h.b16 %v601
        %v1917 = vunpack.c.l.b16 %v602
        %v1918 = vunpack.c.h.b16 %v602
        %v1919 = vunpack.c.l.b16 %v603
        %v1920 = vunpack.c.h.b16 %v603
        %v1921 = vunpack.c.l.b16 %v604
        %v1922 = vunpack.c.h.b16 %v604
        %v1923 = vunpack.c.l.b16 %v605
        %v1924 = vunpack.c.h.b16 %v605
        %v1925 = vunpack.c.l.b16 %v606
        %v1926 = vunpack.c.h.b16 %v606
        %v1927 = vunpack.c.l.b16 %v607
        %v1928 = vunpack.c.h.b16 %v607
        %v1929 = vunpack.c.l.b16 %v608
        %v1930 = vunpack.c.h.b16 %v608
        %v1931 = vunpack.c.l.b16 %v609
        %v1932 = vunpack.c.h.b16 %v609
        %v1933 = vunpack.c.l.b16 %v610
        %v1934 = vunpack.c.l.b16 %v611
        %v1935 = vunpack.c.h.b16 %v611
        %v1936 = vunpack.c.l.b16 %v612
        %v1937 = vunpack.c.h.b16 %v612
        %v1938 = vunpack.c.l.b16 %v613
        %v1939 = vunpack.c.h.b16 %v613
        %v1940 = vunpack.c.l.b16 %v614
        %v1941 = vunpack.c.h.b16 %v614
        %v1942 = vunpack.c.l.b16 %v615
        %v1943 = vunpack.c.h.b16 %v615
        %v1944 = vunpack.c.l.b16 %v616
        %v1945 = vunpack.c.h.b16 %v616
        %v1946 = vunpack.c.l.b16 %v617
        %v1947 = vunpack.c.h.b16 %v617
        %v1948 = vunpack.c.l.b16 %v618
        %v1949 = vunpack.c.h.b16 %v618
        %v1950 = vunpack.c.l.b16 %v619
        %v1951 = vunpack.c.h.b16 %v619
        %v1952 = vunpack.c.l.b16 %v620
        %v1953 = vunpack.c.h.b16 %v620
        %v1954 = vunpack.c.l.b16 %v621
        %v1955 = vunpack.c.h.b16 %v621
        %v1956 = vunpack.c.l.b16 %v622
        %v1957 = vunpack.c.h.b16 %v622
        %v1958 = vunpack.c.l.b16 %v623
        %v1959 = vunpack.c.h.b16 %v623
        %v1960 = vunpack.c.l.b16 %v624
        %v1961 = vpack.c.b16 %v1556, %v1529
        %v1962 = vpack.c.b16 %v1557, %v1530
        %v1963 = vpack.c.b16 %v1558, %v1531
        %v1964 = vpack.c.b16 %v1559, %v1532
        %v1965 = vpack.c.b16 %v1560, %v1533
        %v1966 = vpack.c.b16 %v1561, %v1534
        %v1967 = vpack.c.b16 %v1562, %v1535
        %v1968 = vpack.c.b16 %v1563, %v1536
        %v1969 = vpack.c.b16 %v1564, %v1537
        %v1970 = vpack.c.b16 %v1565, %v1538
        %v1971 = vpack.c.b16 %v1566, %v1539
        %v1972 = vpack.c.b16 %v1567, %v1540
        %v1973 = vpack.c.b16 %v1568, %v1541
        %v1974 = vpack.c.b16 %v1569, %v1542
        %v1975 = vpack.c.b16 %v1570, %v1543
        %v1976 = vpack.c.b16 %v1571, %v1544
        %v1977 = vpack.c.b16 %v1572, %v1545
        %v1978 = vpack.c.b16 %v1573, %v1546
        %v1979 = vpack.c.b16 %v1574, %v1547
        %v1980 = vpack.c.b16 %v1575, %v1548
        %v1981 = vpack.c.b16 %v1576, %v1549
        %v1982 = vpack.c.b16 %v1577, %v1550
        %v1983 = vpack.c.b16 %v1578, %v1551
        %v1984 = vpack.c.b16 %v1579, %v1552
        %v1985 = vpack.c.b16 %v1580, %v1553
        %v1986 = vpack.c.b16 %v1581, %v1554
        %v1987 = vpack.c.b16 %v1582, %v1555
        %v1988 = vpack.c.b16 %v1610, %v1583
        %v1989 = vpack.c.b16 %v1611, %v1584
        %v1990 = vpack.c.b16 %v1612, %v1585
        %v1991 = vpack.c.b16 %v1613, %v1586
        %v1992 = vpack.c.b16 %v1614, %v1587
        %v1993 = vpack.c.b16 %v1615, %v1588
        %v1994 = vpack.c.b16 %v1616, %v1589
        %v1995 = vpack.c.b16 %v1617, %v1590
        %v1996 = vpack.c.b16 %v1618, %v1591
        %v1997 = vpack.c.b16 %v1619, %v1592
        %v1998 = vpack.c.b16 %v1620, %v1593
        %v1999 = vpack.c.b16 %v1621, %v1594
        %v2000 = vpack.c.b16 %v1622, %v1595
        %v2001 = vpack.c.b16 %v1623, %v1596
        %v2002 = vpack.c.b16 %v1624, %v1597
        %v2003 = vpack.c.b16 %v1625, %v1598
        %v2004 = vpack.c.b16 %v1626, %v1599
        %v2005 = vpack.c.b16 %v1627, %v1600
        %v2006 = vpack.c.b16 %v1628, %v1601
        %v2007 = vpack.c.b16 %v1629, %v1602
        %v2008 = vpack.c.b16 %v1630, %v1603
        %v2009 = vpack.c.b16 %v1631, %v1604
        %v2010 = vpack.c.b16 %v1632, %v1605
        %v2011 = vpack.c.b16 %v1633, %v1606
        %v2012 = vpack.c.b16 %v1634, %v1607
        %v2013 = vpack.c.b16 %v1635, %v1608
        %v2014 = vpack.c.b16 %v1636, %v1609
        %v2015 = vpack.c.b16 %v1664, %v1637
        %v2016 = vpack.c.b16 %v1665, %v1638
        %v2017 = vpack.c.b16 %v1666, %v1639
        %v2018 = vpack.c.b16 %v1667, %v1640
        %v2019 = vpack.c.b16 %v1668, %v1641
        %v2020 = vpack.c.b16 %v1669, %v1642
        %v2021 = vpack.c.b16 %v1670, %v1643
        %v2022 = vpack.c.b16 %v1671, %v1644
        %v2023 = vpack.c.b16 %v1672, %v1645
        %v2024 = vpack.c.b16 %v1673, %v1646
        %v2025 = vpack.c.b16 %v1674, %v1647
        %v2026 = vpack.c.b16 %v1675, %v1648
        %v2027 = vpack.c.b16 %v1676, %v1649
        %v2028 = vpack.c.b16 %v1677, %v1650
        %v2029 = vpack.c.b16 %v1678, %v1651
        %v2030 = vpack.c.b16 %v1679, %v1652
        %v2031 = vpack.c.b16 %v1680, %v1653
        %v2032 = vpack.c.b16 %v1681, %v1654
        %v2033 = vpack.c.b16 %v1682, %v1655
        %v2034 = vpack.c.b16 %v1683, %v1656
        %v2035 = vpack.c.b16 %v1684, %v1657
        %v2036 = vpack.c.b16 %v1685, %v1658
        %v2037 = vpack.c.b16 %v1686, %v1659
        %v2038 = vpack.c.b16 %v1687, %v1660
        %v2039 = vpack.c.b16 %v1688, %v1661
        %v2040 = vpack.c.b16 %v1689, %v1662
        %v2041 = vpack.c.b16 %v1690, %v1663
        %v2042 = vpack.c.b16 %v1718, %v1691
        %v2043 = vpack.c.b16 %v1719, %v1692
        %v2044 = vpack.c.b16 %v1720, %v1693
        %v2045 = vpack.c.b16 %v1721, %v1694
        %v2046 = vpack.c.b16 %v1722, %v1695
        %v2047 = vpack.c.b16 %v1723, %v1696
        %v2048 = vpack.c.b16 %v1724, %v1697
        %v2049 = vpack.c.b16 %v1725, %v1698
        %v2050 = vpack.c.b16 %v1726, %v1699
        %v2051 = vpack.c.b16 %v1727, %v1700
        %v2052 = vpack.c.b16 %v1728, %v1701
        %v2053 = vpack.c.b16 %v1729, %v1702
        %v2054 = vpack.c.b16 %v1730, %v1703
        %v2055 = vpack.c.b16 %v1731, %v1704
        %v2056 = vpack.c.b16 %v1732, %v1705
        %v2057 = vpack.c.b16 %v1733, %v1706
        %v2058 = vpack.c.b16 %v1734, %v1707
        %v2059 = vpack.c.b16 %v1735, %v1708
        %v2060 = vpack.c.b16 %v1736, %v1709
        %v2061 = vpack.c.b16 %v1737, %v1710
        %v2062 = vpack.c.b16 %v1738, %v1711
        %v2063 = vpack.c.b16 %v1739, %v1712
        %v2064 = vpack.c.b16 %v1740, %v1713
        %v2065 = vpack.c.b16 %v1741, %v1714
        %v2066 = vpack.c.b16 %v1742, %v1715
        %v2067 = vpack.c.b16 %v1743, %v1716
        %v2068 = vpack.c.b16 %v1744, %v1717
        %v2069 = vpack.c.b16 %v1772, %v1745
        %v2070 = vpack.c.b16 %v1773, %v1746
        %v2071 = vpack.c.b16 %v1774, %v1747
        %v2072 = vpack.c.b16 %v1775, %v1748
        %v2073 = vpack.c.b16 %v1776, %v1749
        %v2074 = vpack.c.b16 %v1777, %v1750
        %v2075 = vpack.c.b16 %v1778, %v1751
        %v2076 = vpack.c.b16 %v1779, %v1752
        %v2077 = vpack.c.b16 %v1780, %v1753
        %v2078 = vpack.c.b16 %v1781, %v1754
        %v2079 = vpack.c.b16 %v1782, %v1755
        %v2080 = vpack.c.b16 %v1783, %v1756
        %v2081 = vpack.c.b16 %v1784, %v1757
        %v2082 = vpack.c.b16 %v1785, %v1758
        %v2083 = vpack.c.b16 %v1786, %v1759
        %v2084 = vpack.c.b16 %v1787, %v1760
        %v2085 = vpack.c.b16 %v1788, %v1761
        %v2086 = vpack.c.b16 %v1789, %v1762
        %v2087 = vpack.c.b16 %v1790, %v1763
        %v2088 = vpack.c.b16 %v1791, %v1764
        %v2089 = vpack.c.b16 %v1792, %v1765
        %v2090 = vpack.c.b16 %v1793, %v1766
        %v2091 = vpack.c.b16 %v1794, %v1767
        %v2092 = vpack.c.b16 %v1795, %v1768
        %v2093 = vpack.c.b16 %v1796, %v1769
        %v2094 = vpack.c.b16 %v1797, %v1770
        %v2095 = vpack.c.b16 %v1798, %v1771
        %v2096 = vpack.c.b16 %v1826, %v1799
        %v2097 = vpack.c.b16 %v1827, %v1800
        %v2098 = vpack.c.b16 %v1828, %v1801
        %v2099 = vpack.c.b16 %v1829, %v1802
        %v2100 = vpack.c.b16 %v1830, %v1803
        %v2101 = vpack.c.b16 %v1831, %v1804
        %v2102 = vpack.c.b16 %v1832, %v1805
        %v2103 = vpack.c.b16 %v1833, %v1806
        %v2104 = vpack.c.b16 %v1834, %v1807
        %v2105 = vpack.c.b16 %v1835, %v1808
        %v2106 = vpack.c.b16 %v1836, %v1809
        %v2107 = vpack.c.b16 %v1837, %v1810
        %v2108 = vpack.c.b16 %v1838, %v1811
        %v2109 = vpack.c.b16 %v1839, %v1812
        %v2110 = vpack.c.b16 %v1840, %v1813
        %v2111 = vpack.c.b16 %v1841, %v1814
        %v2112 = vpack.c.b16 %v1842, %v1815
        %v2113 = vpack.c.b16 %v1843, %v1816
        %v2114 = vpack.c.b16 %v1844, %v1817
        %v2115 = vpack.c.b16 %v1845, %v1818
        %v2116 = vpack.c.b16 %v1846, %v1819
        %v2117 = vpack.c.b16 %v1847, %v1820
        %v2118 = vpack.c.b16 %v1848, %v1821
        %v2119 = vpack.c.b16 %v1849, %v1822
        %v2120 = vpack.c.b16 %v1850, %v1823
        %v2121 = vpack.c.b16 %v1851, %v1824
        %v2122 = vpack.c.b16 %v1852, %v1825
        %v2123 = vpack.c.b16 %v1880, %v1853
        %v2124 = vpack.c.b16 %v1881, %v1854
        %v2125 = vpack.c.b16 %v1882, %v1855
        %v2126 = vpack.c.b16 %v1883, %v1856
        %v2127 = vpack.c.b16 %v1884, %v1857
        %v2128 = vpack.c.b16 %v1885, %v1858
        %v2129 = vpack.c.b16 %v1886, %v1859
        %v2130 = vpack.c.b16 %v1887, %v1860
        %v2131 = vpack.c.b16 %v1888, %v1861
        %v2132 = vpack.c.b16 %v1889, %v1862
        %v2133 = vpack.c.b16 %v1890, %v1863
        %v2134 = vpack.c.b16 %v1891, %v1864
        %v2135 = vpack.c.b16 %v1892, %v1865
        %v2136 = vpack.c.b16 %v1893, %v1866
        %v2137 = vpack.c.b16 %v1894, %v1867
        %v2138 = vpack.c.b16 %v1895, %v1868
        %v2139 = vpack.c.b16 %v1896, %v1869
        %v2140 = vpack.c.b16 %v1897, %v1870
        %v2141 = vpack.c.b16 %v1898, %v1871
        %v2142 = vpack.c.b16 %v1899, %v1872
        %v2143 = vpack.c.b16 %v1900, %v1873
        %v2144 = vpack.c.b16 %v1901, %v1874
        %v2145 = vpack.c.b16 %v1902, %v1875
        %v2146 = vpack.c.b16 %v1903, %v1876
        %v2147 = vpack.c.b16 %v1904, %v1877
        %v2148 = vpack.c.b16 %v1905, %v1878
        %v2149 = vpack.c.b16 %v1906, %v1879
        %v2150 = vpack.c.b16 %v1934, %v1907
        %v2151 = vpack.c.b16 %v1935, %v1908
        %v2152 = vpack.c.b16 %v1936, %v1909
        %v2153 = vpack.c.b16 %v1937, %v1910
        %v2154 = vpack.c.b16 %v1938, %v1911
        %v2155 = vpack.c.b16 %v1939, %v1912
        %v2156 = vpack.c.b16 %v1940, %v1913
        %v2157 = vpack.c.b16 %v1941, %v1914
        %v2158 = vpack.c.b16 %v1942, %v1915
        %v2159 = vpack.c.b16 %v1943, %v1916
        %v2160 = vpack.c.b16 %v1944, %v1917
        %v2161 = vpack.c.b16 %v1945, %v1918
        %v2162 = vpack.c.b16 %v1946, %v1919
        %v2163 = vpack.c.b16 %v1947, %v1920
        %v2164 = vpack.c.b16 %v1948, %v1921
        %v2165 = vpack.c.b16 %v1949, %v1922
        %v2166 = vpack.c.b16 %v1950, %v1923
        %v2167 = vpack.c.b16 %v1951, %v1924
        %v2168 = vpack.c.b16 %v1952, %v1925
        %v2169 = vpack.c.b16 %v1953, %v1926
        %v2170 = vpack.c.b16 %v1954, %v1927
        %v2171 = vpack.c.b16 %v1955, %v1928
        %v2172 = vpack.c.b16 %v1956, %v1929
        %v2173 = vpack.c.b16 %v1957, %v1930
        %v2174 = vpack.c.b16 %v1958, %v1931
        %v2175 = vpack.c.b16 %v1959, %v1932
        %v2176 = vpack.c.b16 %v1960, %v1933
        %2393 = vmatprep.subr.bf16.mxu0 %v888
        %2394 = vmatpush1.bf16.msra.mxu0 %v887
        %2395 = vmatprep.subr.bf16.mxu0 %v886
        %2396 = vmatpush1.bf16.msra.mxu0 %v885
        %2397 = vmatprep.subr.bf16.mxu0 %v884
        %2398 = vmatpush1.bf16.msra.mxu0 %v883
        %2399 = vmatprep.subr.bf16.mxu0 %v882
        %2400 = vmatpush1.bf16.msra.mxu0 %v881
        %2401 = vmatprep.subr.bf16.mxu0 %v880
        %2402 = vmatpush1.bf16.msra.mxu0 %v879
        %2403 = vmatprep.subr.bf16.mxu0 %v878
        %2404 = vmatpush1.bf16.msra.mxu0 %v877
        %2405 = vmatprep.subr.bf16.mxu0 %v876
        %2406 = vmatpush1.bf16.msra.mxu0 %v875
        %2407 = vmatprep.subr.bf16.mxu0 %v874
        %2408 = vmatpush1.bf16.msra.mxu0 %v873
        %2409 = vmatprep.subr.bf16.mxu0 %v904
        %2410 = vmatpush2.bf16.msra.mxu0 %v903
        %2411 = vmatprep.subr.bf16.mxu0 %v902
        %2412 = vmatpush2.bf16.msra.mxu0 %v901
        %2413 = vmatprep.subr.bf16.mxu0 %v900
        %2414 = vmatpush2.bf16.msra.mxu0 %v899
        %2415 = vmatprep.subr.bf16.mxu0 %v898
        %2416 = vmatpush2.bf16.msra.mxu0 %v897
        %2417 = vmatprep.subr.bf16.mxu0 %v896
        %2418 = vmatpush2.bf16.msra.mxu0 %v895
        %2419 = vmatprep.subr.bf16.mxu0 %v894
        %2420 = vmatpush2.bf16.msra.mxu0 %v893
        %2421 = vmatprep.subr.bf16.mxu0 %v892
        %2422 = vmatpush2.bf16.msra.mxu0 %v891
        %2423 = vmatprep.subr.bf16.mxu0 %v890
        %2424 = vmatpush2.bf16.msra.mxu0 %v889
        %2425 = vmatprep.mubr.bf16.mxu0 %v1962
        %2426 = vmatmul.mubr.bf16.gmra.mxu0 %v1961
        %v2427 = vpop.f32.mrf.mxu0
        %v2428 = vadd.f32 0.0, %v2427
        %v2429 = vpop.f32.mrf.mxu0
        %v2430 = vadd.f32 0.0, %v2429
        %v2431 = vpop.f32.mrf.mxu0
        %v2432 = vadd.f32 0.0, %v2431
        %v2433 = vpop.f32.mrf.mxu0
        %v2434 = vadd.f32 0.0, %v2433
        %2435 = vmatprep.mubr.bf16.mxu0 %v1989
        %2436 = vmatmul.mubr.bf16.gmra.mxu0 %v1988
        %v2437 = vpop.f32.mrf.mxu0
        %v2438 = vadd.f32 0.0, %v2437
        %v2439 = vpop.f32.mrf.mxu0
        %v2440 = vadd.f32 0.0, %v2439
        %v2441 = vpop.f32.mrf.mxu0
        %v2442 = vadd.f32 0.0, %v2441
        %v2443 = vpop.f32.mrf.mxu0
        %v2444 = vadd.f32 0.0, %v2443
        %2445 = vmatprep.mubr.bf16.mxu0 %v2016
        %2446 = vmatmul.mubr.bf16.gmra.mxu0 %v2015
        %v2447 = vpop.f32.mrf.mxu0
        %v2448 = vadd.f32 0.0, %v2447
        %v2449 = vpop.f32.mrf.mxu0
        %v2450 = vadd.f32 0.0, %v2449
        %v2451 = vpop.f32.mrf.mxu0
        %v2452 = vadd.f32 0.0, %v2451
        %v2453 = vpop.f32.mrf.mxu0
        %v2454 = vadd.f32 0.0, %v2453
        %2455 = vmatprep.mubr.bf16.mxu0 %v2043
        %2456 = vmatmul.mubr.bf16.gmra.mxu0 %v2042
        %v2457 = vpop.f32.mrf.mxu0
        %v2458 = vadd.f32 0.0, %v2457
        %v2459 = vpop.f32.mrf.mxu0
        %v2460 = vadd.f32 0.0, %v2459
        %v2461 = vpop.f32.mrf.mxu0
        %v2462 = vadd.f32 0.0, %v2461
        %v2463 = vpop.f32.mrf.mxu0
        %v2464 = vadd.f32 0.0, %v2463
        %2465 = vmatprep.mubr.bf16.mxu0 %v2070
        %2466 = vmatmul.mubr.bf16.gmra.mxu0 %v2069
        %v2467 = vpop.f32.mrf.mxu0
        %v2468 = vadd.f32 0.0, %v2467
        %v2469 = vpop.f32.mrf.mxu0
        %v2470 = vadd.f32 0.0, %v2469
        %v2471 = vpop.f32.mrf.mxu0
        %v2472 = vadd.f32 0.0, %v2471
        %v2473 = vpop.f32.mrf.mxu0
        %v2474 = vadd.f32 0.0, %v2473
        %2475 = vmatprep.mubr.bf16.mxu0 %v2097
        %2476 = vmatmul.mubr.bf16.gmra.mxu0 %v2096
        %v2477 = vpop.f32.mrf.mxu0
        %v2478 = vadd.f32 0.0, %v2477
        %v2479 = vpop.f32.mrf.mxu0
        %v2480 = vadd.f32 0.0, %v2479
        %v2481 = vpop.f32.mrf.mxu0
        %v2482 = vadd.f32 0.0, %v2481
        %v2483 = vpop.f32.mrf.mxu0
        %v2484 = vadd.f32 0.0, %v2483
        %2485 = vmatprep.mubr.bf16.mxu0 %v2124
        %2486 = vmatmul.mubr.bf16.gmra.mxu0 %v2123
        %v2487 = vpop.f32.mrf.mxu0
        %v2488 = vadd.f32 0.0, %v2487
        %v2489 = vpop.f32.mrf.mxu0
        %v2490 = vadd.f32 0.0, %v2489
        %v2491 = vpop.f32.mrf.mxu0
        %v2492 = vadd.f32 0.0, %v2491
        %v2493 = vpop.f32.mrf.mxu0
        %v2494 = vadd.f32 0.0, %v2493
        %2495 = vmatprep.mubr.bf16.mxu0 %v2151
        %2496 = vmatmul.mubr.bf16.gmra.mxu0 %v2150
        %v2497 = vpop.f32.mrf.mxu0
        %v2498 = vadd.f32 0.0, %v2497
        %v2499 = vpop.f32.mrf.mxu0
        %v2500 = vadd.f32 0.0, %v2499
        %v2501 = vpop.f32.mrf.mxu0
        %v2502 = vadd.f32 0.0, %v2501
        %v2503 = vpop.f32.mrf.mxu0
        %v2504 = vadd.f32 0.0, %v2503
        %2505 = vdwg.mxu0
        %2506 = vmatprep.subr.bf16.mxu0 %v920
        %2507 = vmatpush1.bf16.msra.mxu0 %v919
        %2508 = vmatprep.subr.bf16.mxu0 %v918
        %2509 = vmatpush1.bf16.msra.mxu0 %v917
        %2510 = vmatprep.subr.bf16.mxu0 %v916
        %2511 = vmatpush1.bf16.msra.mxu0 %v915
        %2512 = vmatprep.subr.bf16.mxu0 %v914
        %2513 = vmatpush1.bf16.msra.mxu0 %v913
        %2514 = vmatprep.subr.bf16.mxu0 %v912
        %2515 = vmatpush1.bf16.msra.mxu0 %v911
        %2516 = vmatprep.subr.bf16.mxu0 %v910
        %2517 = vmatpush1.bf16.msra.mxu0 %v909
        %2518 = vmatprep.subr.bf16.mxu0 %v908
        %2519 = vmatpush1.bf16.msra.mxu0 %v907
        %2520 = vmatprep.subr.bf16.mxu0 %v906
        %2521 = vmatpush1.bf16.msra.mxu0 %v905
        %2522 = vmatprep.subr.bf16.mxu0 %v936
        %2523 = vmatpush2.bf16.msra.mxu0 %v935
        %2524 = vmatprep.subr.bf16.mxu0 %v934
        %2525 = vmatpush2.bf16.msra.mxu0 %v933
        %2526 = vmatprep.subr.bf16.mxu0 %v932
        %2527 = vmatpush2.bf16.msra.mxu0 %v931
        %2528 = vmatprep.subr.bf16.mxu0 %v930
        %2529 = vmatpush2.bf16.msra.mxu0 %v929
        %2530 = vmatprep.subr.bf16.mxu0 %v928
        %2531 = vmatpush2.bf16.msra.mxu0 %v927
        %2532 = vmatprep.subr.bf16.mxu0 %v926
        %2533 = vmatpush2.bf16.msra.mxu0 %v925
        %2534 = vmatprep.subr.bf16.mxu0 %v924
        %2535 = vmatpush2.bf16.msra.mxu0 %v923
        %2536 = vmatprep.subr.bf16.mxu0 %v922
        %2537 = vmatpush2.bf16.msra.mxu0 %v921
        %2538 = vmatprep.mubr.bf16.mxu0 %v1964
        %2539 = vmatmul.mubr.bf16.gmra.mxu0 %v1963
        %v2540 = vpop.f32.mrf.mxu0
        %v2541 = vadd.f32 %v2428, %v2540
        %v2542 = vpop.f32.mrf.mxu0
        %v2543 = vadd.f32 %v2430, %v2542
        %v2544 = vpop.f32.mrf.mxu0
        %v2545 = vadd.f32 %v2432, %v2544
        %v2546 = vpop.f32.mrf.mxu0
        %v2547 = vadd.f32 %v2434, %v2546
        %2548 = vmatprep.mubr.bf16.mxu0 %v1991
        %2549 = vmatmul.mubr.bf16.gmra.mxu0 %v1990
        %v2550 = vpop.f32.mrf.mxu0
        %v2551 = vadd.f32 %v2438, %v2550
        %v2552 = vpop.f32.mrf.mxu0
        %v2553 = vadd.f32 %v2440, %v2552
        %v2554 = vpop.f32.mrf.mxu0
        %v2555 = vadd.f32 %v2442, %v2554
        %v2556 = vpop.f32.mrf.mxu0
        %v2557 = vadd.f32 %v2444, %v2556
        %2558 = vmatprep.mubr.bf16.mxu0 %v2018
        %2559 = vmatmul.mubr.bf16.gmra.mxu0 %v2017
        %v2560 = vpop.f32.mrf.mxu0
        %v2561 = vadd.f32 %v2448, %v2560
        %v2562 = vpop.f32.mrf.mxu0
        %v2563 = vadd.f32 %v2450, %v2562
        %v2564 = vpop.f32.mrf.mxu0
        %v2565 = vadd.f32 %v2452, %v2564
        %v2566 = vpop.f32.mrf.mxu0
        %v2567 = vadd.f32 %v2454, %v2566
        %2568 = vmatprep.mubr.bf16.mxu0 %v2045
        %2569 = vmatmul.mubr.bf16.gmra.mxu0 %v2044
        %v2570 = vpop.f32.mrf.mxu0
        %v2571 = vadd.f32 %v2458, %v2570
        %v2572 = vpop.f32.mrf.mxu0
        %v2573 = vadd.f32 %v2460, %v2572
        %v2574 = vpop.f32.mrf.mxu0
        %v2575 = vadd.f32 %v2462, %v2574
        %v2576 = vpop.f32.mrf.mxu0
        %v2577 = vadd.f32 %v2464, %v2576
        %2578 = vmatprep.mubr.bf16.mxu0 %v2072
        %2579 = vmatmul.mubr.bf16.gmra.mxu0 %v2071
        %v2580 = vpop.f32.mrf.mxu0
        %v2581 = vadd.f32 %v2468, %v2580
        %v2582 = vpop.f32.mrf.mxu0
        %v2583 = vadd.f32 %v2470, %v2582
        %v2584 = vpop.f32.mrf.mxu0
        %v2585 = vadd.f32 %v2472, %v2584
        %v2586 = vpop.f32.mrf.mxu0
        %v2587 = vadd.f32 %v2474, %v2586
        %2588 = vmatprep.mubr.bf16.mxu0 %v2099
        %2589 = vmatmul.mubr.bf16.gmra.mxu0 %v2098
        %v2590 = vpop.f32.mrf.mxu0
        %v2591 = vadd.f32 %v2478, %v2590
        %v2592 = vpop.f32.mrf.mxu0
        %v2593 = vadd.f32 %v2480, %v2592
        %v2594 = vpop.f32.mrf.mxu0
        %v2595 = vadd.f32 %v2482, %v2594
        %v2596 = vpop.f32.mrf.mxu0
        %v2597 = vadd.f32 %v2484, %v2596
        %2598 = vmatprep.mubr.bf16.mxu0 %v2126
        %2599 = vmatmul.mubr.bf16.gmra.mxu0 %v2125
        %v2600 = vpop.f32.mrf.mxu0
        %v2601 = vadd.f32 %v2488, %v2600
        %v2602 = vpop.f32.mrf.mxu0
        %v2603 = vadd.f32 %v2490, %v2602
        %v2604 = vpop.f32.mrf.mxu0
        %v2605 = vadd.f32 %v2492, %v2604
        %v2606 = vpop.f32.mrf.mxu0
        %v2607 = vadd.f32 %v2494, %v2606
        %2608 = vmatprep.mubr.bf16.mxu0 %v2153
        %2609 = vmatmul.mubr.bf16.gmra.mxu0 %v2152
        %v2610 = vpop.f32.mrf.mxu0
        %v2611 = vadd.f32 %v2498, %v2610
        %v2612 = vpop.f32.mrf.mxu0
        %v2613 = vadd.f32 %v2500, %v2612
        %v2614 = vpop.f32.mrf.mxu0
        %v2615 = vadd.f32 %v2502, %v2614
        %v2616 = vpop.f32.mrf.mxu0
        %v2617 = vadd.f32 %v2504, %v2616
        %2618 = vdwg.mxu0
        %2619 = vmatprep.subr.bf16.mxu0 %v952
        %2620 = vmatpush1.bf16.msra.mxu0 %v951
        %2621 = vmatprep.subr.bf16.mxu0 %v950
        %2622 = vmatpush1.bf16.msra.mxu0 %v949
        %2623 = vmatprep.subr.bf16.mxu0 %v948
        %2624 = vmatpush1.bf16.msra.mxu0 %v947
        %2625 = vmatprep.subr.bf16.mxu0 %v946
        %2626 = vmatpush1.bf16.msra.mxu0 %v945
        %2627 = vmatprep.subr.bf16.mxu0 %v944
        %2628 = vmatpush1.bf16.msra.mxu0 %v943
        %2629 = vmatprep.subr.bf16.mxu0 %v942
        %2630 = vmatpush1.bf16.msra.mxu0 %v941
        %2631 = vmatprep.subr.bf16.mxu0 %v940
        %2632 = vmatpush1.bf16.msra.mxu0 %v939
        %2633 = vmatprep.subr.bf16.mxu0 %v938
        %2634 = vmatpush1.bf16.msra.mxu0 %v937
        %2635 = vmatprep.subr.bf16.mxu0 %v968
        %2636 = vmatpush2.bf16.msra.mxu0 %v967
        %2637 = vmatprep.subr.bf16.mxu0 %v966
        %2638 = vmatpush2.bf16.msra.mxu0 %v965
        %2639 = vmatprep.subr.bf16.mxu0 %v964
        %2640 = vmatpush2.bf16.msra.mxu0 %v963
        %2641 = vmatprep.subr.bf16.mxu0 %v962
        %2642 = vmatpush2.bf16.msra.mxu0 %v961
        %2643 = vmatprep.subr.bf16.mxu0 %v960
        %2644 = vmatpush2.bf16.msra.mxu0 %v959
        %2645 = vmatprep.subr.bf16.mxu0 %v958
        %2646 = vmatpush2.bf16.msra.mxu0 %v957
        %2647 = vmatprep.subr.bf16.mxu0 %v956
        %2648 = vmatpush2.bf16.msra.mxu0 %v955
        %2649 = vmatprep.subr.bf16.mxu0 %v954
        %2650 = vmatpush2.bf16.msra.mxu0 %v953
        %2651 = vmatprep.mubr.bf16.mxu0 %v1966
        %2652 = vmatmul.mubr.bf16.gmra.mxu0 %v1965
        %v2653 = vpop.f32.mrf.mxu0
        %v2654 = vadd.f32 %v2541, %v2653
        %v2655 = vpop.f32.mrf.mxu0
        %v2656 = vadd.f32 %v2543, %v2655
        %v2657 = vpop.f32.mrf.mxu0
        %v2658 = vadd.f32 %v2545, %v2657
        %v2659 = vpop.f32.mrf.mxu0
        %v2660 = vadd.f32 %v2547, %v2659
        %2661 = vmatprep.mubr.bf16.mxu0 %v1993
        %2662 = vmatmul.mubr.bf16.gmra.mxu0 %v1992
        %v2663 = vpop.f32.mrf.mxu0
        %v2664 = vadd.f32 %v2551, %v2663
        %v2665 = vpop.f32.mrf.mxu0
        %v2666 = vadd.f32 %v2553, %v2665
        %v2667 = vpop.f32.mrf.mxu0
        %v2668 = vadd.f32 %v2555, %v2667
        %v2669 = vpop.f32.mrf.mxu0
        %v2670 = vadd.f32 %v2557, %v2669
        %2671 = vmatprep.mubr.bf16.mxu0 %v2020
        %2672 = vmatmul.mubr.bf16.gmra.mxu0 %v2019
        %v2673 = vpop.f32.mrf.mxu0
        %v2674 = vadd.f32 %v2561, %v2673
        %v2675 = vpop.f32.mrf.mxu0
        %v2676 = vadd.f32 %v2563, %v2675
        %v2677 = vpop.f32.mrf.mxu0
        %v2678 = vadd.f32 %v2565, %v2677
        %v2679 = vpop.f32.mrf.mxu0
        %v2680 = vadd.f32 %v2567, %v2679
        %2681 = vmatprep.mubr.bf16.mxu0 %v2047
        %2682 = vmatmul.mubr.bf16.gmra.mxu0 %v2046
        %v2683 = vpop.f32.mrf.mxu0
        %v2684 = vadd.f32 %v2571, %v2683
        %v2685 = vpop.f32.mrf.mxu0
        %v2686 = vadd.f32 %v2573, %v2685
        %v2687 = vpop.f32.mrf.mxu0
        %v2688 = vadd.f32 %v2575, %v2687
        %v2689 = vpop.f32.mrf.mxu0
        %v2690 = vadd.f32 %v2577, %v2689
        %2691 = vmatprep.mubr.bf16.mxu0 %v2074
        %2692 = vmatmul.mubr.bf16.gmra.mxu0 %v2073
        %v2693 = vpop.f32.mrf.mxu0
        %v2694 = vadd.f32 %v2581, %v2693
        %v2695 = vpop.f32.mrf.mxu0
        %v2696 = vadd.f32 %v2583, %v2695
        %v2697 = vpop.f32.mrf.mxu0
        %v2698 = vadd.f32 %v2585, %v2697
        %v2699 = vpop.f32.mrf.mxu0
        %v2700 = vadd.f32 %v2587, %v2699
        %2701 = vmatprep.mubr.bf16.mxu0 %v2101
        %2702 = vmatmul.mubr.bf16.gmra.mxu0 %v2100
        %v2703 = vpop.f32.mrf.mxu0
        %v2704 = vadd.f32 %v2591, %v2703
        %v2705 = vpop.f32.mrf.mxu0
        %v2706 = vadd.f32 %v2593, %v2705
        %v2707 = vpop.f32.mrf.mxu0
        %v2708 = vadd.f32 %v2595, %v2707
        %v2709 = vpop.f32.mrf.mxu0
        %v2710 = vadd.f32 %v2597, %v2709
        %2711 = vmatprep.mubr.bf16.mxu0 %v2128
        %2712 = vmatmul.mubr.bf16.gmra.mxu0 %v2127
        %v2713 = vpop.f32.mrf.mxu0
        %v2714 = vadd.f32 %v2601, %v2713
        %v2715 = vpop.f32.mrf.mxu0
        %v2716 = vadd.f32 %v2603, %v2715
        %v2717 = vpop.f32.mrf.mxu0
        %v2718 = vadd.f32 %v2605, %v2717
        %v2719 = vpop.f32.mrf.mxu0
        %v2720 = vadd.f32 %v2607, %v2719
        %2721 = vmatprep.mubr.bf16.mxu0 %v2155
        %2722 = vmatmul.mubr.bf16.gmra.mxu0 %v2154
        %v2723 = vpop.f32.mrf.mxu0
        %v2724 = vadd.f32 %v2611, %v2723
        %v2725 = vpop.f32.mrf.mxu0
        %v2726 = vadd.f32 %v2613, %v2725
        %v2727 = vpop.f32.mrf.mxu0
        %v2728 = vadd.f32 %v2615, %v2727
        %v2729 = vpop.f32.mrf.mxu0
        %v2730 = vadd.f32 %v2617, %v2729
        %2731 = vdwg.mxu0
        %2732 = vmatprep.subr.bf16.mxu0 %v984
        %2733 = vmatpush1.bf16.msra.mxu0 %v983
        %2734 = vmatprep.subr.bf16.mxu0 %v982
        %2735 = vmatpush1.bf16.msra.mxu0 %v981
        %2736 = vmatprep.subr.bf16.mxu0 %v980
        %2737 = vmatpush1.bf16.msra.mxu0 %v979
        %2738 = vmatprep.subr.bf16.mxu0 %v978
        %2739 = vmatpush1.bf16.msra.mxu0 %v977
        %2740 = vmatprep.subr.bf16.mxu0 %v976
        %2741 = vmatpush1.bf16.msra.mxu0 %v975
        %2742 = vmatprep.subr.bf16.mxu0 %v974
        %2743 = vmatpush1.bf16.msra.mxu0 %v973
        %2744 = vmatprep.subr.bf16.mxu0 %v972
        %2745 = vmatpush1.bf16.msra.mxu0 %v971
        %2746 = vmatprep.subr.bf16.mxu0 %v970
        %2747 = vmatpush1.bf16.msra.mxu0 %v969
        %2748 = vmatprep.subr.bf16.mxu0 %v1000
        %2749 = vmatpush2.bf16.msra.mxu0 %v999
        %2750 = vmatprep.subr.bf16.mxu0 %v998
        %2751 = vmatpush2.bf16.msra.mxu0 %v997
        %2752 = vmatprep.subr.bf16.mxu0 %v996
        %2753 = vmatpush2.bf16.msra.mxu0 %v995
        %2754 = vmatprep.subr.bf16.mxu0 %v994
        %2755 = vmatpush2.bf16.msra.mxu0 %v993
        %2756 = vmatprep.subr.bf16.mxu0 %v992
        %2757 = vmatpush2.bf16.msra.mxu0 %v991
        %2758 = vmatprep.subr.bf16.mxu0 %v990
        %2759 = vmatpush2.bf16.msra.mxu0 %v989
        %2760 = vmatprep.subr.bf16.mxu0 %v988
        %2761 = vmatpush2.bf16.msra.mxu0 %v987
        %2762 = vmatprep.subr.bf16.mxu0 %v986
        %2763 = vmatpush2.bf16.msra.mxu0 %v985
        %2764 = vmatprep.mubr.bf16.mxu0 %v1968
        %2765 = vmatmul.mubr.bf16.gmra.mxu0 %v1967
        %v2766 = vpop.f32.mrf.mxu0
        %v2767 = vadd.f32 %v2654, %v2766
        %v2768 = vpop.f32.mrf.mxu0
        %v2769 = vadd.f32 %v2656, %v2768
        %v2770 = vpop.f32.mrf.mxu0
        %v2771 = vadd.f32 %v2658, %v2770
        %v2772 = vpop.f32.mrf.mxu0
        %v2773 = vadd.f32 %v2660, %v2772
        %2774 = vmatprep.mubr.bf16.mxu0 %v1995
        %2775 = vmatmul.mubr.bf16.gmra.mxu0 %v1994
        %v2776 = vpop.f32.mrf.mxu0
        %v2777 = vadd.f32 %v2664, %v2776
        %v2778 = vpop.f32.mrf.mxu0
        %v2779 = vadd.f32 %v2666, %v2778
        %v2780 = vpop.f32.mrf.mxu0
        %v2781 = vadd.f32 %v2668, %v2780
        %v2782 = vpop.f32.mrf.mxu0
        %v2783 = vadd.f32 %v2670, %v2782
        %2784 = vmatprep.mubr.bf16.mxu0 %v2022
        %2785 = vmatmul.mubr.bf16.gmra.mxu0 %v2021
        %v2786 = vpop.f32.mrf.mxu0
        %v2787 = vadd.f32 %v2674, %v2786
        %v2788 = vpop.f32.mrf.mxu0
        %v2789 = vadd.f32 %v2676, %v2788
        %v2790 = vpop.f32.mrf.mxu0
        %v2791 = vadd.f32 %v2678, %v2790
        %v2792 = vpop.f32.mrf.mxu0
        %v2793 = vadd.f32 %v2680, %v2792
        %2794 = vmatprep.mubr.bf16.mxu0 %v2049
        %2795 = vmatmul.mubr.bf16.gmra.mxu0 %v2048
        %v2796 = vpop.f32.mrf.mxu0
        %v2797 = vadd.f32 %v2684, %v2796
        %v2798 = vpop.f32.mrf.mxu0
        %v2799 = vadd.f32 %v2686, %v2798
        %v2800 = vpop.f32.mrf.mxu0
        %v2801 = vadd.f32 %v2688, %v2800
        %v2802 = vpop.f32.mrf.mxu0
        %v2803 = vadd.f32 %v2690, %v2802
        %2804 = vmatprep.mubr.bf16.mxu0 %v2076
        %2805 = vmatmul.mubr.bf16.gmra.mxu0 %v2075
        %v2806 = vpop.f32.mrf.mxu0
        %v2807 = vadd.f32 %v2694, %v2806
        %v2808 = vpop.f32.mrf.mxu0
        %v2809 = vadd.f32 %v2696, %v2808
        %v2810 = vpop.f32.mrf.mxu0
        %v2811 = vadd.f32 %v2698, %v2810
        %v2812 = vpop.f32.mrf.mxu0
        %v2813 = vadd.f32 %v2700, %v2812
        %2814 = vmatprep.mubr.bf16.mxu0 %v2103
        %2815 = vmatmul.mubr.bf16.gmra.mxu0 %v2102
        %v2816 = vpop.f32.mrf.mxu0
        %v2817 = vadd.f32 %v2704, %v2816
        %v2818 = vpop.f32.mrf.mxu0
        %v2819 = vadd.f32 %v2706, %v2818
        %v2820 = vpop.f32.mrf.mxu0
        %v2821 = vadd.f32 %v2708, %v2820
        %v2822 = vpop.f32.mrf.mxu0
        %v2823 = vadd.f32 %v2710, %v2822
        %2824 = vmatprep.mubr.bf16.mxu0 %v2130
        %2825 = vmatmul.mubr.bf16.gmra.mxu0 %v2129
        %v2826 = vpop.f32.mrf.mxu0
        %v2827 = vadd.f32 %v2714, %v2826
        %v2828 = vpop.f32.mrf.mxu0
        %v2829 = vadd.f32 %v2716, %v2828
        %v2830 = vpop.f32.mrf.mxu0
        %v2831 = vadd.f32 %v2718, %v2830
        %v2832 = vpop.f32.mrf.mxu0
        %v2833 = vadd.f32 %v2720, %v2832
        %2834 = vmatprep.mubr.bf16.mxu0 %v2157
        %2835 = vmatmul.mubr.bf16.gmra.mxu0 %v2156
        %v2836 = vpop.f32.mrf.mxu0
        %v2837 = vadd.f32 %v2724, %v2836
        %v2838 = vpop.f32.mrf.mxu0
        %v2839 = vadd.f32 %v2726, %v2838
        %v2840 = vpop.f32.mrf.mxu0
        %v2841 = vadd.f32 %v2728, %v2840
        %v2842 = vpop.f32.mrf.mxu0
        %v2843 = vadd.f32 %v2730, %v2842
        %2844 = vdwg.mxu0
        %2845 = vmatprep.subr.bf16.mxu0 %v1016
        %2846 = vmatpush1.bf16.msra.mxu0 %v1015
        %2847 = vmatprep.subr.bf16.mxu0 %v1014
        %2848 = vmatpush1.bf16.msra.mxu0 %v1013
        %2849 = vmatprep.subr.bf16.mxu0 %v1012
        %2850 = vmatpush1.bf16.msra.mxu0 %v1011
        %2851 = vmatprep.subr.bf16.mxu0 %v1010
        %2852 = vmatpush1.bf16.msra.mxu0 %v1009
        %2853 = vmatprep.subr.bf16.mxu0 %v1008
        %2854 = vmatpush1.bf16.msra.mxu0 %v1007
        %2855 = vmatprep.subr.bf16.mxu0 %v1006
        %2856 = vmatpush1.bf16.msra.mxu0 %v1005
        %2857 = vmatprep.subr.bf16.mxu0 %v1004
        %2858 = vmatpush1.bf16.msra.mxu0 %v1003
        %2859 = vmatprep.subr.bf16.mxu0 %v1002
        %2860 = vmatpush1.bf16.msra.mxu0 %v1001
        %2861 = vmatprep.subr.bf16.mxu0 %v1032
        %2862 = vmatpush2.bf16.msra.mxu0 %v1031
        %2863 = vmatprep.subr.bf16.mxu0 %v1030
        %2864 = vmatpush2.bf16.msra.mxu0 %v1029
        %2865 = vmatprep.subr.bf16.mxu0 %v1028
        %2866 = vmatpush2.bf16.msra.mxu0 %v1027
        %2867 = vmatprep.subr.bf16.mxu0 %v1026
        %2868 = vmatpush2.bf16.msra.mxu0 %v1025
        %2869 = vmatprep.subr.bf16.mxu0 %v1024
        %2870 = vmatpush2.bf16.msra.mxu0 %v1023
        %2871 = vmatprep.subr.bf16.mxu0 %v1022
        %2872 = vmatpush2.bf16.msra.mxu0 %v1021
        %2873 = vmatprep.subr.bf16.mxu0 %v1020
        %2874 = vmatpush2.bf16.msra.mxu0 %v1019
        %2875 = vmatprep.subr.bf16.mxu0 %v1018
        %2876 = vmatpush2.bf16.msra.mxu0 %v1017
        %2877 = vmatprep.mubr.bf16.mxu0 %v1970
        %2878 = vmatmul.mubr.bf16.gmra.mxu0 %v1969
        %v2879 = vpop.f32.mrf.mxu0
        %v2880 = vadd.f32 %v2767, %v2879
        %v2881 = vpop.f32.mrf.mxu0
        %v2882 = vadd.f32 %v2769, %v2881
        %v2883 = vpop.f32.mrf.mxu0
        %v2884 = vadd.f32 %v2771, %v2883
        %v2885 = vpop.f32.mrf.mxu0
        %v2886 = vadd.f32 %v2773, %v2885
        %2887 = vmatprep.mubr.bf16.mxu0 %v1997
        %2888 = vmatmul.mubr.bf16.gmra.mxu0 %v1996
        %v2889 = vpop.f32.mrf.mxu0
        %v2890 = vadd.f32 %v2777, %v2889
        %v2891 = vpop.f32.mrf.mxu0
        %v2892 = vadd.f32 %v2779, %v2891
        %v2893 = vpop.f32.mrf.mxu0
        %v2894 = vadd.f32 %v2781, %v2893
        %v2895 = vpop.f32.mrf.mxu0
        %v2896 = vadd.f32 %v2783, %v2895
        %2897 = vmatprep.mubr.bf16.mxu0 %v2024
        %2898 = vmatmul.mubr.bf16.gmra.mxu0 %v2023
        %v2899 = vpop.f32.mrf.mxu0
        %v2900 = vadd.f32 %v2787, %v2899
        %v2901 = vpop.f32.mrf.mxu0
        %v2902 = vadd.f32 %v2789, %v2901
        %v2903 = vpop.f32.mrf.mxu0
        %v2904 = vadd.f32 %v2791, %v2903
        %v2905 = vpop.f32.mrf.mxu0
        %v2906 = vadd.f32 %v2793, %v2905
        %2907 = vmatprep.mubr.bf16.mxu0 %v2051
        %2908 = vmatmul.mubr.bf16.gmra.mxu0 %v2050
        %v2909 = vpop.f32.mrf.mxu0
        %v2910 = vadd.f32 %v2797, %v2909
        %v2911 = vpop.f32.mrf.mxu0
        %v2912 = vadd.f32 %v2799, %v2911
        %v2913 = vpop.f32.mrf.mxu0
        %v2914 = vadd.f32 %v2801, %v2913
        %v2915 = vpop.f32.mrf.mxu0
        %v2916 = vadd.f32 %v2803, %v2915
        %2917 = vmatprep.mubr.bf16.mxu0 %v2078
        %2918 = vmatmul.mubr.bf16.gmra.mxu0 %v2077
        %v2919 = vpop.f32.mrf.mxu0
        %v2920 = vadd.f32 %v2807, %v2919
        %v2921 = vpop.f32.mrf.mxu0
        %v2922 = vadd.f32 %v2809, %v2921
        %v2923 = vpop.f32.mrf.mxu0
        %v2924 = vadd.f32 %v2811, %v2923
        %v2925 = vpop.f32.mrf.mxu0
        %v2926 = vadd.f32 %v2813, %v2925
        %2927 = vmatprep.mubr.bf16.mxu0 %v2105
        %2928 = vmatmul.mubr.bf16.gmra.mxu0 %v2104
        %v2929 = vpop.f32.mrf.mxu0
        %v2930 = vadd.f32 %v2817, %v2929
        %v2931 = vpop.f32.mrf.mxu0
        %v2932 = vadd.f32 %v2819, %v2931
        %v2933 = vpop.f32.mrf.mxu0
        %v2934 = vadd.f32 %v2821, %v2933
        %v2935 = vpop.f32.mrf.mxu0
        %v2936 = vadd.f32 %v2823, %v2935
        %2937 = vmatprep.mubr.bf16.mxu0 %v2132
        %2938 = vmatmul.mubr.bf16.gmra.mxu0 %v2131
        %v2939 = vpop.f32.mrf.mxu0
        %v2940 = vadd.f32 %v2827, %v2939
        %v2941 = vpop.f32.mrf.mxu0
        %v2942 = vadd.f32 %v2829, %v2941
        %v2943 = vpop.f32.mrf.mxu0
        %v2944 = vadd.f32 %v2831, %v2943
        %v2945 = vpop.f32.mrf.mxu0
        %v2946 = vadd.f32 %v2833, %v2945
        %2947 = vmatprep.mubr.bf16.mxu0 %v2159
        %2948 = vmatmul.mubr.bf16.gmra.mxu0 %v2158
        %v2949 = vpop.f32.mrf.mxu0
        %v2950 = vadd.f32 %v2837, %v2949
        %v2951 = vpop.f32.mrf.mxu0
        %v2952 = vadd.f32 %v2839, %v2951
        %v2953 = vpop.f32.mrf.mxu0
        %v2954 = vadd.f32 %v2841, %v2953
        %v2955 = vpop.f32.mrf.mxu0
        %v2956 = vadd.f32 %v2843, %v2955
        %2957 = vdwg.mxu0
        %2958 = vmatprep.subr.bf16.mxu0 %v1048
        %2959 = vmatpush1.bf16.msra.mxu0 %v1047
        %2960 = vmatprep.subr.bf16.mxu0 %v1046
        %2961 = vmatpush1.bf16.msra.mxu0 %v1045
        %2962 = vmatprep.subr.bf16.mxu0 %v1044
        %2963 = vmatpush1.bf16.msra.mxu0 %v1043
        %2964 = vmatprep.subr.bf16.mxu0 %v1042
        %2965 = vmatpush1.bf16.msra.mxu0 %v1041
        %2966 = vmatprep.subr.bf16.mxu0 %v1040
        %2967 = vmatpush1.bf16.msra.mxu0 %v1039
        %2968 = vmatprep.subr.bf16.mxu0 %v1038
        %2969 = vmatpush1.bf16.msra.mxu0 %v1037
        %2970 = vmatprep.subr.bf16.mxu0 %v1036
        %2971 = vmatpush1.bf16.msra.mxu0 %v1035
        %2972 = vmatprep.subr.bf16.mxu0 %v1034
        %2973 = vmatpush1.bf16.msra.mxu0 %v1033
        %2974 = vmatprep.subr.bf16.mxu0 %v1064
        %2975 = vmatpush2.bf16.msra.mxu0 %v1063
        %2976 = vmatprep.subr.bf16.mxu0 %v1062
        %2977 = vmatpush2.bf16.msra.mxu0 %v1061
        %2978 = vmatprep.subr.bf16.mxu0 %v1060
        %2979 = vmatpush2.bf16.msra.mxu0 %v1059
        %2980 = vmatprep.subr.bf16.mxu0 %v1058
        %2981 = vmatpush2.bf16.msra.mxu0 %v1057
        %2982 = vmatprep.subr.bf16.mxu0 %v1056
        %2983 = vmatpush2.bf16.msra.mxu0 %v1055
        %2984 = vmatprep.subr.bf16.mxu0 %v1054
        %2985 = vmatpush2.bf16.msra.mxu0 %v1053
        %2986 = vmatprep.subr.bf16.mxu0 %v1052
        %2987 = vmatpush2.bf16.msra.mxu0 %v1051
        %2988 = vmatprep.subr.bf16.mxu0 %v1050
        %2989 = vmatpush2.bf16.msra.mxu0 %v1049
        %2990 = vmatprep.mubr.bf16.mxu0 %v1972
        %2991 = vmatmul.mubr.bf16.gmra.mxu0 %v1971
        %v2992 = vpop.f32.mrf.mxu0
        %v2993 = vadd.f32 %v2880, %v2992
        %v2994 = vpop.f32.mrf.mxu0
        %v2995 = vadd.f32 %v2882, %v2994
        %v2996 = vpop.f32.mrf.mxu0
        %v2997 = vadd.f32 %v2884, %v2996
        %v2998 = vpop.f32.mrf.mxu0
        %v2999 = vadd.f32 %v2886, %v2998
        %3000 = vmatprep.mubr.bf16.mxu0 %v1999
        %3001 = vmatmul.mubr.bf16.gmra.mxu0 %v1998
        %v3002 = vpop.f32.mrf.mxu0
        %v3003 = vadd.f32 %v2890, %v3002
        %v3004 = vpop.f32.mrf.mxu0
        %v3005 = vadd.f32 %v2892, %v3004
        %v3006 = vpop.f32.mrf.mxu0
        %v3007 = vadd.f32 %v2894, %v3006
        %v3008 = vpop.f32.mrf.mxu0
        %v3009 = vadd.f32 %v2896, %v3008
        %3010 = vmatprep.mubr.bf16.mxu0 %v2026
        %3011 = vmatmul.mubr.bf16.gmra.mxu0 %v2025
        %v3012 = vpop.f32.mrf.mxu0
        %v3013 = vadd.f32 %v2900, %v3012
        %v3014 = vpop.f32.mrf.mxu0
        %v3015 = vadd.f32 %v2902, %v3014
        %v3016 = vpop.f32.mrf.mxu0
        %v3017 = vadd.f32 %v2904, %v3016
        %v3018 = vpop.f32.mrf.mxu0
        %v3019 = vadd.f32 %v2906, %v3018
        %3020 = vmatprep.mubr.bf16.mxu0 %v2053
        %3021 = vmatmul.mubr.bf16.gmra.mxu0 %v2052
        %v3022 = vpop.f32.mrf.mxu0
        %v3023 = vadd.f32 %v2910, %v3022
        %v3024 = vpop.f32.mrf.mxu0
        %v3025 = vadd.f32 %v2912, %v3024
        %v3026 = vpop.f32.mrf.mxu0
        %v3027 = vadd.f32 %v2914, %v3026
        %v3028 = vpop.f32.mrf.mxu0
        %v3029 = vadd.f32 %v2916, %v3028
        %3030 = vmatprep.mubr.bf16.mxu0 %v2080
        %3031 = vmatmul.mubr.bf16.gmra.mxu0 %v2079
        %v3032 = vpop.f32.mrf.mxu0
        %v3033 = vadd.f32 %v2920, %v3032
        %v3034 = vpop.f32.mrf.mxu0
        %v3035 = vadd.f32 %v2922, %v3034
        %v3036 = vpop.f32.mrf.mxu0
        %v3037 = vadd.f32 %v2924, %v3036
        %v3038 = vpop.f32.mrf.mxu0
        %v3039 = vadd.f32 %v2926, %v3038
        %3040 = vmatprep.mubr.bf16.mxu0 %v2107
        %3041 = vmatmul.mubr.bf16.gmra.mxu0 %v2106
        %v3042 = vpop.f32.mrf.mxu0
        %v3043 = vadd.f32 %v2930, %v3042
        %v3044 = vpop.f32.mrf.mxu0
        %v3045 = vadd.f32 %v2932, %v3044
        %v3046 = vpop.f32.mrf.mxu0
        %v3047 = vadd.f32 %v2934, %v3046
        %v3048 = vpop.f32.mrf.mxu0
        %v3049 = vadd.f32 %v2936, %v3048
        %3050 = vmatprep.mubr.bf16.mxu0 %v2134
        %3051 = vmatmul.mubr.bf16.gmra.mxu0 %v2133
        %v3052 = vpop.f32.mrf.mxu0
        %v3053 = vadd.f32 %v2940, %v3052
        %v3054 = vpop.f32.mrf.mxu0
        %v3055 = vadd.f32 %v2942, %v3054
        %v3056 = vpop.f32.mrf.mxu0
        %v3057 = vadd.f32 %v2944, %v3056
        %v3058 = vpop.f32.mrf.mxu0
        %v3059 = vadd.f32 %v2946, %v3058
        %3060 = vmatprep.mubr.bf16.mxu0 %v2161
        %3061 = vmatmul.mubr.bf16.gmra.mxu0 %v2160
        %v3062 = vpop.f32.mrf.mxu0
        %v3063 = vadd.f32 %v2950, %v3062
        %v3064 = vpop.f32.mrf.mxu0
        %v3065 = vadd.f32 %v2952, %v3064
        %v3066 = vpop.f32.mrf.mxu0
        %v3067 = vadd.f32 %v2954, %v3066
        %v3068 = vpop.f32.mrf.mxu0
        %v3069 = vadd.f32 %v2956, %v3068
        %3070 = vdwg.mxu0
        %3071 = vmatprep.subr.bf16.mxu0 %v1080
        %3072 = vmatpush1.bf16.msra.mxu0 %v1079
        %3073 = vmatprep.subr.bf16.mxu0 %v1078
        %3074 = vmatpush1.bf16.msra.mxu0 %v1077
        %3075 = vmatprep.subr.bf16.mxu0 %v1076
        %3076 = vmatpush1.bf16.msra.mxu0 %v1075
        %3077 = vmatprep.subr.bf16.mxu0 %v1074
        %3078 = vmatpush1.bf16.msra.mxu0 %v1073
        %3079 = vmatprep.subr.bf16.mxu0 %v1072
        %3080 = vmatpush1.bf16.msra.mxu0 %v1071
        %3081 = vmatprep.subr.bf16.mxu0 %v1070
        %3082 = vmatpush1.bf16.msra.mxu0 %v1069
        %3083 = vmatprep.subr.bf16.mxu0 %v1068
        %3084 = vmatpush1.bf16.msra.mxu0 %v1067
        %3085 = vmatprep.subr.bf16.mxu0 %v1066
        %3086 = vmatpush1.bf16.msra.mxu0 %v1065
        %3087 = vmatprep.subr.bf16.mxu0 %v1096
        %3088 = vmatpush2.bf16.msra.mxu0 %v1095
        %3089 = vmatprep.subr.bf16.mxu0 %v1094
        %3090 = vmatpush2.bf16.msra.mxu0 %v1093
        %3091 = vmatprep.subr.bf16.mxu0 %v1092
        %3092 = vmatpush2.bf16.msra.mxu0 %v1091
        %3093 = vmatprep.subr.bf16.mxu0 %v1090
        %3094 = vmatpush2.bf16.msra.mxu0 %v1089
        %3095 = vmatprep.subr.bf16.mxu0 %v1088
        %3096 = vmatpush2.bf16.msra.mxu0 %v1087
        %3097 = vmatprep.subr.bf16.mxu0 %v1086
        %3098 = vmatpush2.bf16.msra.mxu0 %v1085
        %3099 = vmatprep.subr.bf16.mxu0 %v1084
        %3100 = vmatpush2.bf16.msra.mxu0 %v1083
        %3101 = vmatprep.subr.bf16.mxu0 %v1082
        %3102 = vmatpush2.bf16.msra.mxu0 %v1081
        %3103 = vmatprep.mubr.bf16.mxu0 %v1974
        %3104 = vmatmul.mubr.bf16.gmra.mxu0 %v1973
        %v3105 = vpop.f32.mrf.mxu0
        %v3106 = vadd.f32 %v2993, %v3105
        %v3107 = vpop.f32.mrf.mxu0
        %v3108 = vadd.f32 %v2995, %v3107
        %v3109 = vpop.f32.mrf.mxu0
        %v3110 = vadd.f32 %v2997, %v3109
        %v3111 = vpop.f32.mrf.mxu0
        %v3112 = vadd.f32 %v2999, %v3111
        %3113 = vmatprep.mubr.bf16.mxu0 %v2001
        %3114 = vmatmul.mubr.bf16.gmra.mxu0 %v2000
        %v3115 = vpop.f32.mrf.mxu0
        %v3116 = vadd.f32 %v3003, %v3115
        %v3117 = vpop.f32.mrf.mxu0
        %v3118 = vadd.f32 %v3005, %v3117
        %v3119 = vpop.f32.mrf.mxu0
        %v3120 = vadd.f32 %v3007, %v3119
        %v3121 = vpop.f32.mrf.mxu0
        %v3122 = vadd.f32 %v3009, %v3121
        %3123 = vmatprep.mubr.bf16.mxu0 %v2028
        %3124 = vmatmul.mubr.bf16.gmra.mxu0 %v2027
        %v3125 = vpop.f32.mrf.mxu0
        %v3126 = vadd.f32 %v3013, %v3125
        %v3127 = vpop.f32.mrf.mxu0
        %v3128 = vadd.f32 %v3015, %v3127
        %v3129 = vpop.f32.mrf.mxu0
        %v3130 = vadd.f32 %v3017, %v3129
        %v3131 = vpop.f32.mrf.mxu0
        %v3132 = vadd.f32 %v3019, %v3131
        %3133 = vmatprep.mubr.bf16.mxu0 %v2055
        %3134 = vmatmul.mubr.bf16.gmra.mxu0 %v2054
        %v3135 = vpop.f32.mrf.mxu0
        %v3136 = vadd.f32 %v3023, %v3135
        %v3137 = vpop.f32.mrf.mxu0
        %v3138 = vadd.f32 %v3025, %v3137
        %v3139 = vpop.f32.mrf.mxu0
        %v3140 = vadd.f32 %v3027, %v3139
        %v3141 = vpop.f32.mrf.mxu0
        %v3142 = vadd.f32 %v3029, %v3141
        %3143 = vmatprep.mubr.bf16.mxu0 %v2082
        %3144 = vmatmul.mubr.bf16.gmra.mxu0 %v2081
        %v3145 = vpop.f32.mrf.mxu0
        %v3146 = vadd.f32 %v3033, %v3145
        %v3147 = vpop.f32.mrf.mxu0
        %v3148 = vadd.f32 %v3035, %v3147
        %v3149 = vpop.f32.mrf.mxu0
        %v3150 = vadd.f32 %v3037, %v3149
        %v3151 = vpop.f32.mrf.mxu0
        %v3152 = vadd.f32 %v3039, %v3151
        %3153 = vmatprep.mubr.bf16.mxu0 %v2109
        %3154 = vmatmul.mubr.bf16.gmra.mxu0 %v2108
        %v3155 = vpop.f32.mrf.mxu0
        %v3156 = vadd.f32 %v3043, %v3155
        %v3157 = vpop.f32.mrf.mxu0
        %v3158 = vadd.f32 %v3045, %v3157
        %v3159 = vpop.f32.mrf.mxu0
        %v3160 = vadd.f32 %v3047, %v3159
        %v3161 = vpop.f32.mrf.mxu0
        %v3162 = vadd.f32 %v3049, %v3161
        %3163 = vmatprep.mubr.bf16.mxu0 %v2136
        %3164 = vmatmul.mubr.bf16.gmra.mxu0 %v2135
        %v3165 = vpop.f32.mrf.mxu0
        %v3166 = vadd.f32 %v3053, %v3165
        %v3167 = vpop.f32.mrf.mxu0
        %v3168 = vadd.f32 %v3055, %v3167
        %v3169 = vpop.f32.mrf.mxu0
        %v3170 = vadd.f32 %v3057, %v3169
        %v3171 = vpop.f32.mrf.mxu0
        %v3172 = vadd.f32 %v3059, %v3171
        %3173 = vmatprep.mubr.bf16.mxu0 %v2163
        %3174 = vmatmul.mubr.bf16.gmra.mxu0 %v2162
        %v3175 = vpop.f32.mrf.mxu0
        %v3176 = vadd.f32 %v3063, %v3175
        %v3177 = vpop.f32.mrf.mxu0
        %v3178 = vadd.f32 %v3065, %v3177
        %v3179 = vpop.f32.mrf.mxu0
        %v3180 = vadd.f32 %v3067, %v3179
        %v3181 = vpop.f32.mrf.mxu0
        %v3182 = vadd.f32 %v3069, %v3181
        %3183 = vdwg.mxu0
        %3184 = vmatprep.subr.bf16.mxu0 %v1112
        %3185 = vmatpush1.bf16.msra.mxu0 %v1111
        %3186 = vmatprep.subr.bf16.mxu0 %v1110
        %3187 = vmatpush1.bf16.msra.mxu0 %v1109
        %3188 = vmatprep.subr.bf16.mxu0 %v1108
        %3189 = vmatpush1.bf16.msra.mxu0 %v1107
        %3190 = vmatprep.subr.bf16.mxu0 %v1106
        %3191 = vmatpush1.bf16.msra.mxu0 %v1105
        %3192 = vmatprep.subr.bf16.mxu0 %v1104
        %3193 = vmatpush1.bf16.msra.mxu0 %v1103
        %3194 = vmatprep.subr.bf16.mxu0 %v1102
        %3195 = vmatpush1.bf16.msra.mxu0 %v1101
        %3196 = vmatprep.subr.bf16.mxu0 %v1100
        %3197 = vmatpush1.bf16.msra.mxu0 %v1099
        %3198 = vmatprep.subr.bf16.mxu0 %v1098
        %3199 = vmatpush1.bf16.msra.mxu0 %v1097
        %3200 = vmatprep.subr.bf16.mxu0 %v1128
        %3201 = vmatpush2.bf16.msra.mxu0 %v1127
        %3202 = vmatprep.subr.bf16.mxu0 %v1126
        %3203 = vmatpush2.bf16.msra.mxu0 %v1125
        %3204 = vmatprep.subr.bf16.mxu0 %v1124
        %3205 = vmatpush2.bf16.msra.mxu0 %v1123
        %3206 = vmatprep.subr.bf16.mxu0 %v1122
        %3207 = vmatpush2.bf16.msra.mxu0 %v1121
        %3208 = vmatprep.subr.bf16.mxu0 %v1120
        %3209 = vmatpush2.bf16.msra.mxu0 %v1119
        %3210 = vmatprep.subr.bf16.mxu0 %v1118
        %3211 = vmatpush2.bf16.msra.mxu0 %v1117
        %3212 = vmatprep.subr.bf16.mxu0 %v1116
        %3213 = vmatpush2.bf16.msra.mxu0 %v1115
        %3214 = vmatprep.subr.bf16.mxu0 %v1114
        %3215 = vmatpush2.bf16.msra.mxu0 %v1113
        %3216 = vmatprep.mubr.bf16.mxu0 %v1976
        %3217 = vmatmul.mubr.bf16.gmra.mxu0 %v1975
        %v3218 = vpop.f32.mrf.mxu0
        %v3219 = vadd.f32 %v3106, %v3218
        %v3220 = vpop.f32.mrf.mxu0
        %v3221 = vadd.f32 %v3108, %v3220
        %v3222 = vpop.f32.mrf.mxu0
        %v3223 = vadd.f32 %v3110, %v3222
        %v3224 = vpop.f32.mrf.mxu0
        %v3225 = vadd.f32 %v3112, %v3224
        %3226 = vmatprep.mubr.bf16.mxu0 %v2003
        %3227 = vmatmul.mubr.bf16.gmra.mxu0 %v2002
        %v3228 = vpop.f32.mrf.mxu0
        %v3229 = vadd.f32 %v3116, %v3228
        %v3230 = vpop.f32.mrf.mxu0
        %v3231 = vadd.f32 %v3118, %v3230
        %v3232 = vpop.f32.mrf.mxu0
        %v3233 = vadd.f32 %v3120, %v3232
        %v3234 = vpop.f32.mrf.mxu0
        %v3235 = vadd.f32 %v3122, %v3234
        %3236 = vmatprep.mubr.bf16.mxu0 %v2030
        %3237 = vmatmul.mubr.bf16.gmra.mxu0 %v2029
        %v3238 = vpop.f32.mrf.mxu0
        %v3239 = vadd.f32 %v3126, %v3238
        %v3240 = vpop.f32.mrf.mxu0
        %v3241 = vadd.f32 %v3128, %v3240
        %v3242 = vpop.f32.mrf.mxu0
        %v3243 = vadd.f32 %v3130, %v3242
        %v3244 = vpop.f32.mrf.mxu0
        %v3245 = vadd.f32 %v3132, %v3244
        %3246 = vmatprep.mubr.bf16.mxu0 %v2057
        %3247 = vmatmul.mubr.bf16.gmra.mxu0 %v2056
        %v3248 = vpop.f32.mrf.mxu0
        %v3249 = vadd.f32 %v3136, %v3248
        %v3250 = vpop.f32.mrf.mxu0
        %v3251 = vadd.f32 %v3138, %v3250
        %v3252 = vpop.f32.mrf.mxu0
        %v3253 = vadd.f32 %v3140, %v3252
        %v3254 = vpop.f32.mrf.mxu0
        %v3255 = vadd.f32 %v3142, %v3254
        %3256 = vmatprep.mubr.bf16.mxu0 %v2084
        %3257 = vmatmul.mubr.bf16.gmra.mxu0 %v2083
        %v3258 = vpop.f32.mrf.mxu0
        %v3259 = vadd.f32 %v3146, %v3258
        %v3260 = vpop.f32.mrf.mxu0
        %v3261 = vadd.f32 %v3148, %v3260
        %v3262 = vpop.f32.mrf.mxu0
        %v3263 = vadd.f32 %v3150, %v3262
        %v3264 = vpop.f32.mrf.mxu0
        %v3265 = vadd.f32 %v3152, %v3264
        %3266 = vmatprep.mubr.bf16.mxu0 %v2111
        %3267 = vmatmul.mubr.bf16.gmra.mxu0 %v2110
        %v3268 = vpop.f32.mrf.mxu0
        %v3269 = vadd.f32 %v3156, %v3268
        %v3270 = vpop.f32.mrf.mxu0
        %v3271 = vadd.f32 %v3158, %v3270
        %v3272 = vpop.f32.mrf.mxu0
        %v3273 = vadd.f32 %v3160, %v3272
        %v3274 = vpop.f32.mrf.mxu0
        %v3275 = vadd.f32 %v3162, %v3274
        %3276 = vmatprep.mubr.bf16.mxu0 %v2138
        %3277 = vmatmul.mubr.bf16.gmra.mxu0 %v2137
        %v3278 = vpop.f32.mrf.mxu0
        %v3279 = vadd.f32 %v3166, %v3278
        %v3280 = vpop.f32.mrf.mxu0
        %v3281 = vadd.f32 %v3168, %v3280
        %v3282 = vpop.f32.mrf.mxu0
        %v3283 = vadd.f32 %v3170, %v3282
        %v3284 = vpop.f32.mrf.mxu0
        %v3285 = vadd.f32 %v3172, %v3284
        %3286 = vmatprep.mubr.bf16.mxu0 %v2165
        %3287 = vmatmul.mubr.bf16.gmra.mxu0 %v2164
        %v3288 = vpop.f32.mrf.mxu0
        %v3289 = vadd.f32 %v3176, %v3288
        %v3290 = vpop.f32.mrf.mxu0
        %v3291 = vadd.f32 %v3178, %v3290
        %v3292 = vpop.f32.mrf.mxu0
        %v3293 = vadd.f32 %v3180, %v3292
        %v3294 = vpop.f32.mrf.mxu0
        %v3295 = vadd.f32 %v3182, %v3294
        %3296 = vdwg.mxu0
        %3297 = vmatprep.subr.bf16.mxu0 %v1144
        %3298 = vmatpush1.bf16.msra.mxu0 %v1143
        %3299 = vmatprep.subr.bf16.mxu0 %v1142
        %3300 = vmatpush1.bf16.msra.mxu0 %v1141
        %3301 = vmatprep.subr.bf16.mxu0 %v1140
        %3302 = vmatpush1.bf16.msra.mxu0 %v1139
        %3303 = vmatprep.subr.bf16.mxu0 %v1138
        %3304 = vmatpush1.bf16.msra.mxu0 %v1137
        %3305 = vmatprep.subr.bf16.mxu0 %v1136
        %3306 = vmatpush1.bf16.msra.mxu0 %v1135
        %3307 = vmatprep.subr.bf16.mxu0 %v1134
        %3308 = vmatpush1.bf16.msra.mxu0 %v1133
        %3309 = vmatprep.subr.bf16.mxu0 %v1132
        %3310 = vmatpush1.bf16.msra.mxu0 %v1131
        %3311 = vmatprep.subr.bf16.mxu0 %v1130
        %3312 = vmatpush1.bf16.msra.mxu0 %v1129
        %3313 = vmatprep.subr.bf16.mxu0 %v1160
        %3314 = vmatpush2.bf16.msra.mxu0 %v1159
        %3315 = vmatprep.subr.bf16.mxu0 %v1158
        %3316 = vmatpush2.bf16.msra.mxu0 %v1157
        %3317 = vmatprep.subr.bf16.mxu0 %v1156
        %3318 = vmatpush2.bf16.msra.mxu0 %v1155
        %3319 = vmatprep.subr.bf16.mxu0 %v1154
        %3320 = vmatpush2.bf16.msra.mxu0 %v1153
        %3321 = vmatprep.subr.bf16.mxu0 %v1152
        %3322 = vmatpush2.bf16.msra.mxu0 %v1151
        %3323 = vmatprep.subr.bf16.mxu0 %v1150
        %3324 = vmatpush2.bf16.msra.mxu0 %v1149
        %3325 = vmatprep.subr.bf16.mxu0 %v1148
        %3326 = vmatpush2.bf16.msra.mxu0 %v1147
        %3327 = vmatprep.subr.bf16.mxu0 %v1146
        %3328 = vmatpush2.bf16.msra.mxu0 %v1145
        %3329 = vmatprep.mubr.bf16.mxu0 %v1978
        %3330 = vmatmul.mubr.bf16.gmra.mxu0 %v1977
        %v3331 = vpop.f32.mrf.mxu0
        %v3332 = vadd.f32 %v3219, %v3331
        %v3333 = vpop.f32.mrf.mxu0
        %v3334 = vadd.f32 %v3221, %v3333
        %v3335 = vpop.f32.mrf.mxu0
        %v3336 = vadd.f32 %v3223, %v3335
        %v3337 = vpop.f32.mrf.mxu0
        %v3338 = vadd.f32 %v3225, %v3337
        %3339 = vmatprep.mubr.bf16.mxu0 %v2005
        %3340 = vmatmul.mubr.bf16.gmra.mxu0 %v2004
        %v3341 = vpop.f32.mrf.mxu0
        %v3342 = vadd.f32 %v3229, %v3341
        %v3343 = vpop.f32.mrf.mxu0
        %v3344 = vadd.f32 %v3231, %v3343
        %v3345 = vpop.f32.mrf.mxu0
        %v3346 = vadd.f32 %v3233, %v3345
        %v3347 = vpop.f32.mrf.mxu0
        %v3348 = vadd.f32 %v3235, %v3347
        %3349 = vmatprep.mubr.bf16.mxu0 %v2032
        %3350 = vmatmul.mubr.bf16.gmra.mxu0 %v2031
        %v3351 = vpop.f32.mrf.mxu0
        %v3352 = vadd.f32 %v3239, %v3351
        %v3353 = vpop.f32.mrf.mxu0
        %v3354 = vadd.f32 %v3241, %v3353
        %v3355 = vpop.f32.mrf.mxu0
        %v3356 = vadd.f32 %v3243, %v3355
        %v3357 = vpop.f32.mrf.mxu0
        %v3358 = vadd.f32 %v3245, %v3357
        %3359 = vmatprep.mubr.bf16.mxu0 %v2059
        %3360 = vmatmul.mubr.bf16.gmra.mxu0 %v2058
        %v3361 = vpop.f32.mrf.mxu0
        %v3362 = vadd.f32 %v3249, %v3361
        %v3363 = vpop.f32.mrf.mxu0
        %v3364 = vadd.f32 %v3251, %v3363
        %v3365 = vpop.f32.mrf.mxu0
        %v3366 = vadd.f32 %v3253, %v3365
        %v3367 = vpop.f32.mrf.mxu0
        %v3368 = vadd.f32 %v3255, %v3367
        %3369 = vmatprep.mubr.bf16.mxu0 %v2086
        %3370 = vmatmul.mubr.bf16.gmra.mxu0 %v2085
        %v3371 = vpop.f32.mrf.mxu0
        %v3372 = vadd.f32 %v3259, %v3371
        %v3373 = vpop.f32.mrf.mxu0
        %v3374 = vadd.f32 %v3261, %v3373
        %v3375 = vpop.f32.mrf.mxu0
        %v3376 = vadd.f32 %v3263, %v3375
        %v3377 = vpop.f32.mrf.mxu0
        %v3378 = vadd.f32 %v3265, %v3377
        %3379 = vmatprep.mubr.bf16.mxu0 %v2113
        %3380 = vmatmul.mubr.bf16.gmra.mxu0 %v2112
        %v3381 = vpop.f32.mrf.mxu0
        %v3382 = vadd.f32 %v3269, %v3381
        %v3383 = vpop.f32.mrf.mxu0
        %v3384 = vadd.f32 %v3271, %v3383
        %v3385 = vpop.f32.mrf.mxu0
        %v3386 = vadd.f32 %v3273, %v3385
        %v3387 = vpop.f32.mrf.mxu0
        %v3388 = vadd.f32 %v3275, %v3387
        %3389 = vmatprep.mubr.bf16.mxu0 %v2140
        %3390 = vmatmul.mubr.bf16.gmra.mxu0 %v2139
        %v3391 = vpop.f32.mrf.mxu0
        %v3392 = vadd.f32 %v3279, %v3391
        %v3393 = vpop.f32.mrf.mxu0
        %v3394 = vadd.f32 %v3281, %v3393
        %v3395 = vpop.f32.mrf.mxu0
        %v3396 = vadd.f32 %v3283, %v3395
        %v3397 = vpop.f32.mrf.mxu0
        %v3398 = vadd.f32 %v3285, %v3397
        %3399 = vmatprep.mubr.bf16.mxu0 %v2167
        %3400 = vmatmul.mubr.bf16.gmra.mxu0 %v2166
        %v3401 = vpop.f32.mrf.mxu0
        %v3402 = vadd.f32 %v3289, %v3401
        %v3403 = vpop.f32.mrf.mxu0
        %v3404 = vadd.f32 %v3291, %v3403
        %v3405 = vpop.f32.mrf.mxu0
        %v3406 = vadd.f32 %v3293, %v3405
        %v3407 = vpop.f32.mrf.mxu0
        %v3408 = vadd.f32 %v3295, %v3407
        %3409 = vdwg.mxu0
        %3410 = vmatprep.subr.bf16.mxu0 %v1176
        %3411 = vmatpush1.bf16.msra.mxu0 %v1175
        %3412 = vmatprep.subr.bf16.mxu0 %v1174
        %3413 = vmatpush1.bf16.msra.mxu0 %v1173
        %3414 = vmatprep.subr.bf16.mxu0 %v1172
        %3415 = vmatpush1.bf16.msra.mxu0 %v1171
        %3416 = vmatprep.subr.bf16.mxu0 %v1170
        %3417 = vmatpush1.bf16.msra.mxu0 %v1169
        %3418 = vmatprep.subr.bf16.mxu0 %v1168
        %3419 = vmatpush1.bf16.msra.mxu0 %v1167
        %3420 = vmatprep.subr.bf16.mxu0 %v1166
        %3421 = vmatpush1.bf16.msra.mxu0 %v1165
        %3422 = vmatprep.subr.bf16.mxu0 %v1164
        %3423 = vmatpush1.bf16.msra.mxu0 %v1163
        %3424 = vmatprep.subr.bf16.mxu0 %v1162
        %3425 = vmatpush1.bf16.msra.mxu0 %v1161
        %3426 = vmatprep.subr.bf16.mxu0 %v1192
        %3427 = vmatpush2.bf16.msra.mxu0 %v1191
        %3428 = vmatprep.subr.bf16.mxu0 %v1190
        %3429 = vmatpush2.bf16.msra.mxu0 %v1189
        %3430 = vmatprep.subr.bf16.mxu0 %v1188
        %3431 = vmatpush2.bf16.msra.mxu0 %v1187
        %3432 = vmatprep.subr.bf16.mxu0 %v1186
        %3433 = vmatpush2.bf16.msra.mxu0 %v1185
        %3434 = vmatprep.subr.bf16.mxu0 %v1184
        %3435 = vmatpush2.bf16.msra.mxu0 %v1183
        %3436 = vmatprep.subr.bf16.mxu0 %v1182
        %3437 = vmatpush2.bf16.msra.mxu0 %v1181
        %3438 = vmatprep.subr.bf16.mxu0 %v1180
        %3439 = vmatpush2.bf16.msra.mxu0 %v1179
        %3440 = vmatprep.subr.bf16.mxu0 %v1178
        %3441 = vmatpush2.bf16.msra.mxu0 %v1177
        %3442 = vmatprep.mubr.bf16.mxu0 %v1980
        %3443 = vmatmul.mubr.bf16.gmra.mxu0 %v1979
        %v3444 = vpop.f32.mrf.mxu0
        %v3445 = vadd.f32 %v3332, %v3444
        %v3446 = vpop.f32.mrf.mxu0
        %v3447 = vadd.f32 %v3334, %v3446
        %v3448 = vpop.f32.mrf.mxu0
        %v3449 = vadd.f32 %v3336, %v3448
        %v3450 = vpop.f32.mrf.mxu0
        %v3451 = vadd.f32 %v3338, %v3450
        %3452 = vmatprep.mubr.bf16.mxu0 %v2007
        %3453 = vmatmul.mubr.bf16.gmra.mxu0 %v2006
        %v3454 = vpop.f32.mrf.mxu0
        %v3455 = vadd.f32 %v3342, %v3454
        %v3456 = vpop.f32.mrf.mxu0
        %v3457 = vadd.f32 %v3344, %v3456
        %v3458 = vpop.f32.mrf.mxu0
        %v3459 = vadd.f32 %v3346, %v3458
        %v3460 = vpop.f32.mrf.mxu0
        %v3461 = vadd.f32 %v3348, %v3460
        %3462 = vmatprep.mubr.bf16.mxu0 %v2034
        %3463 = vmatmul.mubr.bf16.gmra.mxu0 %v2033
        %v3464 = vpop.f32.mrf.mxu0
        %v3465 = vadd.f32 %v3352, %v3464
        %v3466 = vpop.f32.mrf.mxu0
        %v3467 = vadd.f32 %v3354, %v3466
        %v3468 = vpop.f32.mrf.mxu0
        %v3469 = vadd.f32 %v3356, %v3468
        %v3470 = vpop.f32.mrf.mxu0
        %v3471 = vadd.f32 %v3358, %v3470
        %3472 = vmatprep.mubr.bf16.mxu0 %v2061
        %3473 = vmatmul.mubr.bf16.gmra.mxu0 %v2060
        %v3474 = vpop.f32.mrf.mxu0
        %v3475 = vadd.f32 %v3362, %v3474
        %v3476 = vpop.f32.mrf.mxu0
        %v3477 = vadd.f32 %v3364, %v3476
        %v3478 = vpop.f32.mrf.mxu0
        %v3479 = vadd.f32 %v3366, %v3478
        %v3480 = vpop.f32.mrf.mxu0
        %v3481 = vadd.f32 %v3368, %v3480
        %3482 = vmatprep.mubr.bf16.mxu0 %v2088
        %3483 = vmatmul.mubr.bf16.gmra.mxu0 %v2087
        %v3484 = vpop.f32.mrf.mxu0
        %v3485 = vadd.f32 %v3372, %v3484
        %v3486 = vpop.f32.mrf.mxu0
        %v3487 = vadd.f32 %v3374, %v3486
        %v3488 = vpop.f32.mrf.mxu0
        %v3489 = vadd.f32 %v3376, %v3488
        %v3490 = vpop.f32.mrf.mxu0
        %v3491 = vadd.f32 %v3378, %v3490
        %3492 = vmatprep.mubr.bf16.mxu0 %v2115
        %3493 = vmatmul.mubr.bf16.gmra.mxu0 %v2114
        %v3494 = vpop.f32.mrf.mxu0
        %v3495 = vadd.f32 %v3382, %v3494
        %v3496 = vpop.f32.mrf.mxu0
        %v3497 = vadd.f32 %v3384, %v3496
        %v3498 = vpop.f32.mrf.mxu0
        %v3499 = vadd.f32 %v3386, %v3498
        %v3500 = vpop.f32.mrf.mxu0
        %v3501 = vadd.f32 %v3388, %v3500
        %3502 = vmatprep.mubr.bf16.mxu0 %v2142
        %3503 = vmatmul.mubr.bf16.gmra.mxu0 %v2141
        %v3504 = vpop.f32.mrf.mxu0
        %v3505 = vadd.f32 %v3392, %v3504
        %v3506 = vpop.f32.mrf.mxu0
        %v3507 = vadd.f32 %v3394, %v3506
        %v3508 = vpop.f32.mrf.mxu0
        %v3509 = vadd.f32 %v3396, %v3508
        %v3510 = vpop.f32.mrf.mxu0
        %v3511 = vadd.f32 %v3398, %v3510
        %3512 = vmatprep.mubr.bf16.mxu0 %v2169
        %3513 = vmatmul.mubr.bf16.gmra.mxu0 %v2168
        %v3514 = vpop.f32.mrf.mxu0
        %v3515 = vadd.f32 %v3402, %v3514
        %v3516 = vpop.f32.mrf.mxu0
        %v3517 = vadd.f32 %v3404, %v3516
        %v3518 = vpop.f32.mrf.mxu0
        %v3519 = vadd.f32 %v3406, %v3518
        %v3520 = vpop.f32.mrf.mxu0
        %v3521 = vadd.f32 %v3408, %v3520
        %3522 = vdwg.mxu0
        %3523 = vmatprep.subr.bf16.mxu0 %v1208
        %3524 = vmatpush1.bf16.msra.mxu0 %v1207
        %3525 = vmatprep.subr.bf16.mxu0 %v1206
        %3526 = vmatpush1.bf16.msra.mxu0 %v1205
        %3527 = vmatprep.subr.bf16.mxu0 %v1204
        %3528 = vmatpush1.bf16.msra.mxu0 %v1203
        %3529 = vmatprep.subr.bf16.mxu0 %v1202
        %3530 = vmatpush1.bf16.msra.mxu0 %v1201
        %3531 = vmatprep.subr.bf16.mxu0 %v1200
        %3532 = vmatpush1.bf16.msra.mxu0 %v1199
        %3533 = vmatprep.subr.bf16.mxu0 %v1198
        %3534 = vmatpush1.bf16.msra.mxu0 %v1197
        %3535 = vmatprep.subr.bf16.mxu0 %v1196
        %3536 = vmatpush1.bf16.msra.mxu0 %v1195
        %3537 = vmatprep.subr.bf16.mxu0 %v1194
        %3538 = vmatpush1.bf16.msra.mxu0 %v1193
        %3539 = vmatprep.subr.bf16.mxu0 %v1224
        %3540 = vmatpush2.bf16.msra.mxu0 %v1223
        %3541 = vmatprep.subr.bf16.mxu0 %v1222
        %3542 = vmatpush2.bf16.msra.mxu0 %v1221
        %3543 = vmatprep.subr.bf16.mxu0 %v1220
        %3544 = vmatpush2.bf16.msra.mxu0 %v1219
        %3545 = vmatprep.subr.bf16.mxu0 %v1218
        %3546 = vmatpush2.bf16.msra.mxu0 %v1217
        %3547 = vmatprep.subr.bf16.mxu0 %v1216
        %3548 = vmatpush2.bf16.msra.mxu0 %v1215
        %3549 = vmatprep.subr.bf16.mxu0 %v1214
        %3550 = vmatpush2.bf16.msra.mxu0 %v1213
        %3551 = vmatprep.subr.bf16.mxu0 %v1212
        %3552 = vmatpush2.bf16.msra.mxu0 %v1211
        %3553 = vmatprep.subr.bf16.mxu0 %v1210
        %3554 = vmatpush2.bf16.msra.mxu0 %v1209
        %3555 = vmatprep.mubr.bf16.mxu0 %v1982
        %3556 = vmatmul.mubr.bf16.gmra.mxu0 %v1981
        %v3557 = vpop.f32.mrf.mxu0
        %v3558 = vadd.f32 %v3445, %v3557
        %v3559 = vpop.f32.mrf.mxu0
        %v3560 = vadd.f32 %v3447, %v3559
        %v3561 = vpop.f32.mrf.mxu0
        %v3562 = vadd.f32 %v3449, %v3561
        %v3563 = vpop.f32.mrf.mxu0
        %v3564 = vadd.f32 %v3451, %v3563
        %3565 = vmatprep.mubr.bf16.mxu0 %v2009
        %3566 = vmatmul.mubr.bf16.gmra.mxu0 %v2008
        %v3567 = vpop.f32.mrf.mxu0
        %v3568 = vadd.f32 %v3455, %v3567
        %v3569 = vpop.f32.mrf.mxu0
        %v3570 = vadd.f32 %v3457, %v3569
        %v3571 = vpop.f32.mrf.mxu0
        %v3572 = vadd.f32 %v3459, %v3571
        %v3573 = vpop.f32.mrf.mxu0
        %v3574 = vadd.f32 %v3461, %v3573
        %3575 = vmatprep.mubr.bf16.mxu0 %v2036
        %3576 = vmatmul.mubr.bf16.gmra.mxu0 %v2035
        %v3577 = vpop.f32.mrf.mxu0
        %v3578 = vadd.f32 %v3465, %v3577
        %v3579 = vpop.f32.mrf.mxu0
        %v3580 = vadd.f32 %v3467, %v3579
        %v3581 = vpop.f32.mrf.mxu0
        %v3582 = vadd.f32 %v3469, %v3581
        %v3583 = vpop.f32.mrf.mxu0
        %v3584 = vadd.f32 %v3471, %v3583
        %3585 = vmatprep.mubr.bf16.mxu0 %v2063
        %3586 = vmatmul.mubr.bf16.gmra.mxu0 %v2062
        %v3587 = vpop.f32.mrf.mxu0
        %v3588 = vadd.f32 %v3475, %v3587
        %v3589 = vpop.f32.mrf.mxu0
        %v3590 = vadd.f32 %v3477, %v3589
        %v3591 = vpop.f32.mrf.mxu0
        %v3592 = vadd.f32 %v3479, %v3591
        %v3593 = vpop.f32.mrf.mxu0
        %v3594 = vadd.f32 %v3481, %v3593
        %3595 = vmatprep.mubr.bf16.mxu0 %v2090
        %3596 = vmatmul.mubr.bf16.gmra.mxu0 %v2089
        %v3597 = vpop.f32.mrf.mxu0
        %v3598 = vadd.f32 %v3485, %v3597
        %v3599 = vpop.f32.mrf.mxu0
        %v3600 = vadd.f32 %v3487, %v3599
        %v3601 = vpop.f32.mrf.mxu0
        %v3602 = vadd.f32 %v3489, %v3601
        %v3603 = vpop.f32.mrf.mxu0
        %v3604 = vadd.f32 %v3491, %v3603
        %3605 = vmatprep.mubr.bf16.mxu0 %v2117
        %3606 = vmatmul.mubr.bf16.gmra.mxu0 %v2116
        %v3607 = vpop.f32.mrf.mxu0
        %v3608 = vadd.f32 %v3495, %v3607
        %v3609 = vpop.f32.mrf.mxu0
        %v3610 = vadd.f32 %v3497, %v3609
        %v3611 = vpop.f32.mrf.mxu0
        %v3612 = vadd.f32 %v3499, %v3611
        %v3613 = vpop.f32.mrf.mxu0
        %v3614 = vadd.f32 %v3501, %v3613
        %3615 = vmatprep.mubr.bf16.mxu0 %v2144
        %3616 = vmatmul.mubr.bf16.gmra.mxu0 %v2143
        %v3617 = vpop.f32.mrf.mxu0
        %v3618 = vadd.f32 %v3505, %v3617
        %v3619 = vpop.f32.mrf.mxu0
        %v3620 = vadd.f32 %v3507, %v3619
        %v3621 = vpop.f32.mrf.mxu0
        %v3622 = vadd.f32 %v3509, %v3621
        %v3623 = vpop.f32.mrf.mxu0
        %v3624 = vadd.f32 %v3511, %v3623
        %3625 = vmatprep.mubr.bf16.mxu0 %v2171
        %3626 = vmatmul.mubr.bf16.gmra.mxu0 %v2170
        %v3627 = vpop.f32.mrf.mxu0
        %v3628 = vadd.f32 %v3515, %v3627
        %v3629 = vpop.f32.mrf.mxu0
        %v3630 = vadd.f32 %v3517, %v3629
        %v3631 = vpop.f32.mrf.mxu0
        %v3632 = vadd.f32 %v3519, %v3631
        %v3633 = vpop.f32.mrf.mxu0
        %v3634 = vadd.f32 %v3521, %v3633
        %3635 = vdwg.mxu0
        %3636 = vmatprep.subr.bf16.mxu0 %v1240
        %3637 = vmatpush1.bf16.msra.mxu0 %v1239
        %3638 = vmatprep.subr.bf16.mxu0 %v1238
        %3639 = vmatpush1.bf16.msra.mxu0 %v1237
        %3640 = vmatprep.subr.bf16.mxu0 %v1236
        %3641 = vmatpush1.bf16.msra.mxu0 %v1235
        %3642 = vmatprep.subr.bf16.mxu0 %v1234
        %3643 = vmatpush1.bf16.msra.mxu0 %v1233
        %3644 = vmatprep.subr.bf16.mxu0 %v1232
        %3645 = vmatpush1.bf16.msra.mxu0 %v1231
        %3646 = vmatprep.subr.bf16.mxu0 %v1230
        %3647 = vmatpush1.bf16.msra.mxu0 %v1229
        %3648 = vmatprep.subr.bf16.mxu0 %v1228
        %3649 = vmatpush1.bf16.msra.mxu0 %v1227
        %3650 = vmatprep.subr.bf16.mxu0 %v1226
        %3651 = vmatpush1.bf16.msra.mxu0 %v1225
        %3652 = vmatprep.subr.bf16.mxu0 %v1256
        %3653 = vmatpush2.bf16.msra.mxu0 %v1255
        %3654 = vmatprep.subr.bf16.mxu0 %v1254
        %3655 = vmatpush2.bf16.msra.mxu0 %v1253
        %3656 = vmatprep.subr.bf16.mxu0 %v1252
        %3657 = vmatpush2.bf16.msra.mxu0 %v1251
        %3658 = vmatprep.subr.bf16.mxu0 %v1250
        %3659 = vmatpush2.bf16.msra.mxu0 %v1249
        %3660 = vmatprep.subr.bf16.mxu0 %v1248
        %3661 = vmatpush2.bf16.msra.mxu0 %v1247
        %3662 = vmatprep.subr.bf16.mxu0 %v1246
        %3663 = vmatpush2.bf16.msra.mxu0 %v1245
        %3664 = vmatprep.subr.bf16.mxu0 %v1244
        %3665 = vmatpush2.bf16.msra.mxu0 %v1243
        %3666 = vmatprep.subr.bf16.mxu0 %v1242
        %3667 = vmatpush2.bf16.msra.mxu0 %v1241
        %3668 = vmatprep.mubr.bf16.mxu0 %v1984
        %3669 = vmatmul.mubr.bf16.gmra.mxu0 %v1983
        %v3670 = vpop.f32.mrf.mxu0
        %v3671 = vadd.f32 %v3558, %v3670
        %v3672 = vpop.f32.mrf.mxu0
        %v3673 = vadd.f32 %v3560, %v3672
        %v3674 = vpop.f32.mrf.mxu0
        %v3675 = vadd.f32 %v3562, %v3674
        %v3676 = vpop.f32.mrf.mxu0
        %v3677 = vadd.f32 %v3564, %v3676
        %3678 = vmatprep.mubr.bf16.mxu0 %v2011
        %3679 = vmatmul.mubr.bf16.gmra.mxu0 %v2010
        %v3680 = vpop.f32.mrf.mxu0
        %v3681 = vadd.f32 %v3568, %v3680
        %v3682 = vpop.f32.mrf.mxu0
        %v3683 = vadd.f32 %v3570, %v3682
        %v3684 = vpop.f32.mrf.mxu0
        %v3685 = vadd.f32 %v3572, %v3684
        %v3686 = vpop.f32.mrf.mxu0
        %v3687 = vadd.f32 %v3574, %v3686
        %3688 = vmatprep.mubr.bf16.mxu0 %v2038
        %3689 = vmatmul.mubr.bf16.gmra.mxu0 %v2037
        %v3690 = vpop.f32.mrf.mxu0
        %v3691 = vadd.f32 %v3578, %v3690
        %v3692 = vpop.f32.mrf.mxu0
        %v3693 = vadd.f32 %v3580, %v3692
        %v3694 = vpop.f32.mrf.mxu0
        %v3695 = vadd.f32 %v3582, %v3694
        %v3696 = vpop.f32.mrf.mxu0
        %v3697 = vadd.f32 %v3584, %v3696
        %3698 = vmatprep.mubr.bf16.mxu0 %v2065
        %3699 = vmatmul.mubr.bf16.gmra.mxu0 %v2064
        %v3700 = vpop.f32.mrf.mxu0
        %v3701 = vadd.f32 %v3588, %v3700
        %v3702 = vpop.f32.mrf.mxu0
        %v3703 = vadd.f32 %v3590, %v3702
        %v3704 = vpop.f32.mrf.mxu0
        %v3705 = vadd.f32 %v3592, %v3704
        %v3706 = vpop.f32.mrf.mxu0
        %v3707 = vadd.f32 %v3594, %v3706
        %3708 = vmatprep.mubr.bf16.mxu0 %v2092
        %3709 = vmatmul.mubr.bf16.gmra.mxu0 %v2091
        %v3710 = vpop.f32.mrf.mxu0
        %v3711 = vadd.f32 %v3598, %v3710
        %v3712 = vpop.f32.mrf.mxu0
        %v3713 = vadd.f32 %v3600, %v3712
        %v3714 = vpop.f32.mrf.mxu0
        %v3715 = vadd.f32 %v3602, %v3714
        %v3716 = vpop.f32.mrf.mxu0
        %v3717 = vadd.f32 %v3604, %v3716
        %3718 = vmatprep.mubr.bf16.mxu0 %v2119
        %3719 = vmatmul.mubr.bf16.gmra.mxu0 %v2118
        %v3720 = vpop.f32.mrf.mxu0
        %v3721 = vadd.f32 %v3608, %v3720
        %v3722 = vpop.f32.mrf.mxu0
        %v3723 = vadd.f32 %v3610, %v3722
        %v3724 = vpop.f32.mrf.mxu0
        %v3725 = vadd.f32 %v3612, %v3724
        %v3726 = vpop.f32.mrf.mxu0
        %v3727 = vadd.f32 %v3614, %v3726
        %3728 = vmatprep.mubr.bf16.mxu0 %v2146
        %3729 = vmatmul.mubr.bf16.gmra.mxu0 %v2145
        %v3730 = vpop.f32.mrf.mxu0
        %v3731 = vadd.f32 %v3618, %v3730
        %v3732 = vpop.f32.mrf.mxu0
        %v3733 = vadd.f32 %v3620, %v3732
        %v3734 = vpop.f32.mrf.mxu0
        %v3735 = vadd.f32 %v3622, %v3734
        %v3736 = vpop.f32.mrf.mxu0
        %v3737 = vadd.f32 %v3624, %v3736
        %3738 = vmatprep.mubr.bf16.mxu0 %v2173
        %3739 = vmatmul.mubr.bf16.gmra.mxu0 %v2172
        %v3740 = vpop.f32.mrf.mxu0
        %v3741 = vadd.f32 %v3628, %v3740
        %v3742 = vpop.f32.mrf.mxu0
        %v3743 = vadd.f32 %v3630, %v3742
        %v3744 = vpop.f32.mrf.mxu0
        %v3745 = vadd.f32 %v3632, %v3744
        %v3746 = vpop.f32.mrf.mxu0
        %v3747 = vadd.f32 %v3634, %v3746
        %3748 = vdwg.mxu0
        %3749 = vmatprep.subr.bf16.mxu0 %v1272
        %3750 = vmatpush1.bf16.msra.mxu0 %v1271
        %3751 = vmatprep.subr.bf16.mxu0 %v1270
        %3752 = vmatpush1.bf16.msra.mxu0 %v1269
        %3753 = vmatprep.subr.bf16.mxu0 %v1268
        %3754 = vmatpush1.bf16.msra.mxu0 %v1267
        %3755 = vmatprep.subr.bf16.mxu0 %v1266
        %3756 = vmatpush1.bf16.msra.mxu0 %v1265
        %3757 = vmatprep.subr.bf16.mxu0 %v1264
        %3758 = vmatpush1.bf16.msra.mxu0 %v1263
        %3759 = vmatprep.subr.bf16.mxu0 %v1262
        %3760 = vmatpush1.bf16.msra.mxu0 %v1261
        %3761 = vmatprep.subr.bf16.mxu0 %v1260
        %3762 = vmatpush1.bf16.msra.mxu0 %v1259
        %3763 = vmatprep.subr.bf16.mxu0 %v1258
        %3764 = vmatpush1.bf16.msra.mxu0 %v1257
        %3765 = vmatprep.subr.bf16.mxu0 %v1288
        %3766 = vmatpush2.bf16.msra.mxu0 %v1287
        %3767 = vmatprep.subr.bf16.mxu0 %v1286
        %3768 = vmatpush2.bf16.msra.mxu0 %v1285
        %3769 = vmatprep.subr.bf16.mxu0 %v1284
        %3770 = vmatpush2.bf16.msra.mxu0 %v1283
        %3771 = vmatprep.subr.bf16.mxu0 %v1282
        %3772 = vmatpush2.bf16.msra.mxu0 %v1281
        %3773 = vmatprep.subr.bf16.mxu0 %v1280
        %3774 = vmatpush2.bf16.msra.mxu0 %v1279
        %3775 = vmatprep.subr.bf16.mxu0 %v1278
        %3776 = vmatpush2.bf16.msra.mxu0 %v1277
        %3777 = vmatprep.subr.bf16.mxu0 %v1276
        %3778 = vmatpush2.bf16.msra.mxu0 %v1275
        %3779 = vmatprep.subr.bf16.mxu0 %v1274
        %3780 = vmatpush2.bf16.msra.mxu0 %v1273
        %3781 = vmatprep.mubr.bf16.mxu0 %v1986
        %3782 = vmatmul.mubr.bf16.gmra.mxu0 %v1985
        %v3783 = vpop.f32.mrf.mxu0
        %v3784 = vadd.f32 %v3671, %v3783
        %v3785 = vpop.f32.mrf.mxu0
        %v3786 = vadd.f32 %v3673, %v3785
        %v3787 = vpop.f32.mrf.mxu0
        %v3788 = vadd.f32 %v3675, %v3787
        %v3789 = vpop.f32.mrf.mxu0
        %v3790 = vadd.f32 %v3677, %v3789
        %3791 = vmatprep.mubr.bf16.mxu0 %v2013
        %3792 = vmatmul.mubr.bf16.gmra.mxu0 %v2012
        %v3793 = vpop.f32.mrf.mxu0
        %v3794 = vadd.f32 %v3681, %v3793
        %v3795 = vpop.f32.mrf.mxu0
        %v3796 = vadd.f32 %v3683, %v3795
        %v3797 = vpop.f32.mrf.mxu0
        %v3798 = vadd.f32 %v3685, %v3797
        %v3799 = vpop.f32.mrf.mxu0
        %v3800 = vadd.f32 %v3687, %v3799
        %3801 = vmatprep.mubr.bf16.mxu0 %v2040
        %3802 = vmatmul.mubr.bf16.gmra.mxu0 %v2039
        %v3803 = vpop.f32.mrf.mxu0
        %v3804 = vadd.f32 %v3691, %v3803
        %v3805 = vpop.f32.mrf.mxu0
        %v3806 = vadd.f32 %v3693, %v3805
        %v3807 = vpop.f32.mrf.mxu0
        %v3808 = vadd.f32 %v3695, %v3807
        %v3809 = vpop.f32.mrf.mxu0
        %v3810 = vadd.f32 %v3697, %v3809
        %3811 = vmatprep.mubr.bf16.mxu0 %v2067
        %3812 = vmatmul.mubr.bf16.gmra.mxu0 %v2066
        %v3813 = vpop.f32.mrf.mxu0
        %v3814 = vadd.f32 %v3701, %v3813
        %v3815 = vpop.f32.mrf.mxu0
        %v3816 = vadd.f32 %v3703, %v3815
        %v3817 = vpop.f32.mrf.mxu0
        %v3818 = vadd.f32 %v3705, %v3817
        %v3819 = vpop.f32.mrf.mxu0
        %v3820 = vadd.f32 %v3707, %v3819
        %3821 = vmatprep.mubr.bf16.mxu0 %v2094
        %3822 = vmatmul.mubr.bf16.gmra.mxu0 %v2093
        %v3823 = vpop.f32.mrf.mxu0
        %v3824 = vadd.f32 %v3711, %v3823
        %v3825 = vpop.f32.mrf.mxu0
        %v3826 = vadd.f32 %v3713, %v3825
        %v3827 = vpop.f32.mrf.mxu0
        %v3828 = vadd.f32 %v3715, %v3827
        %v3829 = vpop.f32.mrf.mxu0
        %v3830 = vadd.f32 %v3717, %v3829
        %3831 = vmatprep.mubr.bf16.mxu0 %v2121
        %3832 = vmatmul.mubr.bf16.gmra.mxu0 %v2120
        %v3833 = vpop.f32.mrf.mxu0
        %v3834 = vadd.f32 %v3721, %v3833
        %v3835 = vpop.f32.mrf.mxu0
        %v3836 = vadd.f32 %v3723, %v3835
        %v3837 = vpop.f32.mrf.mxu0
        %v3838 = vadd.f32 %v3725, %v3837
        %v3839 = vpop.f32.mrf.mxu0
        %v3840 = vadd.f32 %v3727, %v3839
        %3841 = vmatprep.mubr.bf16.mxu0 %v2148
        %3842 = vmatmul.mubr.bf16.gmra.mxu0 %v2147
        %v3843 = vpop.f32.mrf.mxu0
        %v3844 = vadd.f32 %v3731, %v3843
        %v3845 = vpop.f32.mrf.mxu0
        %v3846 = vadd.f32 %v3733, %v3845
        %v3847 = vpop.f32.mrf.mxu0
        %v3848 = vadd.f32 %v3735, %v3847
        %v3849 = vpop.f32.mrf.mxu0
        %v3850 = vadd.f32 %v3737, %v3849
        %3851 = vmatprep.mubr.bf16.mxu0 %v2175
        %3852 = vmatmul.mubr.bf16.gmra.mxu0 %v2174
        %v3853 = vpop.f32.mrf.mxu0
        %v3854 = vadd.f32 %v3741, %v3853
        %v3855 = vpop.f32.mrf.mxu0
        %v3856 = vadd.f32 %v3743, %v3855
        %v3857 = vpop.f32.mrf.mxu0
        %v3858 = vadd.f32 %v3745, %v3857
        %v3859 = vpop.f32.mrf.mxu0
        %v3860 = vadd.f32 %v3747, %v3859
        %3861 = vdwg.mxu0
        %3862 = vmatprep.subr.bf16.mxu0 %v1304
        %3863 = vmatpush1.bf16.msra.mxu0 %v1303
        %3864 = vmatprep.subr.bf16.mxu0 %v1302
        %3865 = vmatpush1.bf16.msra.mxu0 %v1301
        %3866 = vmatprep.subr.bf16.mxu0 %v1300
        %3867 = vmatpush1.bf16.msra.mxu0 %v1299
        %3868 = vmatprep.subr.bf16.mxu0 %v1298
        %3869 = vmatpush1.bf16.msra.mxu0 %v1297
        %3870 = vmatprep.subr.bf16.mxu0 %v1296
        %3871 = vmatpush1.bf16.msra.mxu0 %v1295
        %3872 = vmatprep.subr.bf16.mxu0 %v1294
        %3873 = vmatpush1.bf16.msra.mxu0 %v1293
        %3874 = vmatprep.subr.bf16.mxu0 %v1292
        %3875 = vmatpush1.bf16.msra.mxu0 %v1291
        %3876 = vmatprep.subr.bf16.mxu0 %v1290
        %3877 = vmatpush1.bf16.msra.mxu0 %v1289
        %3878 = vmatprep.subr.bf16.mxu0 0
        %3879 = vmatpush2.bf16.msra.mxu0 0
        %3880 = vmatprep.subr.bf16.mxu0 0
        %3881 = vmatpush2.bf16.msra.mxu0 0
        %3882 = vmatprep.subr.bf16.mxu0 0
        %3883 = vmatpush2.bf16.msra.mxu0 0
        %3884 = vmatprep.subr.bf16.mxu0 0
        %3885 = vmatpush2.bf16.msra.mxu0 0
        %3886 = vmatprep.subr.bf16.mxu0 0
        %3887 = vmatpush2.bf16.msra.mxu0 0
        %3888 = vmatprep.subr.bf16.mxu0 0
        %3889 = vmatpush2.bf16.msra.mxu0 0
        %3890 = vmatprep.subr.bf16.mxu0 0
        %3891 = vmatpush2.bf16.msra.mxu0 0
        %3892 = vmatprep.subr.bf16.mxu0 0
        %3893 = vmatpush2.bf16.msra.mxu0 0
        %3894 = vmatprep.mubr.bf16.mxu0 0
        %3895 = vmatmul.mubr.bf16.gmra.mxu0 %v1987
        %v3896 = vpop.f32.mrf.mxu0
        %v3897 = vadd.f32 %v3784, %v3896
        %v3898 = vpop.f32.mrf.mxu0
        %v3899 = vadd.f32 %v3786, %v3898
        %v3900 = vpop.f32.mrf.mxu0
        %v3901 = vadd.f32 %v3788, %v3900
        %v3902 = vpop.f32.mrf.mxu0
        %v3903 = vadd.f32 %v3790, %v3902
        %3904 = vmatprep.mubr.bf16.mxu0 0
        %3905 = vmatmul.mubr.bf16.gmra.mxu0 %v2014
        %v3906 = vpop.f32.mrf.mxu0
        %v3907 = vadd.f32 %v3794, %v3906
        %v3908 = vpop.f32.mrf.mxu0
        %v3909 = vadd.f32 %v3796, %v3908
        %v3910 = vpop.f32.mrf.mxu0
        %v3911 = vadd.f32 %v3798, %v3910
        %v3912 = vpop.f32.mrf.mxu0
        %v3913 = vadd.f32 %v3800, %v3912
        %3914 = vmatprep.mubr.bf16.mxu0 0
        %3915 = vmatmul.mubr.bf16.gmra.mxu0 %v2041
        %v3916 = vpop.f32.mrf.mxu0
        %v3917 = vadd.f32 %v3804, %v3916
        %v3918 = vpop.f32.mrf.mxu0
        %v3919 = vadd.f32 %v3806, %v3918
        %v3920 = vpop.f32.mrf.mxu0
        %v3921 = vadd.f32 %v3808, %v3920
        %v3922 = vpop.f32.mrf.mxu0
        %v3923 = vadd.f32 %v3810, %v3922
        %3924 = vmatprep.mubr.bf16.mxu0 0
        %3925 = vmatmul.mubr.bf16.gmra.mxu0 %v2068
        %v3926 = vpop.f32.mrf.mxu0
        %v3927 = vadd.f32 %v3814, %v3926
        %v3928 = vpop.f32.mrf.mxu0
        %v3929 = vadd.f32 %v3816, %v3928
        %v3930 = vpop.f32.mrf.mxu0
        %v3931 = vadd.f32 %v3818, %v3930
        %v3932 = vpop.f32.mrf.mxu0
        %v3933 = vadd.f32 %v3820, %v3932
        %3934 = vmatprep.mubr.bf16.mxu0 0
        %3935 = vmatmul.mubr.bf16.gmra.mxu0 %v2095
        %v3936 = vpop.f32.mrf.mxu0
        %v3937 = vadd.f32 %v3824, %v3936
        %v3938 = vpop.f32.mrf.mxu0
        %v3939 = vadd.f32 %v3826, %v3938
        %v3940 = vpop.f32.mrf.mxu0
        %v3941 = vadd.f32 %v3828, %v3940
        %v3942 = vpop.f32.mrf.mxu0
        %v3943 = vadd.f32 %v3830, %v3942
        %3944 = vmatprep.mubr.bf16.mxu0 0
        %3945 = vmatmul.mubr.bf16.gmra.mxu0 %v2122
        %v3946 = vpop.f32.mrf.mxu0
        %v3947 = vadd.f32 %v3834, %v3946
        %v3948 = vpop.f32.mrf.mxu0
        %v3949 = vadd.f32 %v3836, %v3948
        %v3950 = vpop.f32.mrf.mxu0
        %v3951 = vadd.f32 %v3838, %v3950
        %v3952 = vpop.f32.mrf.mxu0
        %v3953 = vadd.f32 %v3840, %v3952
        %3954 = vmatprep.mubr.bf16.mxu0 0
        %3955 = vmatmul.mubr.bf16.gmra.mxu0 %v2149
        %v3956 = vpop.f32.mrf.mxu0
        %v3957 = vadd.f32 %v3844, %v3956
        %v3958 = vpop.f32.mrf.mxu0
        %v3959 = vadd.f32 %v3846, %v3958
        %v3960 = vpop.f32.mrf.mxu0
        %v3961 = vadd.f32 %v3848, %v3960
        %v3962 = vpop.f32.mrf.mxu0
        %v3963 = vadd.f32 %v3850, %v3962
        %3964 = vmatprep.mubr.bf16.mxu0 0
        %3965 = vmatmul.mubr.bf16.gmra.mxu0 %v2176
        %v3966 = vpop.f32.mrf.mxu0
        %v3967 = vadd.f32 %v3854, %v3966
        %v3968 = vpop.f32.mrf.mxu0
        %v3969 = vadd.f32 %v3856, %v3968
        %v3970 = vpop.f32.mrf.mxu0
        %v3971 = vadd.f32 %v3858, %v3970
        %v3972 = vpop.f32.mrf.mxu0
        %v3973 = vadd.f32 %v3860, %v3972
        %3974 = vdwg.mxu0
        %v3975 = vadd.f32 %v625, %v3897
        %v3976 = vadd.f32 %v626, %v3899
        %v3977 = vadd.f32 %v627, %v3901
        %v3978 = vadd.f32 %v628, %v3903
        %v3979 = vadd.f32 %v629, %v3907
        %v3980 = vadd.f32 %v630, %v3909
        %v3981 = vadd.f32 %v631, %v3911
        %v3982 = vadd.f32 %v632, %v3913
        %v3983 = vadd.f32 %v633, %v3917
        %v3984 = vadd.f32 %v634, %v3919
        %v3985 = vadd.f32 %v635, %v3921
        %v3986 = vadd.f32 %v636, %v3923
        %v3987 = vadd.f32 %v637, %v3927
        %v3988 = vadd.f32 %v638, %v3929
        %v3989 = vadd.f32 %v639, %v3931
        %v3990 = vadd.f32 %v640, %v3933
        %v3991 = vadd.f32 %v641, %v3937
        %v3992 = vadd.f32 %v642, %v3939
        %v3993 = vadd.f32 %v643, %v3941
        %v3994 = vadd.f32 %v644, %v3943
        %v3995 = vadd.f32 %v645, %v3947
        %v3996 = vadd.f32 %v646, %v3949
        %v3997 = vadd.f32 %v647, %v3951
        %v3998 = vadd.f32 %v648, %v3953
        %v3999 = vadd.f32 %v649, %v3957
        %v4000 = vadd.f32 %v650, %v3959
        %v4001 = vadd.f32 %v651, %v3961
        %v4002 = vadd.f32 %v652, %v3963
        %v4003 = vadd.f32 %v653, %v3967
        %v4004 = vadd.f32 %v654, %v3969
        %v4005 = vadd.f32 %v655, %v3971
        %v4006 = vadd.f32 %v656, %v3973
        %4007 = vst [vmem:[#allocation2] sm:$0xff] %v3975
        %4008 = vst [vmem:[#allocation2 + $0x8] sm:$0xff] %v3976
        %4009 = vst [vmem:[#allocation2 + $0x10] sm:$0xff] %v3977
        %4010 = vst [vmem:[#allocation2 + $0x18] sm:$0xff] %v3978
        %4011 = vst [vmem:[#allocation2 + $0x20] sm:$0xff] %v3979
        %4012 = vst [vmem:[#allocation2 + $0x28] sm:$0xff] %v3980
        %4013 = vst [vmem:[#allocation2 + $0x30] sm:$0xff] %v3981
        %4014 = vst [vmem:[#allocation2 + $0x38] sm:$0xff] %v3982
        %4015 = vst [vmem:[#allocation2 + $0x40] sm:$0xff] %v3983
        %4016 = vst [vmem:[#allocation2 + $0x48] sm:$0xff] %v3984
        %4017 = vst [vmem:[#allocation2 + $0x50] sm:$0xff] %v3985
        %4018 = vst [vmem:[#allocation2 + $0x58] sm:$0xff] %v3986
        %4019 = vst [vmem:[#allocation2 + $0x60] sm:$0xff] %v3987
        %4020 = vst [vmem:[#allocation2 + $0x68] sm:$0xff] %v3988
        %4021 = vst [vmem:[#allocation2 + $0x70] sm:$0xff] %v3989
        %4022 = vst [vmem:[#allocation2 + $0x78] sm:$0xff] %v3990
        %4023 = vst [vmem:[#allocation2 + $0x80] sm:$0xff] %v3991
        %4024 = vst [vmem:[#allocation2 + $0x88] sm:$0xff] %v3992
        %4025 = vst [vmem:[#allocation2 + $0x90] sm:$0xff] %v3993
        %4026 = vst [vmem:[#allocation2 + $0x98] sm:$0xff] %v3994
        %4027 = vst [vmem:[#allocation2 + $0xa0] sm:$0xff] %v3995
        %4028 = vst [vmem:[#allocation2 + $0xa8] sm:$0xff] %v3996
        %4029 = vst [vmem:[#allocation2 + $0xb0] sm:$0xff] %v3997
        %4030 = vst [vmem:[#allocation2 + $0xb8] sm:$0xff] %v3998
        %4031 = vst [vmem:[#allocation2 + $0xc0] sm:$0xff] %v3999
        %4032 = vst [vmem:[#allocation2 + $0xc8] sm:$0xff] %v4000
        %4033 = vst [vmem:[#allocation2 + $0xd0] sm:$0xff] %v4001
        %4034 = vst [vmem:[#allocation2 + $0xd8] sm:$0xff] %v4002
        %4035 = vst [vmem:[#allocation2 + $0xe0] sm:$0xff] %v4003
        %4036 = vst [vmem:[#allocation2 + $0xe8] sm:$0xff] %v4004
        %4037 = vst [vmem:[#allocation2 + $0xf0] sm:$0xff] %v4005
        %4038 = vst [vmem:[#allocation2 + $0xf8] sm:$0xff] %v4006
        %p4039 = scmp.eq.s32.totalorder %s27, 3
        // Predicated region
        $region45: #{forward.4} parent=35 // pred_check
          %p4040 = pneg %p4039
        $region46: #{forward.4} parent=35 // pred_check_branch
          %4042 = sbr.rel (%p4040) target = $region48
        $region47: #{forward.4} parent=35 // pred_region
          %v4043 = vld [vmem:[#allocation2] sm:$0xff]
          %v4044 = vld [vmem:[#allocation2 + $0x8] sm:$0xff]
          %v4045 = vld [vmem:[#allocation2 + $0x10] sm:$0xff]
          %v4046 = vld [vmem:[#allocation2 + $0x18] sm:$0xff]
          %v4047 = vld [vmem:[#allocation2 + $0x20] sm:$0xff]
          %v4048 = vld [vmem:[#allocation2 + $0x28] sm:$0xff]
          %v4049 = vld [vmem:[#allocation2 + $0x30] sm:$0xff]
          %v4050 = vld [vmem:[#allocation2 + $0x38] sm:$0xff]
          %v4051 = vld [vmem:[#allocation2 + $0x40] sm:$0xff]
          %v4052 = vld [vmem:[#allocation2 + $0x48] sm:$0xff]
          %v4053 = vld [vmem:[#allocation2 + $0x50] sm:$0xff]
          %v4054 = vld [vmem:[#allocation2 + $0x58] sm:$0xff]
          %v4055 = vld [vmem:[#allocation2 + $0x60] sm:$0xff]
          %v4056 = vld [vmem:[#allocation2 + $0x68] sm:$0xff]
          %v4057 = vld [vmem:[#allocation2 + $0x70] sm:$0xff]
          %v4058 = vld [vmem:[#allocation2 + $0x78] sm:$0xff]
          %v4059 = vld [vmem:[#allocation2 + $0x80] sm:$0xff]
          %v4060 = vld [vmem:[#allocation2 + $0x88] sm:$0xff]
          %v4061 = vld [vmem:[#allocation2 + $0x90] sm:$0xff]
          %v4062 = vld [vmem:[#allocation2 + $0x98] sm:$0xff]
          %v4063 = vld [vmem:[#allocation2 + $0xa0] sm:$0xff]
          %v4064 = vld [vmem:[#allocation2 + $0xa8] sm:$0xff]
          %v4065 = vld [vmem:[#allocation2 + $0xb0] sm:$0xff]
          %v4066 = vld [vmem:[#allocation2 + $0xb8] sm:$0xff]
          %v4067 = vld [vmem:[#allocation2 + $0xc0] sm:$0xff]
          %v4068 = vld [vmem:[#allocation2 + $0xc8] sm:$0xff]
          %v4069 = vld [vmem:[#allocation2 + $0xd0] sm:$0xff]
          %v4070 = vld [vmem:[#allocation2 + $0xd8] sm:$0xff]
          %v4071 = vld [vmem:[#allocation2 + $0xe0] sm:$0xff]
          %v4072 = vld [vmem:[#allocation2 + $0xe8] sm:$0xff]
          %v4073 = vld [vmem:[#allocation2 + $0xf0] sm:$0xff]
          %v4074 = vld [vmem:[#allocation2 + $0xf8] sm:$0xff]
          %v4075 = vld [vmem:[%s346] sm:$0x3]
          %v4077 = vlaneseq
          %v4078 = vshrl.u32 %v4077, 7
          %v4079 = vsub.s32 0, %v4078
          %v4080 = vrot.slane %v4075, %v4079
          %v4081 = vlaneseq
          %v4082 = vshrl.u32 %v4081, 7
          %v4083 = vsub.s32 1, %v4082
          %v4084 = vrot.slane %v4075, %v4083
          %v4087 = vmul.f32 %v4043, %v4080
          %v4088 = vmul.f32 %v4044, %v4084
          %v4089 = vmul.f32 %v4045, %v4080
          %v4090 = vmul.f32 %v4046, %v4084
          %v4091 = vmul.f32 %v4047, %v4080
          %v4092 = vmul.f32 %v4048, %v4084
          %v4093 = vmul.f32 %v4049, %v4080
          %v4094 = vmul.f32 %v4050, %v4084
          %v4095 = vmul.f32 %v4051, %v4080
          %v4096 = vmul.f32 %v4052, %v4084
          %v4097 = vmul.f32 %v4053, %v4080
          %v4098 = vmul.f32 %v4054, %v4084
          %v4099 = vmul.f32 %v4055, %v4080
          %v4100 = vmul.f32 %v4056, %v4084
          %v4101 = vmul.f32 %v4057, %v4080
          %v4102 = vmul.f32 %v4058, %v4084
          %v4103 = vmul.f32 %v4059, %v4080
          %v4104 = vmul.f32 %v4060, %v4084
          %v4105 = vmul.f32 %v4061, %v4080
          %v4106 = vmul.f32 %v4062, %v4084
          %v4107 = vmul.f32 %v4063, %v4080
          %v4108 = vmul.f32 %v4064, %v4084
          %v4109 = vmul.f32 %v4065, %v4080
          %v4110 = vmul.f32 %v4066, %v4084
          %v4111 = vmul.f32 %v4067, %v4080
          %v4112 = vmul.f32 %v4068, %v4084
          %v4113 = vmul.f32 %v4069, %v4080
          %v4114 = vmul.f32 %v4070, %v4084
          %v4115 = vmul.f32 %v4071, %v4080
          %v4116 = vmul.f32 %v4072, %v4084
          %v4117 = vmul.f32 %v4073, %v4080
          %v4118 = vmul.f32 %v4074, %v4084
          %v4119 = vld [vmem:[%s355] sm:$0x3]
          %v4121 = vlaneseq
          %v4122 = vshrl.u32 %v4121, 7
          %v4123 = vsub.s32 0, %v4122
          %v4124 = vrot.slane %v4119, %v4123
          %v4125 = vlaneseq
          %v4126 = vshrl.u32 %v4125, 7
          %v4127 = vsub.s32 1, %v4126
          %v4128 = vrot.slane %v4119, %v4127
          %v4131 = vadd.f32 %v4087, %v4124
          %v4132 = vadd.f32 %v4088, %v4128
          %v4133 = vadd.f32 %v4089, %v4124
          %v4134 = vadd.f32 %v4090, %v4128
          %v4135 = vadd.f32 %v4091, %v4124
          %v4136 = vadd.f32 %v4092, %v4128
          %v4137 = vadd.f32 %v4093, %v4124
          %v4138 = vadd.f32 %v4094, %v4128
          %v4139 = vadd.f32 %v4095, %v4124
          %v4140 = vadd.f32 %v4096, %v4128
          %v4141 = vadd.f32 %v4097, %v4124
          %v4142 = vadd.f32 %v4098, %v4128
          %v4143 = vadd.f32 %v4099, %v4124
          %v4144 = vadd.f32 %v4100, %v4128
          %v4145 = vadd.f32 %v4101, %v4124
          %v4146 = vadd.f32 %v4102, %v4128
          %v4147 = vadd.f32 %v4103, %v4124
          %v4148 = vadd.f32 %v4104, %v4128
          %v4149 = vadd.f32 %v4105, %v4124
          %v4150 = vadd.f32 %v4106, %v4128
          %v4151 = vadd.f32 %v4107, %v4124
          %v4152 = vadd.f32 %v4108, %v4128
          %v4153 = vadd.f32 %v4109, %v4124
          %v4154 = vadd.f32 %v4110, %v4128
          %v4155 = vadd.f32 %v4111, %v4124
          %v4156 = vadd.f32 %v4112, %v4128
          %v4157 = vadd.f32 %v4113, %v4124
          %v4158 = vadd.f32 %v4114, %v4128
          %v4159 = vadd.f32 %v4115, %v4124
          %v4160 = vadd.f32 %v4116, %v4128
          %v4161 = vadd.f32 %v4117, %v4124
          %v4162 = vadd.f32 %v4118, %v4128
          %v4163 = vmax.f32 %v4131, 0.0
          %v4164 = vmax.f32 %v4132, 0.0
          %v4165 = vmax.f32 %v4133, 0.0
          %v4166 = vmax.f32 %v4134, 0.0
          %v4167 = vmax.f32 %v4135, 0.0
          %v4168 = vmax.f32 %v4136, 0.0
          %v4169 = vmax.f32 %v4137, 0.0
          %v4170 = vmax.f32 %v4138, 0.0
          %v4171 = vmax.f32 %v4139, 0.0
          %v4172 = vmax.f32 %v4140, 0.0
          %v4173 = vmax.f32 %v4141, 0.0
          %v4174 = vmax.f32 %v4142, 0.0
          %v4175 = vmax.f32 %v4143, 0.0
          %v4176 = vmax.f32 %v4144, 0.0
          %v4177 = vmax.f32 %v4145, 0.0
          %v4178 = vmax.f32 %v4146, 0.0
          %v4179 = vmax.f32 %v4147, 0.0
          %v4180 = vmax.f32 %v4148, 0.0
          %v4181 = vmax.f32 %v4149, 0.0
          %v4182 = vmax.f32 %v4150, 0.0
          %v4183 = vmax.f32 %v4151, 0.0
          %v4184 = vmax.f32 %v4152, 0.0
          %v4185 = vmax.f32 %v4153, 0.0
          %v4186 = vmax.f32 %v4154, 0.0
          %v4187 = vmax.f32 %v4155, 0.0
          %v4188 = vmax.f32 %v4156, 0.0
          %v4189 = vmax.f32 %v4157, 0.0
          %v4190 = vmax.f32 %v4158, 0.0
          %v4191 = vmax.f32 %v4159, 0.0
          %v4192 = vmax.f32 %v4160, 0.0
          %v4193 = vmax.f32 %v4161, 0.0
          %v4194 = vmax.f32 %v4162, 0.0
          %v4195 = vpack.c.bf16 %v4165, %v4163
          %v4196 = vpack.c.bf16 %v4166, %v4164
          %v4197 = vpack.c.bf16 %v4169, %v4167
          %v4198 = vpack.c.bf16 %v4170, %v4168
          %v4199 = vpack.c.bf16 %v4173, %v4171
          %v4200 = vpack.c.bf16 %v4174, %v4172
          %v4201 = vpack.c.bf16 %v4177, %v4175
          %v4202 = vpack.c.bf16 %v4178, %v4176
          %v4203 = vpack.c.bf16 %v4181, %v4179
          %v4204 = vpack.c.bf16 %v4182, %v4180
          %v4205 = vpack.c.bf16 %v4185, %v4183
          %v4206 = vpack.c.bf16 %v4186, %v4184
          %v4207 = vpack.c.bf16 %v4189, %v4187
          %v4208 = vpack.c.bf16 %v4190, %v4188
          %v4209 = vpack.c.bf16 %v4193, %v4191
          %v4210 = vpack.c.bf16 %v4194, %v4192
          %v4227 = vunpack.c.l.b16 %v4195
          %v4228 = vunpack.c.l.b16 %v4196
          %v4229 = vunpack.c.h.b16 %v4195
          %v4230 = vunpack.c.h.b16 %v4196
          %v4231 = vunpack.c.l.b16 %v4197
          %v4232 = vunpack.c.l.b16 %v4198
          %v4233 = vunpack.c.h.b16 %v4197
          %v4234 = vunpack.c.h.b16 %v4198
          %v4235 = vunpack.c.l.b16 %v4199
          %v4236 = vunpack.c.l.b16 %v4200
          %v4237 = vunpack.c.h.b16 %v4199
          %v4238 = vunpack.c.h.b16 %v4200
          %v4239 = vunpack.c.l.b16 %v4201
          %v4240 = vunpack.c.l.b16 %v4202
          %v4241 = vunpack.c.h.b16 %v4201
          %v4242 = vunpack.c.h.b16 %v4202
          %v4243 = vunpack.c.l.b16 %v4203
          %v4244 = vunpack.c.l.b16 %v4204
          %v4245 = vunpack.c.h.b16 %v4203
          %v4246 = vunpack.c.h.b16 %v4204
          %v4247 = vunpack.c.l.b16 %v4205
          %v4248 = vunpack.c.l.b16 %v4206
          %v4249 = vunpack.c.h.b16 %v4205
          %v4250 = vunpack.c.h.b16 %v4206
          %v4251 = vunpack.c.l.b16 %v4207
          %v4252 = vunpack.c.l.b16 %v4208
          %v4253 = vunpack.c.h.b16 %v4207
          %v4254 = vunpack.c.h.b16 %v4208
          %v4255 = vunpack.c.l.b16 %v4209
          %v4256 = vunpack.c.l.b16 %v4210
          %v4257 = vunpack.c.h.b16 %v4209
          %v4258 = vunpack.c.h.b16 %v4210
          %v4259 = vpack.c.b16 %v4228, %v4227
          %v4260 = vpack.c.b16 %v4230, %v4229
          %v4261 = vpack.c.b16 %v4232, %v4231
          %v4262 = vpack.c.b16 %v4234, %v4233
          %v4263 = vpack.c.b16 %v4236, %v4235
          %v4264 = vpack.c.b16 %v4238, %v4237
          %v4265 = vpack.c.b16 %v4240, %v4239
          %v4266 = vpack.c.b16 %v4242, %v4241
          %v4267 = vpack.c.b16 %v4244, %v4243
          %v4268 = vpack.c.b16 %v4246, %v4245
          %v4269 = vpack.c.b16 %v4248, %v4247
          %v4270 = vpack.c.b16 %v4250, %v4249
          %v4271 = vpack.c.b16 %v4252, %v4251
          %v4272 = vpack.c.b16 %v4254, %v4253
          %v4273 = vpack.c.b16 %v4256, %v4255
          %v4274 = vpack.c.b16 %v4258, %v4257
          %4291 = vst [vmem:[%s326] sm:$0xff] %v4259
          %4292 = vst [vmem:[%s326 + $0x8] sm:$0xff] %v4260
          %4293 = vst [vmem:[%s326 + $0x10] sm:$0xff] %v4261
          %4294 = vst [vmem:[%s326 + $0x18] sm:$0xff] %v4262
          %4295 = vst [vmem:[%s326 + $0x20] sm:$0xff] %v4263
          %4296 = vst [vmem:[%s326 + $0x28] sm:$0xff] %v4264
          %4297 = vst [vmem:[%s326 + $0x30] sm:$0xff] %v4265
          %4298 = vst [vmem:[%s326 + $0x38] sm:$0xff] %v4266
          %4299 = vst [vmem:[%s326 + $0x40] sm:$0xff] %v4267
          %4300 = vst [vmem:[%s326 + $0x48] sm:$0xff] %v4268
          %4301 = vst [vmem:[%s326 + $0x50] sm:$0xff] %v4269
          %4302 = vst [vmem:[%s326 + $0x58] sm:$0xff] %v4270
          %4303 = vst [vmem:[%s326 + $0x60] sm:$0xff] %v4271
          %4304 = vst [vmem:[%s326 + $0x68] sm:$0xff] %v4272
          %4305 = vst [vmem:[%s326 + $0x70] sm:$0xff] %v4273
          %4306 = vst [vmem:[%s326 + $0x78] sm:$0xff] %v4274
        $region48: #{forward.4} parent=35 // pred_fallthru
          _
        %s4307 = sand.u32 %s170, 1
        %s4308 = sand.u32 %s170, 1
        %s4309 = smul.addr %s4308, 128
        %s4310 = scalar_lea.vmem [#allocation5], %s4309
        // Predicated region
        $region49: #{forward.4} parent=35 // pred_check
          %p4311 = pneg %p180
        $region50: #{forward.4} parent=35 // pred_check_branch
          %4313 = sbr.rel (%p4311) target = $region52
        $region51: #{forward.4} parent=35 // pred_region
          %s4314 = smul.u32 16, %s25
          %s4315 = smul.u32 2, %s26
          %s4316 = smul.addr %s4314, 12
          %s4317 = sadd.s32 %s4315, %s4316
          %s4318 = smul.addr %s24, 192
          %s4319 = sadd.s32 %s4317, %s4318
          %s4320 = smul.addr %s4319, 4
          %s4321 = scalar_lea.vmem %s4, %s4320
          // Predicated region
          $region53: #{forward.4} parent=51 // pred_check
            _
          $region54: #{forward.4} parent=51 // pred_check_branch
            %4323 = sbr.rel (0) target = $region56
          $region55: #{forward.4} parent=51 // pred_region
            // Predicated region
            $region57: #{forward.4} parent=55 // pred_check
              _
            $region58: #{forward.4} parent=55 // pred_check_branch
              %4325 = sbr.rel (0) target = $region60
            $region59: #{forward.4} parent=55 // pred_region
              // Predicated region
              $region72: #{forward.4} parent=59 // pred_check
                _
              $region73: #{forward.4} parent=59 // pred_check_branch
                %4371 = sbr.rel (0) target = $region75
              $region74: #{forward.4} parent=59 // pred_region
                loop: start=0, step=1, limit=1
                $region76: #{forward.4} parent=74 // loop_pre_header
                  _
                $region77: #{forward.4} parent=74 // loop_header
                  %s4373 = sphi 0, %s4377
                  %p4374 = scmp.ge.s32.totalorder %s4373, 1
                  %s4378 = sphi %s4310, %s4310
                  %s4379 = sphi %s4321, %s4321
                $region78: #{forward.4} parent=74 // loop_header_branch
                  %4376 = sbr.rel (%p4374) target = $region82
                $region79: #{forward.4} parent=74 // loop_body
                  %v4380 = vld [vmem:[%s4378] sm:$0xff]
                  %4381 = vst [vmem:[%s4379] sm:$0xff] %v4380
                  %v4382 = vld [vmem:[%s4378 + $0x8] sm:$0xff]
                  %4383 = vst [vmem:[%s4379 + $0x30] sm:$0xff] %v4382
                  %v4384 = vld [vmem:[%s4378 + $0x10] sm:$0xff]
                  %4385 = vst [vmem:[%s4379 + $0x60] sm:$0xff] %v4384
                  %v4386 = vld [vmem:[%s4378 + $0x18] sm:$0xff]
                  %4387 = vst [vmem:[%s4379 + $0x90] sm:$0xff] %v4386
                  %v4388 = vld [vmem:[%s4378 + $0x20] sm:$0xff]
                  %4389 = vst [vmem:[%s4379 + $0xc0] sm:$0xff] %v4388
                  %v4390 = vld [vmem:[%s4378 + $0x28] sm:$0xff]
                  %4391 = vst [vmem:[%s4379 + $0xf0] sm:$0xff] %v4390
                  %v4392 = vld [vmem:[%s4378 + $0x30] sm:$0xff]
                  %4393 = vst [vmem:[%s4379 + $0x120] sm:$0xff] %v4392
                  %v4394 = vld [vmem:[%s4378 + $0x38] sm:$0xff]
                  %4395 = vst [vmem:[%s4379 + $0x150] sm:$0xff] %v4394
                  %v4396 = vld [vmem:[%s4378 + $0x40] sm:$0xff]
                  %4397 = vst [vmem:[%s4379 + $0x180] sm:$0xff] %v4396
                  %v4398 = vld [vmem:[%s4378 + $0x48] sm:$0xff]
                  %4399 = vst [vmem:[%s4379 + $0x1b0] sm:$0xff] %v4398
                  %v4400 = vld [vmem:[%s4378 + $0x50] sm:$0xff]
                  %4401 = vst [vmem:[%s4379 + $0x1e0] sm:$0xff] %v4400
                  %v4402 = vld [vmem:[%s4378 + $0x58] sm:$0xff]
                  %4403 = vst [vmem:[%s4379 + $0x210] sm:$0xff] %v4402
                  %v4404 = vld [vmem:[%s4378 + $0x60] sm:$0xff]
                  %4405 = vst [vmem:[%s4379 + $0x240] sm:$0xff] %v4404
                  %v4406 = vld [vmem:[%s4378 + $0x68] sm:$0xff]
                  %4407 = vst [vmem:[%s4379 + $0x270] sm:$0xff] %v4406
                  %v4408 = vld [vmem:[%s4378 + $0x70] sm:$0xff]
                  %4409 = vst [vmem:[%s4379 + $0x2a0] sm:$0xff] %v4408
                  %v4410 = vld [vmem:[%s4378 + $0x78] sm:$0xff]
                  %4411 = vst [vmem:[%s4379 + $0x2d0] sm:$0xff] %v4410
                $region80: #{forward.4} parent=74 // loop_footer
                  %s4377 = sadd.s32 1, %s4373
                $region81: #{forward.4} parent=74 // loop_footer_branch
                  %4372 = sbr.rel target = $region77
                $region82: #{forward.4} parent=74 // loop_exit
                  _
              $region75: #{forward.4} parent=59 // pred_fallthru
                _
              // Predicated region
              $region83: #{forward.4} parent=59 // pred_check
                _
              $region84: #{forward.4} parent=59 // pred_check_branch
                %4413 = sbr.rel target = $region86
              $region85: #{forward.4} parent=59 // pred_region
                _
              $region86: #{forward.4} parent=59 // pred_fallthru
                _
            $region60: #{forward.4} parent=55 // pred_fallthru
              _
            // Predicated region
            $region61: #{forward.4} parent=55 // pred_check
              _
            $region62: #{forward.4} parent=55 // pred_check_branch
              %4327 = sbr.rel target = $region64
            $region63: #{forward.4} parent=55 // pred_region
              %s4329 = ssub.s32 256, 1
              loop: start=0, step=1, limit=1
              $region65: #{forward.4} parent=63 // loop_pre_header
                _
              $region66: #{forward.4} parent=63 // loop_header
                %s4331 = sphi 0, %s4335
                %p4332 = scmp.ge.s32.totalorder %s4331, 1
                %s4336 = sphi %s4310, %s4310
                %s4337 = sphi %s4321, %s4321
              $region67: #{forward.4} parent=63 // loop_header_branch
                %4334 = sbr.rel (%p4332) target = $region71
              $region68: #{forward.4} parent=63 // loop_body
                %v4338 = vld [vmem:[%s4336] sm:%s4329]
                %4339 = vst [vmem:[%s4337] sm:%s4329] %v4338
                %v4340 = vld [vmem:[%s4336 + $0x8] sm:%s4329]
                %4341 = vst [vmem:[%s4337 + $0x30] sm:%s4329] %v4340
                %v4342 = vld [vmem:[%s4336 + $0x10] sm:%s4329]
                %4343 = vst [vmem:[%s4337 + $0x60] sm:%s4329] %v4342
                %v4344 = vld [vmem:[%s4336 + $0x18] sm:%s4329]
                %4345 = vst [vmem:[%s4337 + $0x90] sm:%s4329] %v4344
                %v4346 = vld [vmem:[%s4336 + $0x20] sm:%s4329]
                %4347 = vst [vmem:[%s4337 + $0xc0] sm:%s4329] %v4346
                %v4348 = vld [vmem:[%s4336 + $0x28] sm:%s4329]
                %4349 = vst [vmem:[%s4337 + $0xf0] sm:%s4329] %v4348
                %v4350 = vld [vmem:[%s4336 + $0x30] sm:%s4329]
                %4351 = vst [vmem:[%s4337 + $0x120] sm:%s4329] %v4350
                %v4352 = vld [vmem:[%s4336 + $0x38] sm:%s4329]
                %4353 = vst [vmem:[%s4337 + $0x150] sm:%s4329] %v4352
                %v4354 = vld [vmem:[%s4336 + $0x40] sm:%s4329]
                %4355 = vst [vmem:[%s4337 + $0x180] sm:%s4329] %v4354
                %v4356 = vld [vmem:[%s4336 + $0x48] sm:%s4329]
                %4357 = vst [vmem:[%s4337 + $0x1b0] sm:%s4329] %v4356
                %v4358 = vld [vmem:[%s4336 + $0x50] sm:%s4329]
                %4359 = vst [vmem:[%s4337 + $0x1e0] sm:%s4329] %v4358
                %v4360 = vld [vmem:[%s4336 + $0x58] sm:%s4329]
                %4361 = vst [vmem:[%s4337 + $0x210] sm:%s4329] %v4360
                %v4362 = vld [vmem:[%s4336 + $0x60] sm:%s4329]
                %4363 = vst [vmem:[%s4337 + $0x240] sm:%s4329] %v4362
                %v4364 = vld [vmem:[%s4336 + $0x68] sm:%s4329]
                %4365 = vst [vmem:[%s4337 + $0x270] sm:%s4329] %v4364
                %v4366 = vld [vmem:[%s4336 + $0x70] sm:%s4329]
                %4367 = vst [vmem:[%s4337 + $0x2a0] sm:%s4329] %v4366
                %v4368 = vld [vmem:[%s4336 + $0x78] sm:%s4329]
                %4369 = vst [vmem:[%s4337 + $0x2d0] sm:%s4329] %v4368
              $region69: #{forward.4} parent=63 // loop_footer
                %s4335 = sadd.s32 1, %s4331
              $region70: #{forward.4} parent=63 // loop_footer_branch
                %4330 = sbr.rel target = $region66
              $region71: #{forward.4} parent=63 // loop_exit
                _
            $region64: #{forward.4} parent=55 // pred_fallthru
              _
          $region56: #{forward.4} parent=51 // pred_fallthru
            _
          %4414 = vnop
        $region52: #{forward.4} parent=35 // pred_fallthru
          _
      $region36: #{forward.4} parent=5 // pred_fallthru
        _
      %p4415 = scmp.le.s32.totalorder 2, %s13
      // Predicated region
      $region87: #{forward.4} parent=5 // pred_check
        %p4416 = pneg %p4415
      $region88: #{forward.4} parent=5 // pred_check_branch
        %4418 = sbr.rel (%p4416) target = $region90
      $region89: #{forward.4} parent=5 // pred_region
        %s4419 = ssub.s32 %s13, 2
        // Predicated region
        $region91: #{forward.4} parent=89 // pred_check
          %p4420 = pneg %p186
        $region92: #{forward.4} parent=89 // pred_check_branch
          %4422 = sbr.rel (%p4420) target = $region94
        $region93: #{forward.4} parent=89 // pred_region
          %s4423 = sand.u32 %s171, 1
          %s4424 = sand.u32 %s171, 1
          %s4425 = smul.addr %s4424, 128
          %s4426 = scalar_lea.vmem [#allocation5], %s4425
        $region94: #{forward.4} parent=89 // pred_fallthru
          _
      $region90: #{forward.4} parent=5 // pred_fallthru
        _
    $region6: #{forward.4} parent=1 // loop_footer
      %s17 = sadd.s32 1, %s13
    $region7: #{forward.4} parent=1 // loop_footer_branch
      %12 = sbr.rel target = $region3
    $region8: #{forward.4} parent=1 // loop_exit
      _
    %4427 = vsyncpa [#allocation4], 1
    %s4428 = scalar_lea.sflag [#allocation4], 1
    %4429 = vsyncpa %s4428, 1

// kernel: forward.5
$region0: #{forward.5}
  #allocation0 [shape = 'u32[]', space=smem, size = 0x4, offset = 0x4, fixed_abs, tag = 'smem constant byte address 0x4 - core index']
  #allocation1 [shape = 'u32[144,128]{1,0:T(1,128)}', space=vmem, size = 0x12000, scoped, tag = 'internal scratch']
  #allocation2 [shape = 'f32[128,128]{1,0:T(8,128)}', space=vmem, size = 0x10000, scoped, tag = 'scratch operand']
  %s0 = inlined_call_operand.vmem [shape: bf16[1,128,13824], index: 0, kind: input, shape index: {}]
  %s1 = inlined_call_operand.vmem [shape: s8[1,2,13824,128], index: 1, kind: input, shape index: {}]
  %s2 = inlined_call_operand.vmem [shape: f32[1,1,256], index: 2, kind: input, shape index: {}]
  %s3 = inlined_call_operand.vmem [shape: f32[1,1,256], index: 3, kind: input, shape index: {}]
  %s4 = inlined_call_operand.vmem [shape: bf16[1,128,256], index: 4, kind: output, shape index: {}]
  %s5 = sld [smem:[#allocation0]]
  $region94: #{forward.5} parent=0
    _
  %s7 = ssub.s32 1, %s5
  %s8 = scalar_select 0, %s7, %s5
  $region1: #{forward.5} parent=0
    #allocation3 [shape = 'u8[65536]{0}', space=vmem, size = 0x10000, scoped, tag = 'output window, operand 0']
    loop: start=0, step=1, limit=10
    $region2: #{forward.5} parent=1 // loop_pre_header
      _
    $region3: #{forward.5} parent=1 // loop_header
      %s10 = sphi 0, %s14
      %p11 = scmp.ge.s32.totalorder %s10, 10
      %s17 = sphi 0, %s43
      %s18 = sphi 0, %s39
      %s19 = sphi 0, %s35
      %s20 = sphi 0, %s31
      %s21 = sphi 0, %s17
      %s22 = sphi 0, %s18
      %s23 = sphi 0, %s19
      %s24 = sphi 0, %s20
      %s25 = sphi 0, %s21
      %s26 = sphi 0, %s22
      %s27 = sphi 0, %s23
      %s28 = sphi 0, %s24
      %s48 = sphi 0, %s50
      %s51 = sphi 0, %s48
      %s52 = sphi 0, %s51
      %s68 = sphi 0, %s52
      %s78 = sphi 0, %s80
      %s81 = sphi 0, %s78
      %s82 = sphi 0, %s81
      %s98 = sphi 0, %s82
      %s106 = sphi 0, %s108
      %s109 = sphi 0, %s106
      %s110 = sphi 0, %s109
      %s126 = sphi 0, %s110
      %s134 = sphi 0, %s136
      %s137 = sphi 0, %s134
      %s138 = sphi 0, %s137
      %s154 = sphi 0, %s138
      %s164 = sphi 0, %s166
      %s167 = sphi 0, %s164
      %s168 = sphi 0, %s167
      %s184 = sphi 0, %s168
    $region4: #{forward.5} parent=1 // loop_header_branch
      %13 = sbr.rel (%p11) target = $region8
    $region5: #{forward.5} parent=1 // loop_body
      %s15 = ssub.s32 %s10, 1
      %s16 = ssub.s32 %s10, 2
      %s29 = sadd.s32 1, %s20
      %p30 = scmp.ge.s32.totalorder %s29, 4
      %s31 = scalar_select %p30, 0, %s29
      %s32 = sadd.s32 1, %s19
      %s33 = scalar_select %p30, %s32, %s19
      %p34 = scmp.ge.s32.totalorder %s33, 2
      %s35 = scalar_select %p34, 0, %s33
      %s36 = sadd.s32 1, %s18
      %s37 = scalar_select %p34, %s36, %s18
      %p38 = scmp.ge.s32.totalorder %s37, 1
      %s39 = scalar_select %p38, 0, %s37
      %s40 = sadd.s32 1, %s17
      %s41 = scalar_select %p38, %s40, %s17
      %p42 = scmp.ge.s32.totalorder %s41, 1
      %s43 = scalar_select %p42, 0, %s41
      %s44 = ssub.s32 %s17, %s43
      %s45 = ssub.s32 %s18, %s39
      %s46 = sor.u32 %s44, %s45
      %p47 = scmp.eq.s32.totalorder %s46, 0
      %s49 = sadd.s32 %s48, 1
      %s50 = scalar_select %p47, %s48, %s49
      %p53 = pneg %p47
      %p54 = scmp.eq.s32.totalorder %s10, 7
      %p55 = por %p53, %p54
      %p56 = scmp.ne.s32.totalorder %s48, %s51
      %p57 = scmp.eq.s32.totalorder %s10, 0
      %p58 = por %p56, %p57
      %p59 = scmp.ne.s32.totalorder %s48, %s51
      %p60 = scmp.eq.s32.totalorder %s15, 7
      %p61 = por %p59, %p60
      %p62 = scmp.ne.s32.totalorder %s51, %s52
      %p63 = scmp.eq.s32.totalorder %s15, 0
      %p64 = por %p62, %p63
      %p65 = scmp.ne.s32.totalorder %s51, %s52
      %p66 = scmp.eq.s32.totalorder %s16, 7
      %p67 = por %p65, %p66
      %p69 = scmp.ne.s32.totalorder %s52, %s68
      %p70 = scmp.eq.s32.totalorder %s16, 0
      %p71 = por %p69, %p70
      %s72 = ssub.s32 %s17, %s43
      %s73 = ssub.s32 %s19, %s35
      %s74 = sor.u32 %s72, %s73
      %s75 = ssub.s32 %s20, %s31
      %s76 = sor.u32 %s74, %s75
      %p77 = scmp.eq.s32.totalorder %s76, 0
      %s79 = sadd.s32 %s78, 1
      %s80 = scalar_select %p77, %s78, %s79
      %p83 = pneg %p77
      %p84 = scmp.eq.s32.totalorder %s10, 7
      %p85 = por %p83, %p84
      %p86 = scmp.ne.s32.totalorder %s78, %s81
      %p87 = scmp.eq.s32.totalorder %s10, 0
      %p88 = por %p86, %p87
      %p89 = scmp.ne.s32.totalorder %s78, %s81
      %p90 = scmp.eq.s32.totalorder %s15, 7
      %p91 = por %p89, %p90
      %p92 = scmp.ne.s32.totalorder %s81, %s82
      %p93 = scmp.eq.s32.totalorder %s15, 0
      %p94 = por %p92, %p93
      %p95 = scmp.ne.s32.totalorder %s81, %s82
      %p96 = scmp.eq.s32.totalorder %s16, 7
      %p97 = por %p95, %p96
      %p99 = scmp.ne.s32.totalorder %s82, %s98
      %p100 = scmp.eq.s32.totalorder %s16, 0
      %p101 = por %p99, %p100
      %s102 = ssub.s32 %s17, %s43
      %s103 = ssub.s32 %s19, %s35
      %s104 = sor.u32 %s102, %s103
      %p105 = scmp.eq.s32.totalorder %s104, 0
      %s107 = sadd.s32 %s106, 1
      %s108 = scalar_select %p105, %s106, %s107
      %p111 = pneg %p105
      %p112 = scmp.eq.s32.totalorder %s10, 7
      %p113 = por %p111, %p112
      %p114 = scmp.ne.s32.totalorder %s106, %s109
      %p115 = scmp.eq.s32.totalorder %s10, 0
      %p116 = por %p114, %p115
      %p117 = scmp.ne.s32.totalorder %s106, %s109
      %p118 = scmp.eq.s32.totalorder %s15, 7
      %p119 = por %p117, %p118
      %p120 = scmp.ne.s32.totalorder %s109, %s110
      %p121 = scmp.eq.s32.totalorder %s15, 0
      %p122 = por %p120, %p121
      %p123 = scmp.ne.s32.totalorder %s109, %s110
      %p124 = scmp.eq.s32.totalorder %s16, 7
      %p125 = por %p123, %p124
      %p127 = scmp.ne.s32.totalorder %s110, %s126
      %p128 = scmp.eq.s32.totalorder %s16, 0
      %p129 = por %p127, %p128
      %s130 = ssub.s32 %s17, %s43
      %s131 = ssub.s32 %s19, %s35
      %s132 = sor.u32 %s130, %s131
      %p133 = scmp.eq.s32.totalorder %s132, 0
      %s135 = sadd.s32 %s134, 1
      %s136 = scalar_select %p133, %s134, %s135
      %p139 = pneg %p133
      %p140 = scmp.eq.s32.totalorder %s10, 7
      %p141 = por %p139, %p140
      %p142 = scmp.ne.s32.totalorder %s134, %s137
      %p143 = scmp.eq.s32.totalorder %s10, 0
      %p144 = por %p142, %p143
      %p145 = scmp.ne.s32.totalorder %s134, %s137
      %p146 = scmp.eq.s32.totalorder %s15, 7
      %p147 = por %p145, %p146
      %p148 = scmp.ne.s32.totalorder %s137, %s138
      %p149 = scmp.eq.s32.totalorder %s15, 0
      %p150 = por %p148, %p149
      %p151 = scmp.ne.s32.totalorder %s137, %s138
      %p152 = scmp.eq.s32.totalorder %s16, 7
      %p153 = por %p151, %p152
      %p155 = scmp.ne.s32.totalorder %s138, %s154
      %p156 = scmp.eq.s32.totalorder %s16, 0
      %p157 = por %p155, %p156
      %s158 = ssub.s32 %s17, %s43
      %s159 = ssub.s32 %s18, %s39
      %s160 = sor.u32 %s158, %s159
      %s161 = ssub.s32 %s19, %s35
      %s162 = sor.u32 %s160, %s161
      %p163 = scmp.eq.s32.totalorder %s162, 0
      %s165 = sadd.s32 %s164, 1
      %s166 = scalar_select %p163, %s164, %s165
      %p169 = pneg %p163
      %p170 = scmp.eq.s32.totalorder %s10, 7
      %p171 = por %p169, %p170
      %p172 = scmp.ne.s32.totalorder %s164, %s167
      %p173 = scmp.eq.s32.totalorder %s10, 0
      %p174 = por %p172, %p173
      %p175 = scmp.ne.s32.totalorder %s164, %s167
      %p176 = scmp.eq.s32.totalorder %s15, 7
      %p177 = por %p175, %p176
      %p178 = scmp.ne.s32.totalorder %s167, %s168
      %p179 = scmp.eq.s32.totalorder %s15, 0
      %p180 = por %p178, %p179
      %p181 = scmp.ne.s32.totalorder %s167, %s168
      %p182 = scmp.eq.s32.totalorder %s16, 7
      %p183 = por %p181, %p182
      %p185 = scmp.ne.s32.totalorder %s168, %s184
      %p186 = scmp.eq.s32.totalorder %s16, 0
      %p187 = por %p185, %p186
      %p188 = scmp.le.s32.totalorder 1, %s10
      %p189 = scmp.lt.s32.totalorder %s10, 9
      %p190 = pnand %p188, %p189
      %p191 = pneg %p190
      // Predicated region
      $region9: #{forward.5} parent=5 // pred_check
        _
      $region10: #{forward.5} parent=5 // pred_check_branch
        %193 = sbr.rel (%p190) target = $region12
      $region11: #{forward.5} parent=5 // pred_region
        %s194 = ssub.s32 %s10, 1
        // Predicated region
        $region13: #{forward.5} parent=11 // pred_check
          %p195 = pneg %p64
        $region14: #{forward.5} parent=11 // pred_check_branch
          %197 = sbr.rel (%p195) target = $region16
        $region15: #{forward.5} parent=11 // pred_region
          %s198 = smul.u32 16, %s22
          %p199 = scmp.lt.s32.totalorder %s21, 0
          %s200 = scalar_select %p199, %s21, 0
          %p201 = scmp.lt.s32.totalorder %s198, 15
          %s202 = scalar_select %p201, %s198, 15
          %s203 = smul.addr %s202, 108
          %s204 = smul.addr %s200, 1728
          %s205 = sadd.s32 %s203, %s204
          %s206 = smul.addr %s205, 4
          %s207 = scalar_lea.vmem %s0, %s206
          %s208 = smul.u32 16, %s22
        $region16: #{forward.5} parent=11 // pred_fallthru
          _
      $region12: #{forward.5} parent=5 // pred_fallthru
        _
      %p209 = scmp.lt.s32.totalorder %s10, 8
      // Predicated region
      $region17: #{forward.5} parent=5 // pred_check
        %p210 = pneg %p209
      $region18: #{forward.5} parent=5 // pred_check_branch
        %212 = sbr.rel (%p210) target = $region20
      $region19: #{forward.5} parent=5 // pred_region
        // Predicated region
        $region21: #{forward.5} parent=19 // pred_check
          %p213 = pneg %p88
        $region22: #{forward.5} parent=19 // pred_check_branch
          %215 = sbr.rel (%p213) target = $region24
        $region23: #{forward.5} parent=19 // pred_region
          %s216 = smul.u32 108, %s20
          %p217 = scmp.lt.s32.totalorder %s17, 0
          %s218 = scalar_select %p217, %s17, 0
          %p219 = scmp.lt.s32.totalorder %s19, 1
          %s220 = scalar_select %p219, %s19, 1
          %p221 = scmp.lt.s32.totalorder %s216, 431
          %s222 = scalar_select %p221, %s216, 431
          %s223 = smul.addr %s220, 432
          %s224 = sadd.s32 %s222, %s223
          %s225 = smul.addr %s218, 864
          %s226 = sadd.s32 %s224, %s225
          %s227 = smul.addr %s226, 8
          %s228 = scalar_lea.vmem %s1, %s227
          %s229 = smul.u32 108, %s20
        $region24: #{forward.5} parent=19 // pred_fallthru
          _
        // Predicated region
        $region25: #{forward.5} parent=19 // pred_check
          %p230 = pneg %p116
        $region26: #{forward.5} parent=19 // pred_check_branch
          %232 = sbr.rel (%p230) target = $region28
        $region27: #{forward.5} parent=19 // pred_region
          %p233 = scmp.lt.s32.totalorder %s17, 0
          %s234 = scalar_select %p233, %s17, 0
          %p235 = scmp.lt.s32.totalorder %s19, 1
          %s236 = scalar_select %p235, %s19, 1
          %s237 = smul.addr %s234, 2
          %s238 = sadd.s32 %s236, %s237
          %s239 = scalar_lea.vmem %s2, %s238
        $region28: #{forward.5} parent=19 // pred_fallthru
          _
        // Predicated region
        $region29: #{forward.5} parent=19 // pred_check
          %p240 = pneg %p144
        $region30: #{forward.5} parent=19 // pred_check_branch
          %242 = sbr.rel (%p240) target = $region32
        $region31: #{forward.5} parent=19 // pred_region
          %p243 = scmp.lt.s32.totalorder %s17, 0
          %s244 = scalar_select %p243, %s17, 0
          %p245 = scmp.lt.s32.totalorder %s19, 1
          %s246 = scalar_select %p245, %s19, 1
          %s247 = smul.addr %s244, 2
          %s248 = sadd.s32 %s246, %s247
          %s249 = scalar_lea.vmem %s3, %s248
        $region32: #{forward.5} parent=19 // pred_fallthru
          _
      $region20: #{forward.5} parent=5 // pred_fallthru
        _
      %p250 = scmp.le.s32.totalorder 1, %s10
      %p251 = scmp.lt.s32.totalorder %s10, 9
      %p252 = pnand %p250, %p251
      %p253 = pneg %p252
      // Predicated region
      $region33: #{forward.5} parent=5 // pred_check
        _
      $region34: #{forward.5} parent=5 // pred_check_branch
        %255 = sbr.rel (%p252) target = $region36
      $region35: #{forward.5} parent=5 // pred_region
        %s256 = ssub.s32 %s10, 1
        %s257 = smul.u32 16, %s22
        %p258 = scmp.lt.s32.totalorder %s21, 0
        %s259 = scalar_select %p258, %s21, 0
        %p260 = scmp.lt.s32.totalorder %s257, 15
        %s261 = scalar_select %p260, %s257, 15
        %s262 = smul.addr %s261, 108
        %s263 = smul.addr %s259, 1728
        %s264 = sadd.s32 %s262, %s263
        %s265 = smul.addr %s264, 4
        %s266 = scalar_lea.vmem %s0, %s265
        %p267 = pneg %p64
        %p268 = pneg %p61
        %s269 = smul.u32 108, %s24
        %p270 = scmp.lt.s32.totalorder %s21, 0
        %s271 = scalar_select %p270, %s21, 0
        %p272 = scmp.lt.s32.totalorder %s23, 1
        %s273 = scalar_select %p272, %s23, 1
        %p274 = scmp.lt.s32.totalorder %s269, 431
        %s275 = scalar_select %p274, %s269, 431
        %s276 = smul.addr %s273, 432
        %s277 = sadd.s32 %s275, %s276
        %s278 = smul.addr %s271, 864
        %s279 = sadd.s32 %s277, %s278
        %s280 = smul.addr %s279, 8
        %s281 = scalar_lea.vmem %s1, %s280
        %p282 = pneg %p94
        %p283 = pneg %p91
        %p284 = scmp.lt.s32.totalorder %s21, 0
        %s285 = scalar_select %p284, %s21, 0
        %p286 = scmp.lt.s32.totalorder %s23, 1
        %s287 = scalar_select %p286, %s23, 1
        %s288 = smul.addr %s285, 2
        %s289 = sadd.s32 %s287, %s288
        %s290 = scalar_lea.vmem %s2, %s289
        %p291 = pneg %p122
        %p292 = pneg %p119
        %p293 = scmp.lt.s32.totalorder %s21, 0
        %s294 = scalar_select %p293, %s21, 0
        %p295 = scmp.lt.s32.totalorder %s23, 1
        %s296 = scalar_select %p295, %s23, 1
        %s297 = smul.addr %s294, 2
        %s298 = sadd.s32 %s296, %s297
        %s299 = scalar_lea.vmem %s3, %s298
        %p300 = pneg %p150
        %p301 = pneg %p147
        %p302 = pneg %p180
        %p303 = pneg %p177
        %s304 = sand.u32 %s167, 1
        %s305 = sand.u32 %s167, 1
        %s306 = smul.addr %s305, 64
        %s307 = scalar_lea.vmem [#allocation3], %s306
        %s308 = smul.u32 16, %s22
        %p309 = scmp.lt.s32.totalorder %s21, 0
        %s310 = scalar_select %p309, %s21, 0
        %p311 = scmp.lt.s32.totalorder %s308, 15
        %s312 = scalar_select %p311, %s308, 15
        %s313 = smul.addr %s312, 108
        %s314 = smul.addr %s310, 1728
        %s315 = sadd.s32 %s313, %s314
        %s316 = smul.addr %s315, 4
        %s317 = scalar_lea.vmem %s0, %s316
        %s318 = smul.u32 16, %s22
        %s319 = smul.u32 108, %s24
        %p320 = scmp.lt.s32.totalorder %s21, 0
        %s321 = scalar_select %p320, %s21, 0
        %p322 = scmp.lt.s32.totalorder %s23, 1
        %s323 = scalar_select %p322, %s23, 1
        %p324 = scmp.lt.s32.totalorder %s319, 431
        %s325 = scalar_select %p324, %s319, 431
        %s326 = smul.addr %s323, 432
        %s327 = sadd.s32 %s325, %s326
        %s328 = smul.addr %s321, 864
        %s329 = sadd.s32 %s327, %s328
        %s330 = smul.addr %s329, 8
        %s331 = scalar_lea.vmem %s1, %s330
        %s332 = smul.u32 108, %s24
        %p333 = scmp.lt.s32.totalorder %s21, 0
        %s334 = scalar_select %p333, %s21, 0
        %p335 = scmp.lt.s32.totalorder %s23, 1
        %s336 = scalar_select %p335, %s23, 1
        %s337 = smul.addr %s334, 2
        %s338 = sadd.s32 %s336, %s337
        %s339 = scalar_lea.vmem %s2, %s338
        %p340 = scmp.lt.s32.totalorder %s21, 0
        %s341 = scalar_select %p340, %s21, 0
        %p342 = scmp.lt.s32.totalorder %s23, 1
        %s343 = scalar_select %p342, %s23, 1
        %s344 = smul.addr %s341, 2
        %s345 = sadd.s32 %s343, %s344
        %s346 = scalar_lea.vmem %s3, %s345
        %s347 = smul.u32 16, %s22
        %p349 = scmp.eq.s32.totalorder %s24, 0
        // Predicated region
        $region37: #{forward.5} parent=35 // pred_check
          %p350 = pneg %p349
        $region38: #{forward.5} parent=35 // pred_check_branch
          %352 = sbr.rel (%p350) target = $region40
        $region39: #{forward.5} parent=35 // pred_region
          %353 = vst [vmem:[#allocation2] sm:$0xff] 0.0
          %354 = vst [vmem:[#allocation2 + $0x8] sm:$0xff] 0.0
          %355 = vst [vmem:[#allocation2 + $0x10] sm:$0xff] 0.0
          %356 = vst [vmem:[#allocation2 + $0x18] sm:$0xff] 0.0
          %357 = vst [vmem:[#allocation2 + $0x20] sm:$0xff] 0.0
          %358 = vst [vmem:[#allocation2 + $0x28] sm:$0xff] 0.0
          %359 = vst [vmem:[#allocation2 + $0x30] sm:$0xff] 0.0
          %360 = vst [vmem:[#allocation2 + $0x38] sm:$0xff] 0.0
          %361 = vst [vmem:[#allocation2 + $0x40] sm:$0xff] 0.0
          %362 = vst [vmem:[#allocation2 + $0x48] sm:$0xff] 0.0
          %363 = vst [vmem:[#allocation2 + $0x50] sm:$0xff] 0.0
          %364 = vst [vmem:[#allocation2 + $0x58] sm:$0xff] 0.0
          %365 = vst [vmem:[#allocation2 + $0x60] sm:$0xff] 0.0
          %366 = vst [vmem:[#allocation2 + $0x68] sm:$0xff] 0.0
          %367 = vst [vmem:[#allocation2 + $0x70] sm:$0xff] 0.0
          %368 = vst [vmem:[#allocation2 + $0x78] sm:$0xff] 0.0
        $region40: #{forward.5} parent=35 // pred_fallthru
          _
        %s369 = smul.u32 %s24, 3456
        %s370 = sshra.s32 %s369, 7
        %s371 = sand.u32 %s369, 127
        %s372 = smul.addr %s370, 4
        %s373 = scalar_lea.vmem %s317, %s372
        %v374 = vld [vmem:[%s373] sm:$0xff]
        %v375 = vld [vmem:[%s373 + $0x8] sm:$0xff]
        %v376 = vld [vmem:[%s373 + $0x10] sm:$0xff]
        %v377 = vld [vmem:[%s373 + $0x18] sm:$0xff]
        %v378 = vld [vmem:[%s373 + $0x20] sm:$0xff]
        %v379 = vld [vmem:[%s373 + $0x28] sm:$0xff]
        %v380 = vld [vmem:[%s373 + $0x30] sm:$0xff]
        %v381 = vld [vmem:[%s373 + $0x38] sm:$0xff]
        %v382 = vld [vmem:[%s373 + $0x40] sm:$0xff]
        %v383 = vld [vmem:[%s373 + $0x48] sm:$0xff]
        %v384 = vld [vmem:[%s373 + $0x50] sm:$0xff]
        %v385 = vld [vmem:[%s373 + $0x58] sm:$0xff]
        %v386 = vld [vmem:[%s373 + $0x60] sm:$0xff]
        %v387 = vld [vmem:[%s373 + $0x68] sm:$0xf]
        %v388 = vld [vmem:[%s373 + $0x1b0] sm:$0xff]
        %v389 = vld [vmem:[%s373 + $0x1b8] sm:$0xff]
        %v390 = vld [vmem:[%s373 + $0x1c0] sm:$0xff]
        %v391 = vld [vmem:[%s373 + $0x1c8] sm:$0xff]
        %v392 = vld [vmem:[%s373 + $0x1d0] sm:$0xff]
        %v393 = vld [vmem:[%s373 + $0x1d8] sm:$0xff]
        %v394 = vld [vmem:[%s373 + $0x1e0] sm:$0xff]
        %v395 = vld [vmem:[%s373 + $0x1e8] sm:$0xff]
        %v396 = vld [vmem:[%s373 + $0x1f0] sm:$0xff]
        %v397 = vld [vmem:[%s373 + $0x1f8] sm:$0xff]
        %v398 = vld [vmem:[%s373 + $0x200] sm:$0xff]
        %v399 = vld [vmem:[%s373 + $0x208] sm:$0xff]
        %v400 = vld [vmem:[%s373 + $0x210] sm:$0xff]
        %v401 = vld [vmem:[%s373 + $0x218] sm:$0xf]
        %v402 = vld [vmem:[%s373 + $0x360] sm:$0xff]
        %v403 = vld [vmem:[%s373 + $0x368] sm:$0xff]
        %v404 = vld [vmem:[%s373 + $0x370] sm:$0xff]
        %v405 = vld [vmem:[%s373 + $0x378] sm:$0xff]
        %v406 = vld [vmem:[%s373 + $0x380] sm:$0xff]
        %v407 = vld [vmem:[%s373 + $0x388] sm:$0xff]
        %v408 = vld [vmem:[%s373 + $0x390] sm:$0xff]
        %v409 = vld [vmem:[%s373 + $0x398] sm:$0xff]
        %v410 = vld [vmem:[%s373 + $0x3a0] sm:$0xff]
        %v411 = vld [vmem:[%s373 + $0x3a8] sm:$0xff]
        %v412 = vld [vmem:[%s373 + $0x3b0] sm:$0xff]
        %v413 = vld [vmem:[%s373 + $0x3b8] sm:$0xff]
        %v414 = vld [vmem:[%s373 + $0x3c0] sm:$0xff]
        %v415 = vld [vmem:[%s373 + $0x3c8] sm:$0xf]
        %v416 = vld [vmem:[%s373 + $0x510] sm:$0xff]
        %v417 = vld [vmem:[%s373 + $0x518] sm:$0xff]
        %v418 = vld [vmem:[%s373 + $0x520] sm:$0xff]
        %v419 = vld [vmem:[%s373 + $0x528] sm:$0xff]
        %v420 = vld [vmem:[%s373 + $0x530] sm:$0xff]
        %v421 = vld [vmem:[%s373 + $0x538] sm:$0xff]
        %v422 = vld [vmem:[%s373 + $0x540] sm:$0xff]
        %v423 = vld [vmem:[%s373 + $0x548] sm:$0xff]
        %v424 = vld [vmem:[%s373 + $0x550] sm:$0xff]
        %v425 = vld [vmem:[%s373 + $0x558] sm:$0xff]
        %v426 = vld [vmem:[%s373 + $0x560] sm:$0xff]
        %v427 = vld [vmem:[%s373 + $0x568] sm:$0xff]
        %v428 = vld [vmem:[%s373 + $0x570] sm:$0xff]
        %v429 = vld [vmem:[%s373 + $0x578] sm:$0xf]
        %v430 = vld [vmem:[%s373 + $0x6c0] sm:$0xff]
        %v431 = vld [vmem:[%s373 + $0x6c8] sm:$0xff]
        %v432 = vld [vmem:[%s373 + $0x6d0] sm:$0xff]
        %v433 = vld [vmem:[%s373 + $0x6d8] sm:$0xff]
        %v434 = vld [vmem:[%s373 + $0x6e0] sm:$0xff]
        %v435 = vld [vmem:[%s373 + $0x6e8] sm:$0xff]
        %v436 = vld [vmem:[%s373 + $0x6f0] sm:$0xff]
        %v437 = vld [vmem:[%s373 + $0x6f8] sm:$0xff]
        %v438 = vld [vmem:[%s373 + $0x700] sm:$0xff]
        %v439 = vld [vmem:[%s373 + $0x708] sm:$0xff]
        %v440 = vld [vmem:[%s373 + $0x710] sm:$0xff]
        %v441 = vld [vmem:[%s373 + $0x718] sm:$0xff]
        %v442 = vld [vmem:[%s373 + $0x720] sm:$0xff]
        %v443 = vld [vmem:[%s373 + $0x728] sm:$0xf]
        %v444 = vld [vmem:[%s373 + $0x870] sm:$0xff]
        %v445 = vld [vmem:[%s373 + $0x878] sm:$0xff]
        %v446 = vld [vmem:[%s373 + $0x880] sm:$0xff]
        %v447 = vld [vmem:[%s373 + $0x888] sm:$0xff]
        %v448 = vld [vmem:[%s373 + $0x890] sm:$0xff]
        %v449 = vld [vmem:[%s373 + $0x898] sm:$0xff]
        %v450 = vld [vmem:[%s373 + $0x8a0] sm:$0xff]
        %v451 = vld [vmem:[%s373 + $0x8a8] sm:$0xff]
        %v452 = vld [vmem:[%s373 + $0x8b0] sm:$0xff]
        %v453 = vld [vmem:[%s373 + $0x8b8] sm:$0xff]
        %v454 = vld [vmem:[%s373 + $0x8c0] sm:$0xff]
        %v455 = vld [vmem:[%s373 + $0x8c8] sm:$0xff]
        %v456 = vld [vmem:[%s373 + $0x8d0] sm:$0xff]
        %v457 = vld [vmem:[%s373 + $0x8d8] sm:$0xf]
        %v458 = vld [vmem:[%s373 + $0xa20] sm:$0xff]
        %v459 = vld [vmem:[%s373 + $0xa28] sm:$0xff]
        %v460 = vld [vmem:[%s373 + $0xa30] sm:$0xff]
        %v461 = vld [vmem:[%s373 + $0xa38] sm:$0xff]
        %v462 = vld [vmem:[%s373 + $0xa40] sm:$0xff]
        %v463 = vld [vmem:[%s373 + $0xa48] sm:$0xff]
        %v464 = vld [vmem:[%s373 + $0xa50] sm:$0xff]
        %v465 = vld [vmem:[%s373 + $0xa58] sm:$0xff]
        %v466 = vld [vmem:[%s373 + $0xa60] sm:$0xff]
        %v467 = vld [vmem:[%s373 + $0xa68] sm:$0xff]
        %v468 = vld [vmem:[%s373 + $0xa70] sm:$0xff]
        %v469 = vld [vmem:[%s373 + $0xa78] sm:$0xff]
        %v470 = vld [vmem:[%s373 + $0xa80] sm:$0xff]
        %v471 = vld [vmem:[%s373 + $0xa88] sm:$0xf]
        %v472 = vld [vmem:[%s373 + $0xbd0] sm:$0xff]
        %v473 = vld [vmem:[%s373 + $0xbd8] sm:$0xff]
        %v474 = vld [vmem:[%s373 + $0xbe0] sm:$0xff]
        %v475 = vld [vmem:[%s373 + $0xbe8] sm:$0xff]
        %v476 = vld [vmem:[%s373 + $0xbf0] sm:$0xff]
        %v477 = vld [vmem:[%s373 + $0xbf8] sm:$0xff]
        %v478 = vld [vmem:[%s373 + $0xc00] sm:$0xff]
        %v479 = vld [vmem:[%s373 + $0xc08] sm:$0xff]
        %v480 = vld [vmem:[%s373 + $0xc10] sm:$0xff]
        %v481 = vld [vmem:[%s373 + $0xc18] sm:$0xff]
        %v482 = vld [vmem:[%s373 + $0xc20] sm:$0xff]
        %v483 = vld [vmem:[%s373 + $0xc28] sm:$0xff]
        %v484 = vld [vmem:[%s373 + $0xc30] sm:$0xff]
        %v485 = vld [vmem:[%s373 + $0xc38] sm:$0xf]
        %v486 = vld [vmem:[%s373 + $0xd80] sm:$0xff]
        %v487 = vld [vmem:[%s373 + $0xd88] sm:$0xff]
        %v488 = vld [vmem:[%s373 + $0xd90] sm:$0xff]
        %v489 = vld [vmem:[%s373 + $0xd98] sm:$0xff]
        %v490 = vld [vmem:[%s373 + $0xda0] sm:$0xff]
        %v491 = vld [vmem:[%s373 + $0xda8] sm:$0xff]
        %v492 = vld [vmem:[%s373 + $0xdb0] sm:$0xff]
        %v493 = vld [vmem:[%s373 + $0xdb8] sm:$0xff]
        %v494 = vld [vmem:[%s373 + $0xdc0] sm:$0xff]
        %v495 = vld [vmem:[%s373 + $0xdc8] sm:$0xff]
        %v496 = vld [vmem:[%s373 + $0xdd0] sm:$0xff]
        %v497 = vld [vmem:[%s373 + $0xdd8] sm:$0xff]
        %v498 = vld [vmem:[%s373 + $0xde0] sm:$0xff]
        %v499 = vld [vmem:[%s373 + $0xde8] sm:$0xf]
        %v500 = vld [vmem:[%s373 + $0xf30] sm:$0xff]
        %v501 = vld [vmem:[%s373 + $0xf38] sm:$0xff]
        %v502 = vld [vmem:[%s373 + $0xf40] sm:$0xff]
        %v503 = vld [vmem:[%s373 + $0xf48] sm:$0xff]
        %v504 = vld [vmem:[%s373 + $0xf50] sm:$0xff]
        %v505 = vld [vmem:[%s373 + $0xf58] sm:$0xff]
        %v506 = vld [vmem:[%s373 + $0xf60] sm:$0xff]
        %v507 = vld [vmem:[%s373 + $0xf68] sm:$0xff]
        %v508 = vld [vmem:[%s373 + $0xf70] sm:$0xff]
        %v509 = vld [vmem:[%s373 + $0xf78] sm:$0xff]
        %v510 = vld [vmem:[%s373 + $0xf80] sm:$0xff]
        %v511 = vld [vmem:[%s373 + $0xf88] sm:$0xff]
        %v512 = vld [vmem:[%s373 + $0xf90] sm:$0xff]
        %v513 = vld [vmem:[%s373 + $0xf98] sm:$0xf]
        %v514 = vld [vmem:[%s373 + $0x10e0] sm:$0xff]
        %v515 = vld [vmem:[%s373 + $0x10e8] sm:$0xff]
        %v516 = vld [vmem:[%s373 + $0x10f0] sm:$0xff]
        %v517 = vld [vmem:[%s373 + $0x10f8] sm:$0xff]
        %v518 = vld [vmem:[%s373 + $0x1100] sm:$0xff]
        %v519 = vld [vmem:[%s373 + $0x1108] sm:$0xff]
        %v520 = vld [vmem:[%s373 + $0x1110] sm:$0xff]
        %v521 = vld [vmem:[%s373 + $0x1118] sm:$0xff]
        %v522 = vld [vmem:[%s373 + $0x1120] sm:$0xff]
        %v523 = vld [vmem:[%s373 + $0x1128] sm:$0xff]
        %v524 = vld [vmem:[%s373 + $0x1130] sm:$0xff]
        %v525 = vld [vmem:[%s373 + $0x1138] sm:$0xff]
        %v526 = vld [vmem:[%s373 + $0x1140] sm:$0xff]
        %v527 = vld [vmem:[%s373 + $0x1148] sm:$0xf]
        %v528 = vld [vmem:[%s373 + $0x1290] sm:$0xff]
        %v529 = vld [vmem:[%s373 + $0x1298] sm:$0xff]
        %v530 = vld [vmem:[%s373 + $0x12a0] sm:$0xff]
        %v531 = vld [vmem:[%s373 + $0x12a8] sm:$0xff]
        %v532 = vld [vmem:[%s373 + $0x12b0] sm:$0xff]
        %v533 = vld [vmem:[%s373 + $0x12b8] sm:$0xff]
        %v534 = vld [vmem:[%s373 + $0x12c0] sm:$0xff]
        %v535 = vld [vmem:[%s373 + $0x12c8] sm:$0xff]
        %v536 = vld [vmem:[%s373 + $0x12d0] sm:$0xff]
        %v537 = vld [vmem:[%s373 + $0x12d8] sm:$0xff]
        %v538 = vld [vmem:[%s373 + $0x12e0] sm:$0xff]
        %v539 = vld [vmem:[%s373 + $0x12e8] sm:$0xff]
        %v540 = vld [vmem:[%s373 + $0x12f0] sm:$0xff]
        %v541 = vld [vmem:[%s373 + $0x12f8] sm:$0xf]
        %v542 = vld [vmem:[%s373 + $0x1440] sm:$0xff]
        %v543 = vld [vmem:[%s373 + $0x1448] sm:$0xff]
        %v544 = vld [vmem:[%s373 + $0x1450] sm:$0xff]
        %v545 = vld [vmem:[%s373 + $0x1458] sm:$0xff]
        %v546 = vld [vmem:[%s373 + $0x1460] sm:$0xff]
        %v547 = vld [vmem:[%s373 + $0x1468] sm:$0xff]
        %v548 = vld [vmem:[%s373 + $0x1470] sm:$0xff]
        %v549 = vld [vmem:[%s373 + $0x1478] sm:$0xff]
        %v550 = vld [vmem:[%s373 + $0x1480] sm:$0xff]
        %v551 = vld [vmem:[%s373 + $0x1488] sm:$0xff]
        %v552 = vld [vmem:[%s373 + $0x1490] sm:$0xff]
        %v553 = vld [vmem:[%s373 + $0x1498] sm:$0xff]
        %v554 = vld [vmem:[%s373 + $0x14a0] sm:$0xff]
        %v555 = vld [vmem:[%s373 + $0x14a8] sm:$0xf]
        %v556 = vld [vmem:[%s373 + $0x15f0] sm:$0xff]
        %v557 = vld [vmem:[%s373 + $0x15f8] sm:$0xff]
        %v558 = vld [vmem:[%s373 + $0x1600] sm:$0xff]
        %v559 = vld [vmem:[%s373 + $0x1608] sm:$0xff]
        %v560 = vld [vmem:[%s373 + $0x1610] sm:$0xff]
        %v561 = vld [vmem:[%s373 + $0x1618] sm:$0xff]
        %v562 = vld [vmem:[%s373 + $0x1620] sm:$0xff]
        %v563 = vld [vmem:[%s373 + $0x1628] sm:$0xff]
        %v564 = vld [vmem:[%s373 + $0x1630] sm:$0xff]
        %v565 = vld [vmem:[%s373 + $0x1638] sm:$0xff]
        %v566 = vld [vmem:[%s373 + $0x1640] sm:$0xff]
        %v567 = vld [vmem:[%s373 + $0x1648] sm:$0xff]
        %v568 = vld [vmem:[%s373 + $0x1650] sm:$0xff]
        %v569 = vld [vmem:[%s373 + $0x1658] sm:$0xf]
        %v570 = vld [vmem:[%s373 + $0x17a0] sm:$0xff]
        %v571 = vld [vmem:[%s373 + $0x17a8] sm:$0xff]
        %v572 = vld [vmem:[%s373 + $0x17b0] sm:$0xff]
        %v573 = vld [vmem:[%s373 + $0x17b8] sm:$0xff]
        %v574 = vld [vmem:[%s373 + $0x17c0] sm:$0xff]
        %v575 = vld [vmem:[%s373 + $0x17c8] sm:$0xff]
        %v576 = vld [vmem:[%s373 + $0x17d0] sm:$0xff]
        %v577 = vld [vmem:[%s373 + $0x17d8] sm:$0xff]
        %v578 = vld [vmem:[%s373 + $0x17e0] sm:$0xff]
        %v579 = vld [vmem:[%s373 + $0x17e8] sm:$0xff]
        %v580 = vld [vmem:[%s373 + $0x17f0] sm:$0xff]
        %v581 = vld [vmem:[%s373 + $0x17f8] sm:$0xff]
        %v582 = vld [vmem:[%s373 + $0x1800] sm:$0xff]
        %v583 = vld [vmem:[%s373 + $0x1808] sm:$0xf]
        %v584 = vld [vmem:[%s373 + $0x1950] sm:$0xff]
        %v585 = vld [vmem:[%s373 + $0x1958] sm:$0xff]
        %v586 = vld [vmem:[%s373 + $0x1960] sm:$0xff]
        %v587 = vld [vmem:[%s373 + $0x1968] sm:$0xff]
        %v588 = vld [vmem:[%s373 + $0x1970] sm:$0xff]
        %v589 = vld [vmem:[%s373 + $0x1978] sm:$0xff]
        %v590 = vld [vmem:[%s373 + $0x1980] sm:$0xff]
        %v591 = vld [vmem:[%s373 + $0x1988] sm:$0xff]
        %v592 = vld [vmem:[%s373 + $0x1990] sm:$0xff]
        %v593 = vld [vmem:[%s373 + $0x1998] sm:$0xff]
        %v594 = vld [vmem:[%s373 + $0x19a0] sm:$0xff]
        %v595 = vld [vmem:[%s373 + $0x19a8] sm:$0xff]
        %v596 = vld [vmem:[%s373 + $0x19b0] sm:$0xff]
        %v597 = vld [vmem:[%s373 + $0x19b8] sm:$0xf]
        %v598 = vld [vmem:[#allocation2] sm:$0xff]
        %v599 = vld [vmem:[#allocation2 + $0x8] sm:$0xff]
        %v600 = vld [vmem:[#allocation2 + $0x10] sm:$0xff]
        %v601 = vld [vmem:[#allocation2 + $0x18] sm:$0xff]
        %v602 = vld [vmem:[#allocation2 + $0x20] sm:$0xff]
        %v603 = vld [vmem:[#allocation2 + $0x28] sm:$0xff]
        %v604 = vld [vmem:[#allocation2 + $0x30] sm:$0xff]
        %v605 = vld [vmem:[#allocation2 + $0x38] sm:$0xff]
        %v606 = vld [vmem:[#allocation2 + $0x40] sm:$0xff]
        %v607 = vld [vmem:[#allocation2 + $0x48] sm:$0xff]
        %v608 = vld [vmem:[#allocation2 + $0x50] sm:$0xff]
        %v609 = vld [vmem:[#allocation2 + $0x58] sm:$0xff]
        %v610 = vld [vmem:[#allocation2 + $0x60] sm:$0xff]
        %v611 = vld [vmem:[#allocation2 + $0x68] sm:$0xff]
        %v612 = vld [vmem:[#allocation2 + $0x70] sm:$0xff]
        %v613 = vld [vmem:[#allocation2 + $0x78] sm:$0xff]
        %v614 = vld [vmem:[%s331] sm:$0xff]
        %v615 = vld [vmem:[%s331 + $0x8] sm:$0xff]
        %v616 = vld [vmem:[%s331 + $0x10] sm:$0xff]
        %v617 = vld [vmem:[%s331 + $0x18] sm:$0xff]
        %v618 = vld [vmem:[%s331 + $0x20] sm:$0xff]
        %v619 = vld [vmem:[%s331 + $0x28] sm:$0xff]
        %v620 = vld [vmem:[%s331 + $0x30] sm:$0xff]
        %v621 = vld [vmem:[%s331 + $0x38] sm:$0xff]
        %v622 = vld [vmem:[%s331 + $0x40] sm:$0xff]
        %v623 = vld [vmem:[%s331 + $0x48] sm:$0xff]
        %v624 = vld [vmem:[%s331 + $0x50] sm:$0xff]
        %v625 = vld [vmem:[%s331 + $0x58] sm:$0xff]
        %v626 = vld [vmem:[%s331 + $0x60] sm:$0xff]
        %v627 = vld [vmem:[%s331 + $0x68] sm:$0xff]
        %v628 = vld [vmem:[%s331 + $0x70] sm:$0xff]
        %v629 = vld [vmem:[%s331 + $0x78] sm:$0xff]
        %v630 = vld [vmem:[%s331 + $0x80] sm:$0xff]
        %v631 = vld [vmem:[%s331 + $0x88] sm:$0xff]
        %v632 = vld [vmem:[%s331 + $0x90] sm:$0xff]
        %v633 = vld [vmem:[%s331 + $0x98] sm:$0xff]
        %v634 = vld [vmem:[%s331 + $0xa0] sm:$0xff]
        %v635 = vld [vmem:[%s331 + $0xa8] sm:$0xff]
        %v636 = vld [vmem:[%s331 + $0xb0] sm:$0xff]
        %v637 = vld [vmem:[%s331 + $0xb8] sm:$0xff]
        %v638 = vld [vmem:[%s331 + $0xc0] sm:$0xff]
        %v639 = vld [vmem:[%s331 + $0xc8] sm:$0xff]
        %v640 = vld [vmem:[%s331 + $0xd0] sm:$0xff]
        %v641 = vld [vmem:[%s331 + $0xd8] sm:$0xff]
        %v642 = vld [vmem:[%s331 + $0xe0] sm:$0xff]
        %v643 = vld [vmem:[%s331 + $0xe8] sm:$0xff]
        %v644 = vld [vmem:[%s331 + $0xf0] sm:$0xff]
        %v645 = vld [vmem:[%s331 + $0xf8] sm:$0xff]
        %v646 = vld [vmem:[%s331 + $0x100] sm:$0xff]
        %v647 = vld [vmem:[%s331 + $0x108] sm:$0xff]
        %v648 = vld [vmem:[%s331 + $0x110] sm:$0xff]
        %v649 = vld [vmem:[%s331 + $0x118] sm:$0xff]
        %v650 = vld [vmem:[%s331 + $0x120] sm:$0xff]
        %v651 = vld [vmem:[%s331 + $0x128] sm:$0xff]
        %v652 = vld [vmem:[%s331 + $0x130] sm:$0xff]
        %v653 = vld [vmem:[%s331 + $0x138] sm:$0xff]
        %v654 = vld [vmem:[%s331 + $0x140] sm:$0xff]
        %v655 = vld [vmem:[%s331 + $0x148] sm:$0xff]
        %v656 = vld [vmem:[%s331 + $0x150] sm:$0xff]
        %v657 = vld [vmem:[%s331 + $0x158] sm:$0xff]
        %v658 = vld [vmem:[%s331 + $0x160] sm:$0xff]
        %v659 = vld [vmem:[%s331 + $0x168] sm:$0xff]
        %v660 = vld [vmem:[%s331 + $0x170] sm:$0xff]
        %v661 = vld [vmem:[%s331 + $0x178] sm:$0xff]
        %v662 = vld [vmem:[%s331 + $0x180] sm:$0xff]
        %v663 = vld [vmem:[%s331 + $0x188] sm:$0xff]
        %v664 = vld [vmem:[%s331 + $0x190] sm:$0xff]
        %v665 = vld [vmem:[%s331 + $0x198] sm:$0xff]
        %v666 = vld [vmem:[%s331 + $0x1a0] sm:$0xff]
        %v667 = vld [vmem:[%s331 + $0x1a8] sm:$0xff]
        %v668 = vld [vmem:[%s331 + $0x1b0] sm:$0xff]
        %v669 = vld [vmem:[%s331 + $0x1b8] sm:$0xff]
        %v670 = vld [vmem:[%s331 + $0x1c0] sm:$0xff]
        %v671 = vld [vmem:[%s331 + $0x1c8] sm:$0xff]
        %v672 = vld [vmem:[%s331 + $0x1d0] sm:$0xff]
        %v673 = vld [vmem:[%s331 + $0x1d8] sm:$0xff]
        %v674 = vld [vmem:[%s331 + $0x1e0] sm:$0xff]
        %v675 = vld [vmem:[%s331 + $0x1e8] sm:$0xff]
        %v676 = vld [vmem:[%s331 + $0x1f0] sm:$0xff]
        %v677 = vld [vmem:[%s331 + $0x1f8] sm:$0xff]
        %v678 = vld [vmem:[%s331 + $0x200] sm:$0xff]
        %v679 = vld [vmem:[%s331 + $0x208] sm:$0xff]
        %v680 = vld [vmem:[%s331 + $0x210] sm:$0xff]
        %v681 = vld [vmem:[%s331 + $0x218] sm:$0xff]
        %v682 = vld [vmem:[%s331 + $0x220] sm:$0xff]
        %v683 = vld [vmem:[%s331 + $0x228] sm:$0xff]
        %v684 = vld [vmem:[%s331 + $0x230] sm:$0xff]
        %v685 = vld [vmem:[%s331 + $0x238] sm:$0xff]
        %v686 = vld [vmem:[%s331 + $0x240] sm:$0xff]
        %v687 = vld [vmem:[%s331 + $0x248] sm:$0xff]
        %v688 = vld [vmem:[%s331 + $0x250] sm:$0xff]
        %v689 = vld [vmem:[%s331 + $0x258] sm:$0xff]
        %v690 = vld [vmem:[%s331 + $0x260] sm:$0xff]
        %v691 = vld [vmem:[%s331 + $0x268] sm:$0xff]
        %v692 = vld [vmem:[%s331 + $0x270] sm:$0xff]
        %v693 = vld [vmem:[%s331 + $0x278] sm:$0xff]
        %v694 = vld [vmem:[%s331 + $0x280] sm:$0xff]
        %v695 = vld [vmem:[%s331 + $0x288] sm:$0xff]
        %v696 = vld [vmem:[%s331 + $0x290] sm:$0xff]
        %v697 = vld [vmem:[%s331 + $0x298] sm:$0xff]
        %v698 = vld [vmem:[%s331 + $0x2a0] sm:$0xff]
        %v699 = vld [vmem:[%s331 + $0x2a8] sm:$0xff]
        %v700 = vld [vmem:[%s331 + $0x2b0] sm:$0xff]
        %v701 = vld [vmem:[%s331 + $0x2b8] sm:$0xff]
        %v702 = vld [vmem:[%s331 + $0x2c0] sm:$0xff]
        %v703 = vld [vmem:[%s331 + $0x2c8] sm:$0xff]
        %v704 = vld [vmem:[%s331 + $0x2d0] sm:$0xff]
        %v705 = vld [vmem:[%s331 + $0x2d8] sm:$0xff]
        %v706 = vld [vmem:[%s331 + $0x2e0] sm:$0xff]
        %v707 = vld [vmem:[%s331 + $0x2e8] sm:$0xff]
        %v708 = vld [vmem:[%s331 + $0x2f0] sm:$0xff]
        %v709 = vld [vmem:[%s331 + $0x2f8] sm:$0xff]
        %v710 = vld [vmem:[%s331 + $0x300] sm:$0xff]
        %v711 = vld [vmem:[%s331 + $0x308] sm:$0xff]
        %v712 = vld [vmem:[%s331 + $0x310] sm:$0xff]
        %v713 = vld [vmem:[%s331 + $0x318] sm:$0xff]
        %v714 = vld [vmem:[%s331 + $0x320] sm:$0xff]
        %v715 = vld [vmem:[%s331 + $0x328] sm:$0xff]
        %v716 = vld [vmem:[%s331 + $0x330] sm:$0xff]
        %v717 = vld [vmem:[%s331 + $0x338] sm:$0xff]
        %v718 = vld [vmem:[%s331 + $0x340] sm:$0xff]
        %v719 = vld [vmem:[%s331 + $0x348] sm:$0xff]
        %v720 = vld [vmem:[%s331 + $0x350] sm:$0xff]
        %v721 = vld [vmem:[%s331 + $0x358] sm:$0xff]
        %v722 = vunpack.c.l.s8.bf16 %v614
        %v723 = vunpack.c.h.s8.bf16 %v614
        %v724 = vunpack.c.l.s8.bf16 %v615
        %v725 = vunpack.c.h.s8.bf16 %v615
        %v726 = vunpack.c.l.s8.bf16 %v616
        %v727 = vunpack.c.h.s8.bf16 %v616
        %v728 = vunpack.c.l.s8.bf16 %v617
        %v729 = vunpack.c.h.s8.bf16 %v617
        %v730 = vunpack.c.l.s8.bf16 %v618
        %v731 = vunpack.c.h.s8.bf16 %v618
        %v732 = vunpack.c.l.s8.bf16 %v619
        %v733 = vunpack.c.h.s8.bf16 %v619
        %v734 = vunpack.c.l.s8.bf16 %v620
        %v735 = vunpack.c.h.s8.bf16 %v620
        %v736 = vunpack.c.l.s8.bf16 %v621
        %v737 = vunpack.c.h.s8.bf16 %v621
        %v738 = vunpack.c.l.s8.bf16 %v622
        %v739 = vunpack.c.h.s8.bf16 %v622
        %v740 = vunpack.c.l.s8.bf16 %v623
        %v741 = vunpack.c.h.s8.bf16 %v623
        %v742 = vunpack.c.l.s8.bf16 %v624
        %v743 = vunpack.c.h.s8.bf16 %v624
        %v744 = vunpack.c.l.s8.bf16 %v625
        %v745 = vunpack.c.h.s8.bf16 %v625
        %v746 = vunpack.c.l.s8.bf16 %v626
        %v747 = vunpack.c.h.s8.bf16 %v626
        %v748 = vunpack.c.l.s8.bf16 %v627
        %v749 = vunpack.c.h.s8.bf16 %v627
        %v750 = vunpack.c.l.s8.bf16 %v628
        %v751 = vunpack.c.h.s8.bf16 %v628
        %v752 = vunpack.c.l.s8.bf16 %v629
        %v753 = vunpack.c.h.s8.bf16 %v629
        %v754 = vunpack.c.l.s8.bf16 %v630
        %v755 = vunpack.c.h.s8.bf16 %v630
        %v756 = vunpack.c.l.s8.bf16 %v631
        %v757 = vunpack.c.h.s8.bf16 %v631
        %v758 = vunpack.c.l.s8.bf16 %v632
        %v759 = vunpack.c.h.s8.bf16 %v632
        %v760 = vunpack.c.l.s8.bf16 %v633
        %v761 = vunpack.c.h.s8.bf16 %v633
        %v762 = vunpack.c.l.s8.bf16 %v634
        %v763 = vunpack.c.h.s8.bf16 %v634
        %v764 = vunpack.c.l.s8.bf16 %v635
        %v765 = vunpack.c.h.s8.bf16 %v635
        %v766 = vunpack.c.l.s8.bf16 %v636
        %v767 = vunpack.c.h.s8.bf16 %v636
        %v768 = vunpack.c.l.s8.bf16 %v637
        %v769 = vunpack.c.h.s8.bf16 %v637
        %v770 = vunpack.c.l.s8.bf16 %v638
        %v771 = vunpack.c.h.s8.bf16 %v638
        %v772 = vunpack.c.l.s8.bf16 %v639
        %v773 = vunpack.c.h.s8.bf16 %v639
        %v774 = vunpack.c.l.s8.bf16 %v640
        %v775 = vunpack.c.h.s8.bf16 %v640
        %v776 = vunpack.c.l.s8.bf16 %v641
        %v777 = vunpack.c.h.s8.bf16 %v641
        %v778 = vunpack.c.l.s8.bf16 %v642
        %v779 = vunpack.c.h.s8.bf16 %v642
        %v780 = vunpack.c.l.s8.bf16 %v643
        %v781 = vunpack.c.h.s8.bf16 %v643
        %v782 = vunpack.c.l.s8.bf16 %v644
        %v783 = vunpack.c.h.s8.bf16 %v644
        %v784 = vunpack.c.l.s8.bf16 %v645
        %v785 = vunpack.c.h.s8.bf16 %v645
        %v786 = vunpack.c.l.s8.bf16 %v646
        %v787 = vunpack.c.h.s8.bf16 %v646
        %v788 = vunpack.c.l.s8.bf16 %v647
        %v789 = vunpack.c.h.s8.bf16 %v647
        %v790 = vunpack.c.l.s8.bf16 %v648
        %v791 = vunpack.c.h.s8.bf16 %v648
        %v792 = vunpack.c.l.s8.bf16 %v649
        %v793 = vunpack.c.h.s8.bf16 %v649
        %v794 = vunpack.c.l.s8.bf16 %v650
        %v795 = vunpack.c.h.s8.bf16 %v650
        %v796 = vunpack.c.l.s8.bf16 %v651
        %v797 = vunpack.c.h.s8.bf16 %v651
        %v798 = vunpack.c.l.s8.bf16 %v652
        %v799 = vunpack.c.h.s8.bf16 %v652
        %v800 = vunpack.c.l.s8.bf16 %v653
        %v801 = vunpack.c.h.s8.bf16 %v653
        %v802 = vunpack.c.l.s8.bf16 %v654
        %v803 = vunpack.c.h.s8.bf16 %v654
        %v804 = vunpack.c.l.s8.bf16 %v655
        %v805 = vunpack.c.h.s8.bf16 %v655
        %v806 = vunpack.c.l.s8.bf16 %v656
        %v807 = vunpack.c.h.s8.bf16 %v656
        %v808 = vunpack.c.l.s8.bf16 %v657
        %v809 = vunpack.c.h.s8.bf16 %v657
        %v810 = vunpack.c.l.s8.bf16 %v658
        %v811 = vunpack.c.h.s8.bf16 %v658
        %v812 = vunpack.c.l.s8.bf16 %v659
        %v813 = vunpack.c.h.s8.bf16 %v659
        %v814 = vunpack.c.l.s8.bf16 %v660
        %v815 = vunpack.c.h.s8.bf16 %v660
        %v816 = vunpack.c.l.s8.bf16 %v661
        %v817 = vunpack.c.h.s8.bf16 %v661
        %v818 = vunpack.c.l.s8.bf16 %v662
        %v819 = vunpack.c.h.s8.bf16 %v662
        %v820 = vunpack.c.l.s8.bf16 %v663
        %v821 = vunpack.c.h.s8.bf16 %v663
        %v822 = vunpack.c.l.s8.bf16 %v664
        %v823 = vunpack.c.h.s8.bf16 %v664
        %v824 = vunpack.c.l.s8.bf16 %v665
        %v825 = vunpack.c.h.s8.bf16 %v665
        %v826 = vunpack.c.l.s8.bf16 %v666
        %v827 = vunpack.c.h.s8.bf16 %v666
        %v828 = vunpack.c.l.s8.bf16 %v667
        %v829 = vunpack.c.h.s8.bf16 %v667
        %v830 = vunpack.c.l.s8.bf16 %v668
        %v831 = vunpack.c.h.s8.bf16 %v668
        %v832 = vunpack.c.l.s8.bf16 %v669
        %v833 = vunpack.c.h.s8.bf16 %v669
        %v834 = vunpack.c.l.s8.bf16 %v670
        %v835 = vunpack.c.h.s8.bf16 %v670
        %v836 = vunpack.c.l.s8.bf16 %v671
        %v837 = vunpack.c.h.s8.bf16 %v671
        %v838 = vunpack.c.l.s8.bf16 %v672
        %v839 = vunpack.c.h.s8.bf16 %v672
        %v840 = vunpack.c.l.s8.bf16 %v673
        %v841 = vunpack.c.h.s8.bf16 %v673
        %v842 = vunpack.c.l.s8.bf16 %v674
        %v843 = vunpack.c.h.s8.bf16 %v674
        %v844 = vunpack.c.l.s8.bf16 %v675
        %v845 = vunpack.c.h.s8.bf16 %v675
        %v846 = vunpack.c.l.s8.bf16 %v676
        %v847 = vunpack.c.h.s8.bf16 %v676
        %v848 = vunpack.c.l.s8.bf16 %v677
        %v849 = vunpack.c.h.s8.bf16 %v677
        %v850 = vunpack.c.l.s8.bf16 %v678
        %v851 = vunpack.c.h.s8.bf16 %v678
        %v852 = vunpack.c.l.s8.bf16 %v679
        %v853 = vunpack.c.h.s8.bf16 %v679
        %v854 = vunpack.c.l.s8.bf16 %v680
        %v855 = vunpack.c.h.s8.bf16 %v680
        %v856 = vunpack.c.l.s8.bf16 %v681
        %v857 = vunpack.c.h.s8.bf16 %v681
        %v858 = vunpack.c.l.s8.bf16 %v682
        %v859 = vunpack.c.h.s8.bf16 %v682
        %v860 = vunpack.c.l.s8.bf16 %v683
        %v861 = vunpack.c.h.s8.bf16 %v683
        %v862 = vunpack.c.l.s8.bf16 %v684
        %v863 = vunpack.c.h.s8.bf16 %v684
        %v864 = vunpack.c.l.s8.bf16 %v685
        %v865 = vunpack.c.h.s8.bf16 %v685
        %v866 = vunpack.c.l.s8.bf16 %v686
        %v867 = vunpack.c.h.s8.bf16 %v686
        %v868 = vunpack.c.l.s8.bf16 %v687
        %v869 = vunpack.c.h.s8.bf16 %v687
        %v870 = vunpack.c.l.s8.bf16 %v688
        %v871 = vunpack.c.h.s8.bf16 %v688
        %v872 = vunpack.c.l.s8.bf16 %v689
        %v873 = vunpack.c.h.s8.bf16 %v689
        %v874 = vunpack.c.l.s8.bf16 %v690
        %v875 = vunpack.c.h.s8.bf16 %v690
        %v876 = vunpack.c.l.s8.bf16 %v691
        %v877 = vunpack.c.h.s8.bf16 %v691
        %v878 = vunpack.c.l.s8.bf16 %v692
        %v879 = vunpack.c.h.s8.bf16 %v692
        %v880 = vunpack.c.l.s8.bf16 %v693
        %v881 = vunpack.c.h.s8.bf16 %v693
        %v882 = vunpack.c.l.s8.bf16 %v694
        %v883 = vunpack.c.h.s8.bf16 %v694
        %v884 = vunpack.c.l.s8.bf16 %v695
        %v885 = vunpack.c.h.s8.bf16 %v695
        %v886 = vunpack.c.l.s8.bf16 %v696
        %v887 = vunpack.c.h.s8.bf16 %v696
        %v888 = vunpack.c.l.s8.bf16 %v697
        %v889 = vunpack.c.h.s8.bf16 %v697
        %v890 = vunpack.c.l.s8.bf16 %v698
        %v891 = vunpack.c.h.s8.bf16 %v698
        %v892 = vunpack.c.l.s8.bf16 %v699
        %v893 = vunpack.c.h.s8.bf16 %v699
        %v894 = vunpack.c.l.s8.bf16 %v700
        %v895 = vunpack.c.h.s8.bf16 %v700
        %v896 = vunpack.c.l.s8.bf16 %v701
        %v897 = vunpack.c.h.s8.bf16 %v701
        %v898 = vunpack.c.l.s8.bf16 %v702
        %v899 = vunpack.c.h.s8.bf16 %v702
        %v900 = vunpack.c.l.s8.bf16 %v703
        %v901 = vunpack.c.h.s8.bf16 %v703
        %v902 = vunpack.c.l.s8.bf16 %v704
        %v903 = vunpack.c.h.s8.bf16 %v704
        %v904 = vunpack.c.l.s8.bf16 %v705
        %v905 = vunpack.c.h.s8.bf16 %v705
        %v906 = vunpack.c.l.s8.bf16 %v706
        %v907 = vunpack.c.h.s8.bf16 %v706
        %v908 = vunpack.c.l.s8.bf16 %v707
        %v909 = vunpack.c.h.s8.bf16 %v707
        %v910 = vunpack.c.l.s8.bf16 %v708
        %v911 = vunpack.c.h.s8.bf16 %v708
        %v912 = vunpack.c.l.s8.bf16 %v709
        %v913 = vunpack.c.h.s8.bf16 %v709
        %v914 = vunpack.c.l.s8.bf16 %v710
        %v915 = vunpack.c.h.s8.bf16 %v710
        %v916 = vunpack.c.l.s8.bf16 %v711
        %v917 = vunpack.c.h.s8.bf16 %v711
        %v918 = vunpack.c.l.s8.bf16 %v712
        %v919 = vunpack.c.h.s8.bf16 %v712
        %v920 = vunpack.c.l.s8.bf16 %v713
        %v921 = vunpack.c.h.s8.bf16 %v713
        %v922 = vunpack.c.l.s8.bf16 %v714
        %v923 = vunpack.c.h.s8.bf16 %v714
        %v924 = vunpack.c.l.s8.bf16 %v715
        %v925 = vunpack.c.h.s8.bf16 %v715
        %v926 = vunpack.c.l.s8.bf16 %v716
        %v927 = vunpack.c.h.s8.bf16 %v716
        %v928 = vunpack.c.l.s8.bf16 %v717
        %v929 = vunpack.c.h.s8.bf16 %v717
        %v930 = vunpack.c.l.s8.bf16 %v718
        %v931 = vunpack.c.h.s8.bf16 %v718
        %v932 = vunpack.c.l.s8.bf16 %v719
        %v933 = vunpack.c.h.s8.bf16 %v719
        %v934 = vunpack.c.l.s8.bf16 %v720
        %v935 = vunpack.c.h.s8.bf16 %v720
        %v936 = vunpack.c.l.s8.bf16 %v721
        %v937 = vunpack.c.h.s8.bf16 %v721
        %v1162 = vunpack.c.l.b16 %v374
        %v1163 = vunpack.c.h.b16 %v374
        %v1164 = vunpack.c.l.b16 %v375
        %v1165 = vunpack.c.h.b16 %v375
        %v1166 = vunpack.c.l.b16 %v376
        %v1167 = vunpack.c.h.b16 %v376
        %v1168 = vunpack.c.l.b16 %v377
        %v1169 = vunpack.c.h.b16 %v377
        %v1170 = vunpack.c.l.b16 %v378
        %v1171 = vunpack.c.h.b16 %v378
        %v1172 = vunpack.c.l.b16 %v379
        %v1173 = vunpack.c.h.b16 %v379
        %v1174 = vunpack.c.l.b16 %v380
        %v1175 = vunpack.c.h.b16 %v380
        %v1176 = vunpack.c.l.b16 %v381
        %v1177 = vunpack.c.h.b16 %v381
        %v1178 = vunpack.c.l.b16 %v382
        %v1179 = vunpack.c.h.b16 %v382
        %v1180 = vunpack.c.l.b16 %v383
        %v1181 = vunpack.c.h.b16 %v383
        %v1182 = vunpack.c.l.b16 %v384
        %v1183 = vunpack.c.h.b16 %v384
        %v1184 = vunpack.c.l.b16 %v385
        %v1185 = vunpack.c.h.b16 %v385
        %v1186 = vunpack.c.l.b16 %v386
        %v1187 = vunpack.c.h.b16 %v386
        %v1188 = vunpack.c.l.b16 %v387
        %v1189 = vunpack.c.l.b16 %v388
        %v1190 = vunpack.c.h.b16 %v388
        %v1191 = vunpack.c.l.b16 %v389
        %v1192 = vunpack.c.h.b16 %v389
        %v1193 = vunpack.c.l.b16 %v390
        %v1194 = vunpack.c.h.b16 %v390
        %v1195 = vunpack.c.l.b16 %v391
        %v1196 = vunpack.c.h.b16 %v391
        %v1197 = vunpack.c.l.b16 %v392
        %v1198 = vunpack.c.h.b16 %v392
        %v1199 = vunpack.c.l.b16 %v393
        %v1200 = vunpack.c.h.b16 %v393
        %v1201 = vunpack.c.l.b16 %v394
        %v1202 = vunpack.c.h.b16 %v394
        %v1203 = vunpack.c.l.b16 %v395
        %v1204 = vunpack.c.h.b16 %v395
        %v1205 = vunpack.c.l.b16 %v396
        %v1206 = vunpack.c.h.b16 %v396
        %v1207 = vunpack.c.l.b16 %v397
        %v1208 = vunpack.c.h.b16 %v397
        %v1209 = vunpack.c.l.b16 %v398
        %v1210 = vunpack.c.h.b16 %v398
        %v1211 = vunpack.c.l.b16 %v399
        %v1212 = vunpack.c.h.b16 %v399
        %v1213 = vunpack.c.l.b16 %v400
        %v1214 = vunpack.c.h.b16 %v400
        %v1215 = vunpack.c.l.b16 %v401
        %v1216 = vunpack.c.l.b16 %v402
        %v1217 = vunpack.c.h.b16 %v402
        %v1218 = vunpack.c.l.b16 %v403
        %v1219 = vunpack.c.h.b16 %v403
        %v1220 = vunpack.c.l.b16 %v404
        %v1221 = vunpack.c.h.b16 %v404
        %v1222 = vunpack.c.l.b16 %v405
        %v1223 = vunpack.c.h.b16 %v405
        %v1224 = vunpack.c.l.b16 %v406
        %v1225 = vunpack.c.h.b16 %v406
        %v1226 = vunpack.c.l.b16 %v407
        %v1227 = vunpack.c.h.b16 %v407
        %v1228 = vunpack.c.l.b16 %v408
        %v1229 = vunpack.c.h.b16 %v408
        %v1230 = vunpack.c.l.b16 %v409
        %v1231 = vunpack.c.h.b16 %v409
        %v1232 = vunpack.c.l.b16 %v410
        %v1233 = vunpack.c.h.b16 %v410
        %v1234 = vunpack.c.l.b16 %v411
        %v1235 = vunpack.c.h.b16 %v411
        %v1236 = vunpack.c.l.b16 %v412
        %v1237 = vunpack.c.h.b16 %v412
        %v1238 = vunpack.c.l.b16 %v413
        %v1239 = vunpack.c.h.b16 %v413
        %v1240 = vunpack.c.l.b16 %v414
        %v1241 = vunpack.c.h.b16 %v414
        %v1242 = vunpack.c.l.b16 %v415
        %v1243 = vunpack.c.l.b16 %v416
        %v1244 = vunpack.c.h.b16 %v416
        %v1245 = vunpack.c.l.b16 %v417
        %v1246 = vunpack.c.h.b16 %v417
        %v1247 = vunpack.c.l.b16 %v418
        %v1248 = vunpack.c.h.b16 %v418
        %v1249 = vunpack.c.l.b16 %v419
        %v1250 = vunpack.c.h.b16 %v419
        %v1251 = vunpack.c.l.b16 %v420
        %v1252 = vunpack.c.h.b16 %v420
        %v1253 = vunpack.c.l.b16 %v421
        %v1254 = vunpack.c.h.b16 %v421
        %v1255 = vunpack.c.l.b16 %v422
        %v1256 = vunpack.c.h.b16 %v422
        %v1257 = vunpack.c.l.b16 %v423
        %v1258 = vunpack.c.h.b16 %v423
        %v1259 = vunpack.c.l.b16 %v424
        %v1260 = vunpack.c.h.b16 %v424
        %v1261 = vunpack.c.l.b16 %v425
        %v1262 = vunpack.c.h.b16 %v425
        %v1263 = vunpack.c.l.b16 %v426
        %v1264 = vunpack.c.h.b16 %v426
        %v1265 = vunpack.c.l.b16 %v427
        %v1266 = vunpack.c.h.b16 %v427
        %v1267 = vunpack.c.l.b16 %v428
        %v1268 = vunpack.c.h.b16 %v428
        %v1269 = vunpack.c.l.b16 %v429
        %v1270 = vunpack.c.l.b16 %v430
        %v1271 = vunpack.c.h.b16 %v430
        %v1272 = vunpack.c.l.b16 %v431
        %v1273 = vunpack.c.h.b16 %v431
        %v1274 = vunpack.c.l.b16 %v432
        %v1275 = vunpack.c.h.b16 %v432
        %v1276 = vunpack.c.l.b16 %v433
        %v1277 = vunpack.c.h.b16 %v433
        %v1278 = vunpack.c.l.b16 %v434
        %v1279 = vunpack.c.h.b16 %v434
        %v1280 = vunpack.c.l.b16 %v435
        %v1281 = vunpack.c.h.b16 %v435
        %v1282 = vunpack.c.l.b16 %v436
        %v1283 = vunpack.c.h.b16 %v436
        %v1284 = vunpack.c.l.b16 %v437
        %v1285 = vunpack.c.h.b16 %v437
        %v1286 = vunpack.c.l.b16 %v438
        %v1287 = vunpack.c.h.b16 %v438
        %v1288 = vunpack.c.l.b16 %v439
        %v1289 = vunpack.c.h.b16 %v439
        %v1290 = vunpack.c.l.b16 %v440
        %v1291 = vunpack.c.h.b16 %v440
        %v1292 = vunpack.c.l.b16 %v441
        %v1293 = vunpack.c.h.b16 %v441
        %v1294 = vunpack.c.l.b16 %v442
        %v1295 = vunpack.c.h.b16 %v442
        %v1296 = vunpack.c.l.b16 %v443
        %v1297 = vunpack.c.l.b16 %v444
        %v1298 = vunpack.c.h.b16 %v444
        %v1299 = vunpack.c.l.b16 %v445
        %v1300 = vunpack.c.h.b16 %v445
        %v1301 = vunpack.c.l.b16 %v446
        %v1302 = vunpack.c.h.b16 %v446
        %v1303 = vunpack.c.l.b16 %v447
        %v1304 = vunpack.c.h.b16 %v447
        %v1305 = vunpack.c.l.b16 %v448
        %v1306 = vunpack.c.h.b16 %v448
        %v1307 = vunpack.c.l.b16 %v449
        %v1308 = vunpack.c.h.b16 %v449
        %v1309 = vunpack.c.l.b16 %v450
        %v1310 = vunpack.c.h.b16 %v450
        %v1311 = vunpack.c.l.b16 %v451
        %v1312 = vunpack.c.h.b16 %v451
        %v1313 = vunpack.c.l.b16 %v452
        %v1314 = vunpack.c.h.b16 %v452
        %v1315 = vunpack.c.l.b16 %v453
        %v1316 = vunpack.c.h.b16 %v453
        %v1317 = vunpack.c.l.b16 %v454
        %v1318 = vunpack.c.h.b16 %v454
        %v1319 = vunpack.c.l.b16 %v455
        %v1320 = vunpack.c.h.b16 %v455
        %v1321 = vunpack.c.l.b16 %v456
        %v1322 = vunpack.c.h.b16 %v456
        %v1323 = vunpack.c.l.b16 %v457
        %v1324 = vunpack.c.l.b16 %v458
        %v1325 = vunpack.c.h.b16 %v458
        %v1326 = vunpack.c.l.b16 %v459
        %v1327 = vunpack.c.h.b16 %v459
        %v1328 = vunpack.c.l.b16 %v460
        %v1329 = vunpack.c.h.b16 %v460
        %v1330 = vunpack.c.l.b16 %v461
        %v1331 = vunpack.c.h.b16 %v461
        %v1332 = vunpack.c.l.b16 %v462
        %v1333 = vunpack.c.h.b16 %v462
        %v1334 = vunpack.c.l.b16 %v463
        %v1335 = vunpack.c.h.b16 %v463
        %v1336 = vunpack.c.l.b16 %v464
        %v1337 = vunpack.c.h.b16 %v464
        %v1338 = vunpack.c.l.b16 %v465
        %v1339 = vunpack.c.h.b16 %v465
        %v1340 = vunpack.c.l.b16 %v466
        %v1341 = vunpack.c.h.b16 %v466
        %v1342 = vunpack.c.l.b16 %v467
        %v1343 = vunpack.c.h.b16 %v467
        %v1344 = vunpack.c.l.b16 %v468
        %v1345 = vunpack.c.h.b16 %v468
        %v1346 = vunpack.c.l.b16 %v469
        %v1347 = vunpack.c.h.b16 %v469
        %v1348 = vunpack.c.l.b16 %v470
        %v1349 = vunpack.c.h.b16 %v470
        %v1350 = vunpack.c.l.b16 %v471
        %v1351 = vunpack.c.l.b16 %v472
        %v1352 = vunpack.c.h.b16 %v472
        %v1353 = vunpack.c.l.b16 %v473
        %v1354 = vunpack.c.h.b16 %v473
        %v1355 = vunpack.c.l.b16 %v474
        %v1356 = vunpack.c.h.b16 %v474
        %v1357 = vunpack.c.l.b16 %v475
        %v1358 = vunpack.c.h.b16 %v475
        %v1359 = vunpack.c.l.b16 %v476
        %v1360 = vunpack.c.h.b16 %v476
        %v1361 = vunpack.c.l.b16 %v477
        %v1362 = vunpack.c.h.b16 %v477
        %v1363 = vunpack.c.l.b16 %v478
        %v1364 = vunpack.c.h.b16 %v478
        %v1365 = vunpack.c.l.b16 %v479
        %v1366 = vunpack.c.h.b16 %v479
        %v1367 = vunpack.c.l.b16 %v480
        %v1368 = vunpack.c.h.b16 %v480
        %v1369 = vunpack.c.l.b16 %v481
        %v1370 = vunpack.c.h.b16 %v481
        %v1371 = vunpack.c.l.b16 %v482
        %v1372 = vunpack.c.h.b16 %v482
        %v1373 = vunpack.c.l.b16 %v483
        %v1374 = vunpack.c.h.b16 %v483
        %v1375 = vunpack.c.l.b16 %v484
        %v1376 = vunpack.c.h.b16 %v484
        %v1377 = vunpack.c.l.b16 %v485
        %v1378 = vunpack.c.l.b16 %v486
        %v1379 = vunpack.c.h.b16 %v486
        %v1380 = vunpack.c.l.b16 %v487
        %v1381 = vunpack.c.h.b16 %v487
        %v1382 = vunpack.c.l.b16 %v488
        %v1383 = vunpack.c.h.b16 %v488
        %v1384 = vunpack.c.l.b16 %v489
        %v1385 = vunpack.c.h.b16 %v489
        %v1386 = vunpack.c.l.b16 %v490
        %v1387 = vunpack.c.h.b16 %v490
        %v1388 = vunpack.c.l.b16 %v491
        %v1389 = vunpack.c.h.b16 %v491
        %v1390 = vunpack.c.l.b16 %v492
        %v1391 = vunpack.c.h.b16 %v492
        %v1392 = vunpack.c.l.b16 %v493
        %v1393 = vunpack.c.h.b16 %v493
        %v1394 = vunpack.c.l.b16 %v494
        %v1395 = vunpack.c.h.b16 %v494
        %v1396 = vunpack.c.l.b16 %v495
        %v1397 = vunpack.c.h.b16 %v495
        %v1398 = vunpack.c.l.b16 %v496
        %v1399 = vunpack.c.h.b16 %v496
        %v1400 = vunpack.c.l.b16 %v497
        %v1401 = vunpack.c.h.b16 %v497
        %v1402 = vunpack.c.l.b16 %v498
        %v1403 = vunpack.c.h.b16 %v498
        %v1404 = vunpack.c.l.b16 %v499
        %v1405 = vunpack.c.l.b16 %v500
        %v1406 = vunpack.c.h.b16 %v500
        %v1407 = vunpack.c.l.b16 %v501
        %v1408 = vunpack.c.h.b16 %v501
        %v1409 = vunpack.c.l.b16 %v502
        %v1410 = vunpack.c.h.b16 %v502
        %v1411 = vunpack.c.l.b16 %v503
        %v1412 = vunpack.c.h.b16 %v503
        %v1413 = vunpack.c.l.b16 %v504
        %v1414 = vunpack.c.h.b16 %v504
        %v1415 = vunpack.c.l.b16 %v505
        %v1416 = vunpack.c.h.b16 %v505
        %v1417 = vunpack.c.l.b16 %v506
        %v1418 = vunpack.c.h.b16 %v506
        %v1419 = vunpack.c.l.b16 %v507
        %v1420 = vunpack.c.h.b16 %v507
        %v1421 = vunpack.c.l.b16 %v508
        %v1422 = vunpack.c.h.b16 %v508
        %v1423 = vunpack.c.l.b16 %v509
        %v1424 = vunpack.c.h.b16 %v509
        %v1425 = vunpack.c.l.b16 %v510
        %v1426 = vunpack.c.h.b16 %v510
        %v1427 = vunpack.c.l.b16 %v511
        %v1428 = vunpack.c.h.b16 %v511
        %v1429 = vunpack.c.l.b16 %v512
        %v1430 = vunpack.c.h.b16 %v512
        %v1431 = vunpack.c.l.b16 %v513
        %v1432 = vunpack.c.l.b16 %v514
        %v1433 = vunpack.c.h.b16 %v514
        %v1434 = vunpack.c.l.b16 %v515
        %v1435 = vunpack.c.h.b16 %v515
        %v1436 = vunpack.c.l.b16 %v516
        %v1437 = vunpack.c.h.b16 %v516
        %v1438 = vunpack.c.l.b16 %v517
        %v1439 = vunpack.c.h.b16 %v517
        %v1440 = vunpack.c.l.b16 %v518
        %v1441 = vunpack.c.h.b16 %v518
        %v1442 = vunpack.c.l.b16 %v519
        %v1443 = vunpack.c.h.b16 %v519
        %v1444 = vunpack.c.l.b16 %v520
        %v1445 = vunpack.c.h.b16 %v520
        %v1446 = vunpack.c.l.b16 %v521
        %v1447 = vunpack.c.h.b16 %v521
        %v1448 = vunpack.c.l.b16 %v522
        %v1449 = vunpack.c.h.b16 %v522
        %v1450 = vunpack.c.l.b16 %v523
        %v1451 = vunpack.c.h.b16 %v523
        %v1452 = vunpack.c.l.b16 %v524
        %v1453 = vunpack.c.h.b16 %v524
        %v1454 = vunpack.c.l.b16 %v525
        %v1455 = vunpack.c.h.b16 %v525
        %v1456 = vunpack.c.l.b16 %v526
        %v1457 = vunpack.c.h.b16 %v526
        %v1458 = vunpack.c.l.b16 %v527
        %v1459 = vunpack.c.l.b16 %v528
        %v1460 = vunpack.c.h.b16 %v528
        %v1461 = vunpack.c.l.b16 %v529
        %v1462 = vunpack.c.h.b16 %v529
        %v1463 = vunpack.c.l.b16 %v530
        %v1464 = vunpack.c.h.b16 %v530
        %v1465 = vunpack.c.l.b16 %v531
        %v1466 = vunpack.c.h.b16 %v531
        %v1467 = vunpack.c.l.b16 %v532
        %v1468 = vunpack.c.h.b16 %v532
        %v1469 = vunpack.c.l.b16 %v533
        %v1470 = vunpack.c.h.b16 %v533
        %v1471 = vunpack.c.l.b16 %v534
        %v1472 = vunpack.c.h.b16 %v534
        %v1473 = vunpack.c.l.b16 %v535
        %v1474 = vunpack.c.h.b16 %v535
        %v1475 = vunpack.c.l.b16 %v536
        %v1476 = vunpack.c.h.b16 %v536
        %v1477 = vunpack.c.l.b16 %v537
        %v1478 = vunpack.c.h.b16 %v537
        %v1479 = vunpack.c.l.b16 %v538
        %v1480 = vunpack.c.h.b16 %v538
        %v1481 = vunpack.c.l.b16 %v539
        %v1482 = vunpack.c.h.b16 %v539
        %v1483 = vunpack.c.l.b16 %v540
        %v1484 = vunpack.c.h.b16 %v540
        %v1485 = vunpack.c.l.b16 %v541
        %v1486 = vunpack.c.l.b16 %v542
        %v1487 = vunpack.c.h.b16 %v542
        %v1488 = vunpack.c.l.b16 %v543
        %v1489 = vunpack.c.h.b16 %v543
        %v1490 = vunpack.c.l.b16 %v544
        %v1491 = vunpack.c.h.b16 %v544
        %v1492 = vunpack.c.l.b16 %v545
        %v1493 = vunpack.c.h.b16 %v545
        %v1494 = vunpack.c.l.b16 %v546
        %v1495 = vunpack.c.h.b16 %v546
        %v1496 = vunpack.c.l.b16 %v547
        %v1497 = vunpack.c.h.b16 %v547
        %v1498 = vunpack.c.l.b16 %v548
        %v1499 = vunpack.c.h.b16 %v548
        %v1500 = vunpack.c.l.b16 %v549
        %v1501 = vunpack.c.h.b16 %v549
        %v1502 = vunpack.c.l.b16 %v550
        %v1503 = vunpack.c.h.b16 %v550
        %v1504 = vunpack.c.l.b16 %v551
        %v1505 = vunpack.c.h.b16 %v551
        %v1506 = vunpack.c.l.b16 %v552
        %v1507 = vunpack.c.h.b16 %v552
        %v1508 = vunpack.c.l.b16 %v553
        %v1509 = vunpack.c.h.b16 %v553
        %v1510 = vunpack.c.l.b16 %v554
        %v1511 = vunpack.c.h.b16 %v554
        %v1512 = vunpack.c.l.b16 %v555
        %v1513 = vunpack.c.l.b16 %v556
        %v1514 = vunpack.c.h.b16 %v556
        %v1515 = vunpack.c.l.b16 %v557
        %v1516 = vunpack.c.h.b16 %v557
        %v1517 = vunpack.c.l.b16 %v558
        %v1518 = vunpack.c.h.b16 %v558
        %v1519 = vunpack.c.l.b16 %v559
        %v1520 = vunpack.c.h.b16 %v559
        %v1521 = vunpack.c.l.b16 %v560
        %v1522 = vunpack.c.h.b16 %v560
        %v1523 = vunpack.c.l.b16 %v561
        %v1524 = vunpack.c.h.b16 %v561
        %v1525 = vunpack.c.l.b16 %v562
        %v1526 = vunpack.c.h.b16 %v562
        %v1527 = vunpack.c.l.b16 %v563
        %v1528 = vunpack.c.h.b16 %v563
        %v1529 = vunpack.c.l.b16 %v564
        %v1530 = vunpack.c.h.b16 %v564
        %v1531 = vunpack.c.l.b16 %v565
        %v1532 = vunpack.c.h.b16 %v565
        %v1533 = vunpack.c.l.b16 %v566
        %v1534 = vunpack.c.h.b16 %v566
        %v1535 = vunpack.c.l.b16 %v567
        %v1536 = vunpack.c.h.b16 %v567
        %v1537 = vunpack.c.l.b16 %v568
        %v1538 = vunpack.c.h.b16 %v568
        %v1539 = vunpack.c.l.b16 %v569
        %v1540 = vunpack.c.l.b16 %v570
        %v1541 = vunpack.c.h.b16 %v570
        %v1542 = vunpack.c.l.b16 %v571
        %v1543 = vunpack.c.h.b16 %v571
        %v1544 = vunpack.c.l.b16 %v572
        %v1545 = vunpack.c.h.b16 %v572
        %v1546 = vunpack.c.l.b16 %v573
        %v1547 = vunpack.c.h.b16 %v573
        %v1548 = vunpack.c.l.b16 %v574
        %v1549 = vunpack.c.h.b16 %v574
        %v1550 = vunpack.c.l.b16 %v575
        %v1551 = vunpack.c.h.b16 %v575
        %v1552 = vunpack.c.l.b16 %v576
        %v1553 = vunpack.c.h.b16 %v576
        %v1554 = vunpack.c.l.b16 %v577
        %v1555 = vunpack.c.h.b16 %v577
        %v1556 = vunpack.c.l.b16 %v578
        %v1557 = vunpack.c.h.b16 %v578
        %v1558 = vunpack.c.l.b16 %v579
        %v1559 = vunpack.c.h.b16 %v579
        %v1560 = vunpack.c.l.b16 %v580
        %v1561 = vunpack.c.h.b16 %v580
        %v1562 = vunpack.c.l.b16 %v581
        %v1563 = vunpack.c.h.b16 %v581
        %v1564 = vunpack.c.l.b16 %v582
        %v1565 = vunpack.c.h.b16 %v582
        %v1566 = vunpack.c.l.b16 %v583
        %v1567 = vunpack.c.l.b16 %v584
        %v1568 = vunpack.c.h.b16 %v584
        %v1569 = vunpack.c.l.b16 %v585
        %v1570 = vunpack.c.h.b16 %v585
        %v1571 = vunpack.c.l.b16 %v586
        %v1572 = vunpack.c.h.b16 %v586
        %v1573 = vunpack.c.l.b16 %v587
        %v1574 = vunpack.c.h.b16 %v587
        %v1575 = vunpack.c.l.b16 %v588
        %v1576 = vunpack.c.h.b16 %v588
        %v1577 = vunpack.c.l.b16 %v589
        %v1578 = vunpack.c.h.b16 %v589
        %v1579 = vunpack.c.l.b16 %v590
        %v1580 = vunpack.c.h.b16 %v590
        %v1581 = vunpack.c.l.b16 %v591
        %v1582 = vunpack.c.h.b16 %v591
        %v1583 = vunpack.c.l.b16 %v592
        %v1584 = vunpack.c.h.b16 %v592
        %v1585 = vunpack.c.l.b16 %v593
        %v1586 = vunpack.c.h.b16 %v593
        %v1587 = vunpack.c.l.b16 %v594
        %v1588 = vunpack.c.h.b16 %v594
        %v1589 = vunpack.c.l.b16 %v595
        %v1590 = vunpack.c.h.b16 %v595
        %v1591 = vunpack.c.l.b16 %v596
        %v1592 = vunpack.c.h.b16 %v596
        %v1593 = vunpack.c.l.b16 %v597
        %v1594 = vpack.c.b16 %v1189, %v1162
        %v1595 = vpack.c.b16 %v1190, %v1163
        %v1596 = vpack.c.b16 %v1191, %v1164
        %v1597 = vpack.c.b16 %v1192, %v1165
        %v1598 = vpack.c.b16 %v1193, %v1166
        %v1599 = vpack.c.b16 %v1194, %v1167
        %v1600 = vpack.c.b16 %v1195, %v1168
        %v1601 = vpack.c.b16 %v1196, %v1169
        %v1602 = vpack.c.b16 %v1197, %v1170
        %v1603 = vpack.c.b16 %v1198, %v1171
        %v1604 = vpack.c.b16 %v1199, %v1172
        %v1605 = vpack.c.b16 %v1200, %v1173
        %v1606 = vpack.c.b16 %v1201, %v1174
        %v1607 = vpack.c.b16 %v1202, %v1175
        %v1608 = vpack.c.b16 %v1203, %v1176
        %v1609 = vpack.c.b16 %v1204, %v1177
        %v1610 = vpack.c.b16 %v1205, %v1178
        %v1611 = vpack.c.b16 %v1206, %v1179
        %v1612 = vpack.c.b16 %v1207, %v1180
        %v1613 = vpack.c.b16 %v1208, %v1181
        %v1614 = vpack.c.b16 %v1209, %v1182
        %v1615 = vpack.c.b16 %v1210, %v1183
        %v1616 = vpack.c.b16 %v1211, %v1184
        %v1617 = vpack.c.b16 %v1212, %v1185
        %v1618 = vpack.c.b16 %v1213, %v1186
        %v1619 = vpack.c.b16 %v1214, %v1187
        %v1620 = vpack.c.b16 %v1215, %v1188
        %v1621 = vpack.c.b16 %v1243, %v1216
        %v1622 = vpack.c.b16 %v1244, %v1217
        %v1623 = vpack.c.b16 %v1245, %v1218
        %v1624 = vpack.c.b16 %v1246, %v1219
        %v1625 = vpack.c.b16 %v1247, %v1220
        %v1626 = vpack.c.b16 %v1248, %v1221
        %v1627 = vpack.c.b16 %v1249, %v1222
        %v1628 = vpack.c.b16 %v1250, %v1223
        %v1629 = vpack.c.b16 %v1251, %v1224
        %v1630 = vpack.c.b16 %v1252, %v1225
        %v1631 = vpack.c.b16 %v1253, %v1226
        %v1632 = vpack.c.b16 %v1254, %v1227
        %v1633 = vpack.c.b16 %v1255, %v1228
        %v1634 = vpack.c.b16 %v1256, %v1229
        %v1635 = vpack.c.b16 %v1257, %v1230
        %v1636 = vpack.c.b16 %v1258, %v1231
        %v1637 = vpack.c.b16 %v1259, %v1232
        %v1638 = vpack.c.b16 %v1260, %v1233
        %v1639 = vpack.c.b16 %v1261, %v1234
        %v1640 = vpack.c.b16 %v1262, %v1235
        %v1641 = vpack.c.b16 %v1263, %v1236
        %v1642 = vpack.c.b16 %v1264, %v1237
        %v1643 = vpack.c.b16 %v1265, %v1238
        %v1644 = vpack.c.b16 %v1266, %v1239
        %v1645 = vpack.c.b16 %v1267, %v1240
        %v1646 = vpack.c.b16 %v1268, %v1241
        %v1647 = vpack.c.b16 %v1269, %v1242
        %v1648 = vpack.c.b16 %v1297, %v1270
        %v1649 = vpack.c.b16 %v1298, %v1271
        %v1650 = vpack.c.b16 %v1299, %v1272
        %v1651 = vpack.c.b16 %v1300, %v1273
        %v1652 = vpack.c.b16 %v1301, %v1274
        %v1653 = vpack.c.b16 %v1302, %v1275
        %v1654 = vpack.c.b16 %v1303, %v1276
        %v1655 = vpack.c.b16 %v1304, %v1277
        %v1656 = vpack.c.b16 %v1305, %v1278
        %v1657 = vpack.c.b16 %v1306, %v1279
        %v1658 = vpack.c.b16 %v1307, %v1280
        %v1659 = vpack.c.b16 %v1308, %v1281
        %v1660 = vpack.c.b16 %v1309, %v1282
        %v1661 = vpack.c.b16 %v1310, %v1283
        %v1662 = vpack.c.b16 %v1311, %v1284
        %v1663 = vpack.c.b16 %v1312, %v1285
        %v1664 = vpack.c.b16 %v1313, %v1286
        %v1665 = vpack.c.b16 %v1314, %v1287
        %v1666 = vpack.c.b16 %v1315, %v1288
        %v1667 = vpack.c.b16 %v1316, %v1289
        %v1668 = vpack.c.b16 %v1317, %v1290
        %v1669 = vpack.c.b16 %v1318, %v1291
        %v1670 = vpack.c.b16 %v1319, %v1292
        %v1671 = vpack.c.b16 %v1320, %v1293
        %v1672 = vpack.c.b16 %v1321, %v1294
        %v1673 = vpack.c.b16 %v1322, %v1295
        %v1674 = vpack.c.b16 %v1323, %v1296
        %v1675 = vpack.c.b16 %v1351, %v1324
        %v1676 = vpack.c.b16 %v1352, %v1325
        %v1677 = vpack.c.b16 %v1353, %v1326
        %v1678 = vpack.c.b16 %v1354, %v1327
        %v1679 = vpack.c.b16 %v1355, %v1328
        %v1680 = vpack.c.b16 %v1356, %v1329
        %v1681 = vpack.c.b16 %v1357, %v1330
        %v1682 = vpack.c.b16 %v1358, %v1331
        %v1683 = vpack.c.b16 %v1359, %v1332
        %v1684 = vpack.c.b16 %v1360, %v1333
        %v1685 = vpack.c.b16 %v1361, %v1334
        %v1686 = vpack.c.b16 %v1362, %v1335
        %v1687 = vpack.c.b16 %v1363, %v1336
        %v1688 = vpack.c.b16 %v1364, %v1337
        %v1689 = vpack.c.b16 %v1365, %v1338
        %v1690 = vpack.c.b16 %v1366, %v1339
        %v1691 = vpack.c.b16 %v1367, %v1340
        %v1692 = vpack.c.b16 %v1368, %v1341
        %v1693 = vpack.c.b16 %v1369, %v1342
        %v1694 = vpack.c.b16 %v1370, %v1343
        %v1695 = vpack.c.b16 %v1371, %v1344
        %v1696 = vpack.c.b16 %v1372, %v1345
        %v1697 = vpack.c.b16 %v1373, %v1346
        %v1698 = vpack.c.b16 %v1374, %v1347
        %v1699 = vpack.c.b16 %v1375, %v1348
        %v1700 = vpack.c.b16 %v1376, %v1349
        %v1701 = vpack.c.b16 %v1377, %v1350
        %v1702 = vpack.c.b16 %v1405, %v1378
        %v1703 = vpack.c.b16 %v1406, %v1379
        %v1704 = vpack.c.b16 %v1407, %v1380
        %v1705 = vpack.c.b16 %v1408, %v1381
        %v1706 = vpack.c.b16 %v1409, %v1382
        %v1707 = vpack.c.b16 %v1410, %v1383
        %v1708 = vpack.c.b16 %v1411, %v1384
        %v1709 = vpack.c.b16 %v1412, %v1385
        %v1710 = vpack.c.b16 %v1413, %v1386
        %v1711 = vpack.c.b16 %v1414, %v1387
        %v1712 = vpack.c.b16 %v1415, %v1388
        %v1713 = vpack.c.b16 %v1416, %v1389
        %v1714 = vpack.c.b16 %v1417, %v1390
        %v1715 = vpack.c.b16 %v1418, %v1391
        %v1716 = vpack.c.b16 %v1419, %v1392
        %v1717 = vpack.c.b16 %v1420, %v1393
        %v1718 = vpack.c.b16 %v1421, %v1394
        %v1719 = vpack.c.b16 %v1422, %v1395
        %v1720 = vpack.c.b16 %v1423, %v1396
        %v1721 = vpack.c.b16 %v1424, %v1397
        %v1722 = vpack.c.b16 %v1425, %v1398
        %v1723 = vpack.c.b16 %v1426, %v1399
        %v1724 = vpack.c.b16 %v1427, %v1400
        %v1725 = vpack.c.b16 %v1428, %v1401
        %v1726 = vpack.c.b16 %v1429, %v1402
        %v1727 = vpack.c.b16 %v1430, %v1403
        %v1728 = vpack.c.b16 %v1431, %v1404
        %v1729 = vpack.c.b16 %v1459, %v1432
        %v1730 = vpack.c.b16 %v1460, %v1433
        %v1731 = vpack.c.b16 %v1461, %v1434
        %v1732 = vpack.c.b16 %v1462, %v1435
        %v1733 = vpack.c.b16 %v1463, %v1436
        %v1734 = vpack.c.b16 %v1464, %v1437
        %v1735 = vpack.c.b16 %v1465, %v1438
        %v1736 = vpack.c.b16 %v1466, %v1439
        %v1737 = vpack.c.b16 %v1467, %v1440
        %v1738 = vpack.c.b16 %v1468, %v1441
        %v1739 = vpack.c.b16 %v1469, %v1442
        %v1740 = vpack.c.b16 %v1470, %v1443
        %v1741 = vpack.c.b16 %v1471, %v1444
        %v1742 = vpack.c.b16 %v1472, %v1445
        %v1743 = vpack.c.b16 %v1473, %v1446
        %v1744 = vpack.c.b16 %v1474, %v1447
        %v1745 = vpack.c.b16 %v1475, %v1448
        %v1746 = vpack.c.b16 %v1476, %v1449
        %v1747 = vpack.c.b16 %v1477, %v1450
        %v1748 = vpack.c.b16 %v1478, %v1451
        %v1749 = vpack.c.b16 %v1479, %v1452
        %v1750 = vpack.c.b16 %v1480, %v1453
        %v1751 = vpack.c.b16 %v1481, %v1454
        %v1752 = vpack.c.b16 %v1482, %v1455
        %v1753 = vpack.c.b16 %v1483, %v1456
        %v1754 = vpack.c.b16 %v1484, %v1457
        %v1755 = vpack.c.b16 %v1485, %v1458
        %v1756 = vpack.c.b16 %v1513, %v1486
        %v1757 = vpack.c.b16 %v1514, %v1487
        %v1758 = vpack.c.b16 %v1515, %v1488
        %v1759 = vpack.c.b16 %v1516, %v1489
        %v1760 = vpack.c.b16 %v1517, %v1490
        %v1761 = vpack.c.b16 %v1518, %v1491
        %v1762 = vpack.c.b16 %v1519, %v1492
        %v1763 = vpack.c.b16 %v1520, %v1493
        %v1764 = vpack.c.b16 %v1521, %v1494
        %v1765 = vpack.c.b16 %v1522, %v1495
        %v1766 = vpack.c.b16 %v1523, %v1496
        %v1767 = vpack.c.b16 %v1524, %v1497
        %v1768 = vpack.c.b16 %v1525, %v1498
        %v1769 = vpack.c.b16 %v1526, %v1499
        %v1770 = vpack.c.b16 %v1527, %v1500
        %v1771 = vpack.c.b16 %v1528, %v1501
        %v1772 = vpack.c.b16 %v1529, %v1502
        %v1773 = vpack.c.b16 %v1530, %v1503
        %v1774 = vpack.c.b16 %v1531, %v1504
        %v1775 = vpack.c.b16 %v1532, %v1505
        %v1776 = vpack.c.b16 %v1533, %v1506
        %v1777 = vpack.c.b16 %v1534, %v1507
        %v1778 = vpack.c.b16 %v1535, %v1508
        %v1779 = vpack.c.b16 %v1536, %v1509
        %v1780 = vpack.c.b16 %v1537, %v1510
        %v1781 = vpack.c.b16 %v1538, %v1511
        %v1782 = vpack.c.b16 %v1539, %v1512
        %v1783 = vpack.c.b16 %v1567, %v1540
        %v1784 = vpack.c.b16 %v1568, %v1541
        %v1785 = vpack.c.b16 %v1569, %v1542
        %v1786 = vpack.c.b16 %v1570, %v1543
        %v1787 = vpack.c.b16 %v1571, %v1544
        %v1788 = vpack.c.b16 %v1572, %v1545
        %v1789 = vpack.c.b16 %v1573, %v1546
        %v1790 = vpack.c.b16 %v1574, %v1547
        %v1791 = vpack.c.b16 %v1575, %v1548
        %v1792 = vpack.c.b16 %v1576, %v1549
        %v1793 = vpack.c.b16 %v1577, %v1550
        %v1794 = vpack.c.b16 %v1578, %v1551
        %v1795 = vpack.c.b16 %v1579, %v1552
        %v1796 = vpack.c.b16 %v1580, %v1553
        %v1797 = vpack.c.b16 %v1581, %v1554
        %v1798 = vpack.c.b16 %v1582, %v1555
        %v1799 = vpack.c.b16 %v1583, %v1556
        %v1800 = vpack.c.b16 %v1584, %v1557
        %v1801 = vpack.c.b16 %v1585, %v1558
        %v1802 = vpack.c.b16 %v1586, %v1559
        %v1803 = vpack.c.b16 %v1587, %v1560
        %v1804 = vpack.c.b16 %v1588, %v1561
        %v1805 = vpack.c.b16 %v1589, %v1562
        %v1806 = vpack.c.b16 %v1590, %v1563
        %v1807 = vpack.c.b16 %v1591, %v1564
        %v1808 = vpack.c.b16 %v1592, %v1565
        %v1809 = vpack.c.b16 %v1593, %v1566
        %2026 = vmatprep.subr.bf16.mxu0 0
        %2027 = vmatpush1.bf16.msra.mxu0 %v729
        %2028 = vmatprep.subr.bf16.mxu0 0
        %2029 = vmatpush1.bf16.msra.mxu0 %v728
        %2030 = vmatprep.subr.bf16.mxu0 0
        %2031 = vmatpush1.bf16.msra.mxu0 %v727
        %2032 = vmatprep.subr.bf16.mxu0 0
        %2033 = vmatpush1.bf16.msra.mxu0 %v726
        %2034 = vmatprep.subr.bf16.mxu0 0
        %2035 = vmatpush1.bf16.msra.mxu0 %v725
        %2036 = vmatprep.subr.bf16.mxu0 0
        %2037 = vmatpush1.bf16.msra.mxu0 %v724
        %2038 = vmatprep.subr.bf16.mxu0 0
        %2039 = vmatpush1.bf16.msra.mxu0 %v723
        %2040 = vmatprep.subr.bf16.mxu0 0
        %2041 = vmatpush1.bf16.msra.mxu0 %v722
        %2042 = vmatprep.subr.bf16.mxu0 0
        %2043 = vmatpush2.bf16.msra.mxu0 %v737
        %2044 = vmatprep.subr.bf16.mxu0 0
        %2045 = vmatpush2.bf16.msra.mxu0 %v736
        %2046 = vmatprep.subr.bf16.mxu0 0
        %2047 = vmatpush2.bf16.msra.mxu0 %v735
        %2048 = vmatprep.subr.bf16.mxu0 0
        %2049 = vmatpush2.bf16.msra.mxu0 %v734
        %2050 = vmatprep.subr.bf16.mxu0 0
        %2051 = vmatpush2.bf16.msra.mxu0 %v733
        %2052 = vmatprep.subr.bf16.mxu0 0
        %2053 = vmatpush2.bf16.msra.mxu0 %v732
        %2054 = vmatprep.subr.bf16.mxu0 0
        %2055 = vmatpush2.bf16.msra.mxu0 %v731
        %2056 = vmatprep.subr.bf16.mxu0 0
        %2057 = vmatpush2.bf16.msra.mxu0 %v730
        %2058 = vmatprep.mubr.bf16.mxu0 %v1595
        %2059 = vmatmul.mubr.bf16.gmra.mxu0 %v1594
        %v2060 = vpop.f32.mrf.mxu0
        %v2061 = vadd.f32 0.0, %v2060
        %v2062 = vpop.f32.mrf.mxu0
        %v2063 = vpop.f32.mrf.mxu0
        %v2064 = vadd.f32 0.0, %v2063
        %v2065 = vpop.f32.mrf.mxu0
        %2066 = vmatprep.mubr.bf16.mxu0 %v1622
        %2067 = vmatmul.mubr.bf16.gmra.mxu0 %v1621
        %v2068 = vpop.f32.mrf.mxu0
        %v2069 = vadd.f32 0.0, %v2068
        %v2070 = vpop.f32.mrf.mxu0
        %v2071 = vpop.f32.mrf.mxu0
        %v2072 = vadd.f32 0.0, %v2071
        %v2073 = vpop.f32.mrf.mxu0
        %2074 = vmatprep.mubr.bf16.mxu0 %v1649
        %2075 = vmatmul.mubr.bf16.gmra.mxu0 %v1648
        %v2076 = vpop.f32.mrf.mxu0
        %v2077 = vadd.f32 0.0, %v2076
        %v2078 = vpop.f32.mrf.mxu0
        %v2079 = vpop.f32.mrf.mxu0
        %v2080 = vadd.f32 0.0, %v2079
        %v2081 = vpop.f32.mrf.mxu0
        %2082 = vmatprep.mubr.bf16.mxu0 %v1676
        %2083 = vmatmul.mubr.bf16.gmra.mxu0 %v1675
        %v2084 = vpop.f32.mrf.mxu0
        %v2085 = vadd.f32 0.0, %v2084
        %v2086 = vpop.f32.mrf.mxu0
        %v2087 = vpop.f32.mrf.mxu0
        %v2088 = vadd.f32 0.0, %v2087
        %v2089 = vpop.f32.mrf.mxu0
        %2090 = vmatprep.mubr.bf16.mxu0 %v1703
        %2091 = vmatmul.mubr.bf16.gmra.mxu0 %v1702
        %v2092 = vpop.f32.mrf.mxu0
        %v2093 = vadd.f32 0.0, %v2092
        %v2094 = vpop.f32.mrf.mxu0
        %v2095 = vpop.f32.mrf.mxu0
        %v2096 = vadd.f32 0.0, %v2095
        %v2097 = vpop.f32.mrf.mxu0
        %2098 = vmatprep.mubr.bf16.mxu0 %v1730
        %2099 = vmatmul.mubr.bf16.gmra.mxu0 %v1729
        %v2100 = vpop.f32.mrf.mxu0
        %v2101 = vadd.f32 0.0, %v2100
        %v2102 = vpop.f32.mrf.mxu0
        %v2103 = vpop.f32.mrf.mxu0
        %v2104 = vadd.f32 0.0, %v2103
        %v2105 = vpop.f32.mrf.mxu0
        %2106 = vmatprep.mubr.bf16.mxu0 %v1757
        %2107 = vmatmul.mubr.bf16.gmra.mxu0 %v1756
        %v2108 = vpop.f32.mrf.mxu0
        %v2109 = vadd.f32 0.0, %v2108
        %v2110 = vpop.f32.mrf.mxu0
        %v2111 = vpop.f32.mrf.mxu0
        %v2112 = vadd.f32 0.0, %v2111
        %v2113 = vpop.f32.mrf.mxu0
        %2114 = vmatprep.mubr.bf16.mxu0 %v1784
        %2115 = vmatmul.mubr.bf16.gmra.mxu0 %v1783
        %v2116 = vpop.f32.mrf.mxu0
        %v2117 = vadd.f32 0.0, %v2116
        %v2118 = vpop.f32.mrf.mxu0
        %v2119 = vpop.f32.mrf.mxu0
        %v2120 = vadd.f32 0.0, %v2119
        %v2121 = vpop.f32.mrf.mxu0
        %2122 = vdwg.mxu0
        %2123 = vmatprep.subr.bf16.mxu0 0
        %2124 = vmatpush1.bf16.msra.mxu0 %v745
        %2125 = vmatprep.subr.bf16.mxu0 0
        %2126 = vmatpush1.bf16.msra.mxu0 %v744
        %2127 = vmatprep.subr.bf16.mxu0 0
        %2128 = vmatpush1.bf16.msra.mxu0 %v743
        %2129 = vmatprep.subr.bf16.mxu0 0
        %2130 = vmatpush1.bf16.msra.mxu0 %v742
        %2131 = vmatprep.subr.bf16.mxu0 0
        %2132 = vmatpush1.bf16.msra.mxu0 %v741
        %2133 = vmatprep.subr.bf16.mxu0 0
        %2134 = vmatpush1.bf16.msra.mxu0 %v740
        %2135 = vmatprep.subr.bf16.mxu0 0
        %2136 = vmatpush1.bf16.msra.mxu0 %v739
        %2137 = vmatprep.subr.bf16.mxu0 0
        %2138 = vmatpush1.bf16.msra.mxu0 %v738
        %2139 = vmatprep.subr.bf16.mxu0 0
        %2140 = vmatpush2.bf16.msra.mxu0 %v753
        %2141 = vmatprep.subr.bf16.mxu0 0
        %2142 = vmatpush2.bf16.msra.mxu0 %v752
        %2143 = vmatprep.subr.bf16.mxu0 0
        %2144 = vmatpush2.bf16.msra.mxu0 %v751
        %2145 = vmatprep.subr.bf16.mxu0 0
        %2146 = vmatpush2.bf16.msra.mxu0 %v750
        %2147 = vmatprep.subr.bf16.mxu0 0
        %2148 = vmatpush2.bf16.msra.mxu0 %v749
        %2149 = vmatprep.subr.bf16.mxu0 0
        %2150 = vmatpush2.bf16.msra.mxu0 %v748
        %2151 = vmatprep.subr.bf16.mxu0 0
        %2152 = vmatpush2.bf16.msra.mxu0 %v747
        %2153 = vmatprep.subr.bf16.mxu0 0
        %2154 = vmatpush2.bf16.msra.mxu0 %v746
        %2155 = vmatprep.mubr.bf16.mxu0 %v1597
        %2156 = vmatmul.mubr.bf16.gmra.mxu0 %v1596
        %v2157 = vpop.f32.mrf.mxu0
        %v2158 = vadd.f32 %v2061, %v2157
        %v2159 = vpop.f32.mrf.mxu0
        %v2160 = vpop.f32.mrf.mxu0
        %v2161 = vadd.f32 %v2064, %v2160
        %v2162 = vpop.f32.mrf.mxu0
        %2163 = vmatprep.mubr.bf16.mxu0 %v1624
        %2164 = vmatmul.mubr.bf16.gmra.mxu0 %v1623
        %v2165 = vpop.f32.mrf.mxu0
        %v2166 = vadd.f32 %v2069, %v2165
        %v2167 = vpop.f32.mrf.mxu0
        %v2168 = vpop.f32.mrf.mxu0
        %v2169 = vadd.f32 %v2072, %v2168
        %v2170 = vpop.f32.mrf.mxu0
        %2171 = vmatprep.mubr.bf16.mxu0 %v1651
        %2172 = vmatmul.mubr.bf16.gmra.mxu0 %v1650
        %v2173 = vpop.f32.mrf.mxu0
        %v2174 = vadd.f32 %v2077, %v2173
        %v2175 = vpop.f32.mrf.mxu0
        %v2176 = vpop.f32.mrf.mxu0
        %v2177 = vadd.f32 %v2080, %v2176
        %v2178 = vpop.f32.mrf.mxu0
        %2179 = vmatprep.mubr.bf16.mxu0 %v1678
        %2180 = vmatmul.mubr.bf16.gmra.mxu0 %v1677
        %v2181 = vpop.f32.mrf.mxu0
        %v2182 = vadd.f32 %v2085, %v2181
        %v2183 = vpop.f32.mrf.mxu0
        %v2184 = vpop.f32.mrf.mxu0
        %v2185 = vadd.f32 %v2088, %v2184
        %v2186 = vpop.f32.mrf.mxu0
        %2187 = vmatprep.mubr.bf16.mxu0 %v1705
        %2188 = vmatmul.mubr.bf16.gmra.mxu0 %v1704
        %v2189 = vpop.f32.mrf.mxu0
        %v2190 = vadd.f32 %v2093, %v2189
        %v2191 = vpop.f32.mrf.mxu0
        %v2192 = vpop.f32.mrf.mxu0
        %v2193 = vadd.f32 %v2096, %v2192
        %v2194 = vpop.f32.mrf.mxu0
        %2195 = vmatprep.mubr.bf16.mxu0 %v1732
        %2196 = vmatmul.mubr.bf16.gmra.mxu0 %v1731
        %v2197 = vpop.f32.mrf.mxu0
        %v2198 = vadd.f32 %v2101, %v2197
        %v2199 = vpop.f32.mrf.mxu0
        %v2200 = vpop.f32.mrf.mxu0
        %v2201 = vadd.f32 %v2104, %v2200
        %v2202 = vpop.f32.mrf.mxu0
        %2203 = vmatprep.mubr.bf16.mxu0 %v1759
        %2204 = vmatmul.mubr.bf16.gmra.mxu0 %v1758
        %v2205 = vpop.f32.mrf.mxu0
        %v2206 = vadd.f32 %v2109, %v2205
        %v2207 = vpop.f32.mrf.mxu0
        %v2208 = vpop.f32.mrf.mxu0
        %v2209 = vadd.f32 %v2112, %v2208
        %v2210 = vpop.f32.mrf.mxu0
        %2211 = vmatprep.mubr.bf16.mxu0 %v1786
        %2212 = vmatmul.mubr.bf16.gmra.mxu0 %v1785
        %v2213 = vpop.f32.mrf.mxu0
        %v2214 = vadd.f32 %v2117, %v2213
        %v2215 = vpop.f32.mrf.mxu0
        %v2216 = vpop.f32.mrf.mxu0
        %v2217 = vadd.f32 %v2120, %v2216
        %v2218 = vpop.f32.mrf.mxu0
        %2219 = vdwg.mxu0
        %2220 = vmatprep.subr.bf16.mxu0 0
        %2221 = vmatpush1.bf16.msra.mxu0 %v761
        %2222 = vmatprep.subr.bf16.mxu0 0
        %2223 = vmatpush1.bf16.msra.mxu0 %v760
        %2224 = vmatprep.subr.bf16.mxu0 0
        %2225 = vmatpush1.bf16.msra.mxu0 %v759
        %2226 = vmatprep.subr.bf16.mxu0 0
        %2227 = vmatpush1.bf16.msra.mxu0 %v758
        %2228 = vmatprep.subr.bf16.mxu0 0
        %2229 = vmatpush1.bf16.msra.mxu0 %v757
        %2230 = vmatprep.subr.bf16.mxu0 0
        %2231 = vmatpush1.bf16.msra.mxu0 %v756
        %2232 = vmatprep.subr.bf16.mxu0 0
        %2233 = vmatpush1.bf16.msra.mxu0 %v755
        %2234 = vmatprep.subr.bf16.mxu0 0
        %2235 = vmatpush1.bf16.msra.mxu0 %v754
        %2236 = vmatprep.subr.bf16.mxu0 0
        %2237 = vmatpush2.bf16.msra.mxu0 %v769
        %2238 = vmatprep.subr.bf16.mxu0 0
        %2239 = vmatpush2.bf16.msra.mxu0 %v768
        %2240 = vmatprep.subr.bf16.mxu0 0
        %2241 = vmatpush2.bf16.msra.mxu0 %v767
        %2242 = vmatprep.subr.bf16.mxu0 0
        %2243 = vmatpush2.bf16.msra.mxu0 %v766
        %2244 = vmatprep.subr.bf16.mxu0 0
        %2245 = vmatpush2.bf16.msra.mxu0 %v765
        %2246 = vmatprep.subr.bf16.mxu0 0
        %2247 = vmatpush2.bf16.msra.mxu0 %v764
        %2248 = vmatprep.subr.bf16.mxu0 0
        %2249 = vmatpush2.bf16.msra.mxu0 %v763
        %2250 = vmatprep.subr.bf16.mxu0 0
        %2251 = vmatpush2.bf16.msra.mxu0 %v762
        %2252 = vmatprep.mubr.bf16.mxu0 %v1599
        %2253 = vmatmul.mubr.bf16.gmra.mxu0 %v1598
        %v2254 = vpop.f32.mrf.mxu0
        %v2255 = vadd.f32 %v2158, %v2254
        %v2256 = vpop.f32.mrf.mxu0
        %v2257 = vpop.f32.mrf.mxu0
        %v2258 = vadd.f32 %v2161, %v2257
        %v2259 = vpop.f32.mrf.mxu0
        %2260 = vmatprep.mubr.bf16.mxu0 %v1626
        %2261 = vmatmul.mubr.bf16.gmra.mxu0 %v1625
        %v2262 = vpop.f32.mrf.mxu0
        %v2263 = vadd.f32 %v2166, %v2262
        %v2264 = vpop.f32.mrf.mxu0
        %v2265 = vpop.f32.mrf.mxu0
        %v2266 = vadd.f32 %v2169, %v2265
        %v2267 = vpop.f32.mrf.mxu0
        %2268 = vmatprep.mubr.bf16.mxu0 %v1653
        %2269 = vmatmul.mubr.bf16.gmra.mxu0 %v1652
        %v2270 = vpop.f32.mrf.mxu0
        %v2271 = vadd.f32 %v2174, %v2270
        %v2272 = vpop.f32.mrf.mxu0
        %v2273 = vpop.f32.mrf.mxu0
        %v2274 = vadd.f32 %v2177, %v2273
        %v2275 = vpop.f32.mrf.mxu0
        %2276 = vmatprep.mubr.bf16.mxu0 %v1680
        %2277 = vmatmul.mubr.bf16.gmra.mxu0 %v1679
        %v2278 = vpop.f32.mrf.mxu0
        %v2279 = vadd.f32 %v2182, %v2278
        %v2280 = vpop.f32.mrf.mxu0
        %v2281 = vpop.f32.mrf.mxu0
        %v2282 = vadd.f32 %v2185, %v2281
        %v2283 = vpop.f32.mrf.mxu0
        %2284 = vmatprep.mubr.bf16.mxu0 %v1707
        %2285 = vmatmul.mubr.bf16.gmra.mxu0 %v1706
        %v2286 = vpop.f32.mrf.mxu0
        %v2287 = vadd.f32 %v2190, %v2286
        %v2288 = vpop.f32.mrf.mxu0
        %v2289 = vpop.f32.mrf.mxu0
        %v2290 = vadd.f32 %v2193, %v2289
        %v2291 = vpop.f32.mrf.mxu0
        %2292 = vmatprep.mubr.bf16.mxu0 %v1734
        %2293 = vmatmul.mubr.bf16.gmra.mxu0 %v1733
        %v2294 = vpop.f32.mrf.mxu0
        %v2295 = vadd.f32 %v2198, %v2294
        %v2296 = vpop.f32.mrf.mxu0
        %v2297 = vpop.f32.mrf.mxu0
        %v2298 = vadd.f32 %v2201, %v2297
        %v2299 = vpop.f32.mrf.mxu0
        %2300 = vmatprep.mubr.bf16.mxu0 %v1761
        %2301 = vmatmul.mubr.bf16.gmra.mxu0 %v1760
        %v2302 = vpop.f32.mrf.mxu0
        %v2303 = vadd.f32 %v2206, %v2302
        %v2304 = vpop.f32.mrf.mxu0
        %v2305 = vpop.f32.mrf.mxu0
        %v2306 = vadd.f32 %v2209, %v2305
        %v2307 = vpop.f32.mrf.mxu0
        %2308 = vmatprep.mubr.bf16.mxu0 %v1788
        %2309 = vmatmul.mubr.bf16.gmra.mxu0 %v1787
        %v2310 = vpop.f32.mrf.mxu0
        %v2311 = vadd.f32 %v2214, %v2310
        %v2312 = vpop.f32.mrf.mxu0
        %v2313 = vpop.f32.mrf.mxu0
        %v2314 = vadd.f32 %v2217, %v2313
        %v2315 = vpop.f32.mrf.mxu0
        %2316 = vdwg.mxu0
        %2317 = vmatprep.subr.bf16.mxu0 0
        %2318 = vmatpush1.bf16.msra.mxu0 %v777
        %2319 = vmatprep.subr.bf16.mxu0 0
        %2320 = vmatpush1.bf16.msra.mxu0 %v776
        %2321 = vmatprep.subr.bf16.mxu0 0
        %2322 = vmatpush1.bf16.msra.mxu0 %v775
        %2323 = vmatprep.subr.bf16.mxu0 0
        %2324 = vmatpush1.bf16.msra.mxu0 %v774
        %2325 = vmatprep.subr.bf16.mxu0 0
        %2326 = vmatpush1.bf16.msra.mxu0 %v773
        %2327 = vmatprep.subr.bf16.mxu0 0
        %2328 = vmatpush1.bf16.msra.mxu0 %v772
        %2329 = vmatprep.subr.bf16.mxu0 0
        %2330 = vmatpush1.bf16.msra.mxu0 %v771
        %2331 = vmatprep.subr.bf16.mxu0 0
        %2332 = vmatpush1.bf16.msra.mxu0 %v770
        %2333 = vmatprep.subr.bf16.mxu0 0
        %2334 = vmatpush2.bf16.msra.mxu0 %v785
        %2335 = vmatprep.subr.bf16.mxu0 0
        %2336 = vmatpush2.bf16.msra.mxu0 %v784
        %2337 = vmatprep.subr.bf16.mxu0 0
        %2338 = vmatpush2.bf16.msra.mxu0 %v783
        %2339 = vmatprep.subr.bf16.mxu0 0
        %2340 = vmatpush2.bf16.msra.mxu0 %v782
        %2341 = vmatprep.subr.bf16.mxu0 0
        %2342 = vmatpush2.bf16.msra.mxu0 %v781
        %2343 = vmatprep.subr.bf16.mxu0 0
        %2344 = vmatpush2.bf16.msra.mxu0 %v780
        %2345 = vmatprep.subr.bf16.mxu0 0
        %2346 = vmatpush2.bf16.msra.mxu0 %v779
        %2347 = vmatprep.subr.bf16.mxu0 0
        %2348 = vmatpush2.bf16.msra.mxu0 %v778
        %2349 = vmatprep.mubr.bf16.mxu0 %v1601
        %2350 = vmatmul.mubr.bf16.gmra.mxu0 %v1600
        %v2351 = vpop.f32.mrf.mxu0
        %v2352 = vadd.f32 %v2255, %v2351
        %v2353 = vpop.f32.mrf.mxu0
        %v2354 = vpop.f32.mrf.mxu0
        %v2355 = vadd.f32 %v2258, %v2354
        %v2356 = vpop.f32.mrf.mxu0
        %2357 = vmatprep.mubr.bf16.mxu0 %v1628
        %2358 = vmatmul.mubr.bf16.gmra.mxu0 %v1627
        %v2359 = vpop.f32.mrf.mxu0
        %v2360 = vadd.f32 %v2263, %v2359
        %v2361 = vpop.f32.mrf.mxu0
        %v2362 = vpop.f32.mrf.mxu0
        %v2363 = vadd.f32 %v2266, %v2362
        %v2364 = vpop.f32.mrf.mxu0
        %2365 = vmatprep.mubr.bf16.mxu0 %v1655
        %2366 = vmatmul.mubr.bf16.gmra.mxu0 %v1654
        %v2367 = vpop.f32.mrf.mxu0
        %v2368 = vadd.f32 %v2271, %v2367
        %v2369 = vpop.f32.mrf.mxu0
        %v2370 = vpop.f32.mrf.mxu0
        %v2371 = vadd.f32 %v2274, %v2370
        %v2372 = vpop.f32.mrf.mxu0
        %2373 = vmatprep.mubr.bf16.mxu0 %v1682
        %2374 = vmatmul.mubr.bf16.gmra.mxu0 %v1681
        %v2375 = vpop.f32.mrf.mxu0
        %v2376 = vadd.f32 %v2279, %v2375
        %v2377 = vpop.f32.mrf.mxu0
        %v2378 = vpop.f32.mrf.mxu0
        %v2379 = vadd.f32 %v2282, %v2378
        %v2380 = vpop.f32.mrf.mxu0
        %2381 = vmatprep.mubr.bf16.mxu0 %v1709
        %2382 = vmatmul.mubr.bf16.gmra.mxu0 %v1708
        %v2383 = vpop.f32.mrf.mxu0
        %v2384 = vadd.f32 %v2287, %v2383
        %v2385 = vpop.f32.mrf.mxu0
        %v2386 = vpop.f32.mrf.mxu0
        %v2387 = vadd.f32 %v2290, %v2386
        %v2388 = vpop.f32.mrf.mxu0
        %2389 = vmatprep.mubr.bf16.mxu0 %v1736
        %2390 = vmatmul.mubr.bf16.gmra.mxu0 %v1735
        %v2391 = vpop.f32.mrf.mxu0
        %v2392 = vadd.f32 %v2295, %v2391
        %v2393 = vpop.f32.mrf.mxu0
        %v2394 = vpop.f32.mrf.mxu0
        %v2395 = vadd.f32 %v2298, %v2394
        %v2396 = vpop.f32.mrf.mxu0
        %2397 = vmatprep.mubr.bf16.mxu0 %v1763
        %2398 = vmatmul.mubr.bf16.gmra.mxu0 %v1762
        %v2399 = vpop.f32.mrf.mxu0
        %v2400 = vadd.f32 %v2303, %v2399
        %v2401 = vpop.f32.mrf.mxu0
        %v2402 = vpop.f32.mrf.mxu0
        %v2403 = vadd.f32 %v2306, %v2402
        %v2404 = vpop.f32.mrf.mxu0
        %2405 = vmatprep.mubr.bf16.mxu0 %v1790
        %2406 = vmatmul.mubr.bf16.gmra.mxu0 %v1789
        %v2407 = vpop.f32.mrf.mxu0
        %v2408 = vadd.f32 %v2311, %v2407
        %v2409 = vpop.f32.mrf.mxu0
        %v2410 = vpop.f32.mrf.mxu0
        %v2411 = vadd.f32 %v2314, %v2410
        %v2412 = vpop.f32.mrf.mxu0
        %2413 = vdwg.mxu0
        %2414 = vmatprep.subr.bf16.mxu0 0
        %2415 = vmatpush1.bf16.msra.mxu0 %v793
        %2416 = vmatprep.subr.bf16.mxu0 0
        %2417 = vmatpush1.bf16.msra.mxu0 %v792
        %2418 = vmatprep.subr.bf16.mxu0 0
        %2419 = vmatpush1.bf16.msra.mxu0 %v791
        %2420 = vmatprep.subr.bf16.mxu0 0
        %2421 = vmatpush1.bf16.msra.mxu0 %v790
        %2422 = vmatprep.subr.bf16.mxu0 0
        %2423 = vmatpush1.bf16.msra.mxu0 %v789
        %2424 = vmatprep.subr.bf16.mxu0 0
        %2425 = vmatpush1.bf16.msra.mxu0 %v788
        %2426 = vmatprep.subr.bf16.mxu0 0
        %2427 = vmatpush1.bf16.msra.mxu0 %v787
        %2428 = vmatprep.subr.bf16.mxu0 0
        %2429 = vmatpush1.bf16.msra.mxu0 %v786
        %2430 = vmatprep.subr.bf16.mxu0 0
        %2431 = vmatpush2.bf16.msra.mxu0 %v801
        %2432 = vmatprep.subr.bf16.mxu0 0
        %2433 = vmatpush2.bf16.msra.mxu0 %v800
        %2434 = vmatprep.subr.bf16.mxu0 0
        %2435 = vmatpush2.bf16.msra.mxu0 %v799
        %2436 = vmatprep.subr.bf16.mxu0 0
        %2437 = vmatpush2.bf16.msra.mxu0 %v798
        %2438 = vmatprep.subr.bf16.mxu0 0
        %2439 = vmatpush2.bf16.msra.mxu0 %v797
        %2440 = vmatprep.subr.bf16.mxu0 0
        %2441 = vmatpush2.bf16.msra.mxu0 %v796
        %2442 = vmatprep.subr.bf16.mxu0 0
        %2443 = vmatpush2.bf16.msra.mxu0 %v795
        %2444 = vmatprep.subr.bf16.mxu0 0
        %2445 = vmatpush2.bf16.msra.mxu0 %v794
        %2446 = vmatprep.mubr.bf16.mxu0 %v1603
        %2447 = vmatmul.mubr.bf16.gmra.mxu0 %v1602
        %v2448 = vpop.f32.mrf.mxu0
        %v2449 = vadd.f32 %v2352, %v2448
        %v2450 = vpop.f32.mrf.mxu0
        %v2451 = vpop.f32.mrf.mxu0
        %v2452 = vadd.f32 %v2355, %v2451
        %v2453 = vpop.f32.mrf.mxu0
        %2454 = vmatprep.mubr.bf16.mxu0 %v1630
        %2455 = vmatmul.mubr.bf16.gmra.mxu0 %v1629
        %v2456 = vpop.f32.mrf.mxu0
        %v2457 = vadd.f32 %v2360, %v2456
        %v2458 = vpop.f32.mrf.mxu0
        %v2459 = vpop.f32.mrf.mxu0
        %v2460 = vadd.f32 %v2363, %v2459
        %v2461 = vpop.f32.mrf.mxu0
        %2462 = vmatprep.mubr.bf16.mxu0 %v1657
        %2463 = vmatmul.mubr.bf16.gmra.mxu0 %v1656
        %v2464 = vpop.f32.mrf.mxu0
        %v2465 = vadd.f32 %v2368, %v2464
        %v2466 = vpop.f32.mrf.mxu0
        %v2467 = vpop.f32.mrf.mxu0
        %v2468 = vadd.f32 %v2371, %v2467
        %v2469 = vpop.f32.mrf.mxu0
        %2470 = vmatprep.mubr.bf16.mxu0 %v1684
        %2471 = vmatmul.mubr.bf16.gmra.mxu0 %v1683
        %v2472 = vpop.f32.mrf.mxu0
        %v2473 = vadd.f32 %v2376, %v2472
        %v2474 = vpop.f32.mrf.mxu0
        %v2475 = vpop.f32.mrf.mxu0
        %v2476 = vadd.f32 %v2379, %v2475
        %v2477 = vpop.f32.mrf.mxu0
        %2478 = vmatprep.mubr.bf16.mxu0 %v1711
        %2479 = vmatmul.mubr.bf16.gmra.mxu0 %v1710
        %v2480 = vpop.f32.mrf.mxu0
        %v2481 = vadd.f32 %v2384, %v2480
        %v2482 = vpop.f32.mrf.mxu0
        %v2483 = vpop.f32.mrf.mxu0
        %v2484 = vadd.f32 %v2387, %v2483
        %v2485 = vpop.f32.mrf.mxu0
        %2486 = vmatprep.mubr.bf16.mxu0 %v1738
        %2487 = vmatmul.mubr.bf16.gmra.mxu0 %v1737
        %v2488 = vpop.f32.mrf.mxu0
        %v2489 = vadd.f32 %v2392, %v2488
        %v2490 = vpop.f32.mrf.mxu0
        %v2491 = vpop.f32.mrf.mxu0
        %v2492 = vadd.f32 %v2395, %v2491
        %v2493 = vpop.f32.mrf.mxu0
        %2494 = vmatprep.mubr.bf16.mxu0 %v1765
        %2495 = vmatmul.mubr.bf16.gmra.mxu0 %v1764
        %v2496 = vpop.f32.mrf.mxu0
        %v2497 = vadd.f32 %v2400, %v2496
        %v2498 = vpop.f32.mrf.mxu0
        %v2499 = vpop.f32.mrf.mxu0
        %v2500 = vadd.f32 %v2403, %v2499
        %v2501 = vpop.f32.mrf.mxu0
        %2502 = vmatprep.mubr.bf16.mxu0 %v1792
        %2503 = vmatmul.mubr.bf16.gmra.mxu0 %v1791
        %v2504 = vpop.f32.mrf.mxu0
        %v2505 = vadd.f32 %v2408, %v2504
        %v2506 = vpop.f32.mrf.mxu0
        %v2507 = vpop.f32.mrf.mxu0
        %v2508 = vadd.f32 %v2411, %v2507
        %v2509 = vpop.f32.mrf.mxu0
        %2510 = vdwg.mxu0
        %2511 = vmatprep.subr.bf16.mxu0 0
        %2512 = vmatpush1.bf16.msra.mxu0 %v809
        %2513 = vmatprep.subr.bf16.mxu0 0
        %2514 = vmatpush1.bf16.msra.mxu0 %v808
        %2515 = vmatprep.subr.bf16.mxu0 0
        %2516 = vmatpush1.bf16.msra.mxu0 %v807
        %2517 = vmatprep.subr.bf16.mxu0 0
        %2518 = vmatpush1.bf16.msra.mxu0 %v806
        %2519 = vmatprep.subr.bf16.mxu0 0
        %2520 = vmatpush1.bf16.msra.mxu0 %v805
        %2521 = vmatprep.subr.bf16.mxu0 0
        %2522 = vmatpush1.bf16.msra.mxu0 %v804
        %2523 = vmatprep.subr.bf16.mxu0 0
        %2524 = vmatpush1.bf16.msra.mxu0 %v803
        %2525 = vmatprep.subr.bf16.mxu0 0
        %2526 = vmatpush1.bf16.msra.mxu0 %v802
        %2527 = vmatprep.subr.bf16.mxu0 0
        %2528 = vmatpush2.bf16.msra.mxu0 %v817
        %2529 = vmatprep.subr.bf16.mxu0 0
        %2530 = vmatpush2.bf16.msra.mxu0 %v816
        %2531 = vmatprep.subr.bf16.mxu0 0
        %2532 = vmatpush2.bf16.msra.mxu0 %v815
        %2533 = vmatprep.subr.bf16.mxu0 0
        %2534 = vmatpush2.bf16.msra.mxu0 %v814
        %2535 = vmatprep.subr.bf16.mxu0 0
        %2536 = vmatpush2.bf16.msra.mxu0 %v813
        %2537 = vmatprep.subr.bf16.mxu0 0
        %2538 = vmatpush2.bf16.msra.mxu0 %v812
        %2539 = vmatprep.subr.bf16.mxu0 0
        %2540 = vmatpush2.bf16.msra.mxu0 %v811
        %2541 = vmatprep.subr.bf16.mxu0 0
        %2542 = vmatpush2.bf16.msra.mxu0 %v810
        %2543 = vmatprep.mubr.bf16.mxu0 %v1605
        %2544 = vmatmul.mubr.bf16.gmra.mxu0 %v1604
        %v2545 = vpop.f32.mrf.mxu0
        %v2546 = vadd.f32 %v2449, %v2545
        %v2547 = vpop.f32.mrf.mxu0
        %v2548 = vpop.f32.mrf.mxu0
        %v2549 = vadd.f32 %v2452, %v2548
        %v2550 = vpop.f32.mrf.mxu0
        %2551 = vmatprep.mubr.bf16.mxu0 %v1632
        %2552 = vmatmul.mubr.bf16.gmra.mxu0 %v1631
        %v2553 = vpop.f32.mrf.mxu0
        %v2554 = vadd.f32 %v2457, %v2553
        %v2555 = vpop.f32.mrf.mxu0
        %v2556 = vpop.f32.mrf.mxu0
        %v2557 = vadd.f32 %v2460, %v2556
        %v2558 = vpop.f32.mrf.mxu0
        %2559 = vmatprep.mubr.bf16.mxu0 %v1659
        %2560 = vmatmul.mubr.bf16.gmra.mxu0 %v1658
        %v2561 = vpop.f32.mrf.mxu0
        %v2562 = vadd.f32 %v2465, %v2561
        %v2563 = vpop.f32.mrf.mxu0
        %v2564 = vpop.f32.mrf.mxu0
        %v2565 = vadd.f32 %v2468, %v2564
        %v2566 = vpop.f32.mrf.mxu0
        %2567 = vmatprep.mubr.bf16.mxu0 %v1686
        %2568 = vmatmul.mubr.bf16.gmra.mxu0 %v1685
        %v2569 = vpop.f32.mrf.mxu0
        %v2570 = vadd.f32 %v2473, %v2569
        %v2571 = vpop.f32.mrf.mxu0
        %v2572 = vpop.f32.mrf.mxu0
        %v2573 = vadd.f32 %v2476, %v2572
        %v2574 = vpop.f32.mrf.mxu0
        %2575 = vmatprep.mubr.bf16.mxu0 %v1713
        %2576 = vmatmul.mubr.bf16.gmra.mxu0 %v1712
        %v2577 = vpop.f32.mrf.mxu0
        %v2578 = vadd.f32 %v2481, %v2577
        %v2579 = vpop.f32.mrf.mxu0
        %v2580 = vpop.f32.mrf.mxu0
        %v2581 = vadd.f32 %v2484, %v2580
        %v2582 = vpop.f32.mrf.mxu0
        %2583 = vmatprep.mubr.bf16.mxu0 %v1740
        %2584 = vmatmul.mubr.bf16.gmra.mxu0 %v1739
        %v2585 = vpop.f32.mrf.mxu0
        %v2586 = vadd.f32 %v2489, %v2585
        %v2587 = vpop.f32.mrf.mxu0
        %v2588 = vpop.f32.mrf.mxu0
        %v2589 = vadd.f32 %v2492, %v2588
        %v2590 = vpop.f32.mrf.mxu0
        %2591 = vmatprep.mubr.bf16.mxu0 %v1767
        %2592 = vmatmul.mubr.bf16.gmra.mxu0 %v1766
        %v2593 = vpop.f32.mrf.mxu0
        %v2594 = vadd.f32 %v2497, %v2593
        %v2595 = vpop.f32.mrf.mxu0
        %v2596 = vpop.f32.mrf.mxu0
        %v2597 = vadd.f32 %v2500, %v2596
        %v2598 = vpop.f32.mrf.mxu0
        %2599 = vmatprep.mubr.bf16.mxu0 %v1794
        %2600 = vmatmul.mubr.bf16.gmra.mxu0 %v1793
        %v2601 = vpop.f32.mrf.mxu0
        %v2602 = vadd.f32 %v2505, %v2601
        %v2603 = vpop.f32.mrf.mxu0
        %v2604 = vpop.f32.mrf.mxu0
        %v2605 = vadd.f32 %v2508, %v2604
        %v2606 = vpop.f32.mrf.mxu0
        %2607 = vdwg.mxu0
        %2608 = vmatprep.subr.bf16.mxu0 0
        %2609 = vmatpush1.bf16.msra.mxu0 %v825
        %2610 = vmatprep.subr.bf16.mxu0 0
        %2611 = vmatpush1.bf16.msra.mxu0 %v824
        %2612 = vmatprep.subr.bf16.mxu0 0
        %2613 = vmatpush1.bf16.msra.mxu0 %v823
        %2614 = vmatprep.subr.bf16.mxu0 0
        %2615 = vmatpush1.bf16.msra.mxu0 %v822
        %2616 = vmatprep.subr.bf16.mxu0 0
        %2617 = vmatpush1.bf16.msra.mxu0 %v821
        %2618 = vmatprep.subr.bf16.mxu0 0
        %2619 = vmatpush1.bf16.msra.mxu0 %v820
        %2620 = vmatprep.subr.bf16.mxu0 0
        %2621 = vmatpush1.bf16.msra.mxu0 %v819
        %2622 = vmatprep.subr.bf16.mxu0 0
        %2623 = vmatpush1.bf16.msra.mxu0 %v818
        %2624 = vmatprep.subr.bf16.mxu0 0
        %2625 = vmatpush2.bf16.msra.mxu0 %v833
        %2626 = vmatprep.subr.bf16.mxu0 0
        %2627 = vmatpush2.bf16.msra.mxu0 %v832
        %2628 = vmatprep.subr.bf16.mxu0 0
        %2629 = vmatpush2.bf16.msra.mxu0 %v831
        %2630 = vmatprep.subr.bf16.mxu0 0
        %2631 = vmatpush2.bf16.msra.mxu0 %v830
        %2632 = vmatprep.subr.bf16.mxu0 0
        %2633 = vmatpush2.bf16.msra.mxu0 %v829
        %2634 = vmatprep.subr.bf16.mxu0 0
        %2635 = vmatpush2.bf16.msra.mxu0 %v828
        %2636 = vmatprep.subr.bf16.mxu0 0
        %2637 = vmatpush2.bf16.msra.mxu0 %v827
        %2638 = vmatprep.subr.bf16.mxu0 0
        %2639 = vmatpush2.bf16.msra.mxu0 %v826
        %2640 = vmatprep.mubr.bf16.mxu0 %v1607
        %2641 = vmatmul.mubr.bf16.gmra.mxu0 %v1606
        %v2642 = vpop.f32.mrf.mxu0
        %v2643 = vadd.f32 %v2546, %v2642
        %v2644 = vpop.f32.mrf.mxu0
        %v2645 = vpop.f32.mrf.mxu0
        %v2646 = vadd.f32 %v2549, %v2645
        %v2647 = vpop.f32.mrf.mxu0
        %2648 = vmatprep.mubr.bf16.mxu0 %v1634
        %2649 = vmatmul.mubr.bf16.gmra.mxu0 %v1633
        %v2650 = vpop.f32.mrf.mxu0
        %v2651 = vadd.f32 %v2554, %v2650
        %v2652 = vpop.f32.mrf.mxu0
        %v2653 = vpop.f32.mrf.mxu0
        %v2654 = vadd.f32 %v2557, %v2653
        %v2655 = vpop.f32.mrf.mxu0
        %2656 = vmatprep.mubr.bf16.mxu0 %v1661
        %2657 = vmatmul.mubr.bf16.gmra.mxu0 %v1660
        %v2658 = vpop.f32.mrf.mxu0
        %v2659 = vadd.f32 %v2562, %v2658
        %v2660 = vpop.f32.mrf.mxu0
        %v2661 = vpop.f32.mrf.mxu0
        %v2662 = vadd.f32 %v2565, %v2661
        %v2663 = vpop.f32.mrf.mxu0
        %2664 = vmatprep.mubr.bf16.mxu0 %v1688
        %2665 = vmatmul.mubr.bf16.gmra.mxu0 %v1687
        %v2666 = vpop.f32.mrf.mxu0
        %v2667 = vadd.f32 %v2570, %v2666
        %v2668 = vpop.f32.mrf.mxu0
        %v2669 = vpop.f32.mrf.mxu0
        %v2670 = vadd.f32 %v2573, %v2669
        %v2671 = vpop.f32.mrf.mxu0
        %2672 = vmatprep.mubr.bf16.mxu0 %v1715
        %2673 = vmatmul.mubr.bf16.gmra.mxu0 %v1714
        %v2674 = vpop.f32.mrf.mxu0
        %v2675 = vadd.f32 %v2578, %v2674
        %v2676 = vpop.f32.mrf.mxu0
        %v2677 = vpop.f32.mrf.mxu0
        %v2678 = vadd.f32 %v2581, %v2677
        %v2679 = vpop.f32.mrf.mxu0
        %2680 = vmatprep.mubr.bf16.mxu0 %v1742
        %2681 = vmatmul.mubr.bf16.gmra.mxu0 %v1741
        %v2682 = vpop.f32.mrf.mxu0
        %v2683 = vadd.f32 %v2586, %v2682
        %v2684 = vpop.f32.mrf.mxu0
        %v2685 = vpop.f32.mrf.mxu0
        %v2686 = vadd.f32 %v2589, %v2685
        %v2687 = vpop.f32.mrf.mxu0
        %2688 = vmatprep.mubr.bf16.mxu0 %v1769
        %2689 = vmatmul.mubr.bf16.gmra.mxu0 %v1768
        %v2690 = vpop.f32.mrf.mxu0
        %v2691 = vadd.f32 %v2594, %v2690
        %v2692 = vpop.f32.mrf.mxu0
        %v2693 = vpop.f32.mrf.mxu0
        %v2694 = vadd.f32 %v2597, %v2693
        %v2695 = vpop.f32.mrf.mxu0
        %2696 = vmatprep.mubr.bf16.mxu0 %v1796
        %2697 = vmatmul.mubr.bf16.gmra.mxu0 %v1795
        %v2698 = vpop.f32.mrf.mxu0
        %v2699 = vadd.f32 %v2602, %v2698
        %v2700 = vpop.f32.mrf.mxu0
        %v2701 = vpop.f32.mrf.mxu0
        %v2702 = vadd.f32 %v2605, %v2701
        %v2703 = vpop.f32.mrf.mxu0
        %2704 = vdwg.mxu0
        %2705 = vmatprep.subr.bf16.mxu0 0
        %2706 = vmatpush1.bf16.msra.mxu0 %v841
        %2707 = vmatprep.subr.bf16.mxu0 0
        %2708 = vmatpush1.bf16.msra.mxu0 %v840
        %2709 = vmatprep.subr.bf16.mxu0 0
        %2710 = vmatpush1.bf16.msra.mxu0 %v839
        %2711 = vmatprep.subr.bf16.mxu0 0
        %2712 = vmatpush1.bf16.msra.mxu0 %v838
        %2713 = vmatprep.subr.bf16.mxu0 0
        %2714 = vmatpush1.bf16.msra.mxu0 %v837
        %2715 = vmatprep.subr.bf16.mxu0 0
        %2716 = vmatpush1.bf16.msra.mxu0 %v836
        %2717 = vmatprep.subr.bf16.mxu0 0
        %2718 = vmatpush1.bf16.msra.mxu0 %v835
        %2719 = vmatprep.subr.bf16.mxu0 0
        %2720 = vmatpush1.bf16.msra.mxu0 %v834
        %2721 = vmatprep.subr.bf16.mxu0 0
        %2722 = vmatpush2.bf16.msra.mxu0 %v849
        %2723 = vmatprep.subr.bf16.mxu0 0
        %2724 = vmatpush2.bf16.msra.mxu0 %v848
        %2725 = vmatprep.subr.bf16.mxu0 0
        %2726 = vmatpush2.bf16.msra.mxu0 %v847
        %2727 = vmatprep.subr.bf16.mxu0 0
        %2728 = vmatpush2.bf16.msra.mxu0 %v846
        %2729 = vmatprep.subr.bf16.mxu0 0
        %2730 = vmatpush2.bf16.msra.mxu0 %v845
        %2731 = vmatprep.subr.bf16.mxu0 0
        %2732 = vmatpush2.bf16.msra.mxu0 %v844
        %2733 = vmatprep.subr.bf16.mxu0 0
        %2734 = vmatpush2.bf16.msra.mxu0 %v843
        %2735 = vmatprep.subr.bf16.mxu0 0
        %2736 = vmatpush2.bf16.msra.mxu0 %v842
        %2737 = vmatprep.mubr.bf16.mxu0 %v1609
        %2738 = vmatmul.mubr.bf16.gmra.mxu0 %v1608
        %v2739 = vpop.f32.mrf.mxu0
        %v2740 = vadd.f32 %v2643, %v2739
        %v2741 = vpop.f32.mrf.mxu0
        %v2742 = vpop.f32.mrf.mxu0
        %v2743 = vadd.f32 %v2646, %v2742
        %v2744 = vpop.f32.mrf.mxu0
        %2745 = vmatprep.mubr.bf16.mxu0 %v1636
        %2746 = vmatmul.mubr.bf16.gmra.mxu0 %v1635
        %v2747 = vpop.f32.mrf.mxu0
        %v2748 = vadd.f32 %v2651, %v2747
        %v2749 = vpop.f32.mrf.mxu0
        %v2750 = vpop.f32.mrf.mxu0
        %v2751 = vadd.f32 %v2654, %v2750
        %v2752 = vpop.f32.mrf.mxu0
        %2753 = vmatprep.mubr.bf16.mxu0 %v1663
        %2754 = vmatmul.mubr.bf16.gmra.mxu0 %v1662
        %v2755 = vpop.f32.mrf.mxu0
        %v2756 = vadd.f32 %v2659, %v2755
        %v2757 = vpop.f32.mrf.mxu0
        %v2758 = vpop.f32.mrf.mxu0
        %v2759 = vadd.f32 %v2662, %v2758
        %v2760 = vpop.f32.mrf.mxu0
        %2761 = vmatprep.mubr.bf16.mxu0 %v1690
        %2762 = vmatmul.mubr.bf16.gmra.mxu0 %v1689
        %v2763 = vpop.f32.mrf.mxu0
        %v2764 = vadd.f32 %v2667, %v2763
        %v2765 = vpop.f32.mrf.mxu0
        %v2766 = vpop.f32.mrf.mxu0
        %v2767 = vadd.f32 %v2670, %v2766
        %v2768 = vpop.f32.mrf.mxu0
        %2769 = vmatprep.mubr.bf16.mxu0 %v1717
        %2770 = vmatmul.mubr.bf16.gmra.mxu0 %v1716
        %v2771 = vpop.f32.mrf.mxu0
        %v2772 = vadd.f32 %v2675, %v2771
        %v2773 = vpop.f32.mrf.mxu0
        %v2774 = vpop.f32.mrf.mxu0
        %v2775 = vadd.f32 %v2678, %v2774
        %v2776 = vpop.f32.mrf.mxu0
        %2777 = vmatprep.mubr.bf16.mxu0 %v1744
        %2778 = vmatmul.mubr.bf16.gmra.mxu0 %v1743
        %v2779 = vpop.f32.mrf.mxu0
        %v2780 = vadd.f32 %v2683, %v2779
        %v2781 = vpop.f32.mrf.mxu0
        %v2782 = vpop.f32.mrf.mxu0
        %v2783 = vadd.f32 %v2686, %v2782
        %v2784 = vpop.f32.mrf.mxu0
        %2785 = vmatprep.mubr.bf16.mxu0 %v1771
        %2786 = vmatmul.mubr.bf16.gmra.mxu0 %v1770
        %v2787 = vpop.f32.mrf.mxu0
        %v2788 = vadd.f32 %v2691, %v2787
        %v2789 = vpop.f32.mrf.mxu0
        %v2790 = vpop.f32.mrf.mxu0
        %v2791 = vadd.f32 %v2694, %v2790
        %v2792 = vpop.f32.mrf.mxu0
        %2793 = vmatprep.mubr.bf16.mxu0 %v1798
        %2794 = vmatmul.mubr.bf16.gmra.mxu0 %v1797
        %v2795 = vpop.f32.mrf.mxu0
        %v2796 = vadd.f32 %v2699, %v2795
        %v2797 = vpop.f32.mrf.mxu0
        %v2798 = vpop.f32.mrf.mxu0
        %v2799 = vadd.f32 %v2702, %v2798
        %v2800 = vpop.f32.mrf.mxu0
        %2801 = vdwg.mxu0
        %2802 = vmatprep.subr.bf16.mxu0 0
        %2803 = vmatpush1.bf16.msra.mxu0 %v857
        %2804 = vmatprep.subr.bf16.mxu0 0
        %2805 = vmatpush1.bf16.msra.mxu0 %v856
        %2806 = vmatprep.subr.bf16.mxu0 0
        %2807 = vmatpush1.bf16.msra.mxu0 %v855
        %2808 = vmatprep.subr.bf16.mxu0 0
        %2809 = vmatpush1.bf16.msra.mxu0 %v854
        %2810 = vmatprep.subr.bf16.mxu0 0
        %2811 = vmatpush1.bf16.msra.mxu0 %v853
        %2812 = vmatprep.subr.bf16.mxu0 0
        %2813 = vmatpush1.bf16.msra.mxu0 %v852
        %2814 = vmatprep.subr.bf16.mxu0 0
        %2815 = vmatpush1.bf16.msra.mxu0 %v851
        %2816 = vmatprep.subr.bf16.mxu0 0
        %2817 = vmatpush1.bf16.msra.mxu0 %v850
        %2818 = vmatprep.subr.bf16.mxu0 0
        %2819 = vmatpush2.bf16.msra.mxu0 %v865
        %2820 = vmatprep.subr.bf16.mxu0 0
        %2821 = vmatpush2.bf16.msra.mxu0 %v864
        %2822 = vmatprep.subr.bf16.mxu0 0
        %2823 = vmatpush2.bf16.msra.mxu0 %v863
        %2824 = vmatprep.subr.bf16.mxu0 0
        %2825 = vmatpush2.bf16.msra.mxu0 %v862
        %2826 = vmatprep.subr.bf16.mxu0 0
        %2827 = vmatpush2.bf16.msra.mxu0 %v861
        %2828 = vmatprep.subr.bf16.mxu0 0
        %2829 = vmatpush2.bf16.msra.mxu0 %v860
        %2830 = vmatprep.subr.bf16.mxu0 0
        %2831 = vmatpush2.bf16.msra.mxu0 %v859
        %2832 = vmatprep.subr.bf16.mxu0 0
        %2833 = vmatpush2.bf16.msra.mxu0 %v858
        %2834 = vmatprep.mubr.bf16.mxu0 %v1611
        %2835 = vmatmul.mubr.bf16.gmra.mxu0 %v1610
        %v2836 = vpop.f32.mrf.mxu0
        %v2837 = vadd.f32 %v2740, %v2836
        %v2838 = vpop.f32.mrf.mxu0
        %v2839 = vpop.f32.mrf.mxu0
        %v2840 = vadd.f32 %v2743, %v2839
        %v2841 = vpop.f32.mrf.mxu0
        %2842 = vmatprep.mubr.bf16.mxu0 %v1638
        %2843 = vmatmul.mubr.bf16.gmra.mxu0 %v1637
        %v2844 = vpop.f32.mrf.mxu0
        %v2845 = vadd.f32 %v2748, %v2844
        %v2846 = vpop.f32.mrf.mxu0
        %v2847 = vpop.f32.mrf.mxu0
        %v2848 = vadd.f32 %v2751, %v2847
        %v2849 = vpop.f32.mrf.mxu0
        %2850 = vmatprep.mubr.bf16.mxu0 %v1665
        %2851 = vmatmul.mubr.bf16.gmra.mxu0 %v1664
        %v2852 = vpop.f32.mrf.mxu0
        %v2853 = vadd.f32 %v2756, %v2852
        %v2854 = vpop.f32.mrf.mxu0
        %v2855 = vpop.f32.mrf.mxu0
        %v2856 = vadd.f32 %v2759, %v2855
        %v2857 = vpop.f32.mrf.mxu0
        %2858 = vmatprep.mubr.bf16.mxu0 %v1692
        %2859 = vmatmul.mubr.bf16.gmra.mxu0 %v1691
        %v2860 = vpop.f32.mrf.mxu0
        %v2861 = vadd.f32 %v2764, %v2860
        %v2862 = vpop.f32.mrf.mxu0
        %v2863 = vpop.f32.mrf.mxu0
        %v2864 = vadd.f32 %v2767, %v2863
        %v2865 = vpop.f32.mrf.mxu0
        %2866 = vmatprep.mubr.bf16.mxu0 %v1719
        %2867 = vmatmul.mubr.bf16.gmra.mxu0 %v1718
        %v2868 = vpop.f32.mrf.mxu0
        %v2869 = vadd.f32 %v2772, %v2868
        %v2870 = vpop.f32.mrf.mxu0
        %v2871 = vpop.f32.mrf.mxu0
        %v2872 = vadd.f32 %v2775, %v2871
        %v2873 = vpop.f32.mrf.mxu0
        %2874 = vmatprep.mubr.bf16.mxu0 %v1746
        %2875 = vmatmul.mubr.bf16.gmra.mxu0 %v1745
        %v2876 = vpop.f32.mrf.mxu0
        %v2877 = vadd.f32 %v2780, %v2876
        %v2878 = vpop.f32.mrf.mxu0
        %v2879 = vpop.f32.mrf.mxu0
        %v2880 = vadd.f32 %v2783, %v2879
        %v2881 = vpop.f32.mrf.mxu0
        %2882 = vmatprep.mubr.bf16.mxu0 %v1773
        %2883 = vmatmul.mubr.bf16.gmra.mxu0 %v1772
        %v2884 = vpop.f32.mrf.mxu0
        %v2885 = vadd.f32 %v2788, %v2884
        %v2886 = vpop.f32.mrf.mxu0
        %v2887 = vpop.f32.mrf.mxu0
        %v2888 = vadd.f32 %v2791, %v2887
        %v2889 = vpop.f32.mrf.mxu0
        %2890 = vmatprep.mubr.bf16.mxu0 %v1800
        %2891 = vmatmul.mubr.bf16.gmra.mxu0 %v1799
        %v2892 = vpop.f32.mrf.mxu0
        %v2893 = vadd.f32 %v2796, %v2892
        %v2894 = vpop.f32.mrf.mxu0
        %v2895 = vpop.f32.mrf.mxu0
        %v2896 = vadd.f32 %v2799, %v2895
        %v2897 = vpop.f32.mrf.mxu0
        %2898 = vdwg.mxu0
        %2899 = vmatprep.subr.bf16.mxu0 0
        %2900 = vmatpush1.bf16.msra.mxu0 %v873
        %2901 = vmatprep.subr.bf16.mxu0 0
        %2902 = vmatpush1.bf16.msra.mxu0 %v872
        %2903 = vmatprep.subr.bf16.mxu0 0
        %2904 = vmatpush1.bf16.msra.mxu0 %v871
        %2905 = vmatprep.subr.bf16.mxu0 0
        %2906 = vmatpush1.bf16.msra.mxu0 %v870
        %2907 = vmatprep.subr.bf16.mxu0 0
        %2908 = vmatpush1.bf16.msra.mxu0 %v869
        %2909 = vmatprep.subr.bf16.mxu0 0
        %2910 = vmatpush1.bf16.msra.mxu0 %v868
        %2911 = vmatprep.subr.bf16.mxu0 0
        %2912 = vmatpush1.bf16.msra.mxu0 %v867
        %2913 = vmatprep.subr.bf16.mxu0 0
        %2914 = vmatpush1.bf16.msra.mxu0 %v866
        %2915 = vmatprep.subr.bf16.mxu0 0
        %2916 = vmatpush2.bf16.msra.mxu0 %v881
        %2917 = vmatprep.subr.bf16.mxu0 0
        %2918 = vmatpush2.bf16.msra.mxu0 %v880
        %2919 = vmatprep.subr.bf16.mxu0 0
        %2920 = vmatpush2.bf16.msra.mxu0 %v879
        %2921 = vmatprep.subr.bf16.mxu0 0
        %2922 = vmatpush2.bf16.msra.mxu0 %v878
        %2923 = vmatprep.subr.bf16.mxu0 0
        %2924 = vmatpush2.bf16.msra.mxu0 %v877
        %2925 = vmatprep.subr.bf16.mxu0 0
        %2926 = vmatpush2.bf16.msra.mxu0 %v876
        %2927 = vmatprep.subr.bf16.mxu0 0
        %2928 = vmatpush2.bf16.msra.mxu0 %v875
        %2929 = vmatprep.subr.bf16.mxu0 0
        %2930 = vmatpush2.bf16.msra.mxu0 %v874
        %2931 = vmatprep.mubr.bf16.mxu0 %v1613
        %2932 = vmatmul.mubr.bf16.gmra.mxu0 %v1612
        %v2933 = vpop.f32.mrf.mxu0
        %v2934 = vadd.f32 %v2837, %v2933
        %v2935 = vpop.f32.mrf.mxu0
        %v2936 = vpop.f32.mrf.mxu0
        %v2937 = vadd.f32 %v2840, %v2936
        %v2938 = vpop.f32.mrf.mxu0
        %2939 = vmatprep.mubr.bf16.mxu0 %v1640
        %2940 = vmatmul.mubr.bf16.gmra.mxu0 %v1639
        %v2941 = vpop.f32.mrf.mxu0
        %v2942 = vadd.f32 %v2845, %v2941
        %v2943 = vpop.f32.mrf.mxu0
        %v2944 = vpop.f32.mrf.mxu0
        %v2945 = vadd.f32 %v2848, %v2944
        %v2946 = vpop.f32.mrf.mxu0
        %2947 = vmatprep.mubr.bf16.mxu0 %v1667
        %2948 = vmatmul.mubr.bf16.gmra.mxu0 %v1666
        %v2949 = vpop.f32.mrf.mxu0
        %v2950 = vadd.f32 %v2853, %v2949
        %v2951 = vpop.f32.mrf.mxu0
        %v2952 = vpop.f32.mrf.mxu0
        %v2953 = vadd.f32 %v2856, %v2952
        %v2954 = vpop.f32.mrf.mxu0
        %2955 = vmatprep.mubr.bf16.mxu0 %v1694
        %2956 = vmatmul.mubr.bf16.gmra.mxu0 %v1693
        %v2957 = vpop.f32.mrf.mxu0
        %v2958 = vadd.f32 %v2861, %v2957
        %v2959 = vpop.f32.mrf.mxu0
        %v2960 = vpop.f32.mrf.mxu0
        %v2961 = vadd.f32 %v2864, %v2960
        %v2962 = vpop.f32.mrf.mxu0
        %2963 = vmatprep.mubr.bf16.mxu0 %v1721
        %2964 = vmatmul.mubr.bf16.gmra.mxu0 %v1720
        %v2965 = vpop.f32.mrf.mxu0
        %v2966 = vadd.f32 %v2869, %v2965
        %v2967 = vpop.f32.mrf.mxu0
        %v2968 = vpop.f32.mrf.mxu0
        %v2969 = vadd.f32 %v2872, %v2968
        %v2970 = vpop.f32.mrf.mxu0
        %2971 = vmatprep.mubr.bf16.mxu0 %v1748
        %2972 = vmatmul.mubr.bf16.gmra.mxu0 %v1747
        %v2973 = vpop.f32.mrf.mxu0
        %v2974 = vadd.f32 %v2877, %v2973
        %v2975 = vpop.f32.mrf.mxu0
        %v2976 = vpop.f32.mrf.mxu0
        %v2977 = vadd.f32 %v2880, %v2976
        %v2978 = vpop.f32.mrf.mxu0
        %2979 = vmatprep.mubr.bf16.mxu0 %v1775
        %2980 = vmatmul.mubr.bf16.gmra.mxu0 %v1774
        %v2981 = vpop.f32.mrf.mxu0
        %v2982 = vadd.f32 %v2885, %v2981
        %v2983 = vpop.f32.mrf.mxu0
        %v2984 = vpop.f32.mrf.mxu0
        %v2985 = vadd.f32 %v2888, %v2984
        %v2986 = vpop.f32.mrf.mxu0
        %2987 = vmatprep.mubr.bf16.mxu0 %v1802
        %2988 = vmatmul.mubr.bf16.gmra.mxu0 %v1801
        %v2989 = vpop.f32.mrf.mxu0
        %v2990 = vadd.f32 %v2893, %v2989
        %v2991 = vpop.f32.mrf.mxu0
        %v2992 = vpop.f32.mrf.mxu0
        %v2993 = vadd.f32 %v2896, %v2992
        %v2994 = vpop.f32.mrf.mxu0
        %2995 = vdwg.mxu0
        %2996 = vmatprep.subr.bf16.mxu0 0
        %2997 = vmatpush1.bf16.msra.mxu0 %v889
        %2998 = vmatprep.subr.bf16.mxu0 0
        %2999 = vmatpush1.bf16.msra.mxu0 %v888
        %3000 = vmatprep.subr.bf16.mxu0 0
        %3001 = vmatpush1.bf16.msra.mxu0 %v887
        %3002 = vmatprep.subr.bf16.mxu0 0
        %3003 = vmatpush1.bf16.msra.mxu0 %v886
        %3004 = vmatprep.subr.bf16.mxu0 0
        %3005 = vmatpush1.bf16.msra.mxu0 %v885
        %3006 = vmatprep.subr.bf16.mxu0 0
        %3007 = vmatpush1.bf16.msra.mxu0 %v884
        %3008 = vmatprep.subr.bf16.mxu0 0
        %3009 = vmatpush1.bf16.msra.mxu0 %v883
        %3010 = vmatprep.subr.bf16.mxu0 0
        %3011 = vmatpush1.bf16.msra.mxu0 %v882
        %3012 = vmatprep.subr.bf16.mxu0 0
        %3013 = vmatpush2.bf16.msra.mxu0 %v897
        %3014 = vmatprep.subr.bf16.mxu0 0
        %3015 = vmatpush2.bf16.msra.mxu0 %v896
        %3016 = vmatprep.subr.bf16.mxu0 0
        %3017 = vmatpush2.bf16.msra.mxu0 %v895
        %3018 = vmatprep.subr.bf16.mxu0 0
        %3019 = vmatpush2.bf16.msra.mxu0 %v894
        %3020 = vmatprep.subr.bf16.mxu0 0
        %3021 = vmatpush2.bf16.msra.mxu0 %v893
        %3022 = vmatprep.subr.bf16.mxu0 0
        %3023 = vmatpush2.bf16.msra.mxu0 %v892
        %3024 = vmatprep.subr.bf16.mxu0 0
        %3025 = vmatpush2.bf16.msra.mxu0 %v891
        %3026 = vmatprep.subr.bf16.mxu0 0
        %3027 = vmatpush2.bf16.msra.mxu0 %v890
        %3028 = vmatprep.mubr.bf16.mxu0 %v1615
        %3029 = vmatmul.mubr.bf16.gmra.mxu0 %v1614
        %v3030 = vpop.f32.mrf.mxu0
        %v3031 = vadd.f32 %v2934, %v3030
        %v3032 = vpop.f32.mrf.mxu0
        %v3033 = vpop.f32.mrf.mxu0
        %v3034 = vadd.f32 %v2937, %v3033
        %v3035 = vpop.f32.mrf.mxu0
        %3036 = vmatprep.mubr.bf16.mxu0 %v1642
        %3037 = vmatmul.mubr.bf16.gmra.mxu0 %v1641
        %v3038 = vpop.f32.mrf.mxu0
        %v3039 = vadd.f32 %v2942, %v3038
        %v3040 = vpop.f32.mrf.mxu0
        %v3041 = vpop.f32.mrf.mxu0
        %v3042 = vadd.f32 %v2945, %v3041
        %v3043 = vpop.f32.mrf.mxu0
        %3044 = vmatprep.mubr.bf16.mxu0 %v1669
        %3045 = vmatmul.mubr.bf16.gmra.mxu0 %v1668
        %v3046 = vpop.f32.mrf.mxu0
        %v3047 = vadd.f32 %v2950, %v3046
        %v3048 = vpop.f32.mrf.mxu0
        %v3049 = vpop.f32.mrf.mxu0
        %v3050 = vadd.f32 %v2953, %v3049
        %v3051 = vpop.f32.mrf.mxu0
        %3052 = vmatprep.mubr.bf16.mxu0 %v1696
        %3053 = vmatmul.mubr.bf16.gmra.mxu0 %v1695
        %v3054 = vpop.f32.mrf.mxu0
        %v3055 = vadd.f32 %v2958, %v3054
        %v3056 = vpop.f32.mrf.mxu0
        %v3057 = vpop.f32.mrf.mxu0
        %v3058 = vadd.f32 %v2961, %v3057
        %v3059 = vpop.f32.mrf.mxu0
        %3060 = vmatprep.mubr.bf16.mxu0 %v1723
        %3061 = vmatmul.mubr.bf16.gmra.mxu0 %v1722
        %v3062 = vpop.f32.mrf.mxu0
        %v3063 = vadd.f32 %v2966, %v3062
        %v3064 = vpop.f32.mrf.mxu0
        %v3065 = vpop.f32.mrf.mxu0
        %v3066 = vadd.f32 %v2969, %v3065
        %v3067 = vpop.f32.mrf.mxu0
        %3068 = vmatprep.mubr.bf16.mxu0 %v1750
        %3069 = vmatmul.mubr.bf16.gmra.mxu0 %v1749
        %v3070 = vpop.f32.mrf.mxu0
        %v3071 = vadd.f32 %v2974, %v3070
        %v3072 = vpop.f32.mrf.mxu0
        %v3073 = vpop.f32.mrf.mxu0
        %v3074 = vadd.f32 %v2977, %v3073
        %v3075 = vpop.f32.mrf.mxu0
        %3076 = vmatprep.mubr.bf16.mxu0 %v1777
        %3077 = vmatmul.mubr.bf16.gmra.mxu0 %v1776
        %v3078 = vpop.f32.mrf.mxu0
        %v3079 = vadd.f32 %v2982, %v3078
        %v3080 = vpop.f32.mrf.mxu0
        %v3081 = vpop.f32.mrf.mxu0
        %v3082 = vadd.f32 %v2985, %v3081
        %v3083 = vpop.f32.mrf.mxu0
        %3084 = vmatprep.mubr.bf16.mxu0 %v1804
        %3085 = vmatmul.mubr.bf16.gmra.mxu0 %v1803
        %v3086 = vpop.f32.mrf.mxu0
        %v3087 = vadd.f32 %v2990, %v3086
        %v3088 = vpop.f32.mrf.mxu0
        %v3089 = vpop.f32.mrf.mxu0
        %v3090 = vadd.f32 %v2993, %v3089
        %v3091 = vpop.f32.mrf.mxu0
        %3092 = vdwg.mxu0
        %3093 = vmatprep.subr.bf16.mxu0 0
        %3094 = vmatpush1.bf16.msra.mxu0 %v905
        %3095 = vmatprep.subr.bf16.mxu0 0
        %3096 = vmatpush1.bf16.msra.mxu0 %v904
        %3097 = vmatprep.subr.bf16.mxu0 0
        %3098 = vmatpush1.bf16.msra.mxu0 %v903
        %3099 = vmatprep.subr.bf16.mxu0 0
        %3100 = vmatpush1.bf16.msra.mxu0 %v902
        %3101 = vmatprep.subr.bf16.mxu0 0
        %3102 = vmatpush1.bf16.msra.mxu0 %v901
        %3103 = vmatprep.subr.bf16.mxu0 0
        %3104 = vmatpush1.bf16.msra.mxu0 %v900
        %3105 = vmatprep.subr.bf16.mxu0 0
        %3106 = vmatpush1.bf16.msra.mxu0 %v899
        %3107 = vmatprep.subr.bf16.mxu0 0
        %3108 = vmatpush1.bf16.msra.mxu0 %v898
        %3109 = vmatprep.subr.bf16.mxu0 0
        %3110 = vmatpush2.bf16.msra.mxu0 %v913
        %3111 = vmatprep.subr.bf16.mxu0 0
        %3112 = vmatpush2.bf16.msra.mxu0 %v912
        %3113 = vmatprep.subr.bf16.mxu0 0
        %3114 = vmatpush2.bf16.msra.mxu0 %v911
        %3115 = vmatprep.subr.bf16.mxu0 0
        %3116 = vmatpush2.bf16.msra.mxu0 %v910
        %3117 = vmatprep.subr.bf16.mxu0 0
        %3118 = vmatpush2.bf16.msra.mxu0 %v909
        %3119 = vmatprep.subr.bf16.mxu0 0
        %3120 = vmatpush2.bf16.msra.mxu0 %v908
        %3121 = vmatprep.subr.bf16.mxu0 0
        %3122 = vmatpush2.bf16.msra.mxu0 %v907
        %3123 = vmatprep.subr.bf16.mxu0 0
        %3124 = vmatpush2.bf16.msra.mxu0 %v906
        %3125 = vmatprep.mubr.bf16.mxu0 %v1617
        %3126 = vmatmul.mubr.bf16.gmra.mxu0 %v1616
        %v3127 = vpop.f32.mrf.mxu0
        %v3128 = vadd.f32 %v3031, %v3127
        %v3129 = vpop.f32.mrf.mxu0
        %v3130 = vpop.f32.mrf.mxu0
        %v3131 = vadd.f32 %v3034, %v3130
        %v3132 = vpop.f32.mrf.mxu0
        %3133 = vmatprep.mubr.bf16.mxu0 %v1644
        %3134 = vmatmul.mubr.bf16.gmra.mxu0 %v1643
        %v3135 = vpop.f32.mrf.mxu0
        %v3136 = vadd.f32 %v3039, %v3135
        %v3137 = vpop.f32.mrf.mxu0
        %v3138 = vpop.f32.mrf.mxu0
        %v3139 = vadd.f32 %v3042, %v3138
        %v3140 = vpop.f32.mrf.mxu0
        %3141 = vmatprep.mubr.bf16.mxu0 %v1671
        %3142 = vmatmul.mubr.bf16.gmra.mxu0 %v1670
        %v3143 = vpop.f32.mrf.mxu0
        %v3144 = vadd.f32 %v3047, %v3143
        %v3145 = vpop.f32.mrf.mxu0
        %v3146 = vpop.f32.mrf.mxu0
        %v3147 = vadd.f32 %v3050, %v3146
        %v3148 = vpop.f32.mrf.mxu0
        %3149 = vmatprep.mubr.bf16.mxu0 %v1698
        %3150 = vmatmul.mubr.bf16.gmra.mxu0 %v1697
        %v3151 = vpop.f32.mrf.mxu0
        %v3152 = vadd.f32 %v3055, %v3151
        %v3153 = vpop.f32.mrf.mxu0
        %v3154 = vpop.f32.mrf.mxu0
        %v3155 = vadd.f32 %v3058, %v3154
        %v3156 = vpop.f32.mrf.mxu0
        %3157 = vmatprep.mubr.bf16.mxu0 %v1725
        %3158 = vmatmul.mubr.bf16.gmra.mxu0 %v1724
        %v3159 = vpop.f32.mrf.mxu0
        %v3160 = vadd.f32 %v3063, %v3159
        %v3161 = vpop.f32.mrf.mxu0
        %v3162 = vpop.f32.mrf.mxu0
        %v3163 = vadd.f32 %v3066, %v3162
        %v3164 = vpop.f32.mrf.mxu0
        %3165 = vmatprep.mubr.bf16.mxu0 %v1752
        %3166 = vmatmul.mubr.bf16.gmra.mxu0 %v1751
        %v3167 = vpop.f32.mrf.mxu0
        %v3168 = vadd.f32 %v3071, %v3167
        %v3169 = vpop.f32.mrf.mxu0
        %v3170 = vpop.f32.mrf.mxu0
        %v3171 = vadd.f32 %v3074, %v3170
        %v3172 = vpop.f32.mrf.mxu0
        %3173 = vmatprep.mubr.bf16.mxu0 %v1779
        %3174 = vmatmul.mubr.bf16.gmra.mxu0 %v1778
        %v3175 = vpop.f32.mrf.mxu0
        %v3176 = vadd.f32 %v3079, %v3175
        %v3177 = vpop.f32.mrf.mxu0
        %v3178 = vpop.f32.mrf.mxu0
        %v3179 = vadd.f32 %v3082, %v3178
        %v3180 = vpop.f32.mrf.mxu0
        %3181 = vmatprep.mubr.bf16.mxu0 %v1806
        %3182 = vmatmul.mubr.bf16.gmra.mxu0 %v1805
        %v3183 = vpop.f32.mrf.mxu0
        %v3184 = vadd.f32 %v3087, %v3183
        %v3185 = vpop.f32.mrf.mxu0
        %v3186 = vpop.f32.mrf.mxu0
        %v3187 = vadd.f32 %v3090, %v3186
        %v3188 = vpop.f32.mrf.mxu0
        %3189 = vdwg.mxu0
        %3190 = vmatprep.subr.bf16.mxu0 0
        %3191 = vmatpush1.bf16.msra.mxu0 %v921
        %3192 = vmatprep.subr.bf16.mxu0 0
        %3193 = vmatpush1.bf16.msra.mxu0 %v920
        %3194 = vmatprep.subr.bf16.mxu0 0
        %3195 = vmatpush1.bf16.msra.mxu0 %v919
        %3196 = vmatprep.subr.bf16.mxu0 0
        %3197 = vmatpush1.bf16.msra.mxu0 %v918
        %3198 = vmatprep.subr.bf16.mxu0 0
        %3199 = vmatpush1.bf16.msra.mxu0 %v917
        %3200 = vmatprep.subr.bf16.mxu0 0
        %3201 = vmatpush1.bf16.msra.mxu0 %v916
        %3202 = vmatprep.subr.bf16.mxu0 0
        %3203 = vmatpush1.bf16.msra.mxu0 %v915
        %3204 = vmatprep.subr.bf16.mxu0 0
        %3205 = vmatpush1.bf16.msra.mxu0 %v914
        %3206 = vmatprep.subr.bf16.mxu0 0
        %3207 = vmatpush2.bf16.msra.mxu0 %v929
        %3208 = vmatprep.subr.bf16.mxu0 0
        %3209 = vmatpush2.bf16.msra.mxu0 %v928
        %3210 = vmatprep.subr.bf16.mxu0 0
        %3211 = vmatpush2.bf16.msra.mxu0 %v927
        %3212 = vmatprep.subr.bf16.mxu0 0
        %3213 = vmatpush2.bf16.msra.mxu0 %v926
        %3214 = vmatprep.subr.bf16.mxu0 0
        %3215 = vmatpush2.bf16.msra.mxu0 %v925
        %3216 = vmatprep.subr.bf16.mxu0 0
        %3217 = vmatpush2.bf16.msra.mxu0 %v924
        %3218 = vmatprep.subr.bf16.mxu0 0
        %3219 = vmatpush2.bf16.msra.mxu0 %v923
        %3220 = vmatprep.subr.bf16.mxu0 0
        %3221 = vmatpush2.bf16.msra.mxu0 %v922
        %3222 = vmatprep.mubr.bf16.mxu0 %v1619
        %3223 = vmatmul.mubr.bf16.gmra.mxu0 %v1618
        %v3224 = vpop.f32.mrf.mxu0
        %v3225 = vadd.f32 %v3128, %v3224
        %v3226 = vpop.f32.mrf.mxu0
        %v3227 = vpop.f32.mrf.mxu0
        %v3228 = vadd.f32 %v3131, %v3227
        %v3229 = vpop.f32.mrf.mxu0
        %3230 = vmatprep.mubr.bf16.mxu0 %v1646
        %3231 = vmatmul.mubr.bf16.gmra.mxu0 %v1645
        %v3232 = vpop.f32.mrf.mxu0
        %v3233 = vadd.f32 %v3136, %v3232
        %v3234 = vpop.f32.mrf.mxu0
        %v3235 = vpop.f32.mrf.mxu0
        %v3236 = vadd.f32 %v3139, %v3235
        %v3237 = vpop.f32.mrf.mxu0
        %3238 = vmatprep.mubr.bf16.mxu0 %v1673
        %3239 = vmatmul.mubr.bf16.gmra.mxu0 %v1672
        %v3240 = vpop.f32.mrf.mxu0
        %v3241 = vadd.f32 %v3144, %v3240
        %v3242 = vpop.f32.mrf.mxu0
        %v3243 = vpop.f32.mrf.mxu0
        %v3244 = vadd.f32 %v3147, %v3243
        %v3245 = vpop.f32.mrf.mxu0
        %3246 = vmatprep.mubr.bf16.mxu0 %v1700
        %3247 = vmatmul.mubr.bf16.gmra.mxu0 %v1699
        %v3248 = vpop.f32.mrf.mxu0
        %v3249 = vadd.f32 %v3152, %v3248
        %v3250 = vpop.f32.mrf.mxu0
        %v3251 = vpop.f32.mrf.mxu0
        %v3252 = vadd.f32 %v3155, %v3251
        %v3253 = vpop.f32.mrf.mxu0
        %3254 = vmatprep.mubr.bf16.mxu0 %v1727
        %3255 = vmatmul.mubr.bf16.gmra.mxu0 %v1726
        %v3256 = vpop.f32.mrf.mxu0
        %v3257 = vadd.f32 %v3160, %v3256
        %v3258 = vpop.f32.mrf.mxu0
        %v3259 = vpop.f32.mrf.mxu0
        %v3260 = vadd.f32 %v3163, %v3259
        %v3261 = vpop.f32.mrf.mxu0
        %3262 = vmatprep.mubr.bf16.mxu0 %v1754
        %3263 = vmatmul.mubr.bf16.gmra.mxu0 %v1753
        %v3264 = vpop.f32.mrf.mxu0
        %v3265 = vadd.f32 %v3168, %v3264
        %v3266 = vpop.f32.mrf.mxu0
        %v3267 = vpop.f32.mrf.mxu0
        %v3268 = vadd.f32 %v3171, %v3267
        %v3269 = vpop.f32.mrf.mxu0
        %3270 = vmatprep.mubr.bf16.mxu0 %v1781
        %3271 = vmatmul.mubr.bf16.gmra.mxu0 %v1780
        %v3272 = vpop.f32.mrf.mxu0
        %v3273 = vadd.f32 %v3176, %v3272
        %v3274 = vpop.f32.mrf.mxu0
        %v3275 = vpop.f32.mrf.mxu0
        %v3276 = vadd.f32 %v3179, %v3275
        %v3277 = vpop.f32.mrf.mxu0
        %3278 = vmatprep.mubr.bf16.mxu0 %v1808
        %3279 = vmatmul.mubr.bf16.gmra.mxu0 %v1807
        %v3280 = vpop.f32.mrf.mxu0
        %v3281 = vadd.f32 %v3184, %v3280
        %v3282 = vpop.f32.mrf.mxu0
        %v3283 = vpop.f32.mrf.mxu0
        %v3284 = vadd.f32 %v3187, %v3283
        %v3285 = vpop.f32.mrf.mxu0
        %3286 = vdwg.mxu0
        %3287 = vmatprep.subr.bf16.mxu0 0
        %3288 = vmatpush1.bf16.msra.mxu0 %v937
        %3289 = vmatprep.subr.bf16.mxu0 0
        %3290 = vmatpush1.bf16.msra.mxu0 %v936
        %3291 = vmatprep.subr.bf16.mxu0 0
        %3292 = vmatpush1.bf16.msra.mxu0 %v935
        %3293 = vmatprep.subr.bf16.mxu0 0
        %3294 = vmatpush1.bf16.msra.mxu0 %v934
        %3295 = vmatprep.subr.bf16.mxu0 0
        %3296 = vmatpush1.bf16.msra.mxu0 %v933
        %3297 = vmatprep.subr.bf16.mxu0 0
        %3298 = vmatpush1.bf16.msra.mxu0 %v932
        %3299 = vmatprep.subr.bf16.mxu0 0
        %3300 = vmatpush1.bf16.msra.mxu0 %v931
        %3301 = vmatprep.subr.bf16.mxu0 0
        %3302 = vmatpush1.bf16.msra.mxu0 %v930
        %3303 = vmatprep.subr.bf16.mxu0 0
        %3304 = vmatpush2.bf16.msra.mxu0 0
        %3305 = vmatprep.subr.bf16.mxu0 0
        %3306 = vmatpush2.bf16.msra.mxu0 0
        %3307 = vmatprep.subr.bf16.mxu0 0
        %3308 = vmatpush2.bf16.msra.mxu0 0
        %3309 = vmatprep.subr.bf16.mxu0 0
        %3310 = vmatpush2.bf16.msra.mxu0 0
        %3311 = vmatprep.subr.bf16.mxu0 0
        %3312 = vmatpush2.bf16.msra.mxu0 0
        %3313 = vmatprep.subr.bf16.mxu0 0
        %3314 = vmatpush2.bf16.msra.mxu0 0
        %3315 = vmatprep.subr.bf16.mxu0 0
        %3316 = vmatpush2.bf16.msra.mxu0 0
        %3317 = vmatprep.subr.bf16.mxu0 0
        %3318 = vmatpush2.bf16.msra.mxu0 0
        %3319 = vmatprep.mubr.bf16.mxu0 0
        %3320 = vmatmul.mubr.bf16.gmra.mxu0 %v1620
        %v3321 = vpop.f32.mrf.mxu0
        %v3322 = vadd.f32 %v3225, %v3321
        %v3323 = vpop.f32.mrf.mxu0
        %v3324 = vpop.f32.mrf.mxu0
        %v3325 = vadd.f32 %v3228, %v3324
        %v3326 = vpop.f32.mrf.mxu0
        %3327 = vmatprep.mubr.bf16.mxu0 0
        %3328 = vmatmul.mubr.bf16.gmra.mxu0 %v1647
        %v3329 = vpop.f32.mrf.mxu0
        %v3330 = vadd.f32 %v3233, %v3329
        %v3331 = vpop.f32.mrf.mxu0
        %v3332 = vpop.f32.mrf.mxu0
        %v3333 = vadd.f32 %v3236, %v3332
        %v3334 = vpop.f32.mrf.mxu0
        %3335 = vmatprep.mubr.bf16.mxu0 0
        %3336 = vmatmul.mubr.bf16.gmra.mxu0 %v1674
        %v3337 = vpop.f32.mrf.mxu0
        %v3338 = vadd.f32 %v3241, %v3337
        %v3339 = vpop.f32.mrf.mxu0
        %v3340 = vpop.f32.mrf.mxu0
        %v3341 = vadd.f32 %v3244, %v3340
        %v3342 = vpop.f32.mrf.mxu0
        %3343 = vmatprep.mubr.bf16.mxu0 0
        %3344 = vmatmul.mubr.bf16.gmra.mxu0 %v1701
        %v3345 = vpop.f32.mrf.mxu0
        %v3346 = vadd.f32 %v3249, %v3345
        %v3347 = vpop.f32.mrf.mxu0
        %v3348 = vpop.f32.mrf.mxu0
        %v3349 = vadd.f32 %v3252, %v3348
        %v3350 = vpop.f32.mrf.mxu0
        %3351 = vmatprep.mubr.bf16.mxu0 0
        %3352 = vmatmul.mubr.bf16.gmra.mxu0 %v1728
        %v3353 = vpop.f32.mrf.mxu0
        %v3354 = vadd.f32 %v3257, %v3353
        %v3355 = vpop.f32.mrf.mxu0
        %v3356 = vpop.f32.mrf.mxu0
        %v3357 = vadd.f32 %v3260, %v3356
        %v3358 = vpop.f32.mrf.mxu0
        %3359 = vmatprep.mubr.bf16.mxu0 0
        %3360 = vmatmul.mubr.bf16.gmra.mxu0 %v1755
        %v3361 = vpop.f32.mrf.mxu0
        %v3362 = vadd.f32 %v3265, %v3361
        %v3363 = vpop.f32.mrf.mxu0
        %v3364 = vpop.f32.mrf.mxu0
        %v3365 = vadd.f32 %v3268, %v3364
        %v3366 = vpop.f32.mrf.mxu0
        %3367 = vmatprep.mubr.bf16.mxu0 0
        %3368 = vmatmul.mubr.bf16.gmra.mxu0 %v1782
        %v3369 = vpop.f32.mrf.mxu0
        %v3370 = vadd.f32 %v3273, %v3369
        %v3371 = vpop.f32.mrf.mxu0
        %v3372 = vpop.f32.mrf.mxu0
        %v3373 = vadd.f32 %v3276, %v3372
        %v3374 = vpop.f32.mrf.mxu0
        %3375 = vmatprep.mubr.bf16.mxu0 0
        %3376 = vmatmul.mubr.bf16.gmra.mxu0 %v1809
        %v3377 = vpop.f32.mrf.mxu0
        %v3378 = vadd.f32 %v3281, %v3377
        %v3379 = vpop.f32.mrf.mxu0
        %v3380 = vpop.f32.mrf.mxu0
        %v3381 = vadd.f32 %v3284, %v3380
        %v3382 = vpop.f32.mrf.mxu0
        %3383 = vdwg.mxu0
        %v3384 = vadd.f32 %v598, %v3322
        %v3385 = vadd.f32 %v599, %v3325
        %v3386 = vadd.f32 %v600, %v3330
        %v3387 = vadd.f32 %v601, %v3333
        %v3388 = vadd.f32 %v602, %v3338
        %v3389 = vadd.f32 %v603, %v3341
        %v3390 = vadd.f32 %v604, %v3346
        %v3391 = vadd.f32 %v605, %v3349
        %v3392 = vadd.f32 %v606, %v3354
        %v3393 = vadd.f32 %v607, %v3357
        %v3394 = vadd.f32 %v608, %v3362
        %v3395 = vadd.f32 %v609, %v3365
        %v3396 = vadd.f32 %v610, %v3370
        %v3397 = vadd.f32 %v611, %v3373
        %v3398 = vadd.f32 %v612, %v3378
        %v3399 = vadd.f32 %v613, %v3381
        %3400 = vst [vmem:[#allocation2] sm:$0xff] %v3384
        %3401 = vst [vmem:[#allocation2 + $0x8] sm:$0xff] %v3385
        %3402 = vst [vmem:[#allocation2 + $0x10] sm:$0xff] %v3386
        %3403 = vst [vmem:[#allocation2 + $0x18] sm:$0xff] %v3387
        %3404 = vst [vmem:[#allocation2 + $0x20] sm:$0xff] %v3388
        %3405 = vst [vmem:[#allocation2 + $0x28] sm:$0xff] %v3389
        %3406 = vst [vmem:[#allocation2 + $0x30] sm:$0xff] %v3390
        %3407 = vst [vmem:[#allocation2 + $0x38] sm:$0xff] %v3391
        %3408 = vst [vmem:[#allocation2 + $0x40] sm:$0xff] %v3392
        %3409 = vst [vmem:[#allocation2 + $0x48] sm:$0xff] %v3393
        %3410 = vst [vmem:[#allocation2 + $0x50] sm:$0xff] %v3394
        %3411 = vst [vmem:[#allocation2 + $0x58] sm:$0xff] %v3395
        %3412 = vst [vmem:[#allocation2 + $0x60] sm:$0xff] %v3396
        %3413 = vst [vmem:[#allocation2 + $0x68] sm:$0xff] %v3397
        %3414 = vst [vmem:[#allocation2 + $0x70] sm:$0xff] %v3398
        %3415 = vst [vmem:[#allocation2 + $0x78] sm:$0xff] %v3399
        %p3416 = scmp.eq.s32.totalorder %s24, 3
        // Predicated region
        $region41: #{forward.5} parent=35 // pred_check
          %p3417 = pneg %p3416
        $region42: #{forward.5} parent=35 // pred_check_branch
          %3419 = sbr.rel (%p3417) target = $region44
        $region43: #{forward.5} parent=35 // pred_region
          %v3420 = vld [vmem:[#allocation2] sm:$0xff]
          %v3421 = vld [vmem:[#allocation2 + $0x8] sm:$0xff]
          %v3422 = vld [vmem:[#allocation2 + $0x10] sm:$0xff]
          %v3423 = vld [vmem:[#allocation2 + $0x18] sm:$0xff]
          %v3424 = vld [vmem:[#allocation2 + $0x20] sm:$0xff]
          %v3425 = vld [vmem:[#allocation2 + $0x28] sm:$0xff]
          %v3426 = vld [vmem:[#allocation2 + $0x30] sm:$0xff]
          %v3427 = vld [vmem:[#allocation2 + $0x38] sm:$0xff]
          %v3428 = vld [vmem:[#allocation2 + $0x40] sm:$0xff]
          %v3429 = vld [vmem:[#allocation2 + $0x48] sm:$0xff]
          %v3430 = vld [vmem:[#allocation2 + $0x50] sm:$0xff]
          %v3431 = vld [vmem:[#allocation2 + $0x58] sm:$0xff]
          %v3432 = vld [vmem:[#allocation2 + $0x60] sm:$0xff]
          %v3433 = vld [vmem:[#allocation2 + $0x68] sm:$0xff]
          %v3434 = vld [vmem:[#allocation2 + $0x70] sm:$0xff]
          %v3435 = vld [vmem:[#allocation2 + $0x78] sm:$0xff]
          %v3436 = vld [vmem:[%s339] sm:$0x1]
          %v3438 = vlaneseq
          %v3439 = vshrl.u32 %v3438, 7
          %v3440 = vsub.s32 0, %v3439
          %v3441 = vrot.slane %v3436, %v3440
          %v3443 = vmul.f32 %v3420, %v3441
          %v3444 = vmul.f32 %v3421, %v3441
          %v3445 = vmul.f32 %v3422, %v3441
          %v3446 = vmul.f32 %v3423, %v3441
          %v3447 = vmul.f32 %v3424, %v3441
          %v3448 = vmul.f32 %v3425, %v3441
          %v3449 = vmul.f32 %v3426, %v3441
          %v3450 = vmul.f32 %v3427, %v3441
          %v3451 = vmul.f32 %v3428, %v3441
          %v3452 = vmul.f32 %v3429, %v3441
          %v3453 = vmul.f32 %v3430, %v3441
          %v3454 = vmul.f32 %v3431, %v3441
          %v3455 = vmul.f32 %v3432, %v3441
          %v3456 = vmul.f32 %v3433, %v3441
          %v3457 = vmul.f32 %v3434, %v3441
          %v3458 = vmul.f32 %v3435, %v3441
          %v3459 = vld [vmem:[%s346] sm:$0x1]
          %v3461 = vlaneseq
          %v3462 = vshrl.u32 %v3461, 7
          %v3463 = vsub.s32 0, %v3462
          %v3464 = vrot.slane %v3459, %v3463
          %v3466 = vadd.f32 %v3443, %v3464
          %v3467 = vadd.f32 %v3444, %v3464
          %v3468 = vadd.f32 %v3445, %v3464
          %v3469 = vadd.f32 %v3446, %v3464
          %v3470 = vadd.f32 %v3447, %v3464
          %v3471 = vadd.f32 %v3448, %v3464
          %v3472 = vadd.f32 %v3449, %v3464
          %v3473 = vadd.f32 %v3450, %v3464
          %v3474 = vadd.f32 %v3451, %v3464
          %v3475 = vadd.f32 %v3452, %v3464
          %v3476 = vadd.f32 %v3453, %v3464
          %v3477 = vadd.f32 %v3454, %v3464
          %v3478 = vadd.f32 %v3455, %v3464
          %v3479 = vadd.f32 %v3456, %v3464
          %v3480 = vadd.f32 %v3457, %v3464
          %v3481 = vadd.f32 %v3458, %v3464
          %v3482 = vmax.f32 %v3466, 0.0
          %v3483 = vmax.f32 %v3467, 0.0
          %v3484 = vmax.f32 %v3468, 0.0
          %v3485 = vmax.f32 %v3469, 0.0
          %v3486 = vmax.f32 %v3470, 0.0
          %v3487 = vmax.f32 %v3471, 0.0
          %v3488 = vmax.f32 %v3472, 0.0
          %v3489 = vmax.f32 %v3473, 0.0
          %v3490 = vmax.f32 %v3474, 0.0
          %v3491 = vmax.f32 %v3475, 0.0
          %v3492 = vmax.f32 %v3476, 0.0
          %v3493 = vmax.f32 %v3477, 0.0
          %v3494 = vmax.f32 %v3478, 0.0
          %v3495 = vmax.f32 %v3479, 0.0
          %v3496 = vmax.f32 %v3480, 0.0
          %v3497 = vmax.f32 %v3481, 0.0
          %v3498 = vpack.c.bf16 %v3483, %v3482
          %v3499 = vpack.c.bf16 %v3485, %v3484
          %v3500 = vpack.c.bf16 %v3487, %v3486
          %v3501 = vpack.c.bf16 %v3489, %v3488
          %v3502 = vpack.c.bf16 %v3491, %v3490
          %v3503 = vpack.c.bf16 %v3493, %v3492
          %v3504 = vpack.c.bf16 %v3495, %v3494
          %v3505 = vpack.c.bf16 %v3497, %v3496
          %v3514 = vunpack.c.l.b16 %v3498
          %v3515 = vunpack.c.h.b16 %v3498
          %v3516 = vunpack.c.l.b16 %v3499
          %v3517 = vunpack.c.h.b16 %v3499
          %v3518 = vunpack.c.l.b16 %v3500
          %v3519 = vunpack.c.h.b16 %v3500
          %v3520 = vunpack.c.l.b16 %v3501
          %v3521 = vunpack.c.h.b16 %v3501
          %v3522 = vunpack.c.l.b16 %v3502
          %v3523 = vunpack.c.h.b16 %v3502
          %v3524 = vunpack.c.l.b16 %v3503
          %v3525 = vunpack.c.h.b16 %v3503
          %v3526 = vunpack.c.l.b16 %v3504
          %v3527 = vunpack.c.h.b16 %v3504
          %v3528 = vunpack.c.l.b16 %v3505
          %v3529 = vunpack.c.h.b16 %v3505
          %v3530 = vpack.c.b16 %v3514, %v3514
          %v3531 = vpack.c.b16 %v3515, %v3515
          %v3532 = vpack.c.b16 %v3516, %v3516
          %v3533 = vpack.c.b16 %v3517, %v3517
          %v3534 = vpack.c.b16 %v3518, %v3518
          %v3535 = vpack.c.b16 %v3519, %v3519
          %v3536 = vpack.c.b16 %v3520, %v3520
          %v3537 = vpack.c.b16 %v3521, %v3521
          %v3538 = vpack.c.b16 %v3522, %v3522
          %v3539 = vpack.c.b16 %v3523, %v3523
          %v3540 = vpack.c.b16 %v3524, %v3524
          %v3541 = vpack.c.b16 %v3525, %v3525
          %v3542 = vpack.c.b16 %v3526, %v3526
          %v3543 = vpack.c.b16 %v3527, %v3527
          %v3544 = vpack.c.b16 %v3528, %v3528
          %v3545 = vpack.c.b16 %v3529, %v3529
          %3562 = vst [vmem:[%s307] sm:$0xf] %v3530
          %3563 = vst [vmem:[%s307 + $0x4] sm:$0xf] %v3531
          %3564 = vst [vmem:[%s307 + $0x8] sm:$0xf] %v3532
          %3565 = vst [vmem:[%s307 + $0xc] sm:$0xf] %v3533
          %3566 = vst [vmem:[%s307 + $0x10] sm:$0xf] %v3534
          %3567 = vst [vmem:[%s307 + $0x14] sm:$0xf] %v3535
          %3568 = vst [vmem:[%s307 + $0x18] sm:$0xf] %v3536
          %3569 = vst [vmem:[%s307 + $0x1c] sm:$0xf] %v3537
          %3570 = vst [vmem:[%s307 + $0x20] sm:$0xf] %v3538
          %3571 = vst [vmem:[%s307 + $0x24] sm:$0xf] %v3539
          %3572 = vst [vmem:[%s307 + $0x28] sm:$0xf] %v3540
          %3573 = vst [vmem:[%s307 + $0x2c] sm:$0xf] %v3541
          %3574 = vst [vmem:[%s307 + $0x30] sm:$0xf] %v3542
          %3575 = vst [vmem:[%s307 + $0x34] sm:$0xf] %v3543
          %3576 = vst [vmem:[%s307 + $0x38] sm:$0xf] %v3544
          %3577 = vst [vmem:[%s307 + $0x3c] sm:$0xf] %v3545
        $region44: #{forward.5} parent=35 // pred_fallthru
          _
        %s3578 = sand.u32 %s167, 1
        %s3579 = sand.u32 %s167, 1
        %s3580 = smul.addr %s3579, 64
        %s3581 = scalar_lea.vmem [#allocation3], %s3580
        // Predicated region
        $region45: #{forward.5} parent=35 // pred_check
          %p3582 = pneg %p177
        $region46: #{forward.5} parent=35 // pred_check_branch
          %3584 = sbr.rel (%p3582) target = $region48
        $region47: #{forward.5} parent=35 // pred_region
          %s3585 = smul.u32 16, %s22
          %s3586 = smul.addr %s3585, 2
          %s3587 = sadd.s32 %s23, %s3586
          %s3588 = smul.addr %s21, 32
          %s3589 = sadd.s32 %s3587, %s3588
          %s3590 = smul.addr %s3589, 4
          %s3591 = scalar_lea.vmem %s4, %s3590
          // Predicated region
          $region49: #{forward.5} parent=47 // pred_check
            _
          $region50: #{forward.5} parent=47 // pred_check_branch
            %3593 = sbr.rel (0) target = $region52
          $region51: #{forward.5} parent=47 // pred_region
            // Predicated region
            $region53: #{forward.5} parent=51 // pred_check
              _
            $region54: #{forward.5} parent=51 // pred_check_branch
              %3595 = sbr.rel target = $region56
            $region55: #{forward.5} parent=51 // pred_region
              // Predicated region
              $region68: #{forward.5} parent=55 // pred_check
                _
              $region69: #{forward.5} parent=55 // pred_check_branch
                %3641 = sbr.rel (0) target = $region71
              $region70: #{forward.5} parent=55 // pred_region
                loop: start=0, step=1, limit=1
                $region72: #{forward.5} parent=70 // loop_pre_header
                  _
                $region73: #{forward.5} parent=70 // loop_header
                  %s3643 = sphi 0, %s3647
                  %p3644 = scmp.ge.s32.totalorder %s3643, 1
                  %s3648 = sphi %s3581, %s3581
                  %s3649 = sphi %s3591, %s3591
                $region74: #{forward.5} parent=70 // loop_header_branch
                  %3646 = sbr.rel (%p3644) target = $region78
                $region75: #{forward.5} parent=70 // loop_body
                  _
                $region76: #{forward.5} parent=70 // loop_footer
                  %s3647 = sadd.s32 1, %s3643
                $region77: #{forward.5} parent=70 // loop_footer_branch
                  %3642 = sbr.rel target = $region73
                $region78: #{forward.5} parent=70 // loop_exit
                  _
                %s3651 = ssub.s32 16, 1
                loop: start=0, step=1, limit=1
                $region79: #{forward.5} parent=70 // loop_pre_header
                  _
                $region80: #{forward.5} parent=70 // loop_header
                  %s3653 = sphi 0, %s3657
                  %p3654 = scmp.ge.s32.totalorder %s3653, 1
                  %s3658 = sphi %s3581, %s3581
                  %s3659 = sphi %s3591, %s3591
                $region81: #{forward.5} parent=70 // loop_header_branch
                  %3656 = sbr.rel (%p3654) target = $region85
                $region82: #{forward.5} parent=70 // loop_body
                  %v3660 = vld [vmem:[%s3658] sm:%s3651]
                  %3661 = vst [vmem:[%s3659] sm:%s3651] %v3660
                  %v3662 = vld [vmem:[%s3658 + $0x4] sm:%s3651]
                  %3663 = vst [vmem:[%s3659 + $0x8] sm:%s3651] %v3662
                  %v3664 = vld [vmem:[%s3658 + $0x8] sm:%s3651]
                  %3665 = vst [vmem:[%s3659 + $0x10] sm:%s3651] %v3664
                  %v3666 = vld [vmem:[%s3658 + $0xc] sm:%s3651]
                  %3667 = vst [vmem:[%s3659 + $0x18] sm:%s3651] %v3666
                  %v3668 = vld [vmem:[%s3658 + $0x10] sm:%s3651]
                  %3669 = vst [vmem:[%s3659 + $0x20] sm:%s3651] %v3668
                  %v3670 = vld [vmem:[%s3658 + $0x14] sm:%s3651]
                  %3671 = vst [vmem:[%s3659 + $0x28] sm:%s3651] %v3670
                  %v3672 = vld [vmem:[%s3658 + $0x18] sm:%s3651]
                  %3673 = vst [vmem:[%s3659 + $0x30] sm:%s3651] %v3672
                  %v3674 = vld [vmem:[%s3658 + $0x1c] sm:%s3651]
                  %3675 = vst [vmem:[%s3659 + $0x38] sm:%s3651] %v3674
                  %v3676 = vld [vmem:[%s3658 + $0x20] sm:%s3651]
                  %3677 = vst [vmem:[%s3659 + $0x40] sm:%s3651] %v3676
                  %v3678 = vld [vmem:[%s3658 + $0x24] sm:%s3651]
                  %3679 = vst [vmem:[%s3659 + $0x48] sm:%s3651] %v3678
                  %v3680 = vld [vmem:[%s3658 + $0x28] sm:%s3651]
                  %3681 = vst [vmem:[%s3659 + $0x50] sm:%s3651] %v3680
                  %v3682 = vld [vmem:[%s3658 + $0x2c] sm:%s3651]
                  %3683 = vst [vmem:[%s3659 + $0x58] sm:%s3651] %v3682
                  %v3684 = vld [vmem:[%s3658 + $0x30] sm:%s3651]
                  %3685 = vst [vmem:[%s3659 + $0x60] sm:%s3651] %v3684
                  %v3686 = vld [vmem:[%s3658 + $0x34] sm:%s3651]
                  %3687 = vst [vmem:[%s3659 + $0x68] sm:%s3651] %v3686
                  %v3688 = vld [vmem:[%s3658 + $0x38] sm:%s3651]
                  %3689 = vst [vmem:[%s3659 + $0x70] sm:%s3651] %v3688
                  %v3690 = vld [vmem:[%s3658 + $0x3c] sm:%s3651]
                  %3691 = vst [vmem:[%s3659 + $0x78] sm:%s3651] %v3690
                $region83: #{forward.5} parent=70 // loop_footer
                  %s3657 = sadd.s32 1, %s3653
                $region84: #{forward.5} parent=70 // loop_footer_branch
                  %3652 = sbr.rel target = $region80
                $region85: #{forward.5} parent=70 // loop_exit
                  _
              $region71: #{forward.5} parent=55 // pred_fallthru
                _
            $region56: #{forward.5} parent=51 // pred_fallthru
              _
            // Predicated region
            $region57: #{forward.5} parent=51 // pred_check
              _
            $region58: #{forward.5} parent=51 // pred_check_branch
              %3597 = sbr.rel (0) target = $region60
            $region59: #{forward.5} parent=51 // pred_region
              %s3599 = ssub.s32 16, 1
              loop: start=0, step=1, limit=1
              $region61: #{forward.5} parent=59 // loop_pre_header
                _
              $region62: #{forward.5} parent=59 // loop_header
                %s3601 = sphi 0, %s3605
                %p3602 = scmp.ge.s32.totalorder %s3601, 1
                %s3606 = sphi %s3581, %s3581
                %s3607 = sphi %s3591, %s3591
              $region63: #{forward.5} parent=59 // loop_header_branch
                %3604 = sbr.rel (%p3602) target = $region67
              $region64: #{forward.5} parent=59 // loop_body
                %v3608 = vld [vmem:[%s3606] sm:%s3599]
                %3609 = vst [vmem:[%s3607] sm:%s3599] %v3608
                %v3610 = vld [vmem:[%s3606 + $0x4] sm:%s3599]
                %3611 = vst [vmem:[%s3607 + $0x8] sm:%s3599] %v3610
                %v3612 = vld [vmem:[%s3606 + $0x8] sm:%s3599]
                %3613 = vst [vmem:[%s3607 + $0x10] sm:%s3599] %v3612
                %v3614 = vld [vmem:[%s3606 + $0xc] sm:%s3599]
                %3615 = vst [vmem:[%s3607 + $0x18] sm:%s3599] %v3614
                %v3616 = vld [vmem:[%s3606 + $0x10] sm:%s3599]
                %3617 = vst [vmem:[%s3607 + $0x20] sm:%s3599] %v3616
                %v3618 = vld [vmem:[%s3606 + $0x14] sm:%s3599]
                %3619 = vst [vmem:[%s3607 + $0x28] sm:%s3599] %v3618
                %v3620 = vld [vmem:[%s3606 + $0x18] sm:%s3599]
                %3621 = vst [vmem:[%s3607 + $0x30] sm:%s3599] %v3620
                %v3622 = vld [vmem:[%s3606 + $0x1c] sm:%s3599]
                %3623 = vst [vmem:[%s3607 + $0x38] sm:%s3599] %v3622
                %v3624 = vld [vmem:[%s3606 + $0x20] sm:%s3599]
                %3625 = vst [vmem:[%s3607 + $0x40] sm:%s3599] %v3624
                %v3626 = vld [vmem:[%s3606 + $0x24] sm:%s3599]
                %3627 = vst [vmem:[%s3607 + $0x48] sm:%s3599] %v3626
                %v3628 = vld [vmem:[%s3606 + $0x28] sm:%s3599]
                %3629 = vst [vmem:[%s3607 + $0x50] sm:%s3599] %v3628
                %v3630 = vld [vmem:[%s3606 + $0x2c] sm:%s3599]
                %3631 = vst [vmem:[%s3607 + $0x58] sm:%s3599] %v3630
                %v3632 = vld [vmem:[%s3606 + $0x30] sm:%s3599]
                %3633 = vst [vmem:[%s3607 + $0x60] sm:%s3599] %v3632
                %v3634 = vld [vmem:[%s3606 + $0x34] sm:%s3599]
                %3635 = vst [vmem:[%s3607 + $0x68] sm:%s3599] %v3634
                %v3636 = vld [vmem:[%s3606 + $0x38] sm:%s3599]
                %3637 = vst [vmem:[%s3607 + $0x70] sm:%s3599] %v3636
                %v3638 = vld [vmem:[%s3606 + $0x3c] sm:%s3599]
                %3639 = vst [vmem:[%s3607 + $0x78] sm:%s3599] %v3638
              $region65: #{forward.5} parent=59 // loop_footer
                %s3605 = sadd.s32 1, %s3601
              $region66: #{forward.5} parent=59 // loop_footer_branch
                %3600 = sbr.rel target = $region62
              $region67: #{forward.5} parent=59 // loop_exit
                _
            $region60: #{forward.5} parent=51 // pred_fallthru
              _
          $region52: #{forward.5} parent=47 // pred_fallthru
            _
          %3692 = vnop
        $region48: #{forward.5} parent=35 // pred_fallthru
          _
      $region36: #{forward.5} parent=5 // pred_fallthru
        _
      %p3693 = scmp.le.s32.totalorder 2, %s10
      // Predicated region
      $region86: #{forward.5} parent=5 // pred_check
        %p3694 = pneg %p3693
      $region87: #{forward.5} parent=5 // pred_check_branch
        %3696 = sbr.rel (%p3694) target = $region89
      $region88: #{forward.5} parent=5 // pred_region
        %s3697 = ssub.s32 %s10, 2
        // Predicated region
        $region90: #{forward.5} parent=88 // pred_check
          %p3698 = pneg %p183
        $region91: #{forward.5} parent=88 // pred_check_branch
          %3700 = sbr.rel (%p3698) target = $region93
        $region92: #{forward.5} parent=88 // pred_region
          %s3701 = sand.u32 %s168, 1
          %s3702 = sand.u32 %s168, 1
          %s3703 = smul.addr %s3702, 64
          %s3704 = scalar_lea.vmem [#allocation3], %s3703
        $region93: #{forward.5} parent=88 // pred_fallthru
          _
      $region89: #{forward.5} parent=5 // pred_fallthru
        _
    $region6: #{forward.5} parent=1 // loop_footer
      %s14 = sadd.s32 1, %s10
    $region7: #{forward.5} parent=1 // loop_footer_branch
      %9 = sbr.rel target = $region3
    $region8: #{forward.5} parent=1 // loop_exit
      _

// kernel: forward.6
$region0: #{forward.6}
  #allocation0 [shape = 'u32[]', space=smem, size = 0x4, offset = 0x4, fixed_abs, tag = 'smem constant byte address 0x4 - core index']
  #allocation1 [shape = 'u32[144,128]{1,0:T(1,128)}', space=vmem, size = 0x12000, scoped, tag = 'internal scratch']
  #allocation2 [shape = 'f32[128,128]{1,0:T(8,128)}', space=vmem, size = 0x10000, scoped, tag = 'scratch operand']
  %s0 = inlined_call_operand.vmem [shape: bf16[1,128,256], index: 0, kind: input, shape index: {}]
  %s1 = inlined_call_operand.vmem [shape: s8[1,7,256,128], index: 1, kind: input, shape index: {}]
  %s2 = inlined_call_operand.vmem [shape: f32[1,1,896], index: 2, kind: input, shape index: {}]
  %s3 = inlined_call_operand.vmem [shape: f32[1,1,896], index: 3, kind: input, shape index: {}]
  %s4 = inlined_call_operand.vmem [shape: bf16[1,128,896], index: 4, kind: output, shape index: {}]
  %s5 = sld [smem:[#allocation0]]
  $region94: #{forward.6} parent=0
    _
  %s7 = ssub.s32 1, %s5
  %s8 = scalar_select 0, %s7, %s5
  $region1: #{forward.6} parent=0
    #allocation3 [shape = 'u8[65536]{0}', space=vmem, size = 0x10000, scoped, tag = 'output window, operand 0']
    loop: start=0, step=1, limit=9
    $region2: #{forward.6} parent=1 // loop_pre_header
      _
    $region3: #{forward.6} parent=1 // loop_header
      %s10 = sphi 0, %s14
      %p11 = scmp.ge.s32.totalorder %s10, 9
      %s17 = sphi 0, %s43
      %s18 = sphi 0, %s39
      %s19 = sphi 0, %s35
      %s20 = sphi 0, %s31
      %s21 = sphi 0, %s17
      %s22 = sphi 0, %s18
      %s23 = sphi 0, %s19
      %s24 = sphi 0, %s20
      %s25 = sphi 0, %s21
      %s26 = sphi 0, %s22
      %s27 = sphi 0, %s23
      %s28 = sphi 0, %s24
      %s48 = sphi 0, %s50
      %s51 = sphi 0, %s48
      %s52 = sphi 0, %s51
      %s68 = sphi 0, %s52
      %s78 = sphi 0, %s80
      %s81 = sphi 0, %s78
      %s82 = sphi 0, %s81
      %s98 = sphi 0, %s82
      %s106 = sphi 0, %s108
      %s109 = sphi 0, %s106
      %s110 = sphi 0, %s109
      %s126 = sphi 0, %s110
      %s134 = sphi 0, %s136
      %s137 = sphi 0, %s134
      %s138 = sphi 0, %s137
      %s154 = sphi 0, %s138
      %s164 = sphi 0, %s166
      %s167 = sphi 0, %s164
      %s168 = sphi 0, %s167
      %s184 = sphi 0, %s168
    $region4: #{forward.6} parent=1 // loop_header_branch
      %13 = sbr.rel (%p11) target = $region8
    $region5: #{forward.6} parent=1 // loop_body
      %s15 = ssub.s32 %s10, 1
      %s16 = ssub.s32 %s10, 2
      %s29 = sadd.s32 1, %s20
      %p30 = scmp.ge.s32.totalorder %s29, 1
      %s31 = scalar_select %p30, 0, %s29
      %s32 = sadd.s32 1, %s19
      %s33 = scalar_select %p30, %s32, %s19
      %p34 = scmp.ge.s32.totalorder %s33, 7
      %s35 = scalar_select %p34, 0, %s33
      %s36 = sadd.s32 1, %s18
      %s37 = scalar_select %p34, %s36, %s18
      %p38 = scmp.ge.s32.totalorder %s37, 1
      %s39 = scalar_select %p38, 0, %s37
      %s40 = sadd.s32 1, %s17
      %s41 = scalar_select %p38, %s40, %s17
      %p42 = scmp.ge.s32.totalorder %s41, 1
      %s43 = scalar_select %p42, 0, %s41
      %s44 = ssub.s32 %s17, %s43
      %s45 = ssub.s32 %s18, %s39
      %s46 = sor.u32 %s44, %s45
      %p47 = scmp.eq.s32.totalorder %s46, 0
      %s49 = sadd.s32 %s48, 1
      %s50 = scalar_select %p47, %s48, %s49
      %p53 = pneg %p47
      %p54 = scmp.eq.s32.totalorder %s10, 6
      %p55 = por %p53, %p54
      %p56 = scmp.ne.s32.totalorder %s48, %s51
      %p57 = scmp.eq.s32.totalorder %s10, 0
      %p58 = por %p56, %p57
      %p59 = scmp.ne.s32.totalorder %s48, %s51
      %p60 = scmp.eq.s32.totalorder %s15, 6
      %p61 = por %p59, %p60
      %p62 = scmp.ne.s32.totalorder %s51, %s52
      %p63 = scmp.eq.s32.totalorder %s15, 0
      %p64 = por %p62, %p63
      %p65 = scmp.ne.s32.totalorder %s51, %s52
      %p66 = scmp.eq.s32.totalorder %s16, 6
      %p67 = por %p65, %p66
      %p69 = scmp.ne.s32.totalorder %s52, %s68
      %p70 = scmp.eq.s32.totalorder %s16, 0
      %p71 = por %p69, %p70
      %s72 = ssub.s32 %s17, %s43
      %s73 = ssub.s32 %s19, %s35
      %s74 = sor.u32 %s72, %s73
      %s75 = ssub.s32 %s20, %s31
      %s76 = sor.u32 %s74, %s75
      %p77 = scmp.eq.s32.totalorder %s76, 0
      %s79 = sadd.s32 %s78, 1
      %s80 = scalar_select %p77, %s78, %s79
      %p83 = pneg %p77
      %p84 = scmp.eq.s32.totalorder %s10, 6
      %p85 = por %p83, %p84
      %p86 = scmp.ne.s32.totalorder %s78, %s81
      %p87 = scmp.eq.s32.totalorder %s10, 0
      %p88 = por %p86, %p87
      %p89 = scmp.ne.s32.totalorder %s78, %s81
      %p90 = scmp.eq.s32.totalorder %s15, 6
      %p91 = por %p89, %p90
      %p92 = scmp.ne.s32.totalorder %s81, %s82
      %p93 = scmp.eq.s32.totalorder %s15, 0
      %p94 = por %p92, %p93
      %p95 = scmp.ne.s32.totalorder %s81, %s82
      %p96 = scmp.eq.s32.totalorder %s16, 6
      %p97 = por %p95, %p96
      %p99 = scmp.ne.s32.totalorder %s82, %s98
      %p100 = scmp.eq.s32.totalorder %s16, 0
      %p101 = por %p99, %p100
      %s102 = ssub.s32 %s17, %s43
      %s103 = ssub.s32 %s19, %s35
      %s104 = sor.u32 %s102, %s103
      %p105 = scmp.eq.s32.totalorder %s104, 0
      %s107 = sadd.s32 %s106, 1
      %s108 = scalar_select %p105, %s106, %s107
      %p111 = pneg %p105
      %p112 = scmp.eq.s32.totalorder %s10, 6
      %p113 = por %p111, %p112
      %p114 = scmp.ne.s32.totalorder %s106, %s109
      %p115 = scmp.eq.s32.totalorder %s10, 0
      %p116 = por %p114, %p115
      %p117 = scmp.ne.s32.totalorder %s106, %s109
      %p118 = scmp.eq.s32.totalorder %s15, 6
      %p119 = por %p117, %p118
      %p120 = scmp.ne.s32.totalorder %s109, %s110
      %p121 = scmp.eq.s32.totalorder %s15, 0
      %p122 = por %p120, %p121
      %p123 = scmp.ne.s32.totalorder %s109, %s110
      %p124 = scmp.eq.s32.totalorder %s16, 6
      %p125 = por %p123, %p124
      %p127 = scmp.ne.s32.totalorder %s110, %s126
      %p128 = scmp.eq.s32.totalorder %s16, 0
      %p129 = por %p127, %p128
      %s130 = ssub.s32 %s17, %s43
      %s131 = ssub.s32 %s19, %s35
      %s132 = sor.u32 %s130, %s131
      %p133 = scmp.eq.s32.totalorder %s132, 0
      %s135 = sadd.s32 %s134, 1
      %s136 = scalar_select %p133, %s134, %s135
      %p139 = pneg %p133
      %p140 = scmp.eq.s32.totalorder %s10, 6
      %p141 = por %p139, %p140
      %p142 = scmp.ne.s32.totalorder %s134, %s137
      %p143 = scmp.eq.s32.totalorder %s10, 0
      %p144 = por %p142, %p143
      %p145 = scmp.ne.s32.totalorder %s134, %s137
      %p146 = scmp.eq.s32.totalorder %s15, 6
      %p147 = por %p145, %p146
      %p148 = scmp.ne.s32.totalorder %s137, %s138
      %p149 = scmp.eq.s32.totalorder %s15, 0
      %p150 = por %p148, %p149
      %p151 = scmp.ne.s32.totalorder %s137, %s138
      %p152 = scmp.eq.s32.totalorder %s16, 6
      %p153 = por %p151, %p152
      %p155 = scmp.ne.s32.totalorder %s138, %s154
      %p156 = scmp.eq.s32.totalorder %s16, 0
      %p157 = por %p155, %p156
      %s158 = ssub.s32 %s17, %s43
      %s159 = ssub.s32 %s18, %s39
      %s160 = sor.u32 %s158, %s159
      %s161 = ssub.s32 %s19, %s35
      %s162 = sor.u32 %s160, %s161
      %p163 = scmp.eq.s32.totalorder %s162, 0
      %s165 = sadd.s32 %s164, 1
      %s166 = scalar_select %p163, %s164, %s165
      %p169 = pneg %p163
      %p170 = scmp.eq.s32.totalorder %s10, 6
      %p171 = por %p169, %p170
      %p172 = scmp.ne.s32.totalorder %s164, %s167
      %p173 = scmp.eq.s32.totalorder %s10, 0
      %p174 = por %p172, %p173
      %p175 = scmp.ne.s32.totalorder %s164, %s167
      %p176 = scmp.eq.s32.totalorder %s15, 6
      %p177 = por %p175, %p176
      %p178 = scmp.ne.s32.totalorder %s167, %s168
      %p179 = scmp.eq.s32.totalorder %s15, 0
      %p180 = por %p178, %p179
      %p181 = scmp.ne.s32.totalorder %s167, %s168
      %p182 = scmp.eq.s32.totalorder %s16, 6
      %p183 = por %p181, %p182
      %p185 = scmp.ne.s32.totalorder %s168, %s184
      %p186 = scmp.eq.s32.totalorder %s16, 0
      %p187 = por %p185, %p186
      %p188 = scmp.le.s32.totalorder 1, %s10
      %p189 = scmp.lt.s32.totalorder %s10, 8
      %p190 = pnand %p188, %p189
      %p191 = pneg %p190
      // Predicated region
      $region9: #{forward.6} parent=5 // pred_check
        _
      $region10: #{forward.6} parent=5 // pred_check_branch
        %193 = sbr.rel (%p190) target = $region12
      $region11: #{forward.6} parent=5 // pred_region
        %s194 = ssub.s32 %s10, 1
        // Predicated region
        $region13: #{forward.6} parent=11 // pred_check
          %p195 = pneg %p64
        $region14: #{forward.6} parent=11 // pred_check_branch
          %197 = sbr.rel (%p195) target = $region16
        $region15: #{forward.6} parent=11 // pred_region
          %s198 = smul.u32 16, %s22
          %p199 = scmp.lt.s32.totalorder %s21, 0
          %s200 = scalar_select %p199, %s21, 0
          %p201 = scmp.lt.s32.totalorder %s198, 15
          %s202 = scalar_select %p201, %s198, 15
          %s203 = smul.addr %s202, 2
          %s204 = smul.addr %s200, 32
          %s205 = sadd.s32 %s203, %s204
          %s206 = smul.addr %s205, 4
          %s207 = scalar_lea.vmem %s0, %s206
          %s208 = smul.u32 16, %s22
        $region16: #{forward.6} parent=11 // pred_fallthru
          _
      $region12: #{forward.6} parent=5 // pred_fallthru
        _
      %p209 = scmp.lt.s32.totalorder %s10, 7
      // Predicated region
      $region17: #{forward.6} parent=5 // pred_check
        %p210 = pneg %p209
      $region18: #{forward.6} parent=5 // pred_check_branch
        %212 = sbr.rel (%p210) target = $region20
      $region19: #{forward.6} parent=5 // pred_region
        // Predicated region
        $region21: #{forward.6} parent=19 // pred_check
          %p213 = pneg %p88
        $region22: #{forward.6} parent=19 // pred_check_branch
          %215 = sbr.rel (%p213) target = $region24
        $region23: #{forward.6} parent=19 // pred_region
          %s216 = smul.u32 8, %s20
          %p217 = scmp.lt.s32.totalorder %s17, 0
          %s218 = scalar_select %p217, %s17, 0
          %p219 = scmp.lt.s32.totalorder %s19, 6
          %s220 = scalar_select %p219, %s19, 6
          %p221 = scmp.lt.s32.totalorder %s216, 7
          %s222 = scalar_select %p221, %s216, 7
          %s223 = smul.addr %s220, 8
          %s224 = sadd.s32 %s222, %s223
          %s225 = smul.addr %s218, 56
          %s226 = sadd.s32 %s224, %s225
          %s227 = smul.addr %s226, 8
          %s228 = scalar_lea.vmem %s1, %s227
          %s229 = smul.u32 8, %s20
        $region24: #{forward.6} parent=19 // pred_fallthru
          _
        // Predicated region
        $region25: #{forward.6} parent=19 // pred_check
          %p230 = pneg %p116
        $region26: #{forward.6} parent=19 // pred_check_branch
          %232 = sbr.rel (%p230) target = $region28
        $region27: #{forward.6} parent=19 // pred_region
          %p233 = scmp.lt.s32.totalorder %s17, 0
          %s234 = scalar_select %p233, %s17, 0
          %p235 = scmp.lt.s32.totalorder %s19, 6
          %s236 = scalar_select %p235, %s19, 6
          %s237 = smul.addr %s234, 7
          %s238 = sadd.s32 %s236, %s237
          %s239 = scalar_lea.vmem %s2, %s238
        $region28: #{forward.6} parent=19 // pred_fallthru
          _
        // Predicated region
        $region29: #{forward.6} parent=19 // pred_check
          %p240 = pneg %p144
        $region30: #{forward.6} parent=19 // pred_check_branch
          %242 = sbr.rel (%p240) target = $region32
        $region31: #{forward.6} parent=19 // pred_region
          %p243 = scmp.lt.s32.totalorder %s17, 0
          %s244 = scalar_select %p243, %s17, 0
          %p245 = scmp.lt.s32.totalorder %s19, 6
          %s246 = scalar_select %p245, %s19, 6
          %s247 = smul.addr %s244, 7
          %s248 = sadd.s32 %s246, %s247
          %s249 = scalar_lea.vmem %s3, %s248
        $region32: #{forward.6} parent=19 // pred_fallthru
          _
      $region20: #{forward.6} parent=5 // pred_fallthru
        _
      %p250 = scmp.le.s32.totalorder 1, %s10
      %p251 = scmp.lt.s32.totalorder %s10, 8
      %p252 = pnand %p250, %p251
      %p253 = pneg %p252
      // Predicated region
      $region33: #{forward.6} parent=5 // pred_check
        _
      $region34: #{forward.6} parent=5 // pred_check_branch
        %255 = sbr.rel (%p252) target = $region36
      $region35: #{forward.6} parent=5 // pred_region
        %s256 = ssub.s32 %s10, 1
        %s257 = smul.u32 16, %s22
        %p258 = scmp.lt.s32.totalorder %s21, 0
        %s259 = scalar_select %p258, %s21, 0
        %p260 = scmp.lt.s32.totalorder %s257, 15
        %s261 = scalar_select %p260, %s257, 15
        %s262 = smul.addr %s261, 2
        %s263 = smul.addr %s259, 32
        %s264 = sadd.s32 %s262, %s263
        %s265 = smul.addr %s264, 4
        %s266 = scalar_lea.vmem %s0, %s265
        %p267 = pneg %p64
        %p268 = pneg %p61
        %s269 = smul.u32 8, %s24
        %p270 = scmp.lt.s32.totalorder %s21, 0
        %s271 = scalar_select %p270, %s21, 0
        %p272 = scmp.lt.s32.totalorder %s23, 6
        %s273 = scalar_select %p272, %s23, 6
        %p274 = scmp.lt.s32.totalorder %s269, 7
        %s275 = scalar_select %p274, %s269, 7
        %s276 = smul.addr %s273, 8
        %s277 = sadd.s32 %s275, %s276
        %s278 = smul.addr %s271, 56
        %s279 = sadd.s32 %s277, %s278
        %s280 = smul.addr %s279, 8
        %s281 = scalar_lea.vmem %s1, %s280
        %p282 = pneg %p94
        %p283 = pneg %p91
        %p284 = scmp.lt.s32.totalorder %s21, 0
        %s285 = scalar_select %p284, %s21, 0
        %p286 = scmp.lt.s32.totalorder %s23, 6
        %s287 = scalar_select %p286, %s23, 6
        %s288 = smul.addr %s285, 7
        %s289 = sadd.s32 %s287, %s288
        %s290 = scalar_lea.vmem %s2, %s289
        %p291 = pneg %p122
        %p292 = pneg %p119
        %p293 = scmp.lt.s32.totalorder %s21, 0
        %s294 = scalar_select %p293, %s21, 0
        %p295 = scmp.lt.s32.totalorder %s23, 6
        %s296 = scalar_select %p295, %s23, 6
        %s297 = smul.addr %s294, 7
        %s298 = sadd.s32 %s296, %s297
        %s299 = scalar_lea.vmem %s3, %s298
        %p300 = pneg %p150
        %p301 = pneg %p147
        %p302 = pneg %p180
        %p303 = pneg %p177
        %s304 = sand.u32 %s167, 1
        %s305 = sand.u32 %s167, 1
        %s306 = smul.addr %s305, 64
        %s307 = scalar_lea.vmem [#allocation3], %s306
        %s308 = smul.u32 16, %s22
        %p309 = scmp.lt.s32.totalorder %s21, 0
        %s310 = scalar_select %p309, %s21, 0
        %p311 = scmp.lt.s32.totalorder %s308, 15
        %s312 = scalar_select %p311, %s308, 15
        %s313 = smul.addr %s312, 2
        %s314 = smul.addr %s310, 32
        %s315 = sadd.s32 %s313, %s314
        %s316 = smul.addr %s315, 4
        %s317 = scalar_lea.vmem %s0, %s316
        %s318 = smul.u32 16, %s22
        %s319 = smul.u32 8, %s24
        %p320 = scmp.lt.s32.totalorder %s21, 0
        %s321 = scalar_select %p320, %s21, 0
        %p322 = scmp.lt.s32.totalorder %s23, 6
        %s323 = scalar_select %p322, %s23, 6
        %p324 = scmp.lt.s32.totalorder %s319, 7
        %s325 = scalar_select %p324, %s319, 7
        %s326 = smul.addr %s323, 8
        %s327 = sadd.s32 %s325, %s326
        %s328 = smul.addr %s321, 56
        %s329 = sadd.s32 %s327, %s328
        %s330 = smul.addr %s329, 8
        %s331 = scalar_lea.vmem %s1, %s330
        %s332 = smul.u32 8, %s24
        %p333 = scmp.lt.s32.totalorder %s21, 0
        %s334 = scalar_select %p333, %s21, 0
        %p335 = scmp.lt.s32.totalorder %s23, 6
        %s336 = scalar_select %p335, %s23, 6
        %s337 = smul.addr %s334, 7
        %s338 = sadd.s32 %s336, %s337
        %s339 = scalar_lea.vmem %s2, %s338
        %p340 = scmp.lt.s32.totalorder %s21, 0
        %s341 = scalar_select %p340, %s21, 0
        %p342 = scmp.lt.s32.totalorder %s23, 6
        %s343 = scalar_select %p342, %s23, 6
        %s344 = smul.addr %s341, 7
        %s345 = sadd.s32 %s343, %s344
        %s346 = scalar_lea.vmem %s3, %s345
        %s347 = smul.u32 16, %s22
        %p349 = scmp.eq.s32.totalorder %s24, 0
        // Predicated region
        $region37: #{forward.6} parent=35 // pred_check
          %p350 = pneg %p349
        $region38: #{forward.6} parent=35 // pred_check_branch
          %352 = sbr.rel (%p350) target = $region40
        $region39: #{forward.6} parent=35 // pred_region
          %353 = vst [vmem:[#allocation2] sm:$0xff] 0.0
          %354 = vst [vmem:[#allocation2 + $0x8] sm:$0xff] 0.0
          %355 = vst [vmem:[#allocation2 + $0x10] sm:$0xff] 0.0
          %356 = vst [vmem:[#allocation2 + $0x18] sm:$0xff] 0.0
          %357 = vst [vmem:[#allocation2 + $0x20] sm:$0xff] 0.0
          %358 = vst [vmem:[#allocation2 + $0x28] sm:$0xff] 0.0
          %359 = vst [vmem:[#allocation2 + $0x30] sm:$0xff] 0.0
          %360 = vst [vmem:[#allocation2 + $0x38] sm:$0xff] 0.0
          %361 = vst [vmem:[#allocation2 + $0x40] sm:$0xff] 0.0
          %362 = vst [vmem:[#allocation2 + $0x48] sm:$0xff] 0.0
          %363 = vst [vmem:[#allocation2 + $0x50] sm:$0xff] 0.0
          %364 = vst [vmem:[#allocation2 + $0x58] sm:$0xff] 0.0
          %365 = vst [vmem:[#allocation2 + $0x60] sm:$0xff] 0.0
          %366 = vst [vmem:[#allocation2 + $0x68] sm:$0xff] 0.0
          %367 = vst [vmem:[#allocation2 + $0x70] sm:$0xff] 0.0
          %368 = vst [vmem:[#allocation2 + $0x78] sm:$0xff] 0.0
        $region40: #{forward.6} parent=35 // pred_fallthru
          _
        %s369 = smul.u32 %s24, 256
        %s370 = sshra.s32 %s369, 7
        %s371 = sand.u32 %s369, 127
        %s372 = smul.addr %s370, 4
        %s373 = scalar_lea.vmem %s317, %s372
        %v374 = vld [vmem:[%s373] sm:$0xff]
        %v375 = vld [vmem:[%s373 + $0x8] sm:$0xff]
        %v376 = vld [vmem:[%s373 + $0x10] sm:$0xff]
        %v377 = vld [vmem:[%s373 + $0x18] sm:$0xff]
        %v378 = vld [vmem:[%s373 + $0x20] sm:$0xff]
        %v379 = vld [vmem:[%s373 + $0x28] sm:$0xff]
        %v380 = vld [vmem:[%s373 + $0x30] sm:$0xff]
        %v381 = vld [vmem:[%s373 + $0x38] sm:$0xff]
        %v382 = vld [vmem:[%s373 + $0x40] sm:$0xff]
        %v383 = vld [vmem:[%s373 + $0x48] sm:$0xff]
        %v384 = vld [vmem:[%s373 + $0x50] sm:$0xff]
        %v385 = vld [vmem:[%s373 + $0x58] sm:$0xff]
        %v386 = vld [vmem:[%s373 + $0x60] sm:$0xff]
        %v387 = vld [vmem:[%s373 + $0x68] sm:$0xff]
        %v388 = vld [vmem:[%s373 + $0x70] sm:$0xff]
        %v389 = vld [vmem:[%s373 + $0x78] sm:$0xff]
        %v390 = vld [vmem:[#allocation2] sm:$0xff]
        %v391 = vld [vmem:[#allocation2 + $0x8] sm:$0xff]
        %v392 = vld [vmem:[#allocation2 + $0x10] sm:$0xff]
        %v393 = vld [vmem:[#allocation2 + $0x18] sm:$0xff]
        %v394 = vld [vmem:[#allocation2 + $0x20] sm:$0xff]
        %v395 = vld [vmem:[#allocation2 + $0x28] sm:$0xff]
        %v396 = vld [vmem:[#allocation2 + $0x30] sm:$0xff]
        %v397 = vld [vmem:[#allocation2 + $0x38] sm:$0xff]
        %v398 = vld [vmem:[#allocation2 + $0x40] sm:$0xff]
        %v399 = vld [vmem:[#allocation2 + $0x48] sm:$0xff]
        %v400 = vld [vmem:[#allocation2 + $0x50] sm:$0xff]
        %v401 = vld [vmem:[#allocation2 + $0x58] sm:$0xff]
        %v402 = vld [vmem:[#allocation2 + $0x60] sm:$0xff]
        %v403 = vld [vmem:[#allocation2 + $0x68] sm:$0xff]
        %v404 = vld [vmem:[#allocation2 + $0x70] sm:$0xff]
        %v405 = vld [vmem:[#allocation2 + $0x78] sm:$0xff]
        %v406 = vld [vmem:[%s331] sm:$0xff]
        %v407 = vld [vmem:[%s331 + $0x8] sm:$0xff]
        %v408 = vld [vmem:[%s331 + $0x10] sm:$0xff]
        %v409 = vld [vmem:[%s331 + $0x18] sm:$0xff]
        %v410 = vld [vmem:[%s331 + $0x20] sm:$0xff]
        %v411 = vld [vmem:[%s331 + $0x28] sm:$0xff]
        %v412 = vld [vmem:[%s331 + $0x30] sm:$0xff]
        %v413 = vld [vmem:[%s331 + $0x38] sm:$0xff]
        %v414 = vunpack.c.l.s8.bf16 %v406
        %v415 = vunpack.c.h.s8.bf16 %v406
        %v416 = vunpack.c.l.s8.bf16 %v407
        %v417 = vunpack.c.h.s8.bf16 %v407
        %v418 = vunpack.c.l.s8.bf16 %v408
        %v419 = vunpack.c.h.s8.bf16 %v408
        %v420 = vunpack.c.l.s8.bf16 %v409
        %v421 = vunpack.c.h.s8.bf16 %v409
        %v422 = vunpack.c.l.s8.bf16 %v410
        %v423 = vunpack.c.h.s8.bf16 %v410
        %v424 = vunpack.c.l.s8.bf16 %v411
        %v425 = vunpack.c.h.s8.bf16 %v411
        %v426 = vunpack.c.l.s8.bf16 %v412
        %v427 = vunpack.c.h.s8.bf16 %v412
        %v428 = vunpack.c.l.s8.bf16 %v413
        %v429 = vunpack.c.h.s8.bf16 %v413
        %v446 = vunpack.c.l.b16 %v374
        %v447 = vunpack.c.h.b16 %v374
        %v448 = vunpack.c.l.b16 %v375
        %v449 = vunpack.c.h.b16 %v375
        %v450 = vunpack.c.l.b16 %v376
        %v451 = vunpack.c.h.b16 %v376
        %v452 = vunpack.c.l.b16 %v377
        %v453 = vunpack.c.h.b16 %v377
        %v454 = vunpack.c.l.b16 %v378
        %v455 = vunpack.c.h.b16 %v378
        %v456 = vunpack.c.l.b16 %v379
        %v457 = vunpack.c.h.b16 %v379
        %v458 = vunpack.c.l.b16 %v380
        %v459 = vunpack.c.h.b16 %v380
        %v460 = vunpack.c.l.b16 %v381
        %v461 = vunpack.c.h.b16 %v381
        %v462 = vunpack.c.l.b16 %v382
        %v463 = vunpack.c.h.b16 %v382
        %v464 = vunpack.c.l.b16 %v383
        %v465 = vunpack.c.h.b16 %v383
        %v466 = vunpack.c.l.b16 %v384
        %v467 = vunpack.c.h.b16 %v384
        %v468 = vunpack.c.l.b16 %v385
        %v469 = vunpack.c.h.b16 %v385
        %v470 = vunpack.c.l.b16 %v386
        %v471 = vunpack.c.h.b16 %v386
        %v472 = vunpack.c.l.b16 %v387
        %v473 = vunpack.c.h.b16 %v387
        %v474 = vunpack.c.l.b16 %v388
        %v475 = vunpack.c.h.b16 %v388
        %v476 = vunpack.c.l.b16 %v389
        %v477 = vunpack.c.h.b16 %v389
        %v478 = vpack.c.b16 %v448, %v446
        %v479 = vpack.c.b16 %v449, %v447
        %v480 = vpack.c.b16 %v452, %v450
        %v481 = vpack.c.b16 %v453, %v451
        %v482 = vpack.c.b16 %v456, %v454
        %v483 = vpack.c.b16 %v457, %v455
        %v484 = vpack.c.b16 %v460, %v458
        %v485 = vpack.c.b16 %v461, %v459
        %v486 = vpack.c.b16 %v464, %v462
        %v487 = vpack.c.b16 %v465, %v463
        %v488 = vpack.c.b16 %v468, %v466
        %v489 = vpack.c.b16 %v469, %v467
        %v490 = vpack.c.b16 %v472, %v470
        %v491 = vpack.c.b16 %v473, %v471
        %v492 = vpack.c.b16 %v476, %v474
        %v493 = vpack.c.b16 %v477, %v475
        %510 = vmatprep.subr.bf16.mxu0 0
        %511 = vmatpush1.bf16.msra.mxu0 %v421
        %512 = vmatprep.subr.bf16.mxu0 0
        %513 = vmatpush1.bf16.msra.mxu0 %v420
        %514 = vmatprep.subr.bf16.mxu0 0
        %515 = vmatpush1.bf16.msra.mxu0 %v419
        %516 = vmatprep.subr.bf16.mxu0 0
        %517 = vmatpush1.bf16.msra.mxu0 %v418
        %518 = vmatprep.subr.bf16.mxu0 0
        %519 = vmatpush1.bf16.msra.mxu0 %v417
        %520 = vmatprep.subr.bf16.mxu0 0
        %521 = vmatpush1.bf16.msra.mxu0 %v416
        %522 = vmatprep.subr.bf16.mxu0 0
        %523 = vmatpush1.bf16.msra.mxu0 %v415
        %524 = vmatprep.subr.bf16.mxu0 0
        %525 = vmatpush1.bf16.msra.mxu0 %v414
        %526 = vmatprep.subr.bf16.mxu0 0
        %527 = vmatpush2.bf16.msra.mxu0 %v429
        %528 = vmatprep.subr.bf16.mxu0 0
        %529 = vmatpush2.bf16.msra.mxu0 %v428
        %530 = vmatprep.subr.bf16.mxu0 0
        %531 = vmatpush2.bf16.msra.mxu0 %v427
        %532 = vmatprep.subr.bf16.mxu0 0
        %533 = vmatpush2.bf16.msra.mxu0 %v426
        %534 = vmatprep.subr.bf16.mxu0 0
        %535 = vmatpush2.bf16.msra.mxu0 %v425
        %536 = vmatprep.subr.bf16.mxu0 0
        %537 = vmatpush2.bf16.msra.mxu0 %v424
        %538 = vmatprep.subr.bf16.mxu0 0
        %539 = vmatpush2.bf16.msra.mxu0 %v423
        %540 = vmatprep.subr.bf16.mxu0 0
        %541 = vmatpush2.bf16.msra.mxu0 %v422
        %542 = vmatprep.mubr.bf16.mxu0 %v479
        %543 = vmatmul.mubr.bf16.gmra.mxu0 %v478
        %v544 = vpop.f32.mrf.mxu0
        %v545 = vadd.f32 0.0, %v544
        %v546 = vpop.f32.mrf.mxu0
        %v547 = vpop.f32.mrf.mxu0
        %v548 = vadd.f32 0.0, %v547
        %v549 = vpop.f32.mrf.mxu0
        %550 = vmatprep.mubr.bf16.mxu0 %v481
        %551 = vmatmul.mubr.bf16.gmra.mxu0 %v480
        %v552 = vpop.f32.mrf.mxu0
        %v553 = vadd.f32 0.0, %v552
        %v554 = vpop.f32.mrf.mxu0
        %v555 = vpop.f32.mrf.mxu0
        %v556 = vadd.f32 0.0, %v555
        %v557 = vpop.f32.mrf.mxu0
        %558 = vmatprep.mubr.bf16.mxu0 %v483
        %559 = vmatmul.mubr.bf16.gmra.mxu0 %v482
        %v560 = vpop.f32.mrf.mxu0
        %v561 = vadd.f32 0.0, %v560
        %v562 = vpop.f32.mrf.mxu0
        %v563 = vpop.f32.mrf.mxu0
        %v564 = vadd.f32 0.0, %v563
        %v565 = vpop.f32.mrf.mxu0
        %566 = vmatprep.mubr.bf16.mxu0 %v485
        %567 = vmatmul.mubr.bf16.gmra.mxu0 %v484
        %v568 = vpop.f32.mrf.mxu0
        %v569 = vadd.f32 0.0, %v568
        %v570 = vpop.f32.mrf.mxu0
        %v571 = vpop.f32.mrf.mxu0
        %v572 = vadd.f32 0.0, %v571
        %v573 = vpop.f32.mrf.mxu0
        %574 = vmatprep.mubr.bf16.mxu0 %v487
        %575 = vmatmul.mubr.bf16.gmra.mxu0 %v486
        %v576 = vpop.f32.mrf.mxu0
        %v577 = vadd.f32 0.0, %v576
        %v578 = vpop.f32.mrf.mxu0
        %v579 = vpop.f32.mrf.mxu0
        %v580 = vadd.f32 0.0, %v579
        %v581 = vpop.f32.mrf.mxu0
        %582 = vmatprep.mubr.bf16.mxu0 %v489
        %583 = vmatmul.mubr.bf16.gmra.mxu0 %v488
        %v584 = vpop.f32.mrf.mxu0
        %v585 = vadd.f32 0.0, %v584
        %v586 = vpop.f32.mrf.mxu0
        %v587 = vpop.f32.mrf.mxu0
        %v588 = vadd.f32 0.0, %v587
        %v589 = vpop.f32.mrf.mxu0
        %590 = vmatprep.mubr.bf16.mxu0 %v491
        %591 = vmatmul.mubr.bf16.gmra.mxu0 %v490
        %v592 = vpop.f32.mrf.mxu0
        %v593 = vadd.f32 0.0, %v592
        %v594 = vpop.f32.mrf.mxu0
        %v595 = vpop.f32.mrf.mxu0
        %v596 = vadd.f32 0.0, %v595
        %v597 = vpop.f32.mrf.mxu0
        %598 = vmatprep.mubr.bf16.mxu0 %v493
        %599 = vmatmul.mubr.bf16.gmra.mxu0 %v492
        %v600 = vpop.f32.mrf.mxu0
        %v601 = vadd.f32 0.0, %v600
        %v602 = vpop.f32.mrf.mxu0
        %v603 = vpop.f32.mrf.mxu0
        %v604 = vadd.f32 0.0, %v603
        %v605 = vpop.f32.mrf.mxu0
        %606 = vdwg.mxu0
        %v607 = vadd.f32 %v390, %v545
        %v608 = vadd.f32 %v391, %v548
        %v609 = vadd.f32 %v392, %v553
        %v610 = vadd.f32 %v393, %v556
        %v611 = vadd.f32 %v394, %v561
        %v612 = vadd.f32 %v395, %v564
        %v613 = vadd.f32 %v396, %v569
        %v614 = vadd.f32 %v397, %v572
        %v615 = vadd.f32 %v398, %v577
        %v616 = vadd.f32 %v399, %v580
        %v617 = vadd.f32 %v400, %v585
        %v618 = vadd.f32 %v401, %v588
        %v619 = vadd.f32 %v402, %v593
        %v620 = vadd.f32 %v403, %v596
        %v621 = vadd.f32 %v404, %v601
        %v622 = vadd.f32 %v405, %v604
        %623 = vst [vmem:[#allocation2] sm:$0xff] %v607
        %624 = vst [vmem:[#allocation2 + $0x8] sm:$0xff] %v608
        %625 = vst [vmem:[#allocation2 + $0x10] sm:$0xff] %v609
        %626 = vst [vmem:[#allocation2 + $0x18] sm:$0xff] %v610
        %627 = vst [vmem:[#allocation2 + $0x20] sm:$0xff] %v611
        %628 = vst [vmem:[#allocation2 + $0x28] sm:$0xff] %v612
        %629 = vst [vmem:[#allocation2 + $0x30] sm:$0xff] %v613
        %630 = vst [vmem:[#allocation2 + $0x38] sm:$0xff] %v614
        %631 = vst [vmem:[#allocation2 + $0x40] sm:$0xff] %v615
        %632 = vst [vmem:[#allocation2 + $0x48] sm:$0xff] %v616
        %633 = vst [vmem:[#allocation2 + $0x50] sm:$0xff] %v617
        %634 = vst [vmem:[#allocation2 + $0x58] sm:$0xff] %v618
        %635 = vst [vmem:[#allocation2 + $0x60] sm:$0xff] %v619
        %636 = vst [vmem:[#allocation2 + $0x68] sm:$0xff] %v620
        %637 = vst [vmem:[#allocation2 + $0x70] sm:$0xff] %v621
        %638 = vst [vmem:[#allocation2 + $0x78] sm:$0xff] %v622
        // Predicated region
        $region41: #{forward.6} parent=35 // pred_check
          %p639 = pneg %p349
        $region42: #{forward.6} parent=35 // pred_check_branch
          %641 = sbr.rel (%p639) target = $region44
        $region43: #{forward.6} parent=35 // pred_region
          %v642 = vld [vmem:[#allocation2] sm:$0xff]
          %v643 = vld [vmem:[#allocation2 + $0x8] sm:$0xff]
          %v644 = vld [vmem:[#allocation2 + $0x10] sm:$0xff]
          %v645 = vld [vmem:[#allocation2 + $0x18] sm:$0xff]
          %v646 = vld [vmem:[#allocation2 + $0x20] sm:$0xff]
          %v647 = vld [vmem:[#allocation2 + $0x28] sm:$0xff]
          %v648 = vld [vmem:[#allocation2 + $0x30] sm:$0xff]
          %v649 = vld [vmem:[#allocation2 + $0x38] sm:$0xff]
          %v650 = vld [vmem:[#allocation2 + $0x40] sm:$0xff]
          %v651 = vld [vmem:[#allocation2 + $0x48] sm:$0xff]
          %v652 = vld [vmem:[#allocation2 + $0x50] sm:$0xff]
          %v653 = vld [vmem:[#allocation2 + $0x58] sm:$0xff]
          %v654 = vld [vmem:[#allocation2 + $0x60] sm:$0xff]
          %v655 = vld [vmem:[#allocation2 + $0x68] sm:$0xff]
          %v656 = vld [vmem:[#allocation2 + $0x70] sm:$0xff]
          %v657 = vld [vmem:[#allocation2 + $0x78] sm:$0xff]
          %v658 = vld [vmem:[%s339] sm:$0x1]
          %v660 = vlaneseq
          %v661 = vshrl.u32 %v660, 7
          %v662 = vsub.s32 0, %v661
          %v663 = vrot.slane %v658, %v662
          %v665 = vmul.f32 %v642, %v663
          %v666 = vmul.f32 %v643, %v663
          %v667 = vmul.f32 %v644, %v663
          %v668 = vmul.f32 %v645, %v663
          %v669 = vmul.f32 %v646, %v663
          %v670 = vmul.f32 %v647, %v663
          %v671 = vmul.f32 %v648, %v663
          %v672 = vmul.f32 %v649, %v663
          %v673 = vmul.f32 %v650, %v663
          %v674 = vmul.f32 %v651, %v663
          %v675 = vmul.f32 %v652, %v663
          %v676 = vmul.f32 %v653, %v663
          %v677 = vmul.f32 %v654, %v663
          %v678 = vmul.f32 %v655, %v663
          %v679 = vmul.f32 %v656, %v663
          %v680 = vmul.f32 %v657, %v663
          %v681 = vld [vmem:[%s346] sm:$0x1]
          %v683 = vlaneseq
          %v684 = vshrl.u32 %v683, 7
          %v685 = vsub.s32 0, %v684
          %v686 = vrot.slane %v681, %v685
          %v688 = vadd.f32 %v665, %v686
          %v689 = vadd.f32 %v666, %v686
          %v690 = vadd.f32 %v667, %v686
          %v691 = vadd.f32 %v668, %v686
          %v692 = vadd.f32 %v669, %v686
          %v693 = vadd.f32 %v670, %v686
          %v694 = vadd.f32 %v671, %v686
          %v695 = vadd.f32 %v672, %v686
          %v696 = vadd.f32 %v673, %v686
          %v697 = vadd.f32 %v674, %v686
          %v698 = vadd.f32 %v675, %v686
          %v699 = vadd.f32 %v676, %v686
          %v700 = vadd.f32 %v677, %v686
          %v701 = vadd.f32 %v678, %v686
          %v702 = vadd.f32 %v679, %v686
          %v703 = vadd.f32 %v680, %v686
          %v704 = vmax.f32 %v688, 0.0
          %v705 = vmax.f32 %v689, 0.0
          %v706 = vmax.f32 %v690, 0.0
          %v707 = vmax.f32 %v691, 0.0
          %v708 = vmax.f32 %v692, 0.0
          %v709 = vmax.f32 %v693, 0.0
          %v710 = vmax.f32 %v694, 0.0
          %v711 = vmax.f32 %v695, 0.0
          %v712 = vmax.f32 %v696, 0.0
          %v713 = vmax.f32 %v697, 0.0
          %v714 = vmax.f32 %v698, 0.0
          %v715 = vmax.f32 %v699, 0.0
          %v716 = vmax.f32 %v700, 0.0
          %v717 = vmax.f32 %v701, 0.0
          %v718 = vmax.f32 %v702, 0.0
          %v719 = vmax.f32 %v703, 0.0
          %v720 = vpack.c.bf16 %v705, %v704
          %v721 = vpack.c.bf16 %v707, %v706
          %v722 = vpack.c.bf16 %v709, %v708
          %v723 = vpack.c.bf16 %v711, %v710
          %v724 = vpack.c.bf16 %v713, %v712
          %v725 = vpack.c.bf16 %v715, %v714
          %v726 = vpack.c.bf16 %v717, %v716
          %v727 = vpack.c.bf16 %v719, %v718
          %v736 = vunpack.c.l.b16 %v720
          %v737 = vunpack.c.h.b16 %v720
          %v738 = vunpack.c.l.b16 %v721
          %v739 = vunpack.c.h.b16 %v721
          %v740 = vunpack.c.l.b16 %v722
          %v741 = vunpack.c.h.b16 %v722
          %v742 = vunpack.c.l.b16 %v723
          %v743 = vunpack.c.h.b16 %v723
          %v744 = vunpack.c.l.b16 %v724
          %v745 = vunpack.c.h.b16 %v724
          %v746 = vunpack.c.l.b16 %v725
          %v747 = vunpack.c.h.b16 %v725
          %v748 = vunpack.c.l.b16 %v726
          %v749 = vunpack.c.h.b16 %v726
          %v750 = vunpack.c.l.b16 %v727
          %v751 = vunpack.c.h.b16 %v727
          %v752 = vpack.c.b16 %v736, %v736
          %v753 = vpack.c.b16 %v737, %v737
          %v754 = vpack.c.b16 %v738, %v738
          %v755 = vpack.c.b16 %v739, %v739
          %v756 = vpack.c.b16 %v740, %v740
          %v757 = vpack.c.b16 %v741, %v741
          %v758 = vpack.c.b16 %v742, %v742
          %v759 = vpack.c.b16 %v743, %v743
          %v760 = vpack.c.b16 %v744, %v744
          %v761 = vpack.c.b16 %v745, %v745
          %v762 = vpack.c.b16 %v746, %v746
          %v763 = vpack.c.b16 %v747, %v747
          %v764 = vpack.c.b16 %v748, %v748
          %v765 = vpack.c.b16 %v749, %v749
          %v766 = vpack.c.b16 %v750, %v750
          %v767 = vpack.c.b16 %v751, %v751
          %784 = vst [vmem:[%s307] sm:$0xf] %v752
          %785 = vst [vmem:[%s307 + $0x4] sm:$0xf] %v753
          %786 = vst [vmem:[%s307 + $0x8] sm:$0xf] %v754
          %787 = vst [vmem:[%s307 + $0xc] sm:$0xf] %v755
          %788 = vst [vmem:[%s307 + $0x10] sm:$0xf] %v756
          %789 = vst [vmem:[%s307 + $0x14] sm:$0xf] %v757
          %790 = vst [vmem:[%s307 + $0x18] sm:$0xf] %v758
          %791 = vst [vmem:[%s307 + $0x1c] sm:$0xf] %v759
          %792 = vst [vmem:[%s307 + $0x20] sm:$0xf] %v760
          %793 = vst [vmem:[%s307 + $0x24] sm:$0xf] %v761
          %794 = vst [vmem:[%s307 + $0x28] sm:$0xf] %v762
          %795 = vst [vmem:[%s307 + $0x2c] sm:$0xf] %v763
          %796 = vst [vmem:[%s307 + $0x30] sm:$0xf] %v764
          %797 = vst [vmem:[%s307 + $0x34] sm:$0xf] %v765
          %798 = vst [vmem:[%s307 + $0x38] sm:$0xf] %v766
          %799 = vst [vmem:[%s307 + $0x3c] sm:$0xf] %v767
        $region44: #{forward.6} parent=35 // pred_fallthru
          _
        %s800 = sand.u32 %s167, 1
        %s801 = sand.u32 %s167, 1
        %s802 = smul.addr %s801, 64
        %s803 = scalar_lea.vmem [#allocation3], %s802
        // Predicated region
        $region45: #{forward.6} parent=35 // pred_check
          %p804 = pneg %p177
        $region46: #{forward.6} parent=35 // pred_check_branch
          %806 = sbr.rel (%p804) target = $region48
        $region47: #{forward.6} parent=35 // pred_region
          %s807 = smul.u32 16, %s22
          %s808 = smul.addr %s807, 7
          %s809 = sadd.s32 %s23, %s808
          %s810 = smul.addr %s21, 112
          %s811 = sadd.s32 %s809, %s810
          %s812 = smul.addr %s811, 4
          %s813 = scalar_lea.vmem %s4, %s812
          // Predicated region
          $region49: #{forward.6} parent=47 // pred_check
            _
          $region50: #{forward.6} parent=47 // pred_check_branch
            %815 = sbr.rel (0) target = $region52
          $region51: #{forward.6} parent=47 // pred_region
            // Predicated region
            $region53: #{forward.6} parent=51 // pred_check
              _
            $region54: #{forward.6} parent=51 // pred_check_branch
              %817 = sbr.rel target = $region56
            $region55: #{forward.6} parent=51 // pred_region
              // Predicated region
              $region68: #{forward.6} parent=55 // pred_check
                _
              $region69: #{forward.6} parent=55 // pred_check_branch
                %863 = sbr.rel (0) target = $region71
              $region70: #{forward.6} parent=55 // pred_region
                loop: start=0, step=1, limit=1
                $region72: #{forward.6} parent=70 // loop_pre_header
                  _
                $region73: #{forward.6} parent=70 // loop_header
                  %s865 = sphi 0, %s869
                  %p866 = scmp.ge.s32.totalorder %s865, 1
                  %s870 = sphi %s803, %s803
                  %s871 = sphi %s813, %s813
                $region74: #{forward.6} parent=70 // loop_header_branch
                  %868 = sbr.rel (%p866) target = $region78
                $region75: #{forward.6} parent=70 // loop_body
                  _
                $region76: #{forward.6} parent=70 // loop_footer
                  %s869 = sadd.s32 1, %s865
                $region77: #{forward.6} parent=70 // loop_footer_branch
                  %864 = sbr.rel target = $region73
                $region78: #{forward.6} parent=70 // loop_exit
                  _
                %s873 = ssub.s32 16, 1
                loop: start=0, step=1, limit=1
                $region79: #{forward.6} parent=70 // loop_pre_header
                  _
                $region80: #{forward.6} parent=70 // loop_header
                  %s875 = sphi 0, %s879
                  %p876 = scmp.ge.s32.totalorder %s875, 1
                  %s880 = sphi %s803, %s803
                  %s881 = sphi %s813, %s813
                $region81: #{forward.6} parent=70 // loop_header_branch
                  %878 = sbr.rel (%p876) target = $region85
                $region82: #{forward.6} parent=70 // loop_body
                  %v882 = vld [vmem:[%s880] sm:%s873]
                  %883 = vst [vmem:[%s881] sm:%s873] %v882
                  %v884 = vld [vmem:[%s880 + $0x4] sm:%s873]
                  %885 = vst [vmem:[%s881 + $0x1c] sm:%s873] %v884
                  %v886 = vld [vmem:[%s880 + $0x8] sm:%s873]
                  %887 = vst [vmem:[%s881 + $0x38] sm:%s873] %v886
                  %v888 = vld [vmem:[%s880 + $0xc] sm:%s873]
                  %889 = vst [vmem:[%s881 + $0x54] sm:%s873] %v888
                  %v890 = vld [vmem:[%s880 + $0x10] sm:%s873]
                  %891 = vst [vmem:[%s881 + $0x70] sm:%s873] %v890
                  %v892 = vld [vmem:[%s880 + $0x14] sm:%s873]
                  %893 = vst [vmem:[%s881 + $0x8c] sm:%s873] %v892
                  %v894 = vld [vmem:[%s880 + $0x18] sm:%s873]
                  %895 = vst [vmem:[%s881 + $0xa8] sm:%s873] %v894
                  %v896 = vld [vmem:[%s880 + $0x1c] sm:%s873]
                  %897 = vst [vmem:[%s881 + $0xc4] sm:%s873] %v896
                  %v898 = vld [vmem:[%s880 + $0x20] sm:%s873]
                  %899 = vst [vmem:[%s881 + $0xe0] sm:%s873] %v898
                  %v900 = vld [vmem:[%s880 + $0x24] sm:%s873]
                  %901 = vst [vmem:[%s881 + $0xfc] sm:%s873] %v900
                  %v902 = vld [vmem:[%s880 + $0x28] sm:%s873]
                  %903 = vst [vmem:[%s881 + $0x118] sm:%s873] %v902
                  %v904 = vld [vmem:[%s880 + $0x2c] sm:%s873]
                  %905 = vst [vmem:[%s881 + $0x134] sm:%s873] %v904
                  %v906 = vld [vmem:[%s880 + $0x30] sm:%s873]
                  %907 = vst [vmem:[%s881 + $0x150] sm:%s873] %v906
                  %v908 = vld [vmem:[%s880 + $0x34] sm:%s873]
                  %909 = vst [vmem:[%s881 + $0x16c] sm:%s873] %v908
                  %v910 = vld [vmem:[%s880 + $0x38] sm:%s873]
                  %911 = vst [vmem:[%s881 + $0x188] sm:%s873] %v910
                  %v912 = vld [vmem:[%s880 + $0x3c] sm:%s873]
                  %913 = vst [vmem:[%s881 + $0x1a4] sm:%s873] %v912
                $region83: #{forward.6} parent=70 // loop_footer
                  %s879 = sadd.s32 1, %s875
                $region84: #{forward.6} parent=70 // loop_footer_branch
                  %874 = sbr.rel target = $region80
                $region85: #{forward.6} parent=70 // loop_exit
                  _
              $region71: #{forward.6} parent=55 // pred_fallthru
                _
            $region56: #{forward.6} parent=51 // pred_fallthru
              _
            // Predicated region
            $region57: #{forward.6} parent=51 // pred_check
              _
            $region58: #{forward.6} parent=51 // pred_check_branch
              %819 = sbr.rel (0) target = $region60
            $region59: #{forward.6} parent=51 // pred_region
              %s821 = ssub.s32 16, 1
              loop: start=0, step=1, limit=1
              $region61: #{forward.6} parent=59 // loop_pre_header
                _
              $region62: #{forward.6} parent=59 // loop_header
                %s823 = sphi 0, %s827
                %p824 = scmp.ge.s32.totalorder %s823, 1
                %s828 = sphi %s803, %s803
                %s829 = sphi %s813, %s813
              $region63: #{forward.6} parent=59 // loop_header_branch
                %826 = sbr.rel (%p824) target = $region67
              $region64: #{forward.6} parent=59 // loop_body
                %v830 = vld [vmem:[%s828] sm:%s821]
                %831 = vst [vmem:[%s829] sm:%s821] %v830
                %v832 = vld [vmem:[%s828 + $0x4] sm:%s821]
                %833 = vst [vmem:[%s829 + $0x1c] sm:%s821] %v832
                %v834 = vld [vmem:[%s828 + $0x8] sm:%s821]
                %835 = vst [vmem:[%s829 + $0x38] sm:%s821] %v834
                %v836 = vld [vmem:[%s828 + $0xc] sm:%s821]
                %837 = vst [vmem:[%s829 + $0x54] sm:%s821] %v836
                %v838 = vld [vmem:[%s828 + $0x10] sm:%s821]
                %839 = vst [vmem:[%s829 + $0x70] sm:%s821] %v838
                %v840 = vld [vmem:[%s828 + $0x14] sm:%s821]
                %841 = vst [vmem:[%s829 + $0x8c] sm:%s821] %v840
                %v842 = vld [vmem:[%s828 + $0x18] sm:%s821]
                %843 = vst [vmem:[%s829 + $0xa8] sm:%s821] %v842
                %v844 = vld [vmem:[%s828 + $0x1c] sm:%s821]
                %845 = vst [vmem:[%s829 + $0xc4] sm:%s821] %v844
                %v846 = vld [vmem:[%s828 + $0x20] sm:%s821]
                %847 = vst [vmem:[%s829 + $0xe0] sm:%s821] %v846
                %v848 = vld [vmem:[%s828 + $0x24] sm:%s821]
                %849 = vst [vmem:[%s829 + $0xfc] sm:%s821] %v848
                %v850 = vld [vmem:[%s828 + $0x28] sm:%s821]
                %851 = vst [vmem:[%s829 + $0x118] sm:%s821] %v850
                %v852 = vld [vmem:[%s828 + $0x2c] sm:%s821]
                %853 = vst [vmem:[%s829 + $0x134] sm:%s821] %v852
                %v854 = vld [vmem:[%s828 + $0x30] sm:%s821]
                %855 = vst [vmem:[%s829 + $0x150] sm:%s821] %v854
                %v856 = vld [vmem:[%s828 + $0x34] sm:%s821]
                %857 = vst [vmem:[%s829 + $0x16c] sm:%s821] %v856
                %v858 = vld [vmem:[%s828 + $0x38] sm:%s821]
                %859 = vst [vmem:[%s829 + $0x188] sm:%s821] %v858
                %v860 = vld [vmem:[%s828 + $0x3c] sm:%s821]
                %861 = vst [vmem:[%s829 + $0x1a4] sm:%s821] %v860
              $region65: #{forward.6} parent=59 // loop_footer
                %s827 = sadd.s32 1, %s823
              $region66: #{forward.6} parent=59 // loop_footer_branch
                %822 = sbr.rel target = $region62
              $region67: #{forward.6} parent=59 // loop_exit
                _
            $region60: #{forward.6} parent=51 // pred_fallthru
              _
          $region52: #{forward.6} parent=47 // pred_fallthru
            _
          %914 = vnop
        $region48: #{forward.6} parent=35 // pred_fallthru
          _
      $region36: #{forward.6} parent=5 // pred_fallthru
        _
      %p915 = scmp.le.s32.totalorder 2, %s10
      // Predicated region
      $region86: #{forward.6} parent=5 // pred_check
        %p916 = pneg %p915
      $region87: #{forward.6} parent=5 // pred_check_branch
        %918 = sbr.rel (%p916) target = $region89
      $region88: #{forward.6} parent=5 // pred_region
        %s919 = ssub.s32 %s10, 2
        // Predicated region
        $region90: #{forward.6} parent=88 // pred_check
          %p920 = pneg %p183
        $region91: #{forward.6} parent=88 // pred_check_branch
          %922 = sbr.rel (%p920) target = $region93
        $region92: #{forward.6} parent=88 // pred_region
          %s923 = sand.u32 %s168, 1
          %s924 = sand.u32 %s168, 1
          %s925 = smul.addr %s924, 64
          %s926 = scalar_lea.vmem [#allocation3], %s925
        $region93: #{forward.6} parent=88 // pred_fallthru
          _
      $region89: #{forward.6} parent=5 // pred_fallthru
        _
    $region6: #{forward.6} parent=1 // loop_footer
      %s14 = sadd.s32 1, %s10
    $region7: #{forward.6} parent=1 // loop_footer_branch
      %9 = sbr.rel target = $region3
    $region8: #{forward.6} parent=1 // loop_exit
      _

// kernel: forward.7
$region0: #{forward.7}
  #allocation0 [shape = 'u32[]', space=smem, size = 0x4, offset = 0x4, fixed_abs, tag = 'smem constant byte address 0x4 - core index']
  #allocation1 [shape = 'u32[144,128]{1,0:T(1,128)}', space=vmem, size = 0x12000, scoped, tag = 'internal scratch']
  #allocation2 [shape = 'f32[128,128]{1,0:T(8,128)}', space=vmem, size = 0x10000, scoped, tag = 'scratch operand']
  %s0 = inlined_call_operand.vmem [shape: bf16[1,128,1024], index: 0, kind: input, shape index: {}]
  %s1 = inlined_call_operand.vmem [shape: s8[1,2,1024,128], index: 1, kind: input, shape index: {}]
  %s2 = inlined_call_operand.vmem [shape: f32[1,1,256], index: 2, kind: input, shape index: {}]
  %s3 = inlined_call_operand.vmem [shape: f32[1,1,256], index: 3, kind: input, shape index: {}]
  %s4 = inlined_call_operand.hbm [shape: f32[1,128,256], index: 4, kind: output, shape index: {}]
  %s5 = sld [smem:[#allocation0]]
  $region57: #{forward.7} parent=0
    _
  %s7 = ssub.s32 1, %s5
  %s8 = scalar_select 0, %s7, %s5
  $region1: #{forward.7} parent=0
    #allocation3 [shape = 'u8[131072]{0}', space=vmem, size = 0x20000, scoped, tag = 'output window, operand 0']
    #allocation4 [shape = 's32[2]{0}', space=sflag, size = 0x8, scoped, tag = 'scoped memory for forward.7']
    %9 = vsyncpa [#allocation4], 0
    %s10 = scalar_lea.sflag [#allocation4], 1
    %11 = vsyncpa %s10, 0
    loop: start=0, step=1, limit=4
    $region2: #{forward.7} parent=1 // loop_pre_header
      _
    $region3: #{forward.7} parent=1 // loop_header
      %s13 = sphi 0, %s17
      %p14 = scmp.ge.s32.totalorder %s13, 4
      %s20 = sphi 0, %s46
      %s21 = sphi 0, %s42
      %s22 = sphi 0, %s38
      %s23 = sphi 0, %s34
      %s24 = sphi 0, %s20
      %s25 = sphi 0, %s21
      %s26 = sphi 0, %s22
      %s27 = sphi 0, %s23
      %s28 = sphi 0, %s24
      %s29 = sphi 0, %s25
      %s30 = sphi 0, %s26
      %s31 = sphi 0, %s27
      %s51 = sphi 0, %s53
      %s54 = sphi 0, %s51
      %s55 = sphi 0, %s54
      %s71 = sphi 0, %s55
      %s81 = sphi 0, %s83
      %s84 = sphi 0, %s81
      %s85 = sphi 0, %s84
      %s101 = sphi 0, %s85
      %s109 = sphi 0, %s111
      %s112 = sphi 0, %s109
      %s113 = sphi 0, %s112
      %s129 = sphi 0, %s113
      %s137 = sphi 0, %s139
      %s140 = sphi 0, %s137
      %s141 = sphi 0, %s140
      %s157 = sphi 0, %s141
      %s167 = sphi 0, %s169
      %s170 = sphi 0, %s167
      %s171 = sphi 0, %s170
      %s187 = sphi 0, %s171
    $region4: #{forward.7} parent=1 // loop_header_branch
      %16 = sbr.rel (%p14) target = $region8
    $region5: #{forward.7} parent=1 // loop_body
      %s18 = ssub.s32 %s13, 1
      %s19 = ssub.s32 %s13, 2
      %s32 = sadd.s32 1, %s23
      %p33 = scmp.ge.s32.totalorder %s32, 1
      %s34 = scalar_select %p33, 0, %s32
      %s35 = sadd.s32 1, %s22
      %s36 = scalar_select %p33, %s35, %s22
      %p37 = scmp.ge.s32.totalorder %s36, 2
      %s38 = scalar_select %p37, 0, %s36
      %s39 = sadd.s32 1, %s21
      %s40 = scalar_select %p37, %s39, %s21
      %p41 = scmp.ge.s32.totalorder %s40, 1
      %s42 = scalar_select %p41, 0, %s40
      %s43 = sadd.s32 1, %s20
      %s44 = scalar_select %p41, %s43, %s20
      %p45 = scmp.ge.s32.totalorder %s44, 1
      %s46 = scalar_select %p45, 0, %s44
      %s47 = ssub.s32 %s20, %s46
      %s48 = ssub.s32 %s21, %s42
      %s49 = sor.u32 %s47, %s48
      %p50 = scmp.eq.s32.totalorder %s49, 0
      %s52 = sadd.s32 %s51, 1
      %s53 = scalar_select %p50, %s51, %s52
      %p56 = pneg %p50
      %p57 = scmp.eq.s32.totalorder %s13, 1
      %p58 = por %p56, %p57
      %p59 = scmp.ne.s32.totalorder %s51, %s54
      %p60 = scmp.eq.s32.totalorder %s13, 0
      %p61 = por %p59, %p60
      %p62 = scmp.ne.s32.totalorder %s51, %s54
      %p63 = scmp.eq.s32.totalorder %s18, 1
      %p64 = por %p62, %p63
      %p65 = scmp.ne.s32.totalorder %s54, %s55
      %p66 = scmp.eq.s32.totalorder %s18, 0
      %p67 = por %p65, %p66
      %p68 = scmp.ne.s32.totalorder %s54, %s55
      %p69 = scmp.eq.s32.totalorder %s19, 1
      %p70 = por %p68, %p69
      %p72 = scmp.ne.s32.totalorder %s55, %s71
      %p73 = scmp.eq.s32.totalorder %s19, 0
      %p74 = por %p72, %p73
      %s75 = ssub.s32 %s20, %s46
      %s76 = ssub.s32 %s22, %s38
      %s77 = sor.u32 %s75, %s76
      %s78 = ssub.s32 %s23, %s34
      %s79 = sor.u32 %s77, %s78
      %p80 = scmp.eq.s32.totalorder %s79, 0
      %s82 = sadd.s32 %s81, 1
      %s83 = scalar_select %p80, %s81, %s82
      %p86 = pneg %p80
      %p87 = scmp.eq.s32.totalorder %s13, 1
      %p88 = por %p86, %p87
      %p89 = scmp.ne.s32.totalorder %s81, %s84
      %p90 = scmp.eq.s32.totalorder %s13, 0
      %p91 = por %p89, %p90
      %p92 = scmp.ne.s32.totalorder %s81, %s84
      %p93 = scmp.eq.s32.totalorder %s18, 1
      %p94 = por %p92, %p93
      %p95 = scmp.ne.s32.totalorder %s84, %s85
      %p96 = scmp.eq.s32.totalorder %s18, 0
      %p97 = por %p95, %p96
      %p98 = scmp.ne.s32.totalorder %s84, %s85
      %p99 = scmp.eq.s32.totalorder %s19, 1
      %p100 = por %p98, %p99
      %p102 = scmp.ne.s32.totalorder %s85, %s101
      %p103 = scmp.eq.s32.totalorder %s19, 0
      %p104 = por %p102, %p103
      %s105 = ssub.s32 %s20, %s46
      %s106 = ssub.s32 %s22, %s38
      %s107 = sor.u32 %s105, %s106
      %p108 = scmp.eq.s32.totalorder %s107, 0
      %s110 = sadd.s32 %s109, 1
      %s111 = scalar_select %p108, %s109, %s110
      %p114 = pneg %p108
      %p115 = scmp.eq.s32.totalorder %s13, 1
      %p116 = por %p114, %p115
      %p117 = scmp.ne.s32.totalorder %s109, %s112
      %p118 = scmp.eq.s32.totalorder %s13, 0
      %p119 = por %p117, %p118
      %p120 = scmp.ne.s32.totalorder %s109, %s112
      %p121 = scmp.eq.s32.totalorder %s18, 1
      %p122 = por %p120, %p121
      %p123 = scmp.ne.s32.totalorder %s112, %s113
      %p124 = scmp.eq.s32.totalorder %s18, 0
      %p125 = por %p123, %p124
      %p126 = scmp.ne.s32.totalorder %s112, %s113
      %p127 = scmp.eq.s32.totalorder %s19, 1
      %p128 = por %p126, %p127
      %p130 = scmp.ne.s32.totalorder %s113, %s129
      %p131 = scmp.eq.s32.totalorder %s19, 0
      %p132 = por %p130, %p131
      %s133 = ssub.s32 %s20, %s46
      %s134 = ssub.s32 %s22, %s38
      %s135 = sor.u32 %s133, %s134
      %p136 = scmp.eq.s32.totalorder %s135, 0
      %s138 = sadd.s32 %s137, 1
      %s139 = scalar_select %p136, %s137, %s138
      %p142 = pneg %p136
      %p143 = scmp.eq.s32.totalorder %s13, 1
      %p144 = por %p142, %p143
      %p145 = scmp.ne.s32.totalorder %s137, %s140
      %p146 = scmp.eq.s32.totalorder %s13, 0
      %p147 = por %p145, %p146
      %p148 = scmp.ne.s32.totalorder %s137, %s140
      %p149 = scmp.eq.s32.totalorder %s18, 1
      %p150 = por %p148, %p149
      %p151 = scmp.ne.s32.totalorder %s140, %s141
      %p152 = scmp.eq.s32.totalorder %s18, 0
      %p153 = por %p151, %p152
      %p154 = scmp.ne.s32.totalorder %s140, %s141
      %p155 = scmp.eq.s32.totalorder %s19, 1
      %p156 = por %p154, %p155
      %p158 = scmp.ne.s32.totalorder %s141, %s157
      %p159 = scmp.eq.s32.totalorder %s19, 0
      %p160 = por %p158, %p159
      %s161 = ssub.s32 %s20, %s46
      %s162 = ssub.s32 %s21, %s42
      %s163 = sor.u32 %s161, %s162
      %s164 = ssub.s32 %s22, %s38
      %s165 = sor.u32 %s163, %s164
      %p166 = scmp.eq.s32.totalorder %s165, 0
      %s168 = sadd.s32 %s167, 1
      %s169 = scalar_select %p166, %s167, %s168
      %p172 = pneg %p166
      %p173 = scmp.eq.s32.totalorder %s13, 1
      %p174 = por %p172, %p173
      %p175 = scmp.ne.s32.totalorder %s167, %s170
      %p176 = scmp.eq.s32.totalorder %s13, 0
      %p177 = por %p175, %p176
      %p178 = scmp.ne.s32.totalorder %s167, %s170
      %p179 = scmp.eq.s32.totalorder %s18, 1
      %p180 = por %p178, %p179
      %p181 = scmp.ne.s32.totalorder %s170, %s171
      %p182 = scmp.eq.s32.totalorder %s18, 0
      %p183 = por %p181, %p182
      %p184 = scmp.ne.s32.totalorder %s170, %s171
      %p185 = scmp.eq.s32.totalorder %s19, 1
      %p186 = por %p184, %p185
      %p188 = scmp.ne.s32.totalorder %s171, %s187
      %p189 = scmp.eq.s32.totalorder %s19, 0
      %p190 = por %p188, %p189
      %p191 = scmp.le.s32.totalorder 1, %s13
      %p192 = scmp.lt.s32.totalorder %s13, 3
      %p193 = pnand %p191, %p192
      %p194 = pneg %p193
      // Predicated region
      $region9: #{forward.7} parent=5 // pred_check
        _
      $region10: #{forward.7} parent=5 // pred_check_branch
        %196 = sbr.rel (%p193) target = $region12
      $region11: #{forward.7} parent=5 // pred_region
        %s197 = ssub.s32 %s13, 1
        // Predicated region
        $region13: #{forward.7} parent=11 // pred_check
          %p198 = pneg %p67
        $region14: #{forward.7} parent=11 // pred_check_branch
          %200 = sbr.rel (%p198) target = $region16
        $region15: #{forward.7} parent=11 // pred_region
          %s201 = smul.u32 16, %s25
          %p202 = scmp.lt.s32.totalorder %s24, 0
          %s203 = scalar_select %p202, %s24, 0
          %p204 = scmp.lt.s32.totalorder %s201, 15
          %s205 = scalar_select %p204, %s201, 15
          %s206 = smul.addr %s205, 8
          %s207 = smul.addr %s203, 128
          %s208 = sadd.s32 %s206, %s207
          %s209 = smul.addr %s208, 4
          %s210 = scalar_lea.vmem %s0, %s209
          %s211 = smul.u32 16, %s25
        $region16: #{forward.7} parent=11 // pred_fallthru
          _
      $region12: #{forward.7} parent=5 // pred_fallthru
        _
      %p212 = scmp.lt.s32.totalorder %s13, 2
      // Predicated region
      $region17: #{forward.7} parent=5 // pred_check
        %p213 = pneg %p212
      $region18: #{forward.7} parent=5 // pred_check_branch
        %215 = sbr.rel (%p213) target = $region20
      $region19: #{forward.7} parent=5 // pred_region
        // Predicated region
        $region21: #{forward.7} parent=19 // pred_check
          %p216 = pneg %p91
        $region22: #{forward.7} parent=19 // pred_check_branch
          %218 = sbr.rel (%p216) target = $region24
        $region23: #{forward.7} parent=19 // pred_region
          %s219 = smul.u32 32, %s23
          %p220 = scmp.lt.s32.totalorder %s20, 0
          %s221 = scalar_select %p220, %s20, 0
          %p222 = scmp.lt.s32.totalorder %s22, 1
          %s223 = scalar_select %p222, %s22, 1
          %p224 = scmp.lt.s32.totalorder %s219, 31
          %s225 = scalar_select %p224, %s219, 31
          %s226 = smul.addr %s223, 32
          %s227 = sadd.s32 %s225, %s226
          %s228 = smul.addr %s221, 64
          %s229 = sadd.s32 %s227, %s228
          %s230 = smul.addr %s229, 8
          %s231 = scalar_lea.vmem %s1, %s230
          %s232 = smul.u32 32, %s23
        $region24: #{forward.7} parent=19 // pred_fallthru
          _
        // Predicated region
        $region25: #{forward.7} parent=19 // pred_check
          %p233 = pneg %p119
        $region26: #{forward.7} parent=19 // pred_check_branch
          %235 = sbr.rel (%p233) target = $region28
        $region27: #{forward.7} parent=19 // pred_region
          %p236 = scmp.lt.s32.totalorder %s20, 0
          %s237 = scalar_select %p236, %s20, 0
          %p238 = scmp.lt.s32.totalorder %s22, 1
          %s239 = scalar_select %p238, %s22, 1
          %s240 = smul.addr %s237, 2
          %s241 = sadd.s32 %s239, %s240
          %s242 = scalar_lea.vmem %s2, %s241
        $region28: #{forward.7} parent=19 // pred_fallthru
          _
        // Predicated region
        $region29: #{forward.7} parent=19 // pred_check
          %p243 = pneg %p147
        $region30: #{forward.7} parent=19 // pred_check_branch
          %245 = sbr.rel (%p243) target = $region32
        $region31: #{forward.7} parent=19 // pred_region
          %p246 = scmp.lt.s32.totalorder %s20, 0
          %s247 = scalar_select %p246, %s20, 0
          %p248 = scmp.lt.s32.totalorder %s22, 1
          %s249 = scalar_select %p248, %s22, 1
          %s250 = smul.addr %s247, 2
          %s251 = sadd.s32 %s249, %s250
          %s252 = scalar_lea.vmem %s3, %s251
        $region32: #{forward.7} parent=19 // pred_fallthru
          _
      $region20: #{forward.7} parent=5 // pred_fallthru
        _
      %p253 = scmp.le.s32.totalorder 1, %s13
      %p254 = scmp.lt.s32.totalorder %s13, 3
      %p255 = pnand %p253, %p254
      %p256 = pneg %p255
      // Predicated region
      $region33: #{forward.7} parent=5 // pred_check
        _
      $region34: #{forward.7} parent=5 // pred_check_branch
        %258 = sbr.rel (%p255) target = $region36
      $region35: #{forward.7} parent=5 // pred_region
        %s259 = ssub.s32 %s13, 1
        %s260 = smul.u32 16, %s25
        %p261 = scmp.lt.s32.totalorder %s24, 0
        %s262 = scalar_select %p261, %s24, 0
        %p263 = scmp.lt.s32.totalorder %s260, 15
        %s264 = scalar_select %p263, %s260, 15
        %s265 = smul.addr %s264, 8
        %s266 = smul.addr %s262, 128
        %s267 = sadd.s32 %s265, %s266
        %s268 = smul.addr %s267, 4
        %s269 = scalar_lea.vmem %s0, %s268
        %p270 = pneg %p67
        %p271 = pneg %p64
        %s272 = smul.u32 32, %s27
        %p273 = scmp.lt.s32.totalorder %s24, 0
        %s274 = scalar_select %p273, %s24, 0
        %p275 = scmp.lt.s32.totalorder %s26, 1
        %s276 = scalar_select %p275, %s26, 1
        %p277 = scmp.lt.s32.totalorder %s272, 31
        %s278 = scalar_select %p277, %s272, 31
        %s279 = smul.addr %s276, 32
        %s280 = sadd.s32 %s278, %s279
        %s281 = smul.addr %s274, 64
        %s282 = sadd.s32 %s280, %s281
        %s283 = smul.addr %s282, 8
        %s284 = scalar_lea.vmem %s1, %s283
        %p285 = pneg %p97
        %p286 = pneg %p94
        %p287 = scmp.lt.s32.totalorder %s24, 0
        %s288 = scalar_select %p287, %s24, 0
        %p289 = scmp.lt.s32.totalorder %s26, 1
        %s290 = scalar_select %p289, %s26, 1
        %s291 = smul.addr %s288, 2
        %s292 = sadd.s32 %s290, %s291
        %s293 = scalar_lea.vmem %s2, %s292
        %p294 = pneg %p125
        %p295 = pneg %p122
        %p296 = scmp.lt.s32.totalorder %s24, 0
        %s297 = scalar_select %p296, %s24, 0
        %p298 = scmp.lt.s32.totalorder %s26, 1
        %s299 = scalar_select %p298, %s26, 1
        %s300 = smul.addr %s297, 2
        %s301 = sadd.s32 %s299, %s300
        %s302 = scalar_lea.vmem %s3, %s301
        %p303 = pneg %p153
        %p304 = pneg %p150
        %p305 = pneg %p183
        %p306 = pneg %p180
        %s307 = sand.u32 %s170, 1
        %s308 = scalar_lea.sflag [#allocation4], %s307
        %s309 = sand.u32 %s170, 1
        %s310 = smul.addr %s309, 128
        %s311 = scalar_lea.vmem [#allocation3], %s310
        %s312 = smul.u32 16, %s25
        %p313 = scmp.lt.s32.totalorder %s24, 0
        %s314 = scalar_select %p313, %s24, 0
        %p315 = scmp.lt.s32.totalorder %s312, 15
        %s316 = scalar_select %p315, %s312, 15
        %s317 = smul.addr %s316, 8
        %s318 = smul.addr %s314, 128
        %s319 = sadd.s32 %s317, %s318
        %s320 = smul.addr %s319, 4
        %s321 = scalar_lea.vmem %s0, %s320
        %s322 = smul.u32 16, %s25
        %s323 = smul.u32 32, %s27
        %p324 = scmp.lt.s32.totalorder %s24, 0
        %s325 = scalar_select %p324, %s24, 0
        %p326 = scmp.lt.s32.totalorder %s26, 1
        %s327 = scalar_select %p326, %s26, 1
        %p328 = scmp.lt.s32.totalorder %s323, 31
        %s329 = scalar_select %p328, %s323, 31
        %s330 = smul.addr %s327, 32
        %s331 = sadd.s32 %s329, %s330
        %s332 = smul.addr %s325, 64
        %s333 = sadd.s32 %s331, %s332
        %s334 = smul.addr %s333, 8
        %s335 = scalar_lea.vmem %s1, %s334
        %s336 = smul.u32 32, %s27
        %p337 = scmp.lt.s32.totalorder %s24, 0
        %s338 = scalar_select %p337, %s24, 0
        %p339 = scmp.lt.s32.totalorder %s26, 1
        %s340 = scalar_select %p339, %s26, 1
        %s341 = smul.addr %s338, 2
        %s342 = sadd.s32 %s340, %s341
        %s343 = scalar_lea.vmem %s2, %s342
        %p344 = scmp.lt.s32.totalorder %s24, 0
        %s345 = scalar_select %p344, %s24, 0
        %p346 = scmp.lt.s32.totalorder %s26, 1
        %s347 = scalar_select %p346, %s26, 1
        %s348 = smul.addr %s345, 2
        %s349 = sadd.s32 %s347, %s348
        %s350 = scalar_lea.vmem %s3, %s349
        %s351 = smul.u32 16, %s25
        %p353 = scmp.eq.s32.totalorder %s27, 0
        // Predicated region
        $region37: #{forward.7} parent=35 // pred_check
          %p354 = pneg %p353
        $region38: #{forward.7} parent=35 // pred_check_branch
          %356 = sbr.rel (%p354) target = $region40
        $region39: #{forward.7} parent=35 // pred_region
          %357 = vst [vmem:[#allocation2] sm:$0xff] 0.0
          %358 = vst [vmem:[#allocation2 + $0x8] sm:$0xff] 0.0
          %359 = vst [vmem:[#allocation2 + $0x10] sm:$0xff] 0.0
          %360 = vst [vmem:[#allocation2 + $0x18] sm:$0xff] 0.0
          %361 = vst [vmem:[#allocation2 + $0x20] sm:$0xff] 0.0
          %362 = vst [vmem:[#allocation2 + $0x28] sm:$0xff] 0.0
          %363 = vst [vmem:[#allocation2 + $0x30] sm:$0xff] 0.0
          %364 = vst [vmem:[#allocation2 + $0x38] sm:$0xff] 0.0
          %365 = vst [vmem:[#allocation2 + $0x40] sm:$0xff] 0.0
          %366 = vst [vmem:[#allocation2 + $0x48] sm:$0xff] 0.0
          %367 = vst [vmem:[#allocation2 + $0x50] sm:$0xff] 0.0
          %368 = vst [vmem:[#allocation2 + $0x58] sm:$0xff] 0.0
          %369 = vst [vmem:[#allocation2 + $0x60] sm:$0xff] 0.0
          %370 = vst [vmem:[#allocation2 + $0x68] sm:$0xff] 0.0
          %371 = vst [vmem:[#allocation2 + $0x70] sm:$0xff] 0.0
          %372 = vst [vmem:[#allocation2 + $0x78] sm:$0xff] 0.0
        $region40: #{forward.7} parent=35 // pred_fallthru
          _
        %s373 = smul.u32 %s27, 1024
        %s374 = sshra.s32 %s373, 7
        %s375 = sand.u32 %s373, 127
        %s376 = smul.addr %s374, 4
        %s377 = scalar_lea.vmem %s321, %s376
        %v378 = vld [vmem:[%s377] sm:$0xff]
        %v379 = vld [vmem:[%s377 + $0x8] sm:$0xff]
        %v380 = vld [vmem:[%s377 + $0x10] sm:$0xff]
        %v381 = vld [vmem:[%s377 + $0x18] sm:$0xff]
        %v382 = vld [vmem:[%s377 + $0x20] sm:$0xff]
        %v383 = vld [vmem:[%s377 + $0x28] sm:$0xff]
        %v384 = vld [vmem:[%s377 + $0x30] sm:$0xff]
        %v385 = vld [vmem:[%s377 + $0x38] sm:$0xff]
        %v386 = vld [vmem:[%s377 + $0x40] sm:$0xff]
        %v387 = vld [vmem:[%s377 + $0x48] sm:$0xff]
        %v388 = vld [vmem:[%s377 + $0x50] sm:$0xff]
        %v389 = vld [vmem:[%s377 + $0x58] sm:$0xff]
        %v390 = vld [vmem:[%s377 + $0x60] sm:$0xff]
        %v391 = vld [vmem:[%s377 + $0x68] sm:$0xff]
        %v392 = vld [vmem:[%s377 + $0x70] sm:$0xff]
        %v393 = vld [vmem:[%s377 + $0x78] sm:$0xff]
        %v394 = vld [vmem:[%s377 + $0x80] sm:$0xff]
        %v395 = vld [vmem:[%s377 + $0x88] sm:$0xff]
        %v396 = vld [vmem:[%s377 + $0x90] sm:$0xff]
        %v397 = vld [vmem:[%s377 + $0x98] sm:$0xff]
        %v398 = vld [vmem:[%s377 + $0xa0] sm:$0xff]
        %v399 = vld [vmem:[%s377 + $0xa8] sm:$0xff]
        %v400 = vld [vmem:[%s377 + $0xb0] sm:$0xff]
        %v401 = vld [vmem:[%s377 + $0xb8] sm:$0xff]
        %v402 = vld [vmem:[%s377 + $0xc0] sm:$0xff]
        %v403 = vld [vmem:[%s377 + $0xc8] sm:$0xff]
        %v404 = vld [vmem:[%s377 + $0xd0] sm:$0xff]
        %v405 = vld [vmem:[%s377 + $0xd8] sm:$0xff]
        %v406 = vld [vmem:[%s377 + $0xe0] sm:$0xff]
        %v407 = vld [vmem:[%s377 + $0xe8] sm:$0xff]
        %v408 = vld [vmem:[%s377 + $0xf0] sm:$0xff]
        %v409 = vld [vmem:[%s377 + $0xf8] sm:$0xff]
        %v410 = vld [vmem:[%s377 + $0x100] sm:$0xff]
        %v411 = vld [vmem:[%s377 + $0x108] sm:$0xff]
        %v412 = vld [vmem:[%s377 + $0x110] sm:$0xff]
        %v413 = vld [vmem:[%s377 + $0x118] sm:$0xff]
        %v414 = vld [vmem:[%s377 + $0x120] sm:$0xff]
        %v415 = vld [vmem:[%s377 + $0x128] sm:$0xff]
        %v416 = vld [vmem:[%s377 + $0x130] sm:$0xff]
        %v417 = vld [vmem:[%s377 + $0x138] sm:$0xff]
        %v418 = vld [vmem:[%s377 + $0x140] sm:$0xff]
        %v419 = vld [vmem:[%s377 + $0x148] sm:$0xff]
        %v420 = vld [vmem:[%s377 + $0x150] sm:$0xff]
        %v421 = vld [vmem:[%s377 + $0x158] sm:$0xff]
        %v422 = vld [vmem:[%s377 + $0x160] sm:$0xff]
        %v423 = vld [vmem:[%s377 + $0x168] sm:$0xff]
        %v424 = vld [vmem:[%s377 + $0x170] sm:$0xff]
        %v425 = vld [vmem:[%s377 + $0x178] sm:$0xff]
        %v426 = vld [vmem:[%s377 + $0x180] sm:$0xff]
        %v427 = vld [vmem:[%s377 + $0x188] sm:$0xff]
        %v428 = vld [vmem:[%s377 + $0x190] sm:$0xff]
        %v429 = vld [vmem:[%s377 + $0x198] sm:$0xff]
        %v430 = vld [vmem:[%s377 + $0x1a0] sm:$0xff]
        %v431 = vld [vmem:[%s377 + $0x1a8] sm:$0xff]
        %v432 = vld [vmem:[%s377 + $0x1b0] sm:$0xff]
        %v433 = vld [vmem:[%s377 + $0x1b8] sm:$0xff]
        %v434 = vld [vmem:[%s377 + $0x1c0] sm:$0xff]
        %v435 = vld [vmem:[%s377 + $0x1c8] sm:$0xff]
        %v436 = vld [vmem:[%s377 + $0x1d0] sm:$0xff]
        %v437 = vld [vmem:[%s377 + $0x1d8] sm:$0xff]
        %v438 = vld [vmem:[%s377 + $0x1e0] sm:$0xff]
        %v439 = vld [vmem:[%s377 + $0x1e8] sm:$0xff]
        %v440 = vld [vmem:[%s377 + $0x1f0] sm:$0xff]
        %v441 = vld [vmem:[%s377 + $0x1f8] sm:$0xff]
        %v442 = vld [vmem:[#allocation2] sm:$0xff]
        %v443 = vld [vmem:[#allocation2 + $0x8] sm:$0xff]
        %v444 = vld [vmem:[#allocation2 + $0x10] sm:$0xff]
        %v445 = vld [vmem:[#allocation2 + $0x18] sm:$0xff]
        %v446 = vld [vmem:[#allocation2 + $0x20] sm:$0xff]
        %v447 = vld [vmem:[#allocation2 + $0x28] sm:$0xff]
        %v448 = vld [vmem:[#allocation2 + $0x30] sm:$0xff]
        %v449 = vld [vmem:[#allocation2 + $0x38] sm:$0xff]
        %v450 = vld [vmem:[#allocation2 + $0x40] sm:$0xff]
        %v451 = vld [vmem:[#allocation2 + $0x48] sm:$0xff]
        %v452 = vld [vmem:[#allocation2 + $0x50] sm:$0xff]
        %v453 = vld [vmem:[#allocation2 + $0x58] sm:$0xff]
        %v454 = vld [vmem:[#allocation2 + $0x60] sm:$0xff]
        %v455 = vld [vmem:[#allocation2 + $0x68] sm:$0xff]
        %v456 = vld [vmem:[#allocation2 + $0x70] sm:$0xff]
        %v457 = vld [vmem:[#allocation2 + $0x78] sm:$0xff]
        %v458 = vld [vmem:[%s335] sm:$0xff]
        %v459 = vld [vmem:[%s335 + $0x8] sm:$0xff]
        %v460 = vld [vmem:[%s335 + $0x10] sm:$0xff]
        %v461 = vld [vmem:[%s335 + $0x18] sm:$0xff]
        %v462 = vld [vmem:[%s335 + $0x20] sm:$0xff]
        %v463 = vld [vmem:[%s335 + $0x28] sm:$0xff]
        %v464 = vld [vmem:[%s335 + $0x30] sm:$0xff]
        %v465 = vld [vmem:[%s335 + $0x38] sm:$0xff]
        %v466 = vld [vmem:[%s335 + $0x40] sm:$0xff]
        %v467 = vld [vmem:[%s335 + $0x48] sm:$0xff]
        %v468 = vld [vmem:[%s335 + $0x50] sm:$0xff]
        %v469 = vld [vmem:[%s335 + $0x58] sm:$0xff]
        %v470 = vld [vmem:[%s335 + $0x60] sm:$0xff]
        %v471 = vld [vmem:[%s335 + $0x68] sm:$0xff]
        %v472 = vld [vmem:[%s335 + $0x70] sm:$0xff]
        %v473 = vld [vmem:[%s335 + $0x78] sm:$0xff]
        %v474 = vld [vmem:[%s335 + $0x80] sm:$0xff]
        %v475 = vld [vmem:[%s335 + $0x88] sm:$0xff]
        %v476 = vld [vmem:[%s335 + $0x90] sm:$0xff]
        %v477 = vld [vmem:[%s335 + $0x98] sm:$0xff]
        %v478 = vld [vmem:[%s335 + $0xa0] sm:$0xff]
        %v479 = vld [vmem:[%s335 + $0xa8] sm:$0xff]
        %v480 = vld [vmem:[%s335 + $0xb0] sm:$0xff]
        %v481 = vld [vmem:[%s335 + $0xb8] sm:$0xff]
        %v482 = vld [vmem:[%s335 + $0xc0] sm:$0xff]
        %v483 = vld [vmem:[%s335 + $0xc8] sm:$0xff]
        %v484 = vld [vmem:[%s335 + $0xd0] sm:$0xff]
        %v485 = vld [vmem:[%s335 + $0xd8] sm:$0xff]
        %v486 = vld [vmem:[%s335 + $0xe0] sm:$0xff]
        %v487 = vld [vmem:[%s335 + $0xe8] sm:$0xff]
        %v488 = vld [vmem:[%s335 + $0xf0] sm:$0xff]
        %v489 = vld [vmem:[%s335 + $0xf8] sm:$0xff]
        %v490 = vunpack.c.l.s8.bf16 %v458
        %v491 = vunpack.c.h.s8.bf16 %v458
        %v492 = vunpack.c.l.s8.bf16 %v459
        %v493 = vunpack.c.h.s8.bf16 %v459
        %v494 = vunpack.c.l.s8.bf16 %v460
        %v495 = vunpack.c.h.s8.bf16 %v460
        %v496 = vunpack.c.l.s8.bf16 %v461
        %v497 = vunpack.c.h.s8.bf16 %v461
        %v498 = vunpack.c.l.s8.bf16 %v462
        %v499 = vunpack.c.h.s8.bf16 %v462
        %v500 = vunpack.c.l.s8.bf16 %v463
        %v501 = vunpack.c.h.s8.bf16 %v463
        %v502 = vunpack.c.l.s8.bf16 %v464
        %v503 = vunpack.c.h.s8.bf16 %v464
        %v504 = vunpack.c.l.s8.bf16 %v465
        %v505 = vunpack.c.h.s8.bf16 %v465
        %v506 = vunpack.c.l.s8.bf16 %v466
        %v507 = vunpack.c.h.s8.bf16 %v466
        %v508 = vunpack.c.l.s8.bf16 %v467
        %v509 = vunpack.c.h.s8.bf16 %v467
        %v510 = vunpack.c.l.s8.bf16 %v468
        %v511 = vunpack.c.h.s8.bf16 %v468
        %v512 = vunpack.c.l.s8.bf16 %v469
        %v513 = vunpack.c.h.s8.bf16 %v469
        %v514 = vunpack.c.l.s8.bf16 %v470
        %v515 = vunpack.c.h.s8.bf16 %v470
        %v516 = vunpack.c.l.s8.bf16 %v471
        %v517 = vunpack.c.h.s8.bf16 %v471
        %v518 = vunpack.c.l.s8.bf16 %v472
        %v519 = vunpack.c.h.s8.bf16 %v472
        %v520 = vunpack.c.l.s8.bf16 %v473
        %v521 = vunpack.c.h.s8.bf16 %v473
        %v522 = vunpack.c.l.s8.bf16 %v474
        %v523 = vunpack.c.h.s8.bf16 %v474
        %v524 = vunpack.c.l.s8.bf16 %v475
        %v525 = vunpack.c.h.s8.bf16 %v475
        %v526 = vunpack.c.l.s8.bf16 %v476
        %v527 = vunpack.c.h.s8.bf16 %v476
        %v528 = vunpack.c.l.s8.bf16 %v477
        %v529 = vunpack.c.h.s8.bf16 %v477
        %v530 = vunpack.c.l.s8.bf16 %v478
        %v531 = vunpack.c.h.s8.bf16 %v478
        %v532 = vunpack.c.l.s8.bf16 %v479
        %v533 = vunpack.c.h.s8.bf16 %v479
        %v534 = vunpack.c.l.s8.bf16 %v480
        %v535 = vunpack.c.h.s8.bf16 %v480
        %v536 = vunpack.c.l.s8.bf16 %v481
        %v537 = vunpack.c.h.s8.bf16 %v481
        %v538 = vunpack.c.l.s8.bf16 %v482
        %v539 = vunpack.c.h.s8.bf16 %v482
        %v540 = vunpack.c.l.s8.bf16 %v483
        %v541 = vunpack.c.h.s8.bf16 %v483
        %v542 = vunpack.c.l.s8.bf16 %v484
        %v543 = vunpack.c.h.s8.bf16 %v484
        %v544 = vunpack.c.l.s8.bf16 %v485
        %v545 = vunpack.c.h.s8.bf16 %v485
        %v546 = vunpack.c.l.s8.bf16 %v486
        %v547 = vunpack.c.h.s8.bf16 %v486
        %v548 = vunpack.c.l.s8.bf16 %v487
        %v549 = vunpack.c.h.s8.bf16 %v487
        %v550 = vunpack.c.l.s8.bf16 %v488
        %v551 = vunpack.c.h.s8.bf16 %v488
        %v552 = vunpack.c.l.s8.bf16 %v489
        %v553 = vunpack.c.h.s8.bf16 %v489
        %v618 = vunpack.c.l.b16 %v378
        %v619 = vunpack.c.h.b16 %v378
        %v620 = vunpack.c.l.b16 %v379
        %v621 = vunpack.c.h.b16 %v379
        %v622 = vunpack.c.l.b16 %v380
        %v623 = vunpack.c.h.b16 %v380
        %v624 = vunpack.c.l.b16 %v381
        %v625 = vunpack.c.h.b16 %v381
        %v626 = vunpack.c.l.b16 %v382
        %v627 = vunpack.c.h.b16 %v382
        %v628 = vunpack.c.l.b16 %v383
        %v629 = vunpack.c.h.b16 %v383
        %v630 = vunpack.c.l.b16 %v384
        %v631 = vunpack.c.h.b16 %v384
        %v632 = vunpack.c.l.b16 %v385
        %v633 = vunpack.c.h.b16 %v385
        %v634 = vunpack.c.l.b16 %v386
        %v635 = vunpack.c.h.b16 %v386
        %v636 = vunpack.c.l.b16 %v387
        %v637 = vunpack.c.h.b16 %v387
        %v638 = vunpack.c.l.b16 %v388
        %v639 = vunpack.c.h.b16 %v388
        %v640 = vunpack.c.l.b16 %v389
        %v641 = vunpack.c.h.b16 %v389
        %v642 = vunpack.c.l.b16 %v390
        %v643 = vunpack.c.h.b16 %v390
        %v644 = vunpack.c.l.b16 %v391
        %v645 = vunpack.c.h.b16 %v391
        %v646 = vunpack.c.l.b16 %v392
        %v647 = vunpack.c.h.b16 %v392
        %v648 = vunpack.c.l.b16 %v393
        %v649 = vunpack.c.h.b16 %v393
        %v650 = vunpack.c.l.b16 %v394
        %v651 = vunpack.c.h.b16 %v394
        %v652 = vunpack.c.l.b16 %v395
        %v653 = vunpack.c.h.b16 %v395
        %v654 = vunpack.c.l.b16 %v396
        %v655 = vunpack.c.h.b16 %v396
        %v656 = vunpack.c.l.b16 %v397
        %v657 = vunpack.c.h.b16 %v397
        %v658 = vunpack.c.l.b16 %v398
        %v659 = vunpack.c.h.b16 %v398
        %v660 = vunpack.c.l.b16 %v399
        %v661 = vunpack.c.h.b16 %v399
        %v662 = vunpack.c.l.b16 %v400
        %v663 = vunpack.c.h.b16 %v400
        %v664 = vunpack.c.l.b16 %v401
        %v665 = vunpack.c.h.b16 %v401
        %v666 = vunpack.c.l.b16 %v402
        %v667 = vunpack.c.h.b16 %v402
        %v668 = vunpack.c.l.b16 %v403
        %v669 = vunpack.c.h.b16 %v403
        %v670 = vunpack.c.l.b16 %v404
        %v671 = vunpack.c.h.b16 %v404
        %v672 = vunpack.c.l.b16 %v405
        %v673 = vunpack.c.h.b16 %v405
        %v674 = vunpack.c.l.b16 %v406
        %v675 = vunpack.c.h.b16 %v406
        %v676 = vunpack.c.l.b16 %v407
        %v677 = vunpack.c.h.b16 %v407
        %v678 = vunpack.c.l.b16 %v408
        %v679 = vunpack.c.h.b16 %v408
        %v680 = vunpack.c.l.b16 %v409
        %v681 = vunpack.c.h.b16 %v409
        %v682 = vunpack.c.l.b16 %v410
        %v683 = vunpack.c.h.b16 %v410
        %v684 = vunpack.c.l.b16 %v411
        %v685 = vunpack.c.h.b16 %v411
        %v686 = vunpack.c.l.b16 %v412
        %v687 = vunpack.c.h.b16 %v412
        %v688 = vunpack.c.l.b16 %v413
        %v689 = vunpack.c.h.b16 %v413
        %v690 = vunpack.c.l.b16 %v414
        %v691 = vunpack.c.h.b16 %v414
        %v692 = vunpack.c.l.b16 %v415
        %v693 = vunpack.c.h.b16 %v415
        %v694 = vunpack.c.l.b16 %v416
        %v695 = vunpack.c.h.b16 %v416
        %v696 = vunpack.c.l.b16 %v417
        %v697 = vunpack.c.h.b16 %v417
        %v698 = vunpack.c.l.b16 %v418
        %v699 = vunpack.c.h.b16 %v418
        %v700 = vunpack.c.l.b16 %v419
        %v701 = vunpack.c.h.b16 %v419
        %v702 = vunpack.c.l.b16 %v420
        %v703 = vunpack.c.h.b16 %v420
        %v704 = vunpack.c.l.b16 %v421
        %v705 = vunpack.c.h.b16 %v421
        %v706 = vunpack.c.l.b16 %v422
        %v707 = vunpack.c.h.b16 %v422
        %v708 = vunpack.c.l.b16 %v423
        %v709 = vunpack.c.h.b16 %v423
        %v710 = vunpack.c.l.b16 %v424
        %v711 = vunpack.c.h.b16 %v424
        %v712 = vunpack.c.l.b16 %v425
        %v713 = vunpack.c.h.b16 %v425
        %v714 = vunpack.c.l.b16 %v426
        %v715 = vunpack.c.h.b16 %v426
        %v716 = vunpack.c.l.b16 %v427
        %v717 = vunpack.c.h.b16 %v427
        %v718 = vunpack.c.l.b16 %v428
        %v719 = vunpack.c.h.b16 %v428
        %v720 = vunpack.c.l.b16 %v429
        %v721 = vunpack.c.h.b16 %v429
        %v722 = vunpack.c.l.b16 %v430
        %v723 = vunpack.c.h.b16 %v430
        %v724 = vunpack.c.l.b16 %v431
        %v725 = vunpack.c.h.b16 %v431
        %v726 = vunpack.c.l.b16 %v432
        %v727 = vunpack.c.h.b16 %v432
        %v728 = vunpack.c.l.b16 %v433
        %v729 = vunpack.c.h.b16 %v433
        %v730 = vunpack.c.l.b16 %v434
        %v731 = vunpack.c.h.b16 %v434
        %v732 = vunpack.c.l.b16 %v435
        %v733 = vunpack.c.h.b16 %v435
        %v734 = vunpack.c.l.b16 %v436
        %v735 = vunpack.c.h.b16 %v436
        %v736 = vunpack.c.l.b16 %v437
        %v737 = vunpack.c.h.b16 %v437
        %v738 = vunpack.c.l.b16 %v438
        %v739 = vunpack.c.h.b16 %v438
        %v740 = vunpack.c.l.b16 %v439
        %v741 = vunpack.c.h.b16 %v439
        %v742 = vunpack.c.l.b16 %v440
        %v743 = vunpack.c.h.b16 %v440
        %v744 = vunpack.c.l.b16 %v441
        %v745 = vunpack.c.h.b16 %v441
        %v746 = vpack.c.b16 %v626, %v618
        %v747 = vpack.c.b16 %v627, %v619
        %v748 = vpack.c.b16 %v628, %v620
        %v749 = vpack.c.b16 %v629, %v621
        %v750 = vpack.c.b16 %v630, %v622
        %v751 = vpack.c.b16 %v631, %v623
        %v752 = vpack.c.b16 %v632, %v624
        %v753 = vpack.c.b16 %v633, %v625
        %v754 = vpack.c.b16 %v642, %v634
        %v755 = vpack.c.b16 %v643, %v635
        %v756 = vpack.c.b16 %v644, %v636
        %v757 = vpack.c.b16 %v645, %v637
        %v758 = vpack.c.b16 %v646, %v638
        %v759 = vpack.c.b16 %v647, %v639
        %v760 = vpack.c.b16 %v648, %v640
        %v761 = vpack.c.b16 %v649, %v641
        %v762 = vpack.c.b16 %v658, %v650
        %v763 = vpack.c.b16 %v659, %v651
        %v764 = vpack.c.b16 %v660, %v652
        %v765 = vpack.c.b16 %v661, %v653
        %v766 = vpack.c.b16 %v662, %v654
        %v767 = vpack.c.b16 %v663, %v655
        %v768 = vpack.c.b16 %v664, %v656
        %v769 = vpack.c.b16 %v665, %v657
        %v770 = vpack.c.b16 %v674, %v666
        %v771 = vpack.c.b16 %v675, %v667
        %v772 = vpack.c.b16 %v676, %v668
        %v773 = vpack.c.b16 %v677, %v669
        %v774 = vpack.c.b16 %v678, %v670
        %v775 = vpack.c.b16 %v679, %v671
        %v776 = vpack.c.b16 %v680, %v672
        %v777 = vpack.c.b16 %v681, %v673
        %v778 = vpack.c.b16 %v690, %v682
        %v779 = vpack.c.b16 %v691, %v683
        %v780 = vpack.c.b16 %v692, %v684
        %v781 = vpack.c.b16 %v693, %v685
        %v782 = vpack.c.b16 %v694, %v686
        %v783 = vpack.c.b16 %v695, %v687
        %v784 = vpack.c.b16 %v696, %v688
        %v785 = vpack.c.b16 %v697, %v689
        %v786 = vpack.c.b16 %v706, %v698
        %v787 = vpack.c.b16 %v707, %v699
        %v788 = vpack.c.b16 %v708, %v700
        %v789 = vpack.c.b16 %v709, %v701
        %v790 = vpack.c.b16 %v710, %v702
        %v791 = vpack.c.b16 %v711, %v703
        %v792 = vpack.c.b16 %v712, %v704
        %v793 = vpack.c.b16 %v713, %v705
        %v794 = vpack.c.b16 %v722, %v714
        %v795 = vpack.c.b16 %v723, %v715
        %v796 = vpack.c.b16 %v724, %v716
        %v797 = vpack.c.b16 %v725, %v717
        %v798 = vpack.c.b16 %v726, %v718
        %v799 = vpack.c.b16 %v727, %v719
        %v800 = vpack.c.b16 %v728, %v720
        %v801 = vpack.c.b16 %v729, %v721
        %v802 = vpack.c.b16 %v738, %v730
        %v803 = vpack.c.b16 %v739, %v731
        %v804 = vpack.c.b16 %v740, %v732
        %v805 = vpack.c.b16 %v741, %v733
        %v806 = vpack.c.b16 %v742, %v734
        %v807 = vpack.c.b16 %v743, %v735
        %v808 = vpack.c.b16 %v744, %v736
        %v809 = vpack.c.b16 %v745, %v737
        %874 = vmatprep.subr.bf16.mxu0 0
        %875 = vmatpush1.bf16.msra.mxu0 %v497
        %876 = vmatprep.subr.bf16.mxu0 0
        %877 = vmatpush1.bf16.msra.mxu0 %v496
        %878 = vmatprep.subr.bf16.mxu0 0
        %879 = vmatpush1.bf16.msra.mxu0 %v495
        %880 = vmatprep.subr.bf16.mxu0 0
        %881 = vmatpush1.bf16.msra.mxu0 %v494
        %882 = vmatprep.subr.bf16.mxu0 0
        %883 = vmatpush1.bf16.msra.mxu0 %v493
        %884 = vmatprep.subr.bf16.mxu0 0
        %885 = vmatpush1.bf16.msra.mxu0 %v492
        %886 = vmatprep.subr.bf16.mxu0 0
        %887 = vmatpush1.bf16.msra.mxu0 %v491
        %888 = vmatprep.subr.bf16.mxu0 0
        %889 = vmatpush1.bf16.msra.mxu0 %v490
        %890 = vmatprep.subr.bf16.mxu0 0
        %891 = vmatpush2.bf16.msra.mxu0 %v505
        %892 = vmatprep.subr.bf16.mxu0 0
        %893 = vmatpush2.bf16.msra.mxu0 %v504
        %894 = vmatprep.subr.bf16.mxu0 0
        %895 = vmatpush2.bf16.msra.mxu0 %v503
        %896 = vmatprep.subr.bf16.mxu0 0
        %897 = vmatpush2.bf16.msra.mxu0 %v502
        %898 = vmatprep.subr.bf16.mxu0 0
        %899 = vmatpush2.bf16.msra.mxu0 %v501
        %900 = vmatprep.subr.bf16.mxu0 0
        %901 = vmatpush2.bf16.msra.mxu0 %v500
        %902 = vmatprep.subr.bf16.mxu0 0
        %903 = vmatpush2.bf16.msra.mxu0 %v499
        %904 = vmatprep.subr.bf16.mxu0 0
        %905 = vmatpush2.bf16.msra.mxu0 %v498
        %906 = vmatprep.mubr.bf16.mxu0 %v747
        %907 = vmatmul.mubr.bf16.gmra.mxu0 %v746
        %v908 = vpop.f32.mrf.mxu0
        %v909 = vadd.f32 0.0, %v908
        %v910 = vpop.f32.mrf.mxu0
        %v911 = vpop.f32.mrf.mxu0
        %v912 = vadd.f32 0.0, %v911
        %v913 = vpop.f32.mrf.mxu0
        %914 = vmatprep.mubr.bf16.mxu0 %v755
        %915 = vmatmul.mubr.bf16.gmra.mxu0 %v754
        %v916 = vpop.f32.mrf.mxu0
        %v917 = vadd.f32 0.0, %v916
        %v918 = vpop.f32.mrf.mxu0
        %v919 = vpop.f32.mrf.mxu0
        %v920 = vadd.f32 0.0, %v919
        %v921 = vpop.f32.mrf.mxu0
        %922 = vmatprep.mubr.bf16.mxu0 %v763
        %923 = vmatmul.mubr.bf16.gmra.mxu0 %v762
        %v924 = vpop.f32.mrf.mxu0
        %v925 = vadd.f32 0.0, %v924
        %v926 = vpop.f32.mrf.mxu0
        %v927 = vpop.f32.mrf.mxu0
        %v928 = vadd.f32 0.0, %v927
        %v929 = vpop.f32.mrf.mxu0
        %930 = vmatprep.mubr.bf16.mxu0 %v771
        %931 = vmatmul.mubr.bf16.gmra.mxu0 %v770
        %v932 = vpop.f32.mrf.mxu0
        %v933 = vadd.f32 0.0, %v932
        %v934 = vpop.f32.mrf.mxu0
        %v935 = vpop.f32.mrf.mxu0
        %v936 = vadd.f32 0.0, %v935
        %v937 = vpop.f32.mrf.mxu0
        %938 = vmatprep.mubr.bf16.mxu0 %v779
        %939 = vmatmul.mubr.bf16.gmra.mxu0 %v778
        %v940 = vpop.f32.mrf.mxu0
        %v941 = vadd.f32 0.0, %v940
        %v942 = vpop.f32.mrf.mxu0
        %v943 = vpop.f32.mrf.mxu0
        %v944 = vadd.f32 0.0, %v943
        %v945 = vpop.f32.mrf.mxu0
        %946 = vmatprep.mubr.bf16.mxu0 %v787
        %947 = vmatmul.mubr.bf16.gmra.mxu0 %v786
        %v948 = vpop.f32.mrf.mxu0
        %v949 = vadd.f32 0.0, %v948
        %v950 = vpop.f32.mrf.mxu0
        %v951 = vpop.f32.mrf.mxu0
        %v952 = vadd.f32 0.0, %v951
        %v953 = vpop.f32.mrf.mxu0
        %954 = vmatprep.mubr.bf16.mxu0 %v795
        %955 = vmatmul.mubr.bf16.gmra.mxu0 %v794
        %v956 = vpop.f32.mrf.mxu0
        %v957 = vadd.f32 0.0, %v956
        %v958 = vpop.f32.mrf.mxu0
        %v959 = vpop.f32.mrf.mxu0
        %v960 = vadd.f32 0.0, %v959
        %v961 = vpop.f32.mrf.mxu0
        %962 = vmatprep.mubr.bf16.mxu0 %v803
        %963 = vmatmul.mubr.bf16.gmra.mxu0 %v802
        %v964 = vpop.f32.mrf.mxu0
        %v965 = vadd.f32 0.0, %v964
        %v966 = vpop.f32.mrf.mxu0
        %v967 = vpop.f32.mrf.mxu0
        %v968 = vadd.f32 0.0, %v967
        %v969 = vpop.f32.mrf.mxu0
        %970 = vdwg.mxu0
        %971 = vmatprep.subr.bf16.mxu0 0
        %972 = vmatpush1.bf16.msra.mxu0 %v513
        %973 = vmatprep.subr.bf16.mxu0 0
        %974 = vmatpush1.bf16.msra.mxu0 %v512
        %975 = vmatprep.subr.bf16.mxu0 0
        %976 = vmatpush1.bf16.msra.mxu0 %v511
        %977 = vmatprep.subr.bf16.mxu0 0
        %978 = vmatpush1.bf16.msra.mxu0 %v510
        %979 = vmatprep.subr.bf16.mxu0 0
        %980 = vmatpush1.bf16.msra.mxu0 %v509
        %981 = vmatprep.subr.bf16.mxu0 0
        %982 = vmatpush1.bf16.msra.mxu0 %v508
        %983 = vmatprep.subr.bf16.mxu0 0
        %984 = vmatpush1.bf16.msra.mxu0 %v507
        %985 = vmatprep.subr.bf16.mxu0 0
        %986 = vmatpush1.bf16.msra.mxu0 %v506
        %987 = vmatprep.subr.bf16.mxu0 0
        %988 = vmatpush2.bf16.msra.mxu0 %v521
        %989 = vmatprep.subr.bf16.mxu0 0
        %990 = vmatpush2.bf16.msra.mxu0 %v520
        %991 = vmatprep.subr.bf16.mxu0 0
        %992 = vmatpush2.bf16.msra.mxu0 %v519
        %993 = vmatprep.subr.bf16.mxu0 0
        %994 = vmatpush2.bf16.msra.mxu0 %v518
        %995 = vmatprep.subr.bf16.mxu0 0
        %996 = vmatpush2.bf16.msra.mxu0 %v517
        %997 = vmatprep.subr.bf16.mxu0 0
        %998 = vmatpush2.bf16.msra.mxu0 %v516
        %999 = vmatprep.subr.bf16.mxu0 0
        %1000 = vmatpush2.bf16.msra.mxu0 %v515
        %1001 = vmatprep.subr.bf16.mxu0 0
        %1002 = vmatpush2.bf16.msra.mxu0 %v514
        %1003 = vmatprep.mubr.bf16.mxu0 %v749
        %1004 = vmatmul.mubr.bf16.gmra.mxu0 %v748
        %v1005 = vpop.f32.mrf.mxu0
        %v1006 = vadd.f32 %v909, %v1005
        %v1007 = vpop.f32.mrf.mxu0
        %v1008 = vpop.f32.mrf.mxu0
        %v1009 = vadd.f32 %v912, %v1008
        %v1010 = vpop.f32.mrf.mxu0
        %1011 = vmatprep.mubr.bf16.mxu0 %v757
        %1012 = vmatmul.mubr.bf16.gmra.mxu0 %v756
        %v1013 = vpop.f32.mrf.mxu0
        %v1014 = vadd.f32 %v917, %v1013
        %v1015 = vpop.f32.mrf.mxu0
        %v1016 = vpop.f32.mrf.mxu0
        %v1017 = vadd.f32 %v920, %v1016
        %v1018 = vpop.f32.mrf.mxu0
        %1019 = vmatprep.mubr.bf16.mxu0 %v765
        %1020 = vmatmul.mubr.bf16.gmra.mxu0 %v764
        %v1021 = vpop.f32.mrf.mxu0
        %v1022 = vadd.f32 %v925, %v1021
        %v1023 = vpop.f32.mrf.mxu0
        %v1024 = vpop.f32.mrf.mxu0
        %v1025 = vadd.f32 %v928, %v1024
        %v1026 = vpop.f32.mrf.mxu0
        %1027 = vmatprep.mubr.bf16.mxu0 %v773
        %1028 = vmatmul.mubr.bf16.gmra.mxu0 %v772
        %v1029 = vpop.f32.mrf.mxu0
        %v1030 = vadd.f32 %v933, %v1029
        %v1031 = vpop.f32.mrf.mxu0
        %v1032 = vpop.f32.mrf.mxu0
        %v1033 = vadd.f32 %v936, %v1032
        %v1034 = vpop.f32.mrf.mxu0
        %1035 = vmatprep.mubr.bf16.mxu0 %v781
        %1036 = vmatmul.mubr.bf16.gmra.mxu0 %v780
        %v1037 = vpop.f32.mrf.mxu0
        %v1038 = vadd.f32 %v941, %v1037
        %v1039 = vpop.f32.mrf.mxu0
        %v1040 = vpop.f32.mrf.mxu0
        %v1041 = vadd.f32 %v944, %v1040
        %v1042 = vpop.f32.mrf.mxu0
        %1043 = vmatprep.mubr.bf16.mxu0 %v789
        %1044 = vmatmul.mubr.bf16.gmra.mxu0 %v788
        %v1045 = vpop.f32.mrf.mxu0
        %v1046 = vadd.f32 %v949, %v1045
        %v1047 = vpop.f32.mrf.mxu0
        %v1048 = vpop.f32.mrf.mxu0
        %v1049 = vadd.f32 %v952, %v1048
        %v1050 = vpop.f32.mrf.mxu0
        %1051 = vmatprep.mubr.bf16.mxu0 %v797
        %1052 = vmatmul.mubr.bf16.gmra.mxu0 %v796
        %v1053 = vpop.f32.mrf.mxu0
        %v1054 = vadd.f32 %v957, %v1053
        %v1055 = vpop.f32.mrf.mxu0
        %v1056 = vpop.f32.mrf.mxu0
        %v1057 = vadd.f32 %v960, %v1056
        %v1058 = vpop.f32.mrf.mxu0
        %1059 = vmatprep.mubr.bf16.mxu0 %v805
        %1060 = vmatmul.mubr.bf16.gmra.mxu0 %v804
        %v1061 = vpop.f32.mrf.mxu0
        %v1062 = vadd.f32 %v965, %v1061
        %v1063 = vpop.f32.mrf.mxu0
        %v1064 = vpop.f32.mrf.mxu0
        %v1065 = vadd.f32 %v968, %v1064
        %v1066 = vpop.f32.mrf.mxu0
        %1067 = vdwg.mxu0
        %1068 = vmatprep.subr.bf16.mxu0 0
        %1069 = vmatpush1.bf16.msra.mxu0 %v529
        %1070 = vmatprep.subr.bf16.mxu0 0
        %1071 = vmatpush1.bf16.msra.mxu0 %v528
        %1072 = vmatprep.subr.bf16.mxu0 0
        %1073 = vmatpush1.bf16.msra.mxu0 %v527
        %1074 = vmatprep.subr.bf16.mxu0 0
        %1075 = vmatpush1.bf16.msra.mxu0 %v526
        %1076 = vmatprep.subr.bf16.mxu0 0
        %1077 = vmatpush1.bf16.msra.mxu0 %v525
        %1078 = vmatprep.subr.bf16.mxu0 0
        %1079 = vmatpush1.bf16.msra.mxu0 %v524
        %1080 = vmatprep.subr.bf16.mxu0 0
        %1081 = vmatpush1.bf16.msra.mxu0 %v523
        %1082 = vmatprep.subr.bf16.mxu0 0
        %1083 = vmatpush1.bf16.msra.mxu0 %v522
        %1084 = vmatprep.subr.bf16.mxu0 0
        %1085 = vmatpush2.bf16.msra.mxu0 %v537
        %1086 = vmatprep.subr.bf16.mxu0 0
        %1087 = vmatpush2.bf16.msra.mxu0 %v536
        %1088 = vmatprep.subr.bf16.mxu0 0
        %1089 = vmatpush2.bf16.msra.mxu0 %v535
        %1090 = vmatprep.subr.bf16.mxu0 0
        %1091 = vmatpush2.bf16.msra.mxu0 %v534
        %1092 = vmatprep.subr.bf16.mxu0 0
        %1093 = vmatpush2.bf16.msra.mxu0 %v533
        %1094 = vmatprep.subr.bf16.mxu0 0
        %1095 = vmatpush2.bf16.msra.mxu0 %v532
        %1096 = vmatprep.subr.bf16.mxu0 0
        %1097 = vmatpush2.bf16.msra.mxu0 %v531
        %1098 = vmatprep.subr.bf16.mxu0 0
        %1099 = vmatpush2.bf16.msra.mxu0 %v530
        %1100 = vmatprep.mubr.bf16.mxu0 %v751
        %1101 = vmatmul.mubr.bf16.gmra.mxu0 %v750
        %v1102 = vpop.f32.mrf.mxu0
        %v1103 = vadd.f32 %v1006, %v1102
        %v1104 = vpop.f32.mrf.mxu0
        %v1105 = vpop.f32.mrf.mxu0
        %v1106 = vadd.f32 %v1009, %v1105
        %v1107 = vpop.f32.mrf.mxu0
        %1108 = vmatprep.mubr.bf16.mxu0 %v759
        %1109 = vmatmul.mubr.bf16.gmra.mxu0 %v758
        %v1110 = vpop.f32.mrf.mxu0
        %v1111 = vadd.f32 %v1014, %v1110
        %v1112 = vpop.f32.mrf.mxu0
        %v1113 = vpop.f32.mrf.mxu0
        %v1114 = vadd.f32 %v1017, %v1113
        %v1115 = vpop.f32.mrf.mxu0
        %1116 = vmatprep.mubr.bf16.mxu0 %v767
        %1117 = vmatmul.mubr.bf16.gmra.mxu0 %v766
        %v1118 = vpop.f32.mrf.mxu0
        %v1119 = vadd.f32 %v1022, %v1118
        %v1120 = vpop.f32.mrf.mxu0
        %v1121 = vpop.f32.mrf.mxu0
        %v1122 = vadd.f32 %v1025, %v1121
        %v1123 = vpop.f32.mrf.mxu0
        %1124 = vmatprep.mubr.bf16.mxu0 %v775
        %1125 = vmatmul.mubr.bf16.gmra.mxu0 %v774
        %v1126 = vpop.f32.mrf.mxu0
        %v1127 = vadd.f32 %v1030, %v1126
        %v1128 = vpop.f32.mrf.mxu0
        %v1129 = vpop.f32.mrf.mxu0
        %v1130 = vadd.f32 %v1033, %v1129
        %v1131 = vpop.f32.mrf.mxu0
        %1132 = vmatprep.mubr.bf16.mxu0 %v783
        %1133 = vmatmul.mubr.bf16.gmra.mxu0 %v782
        %v1134 = vpop.f32.mrf.mxu0
        %v1135 = vadd.f32 %v1038, %v1134
        %v1136 = vpop.f32.mrf.mxu0
        %v1137 = vpop.f32.mrf.mxu0
        %v1138 = vadd.f32 %v1041, %v1137
        %v1139 = vpop.f32.mrf.mxu0
        %1140 = vmatprep.mubr.bf16.mxu0 %v791
        %1141 = vmatmul.mubr.bf16.gmra.mxu0 %v790
        %v1142 = vpop.f32.mrf.mxu0
        %v1143 = vadd.f32 %v1046, %v1142
        %v1144 = vpop.f32.mrf.mxu0
        %v1145 = vpop.f32.mrf.mxu0
        %v1146 = vadd.f32 %v1049, %v1145
        %v1147 = vpop.f32.mrf.mxu0
        %1148 = vmatprep.mubr.bf16.mxu0 %v799
        %1149 = vmatmul.mubr.bf16.gmra.mxu0 %v798
        %v1150 = vpop.f32.mrf.mxu0
        %v1151 = vadd.f32 %v1054, %v1150
        %v1152 = vpop.f32.mrf.mxu0
        %v1153 = vpop.f32.mrf.mxu0
        %v1154 = vadd.f32 %v1057, %v1153
        %v1155 = vpop.f32.mrf.mxu0
        %1156 = vmatprep.mubr.bf16.mxu0 %v807
        %1157 = vmatmul.mubr.bf16.gmra.mxu0 %v806
        %v1158 = vpop.f32.mrf.mxu0
        %v1159 = vadd.f32 %v1062, %v1158
        %v1160 = vpop.f32.mrf.mxu0
        %v1161 = vpop.f32.mrf.mxu0
        %v1162 = vadd.f32 %v1065, %v1161
        %v1163 = vpop.f32.mrf.mxu0
        %1164 = vdwg.mxu0
        %1165 = vmatprep.subr.bf16.mxu0 0
        %1166 = vmatpush1.bf16.msra.mxu0 %v545
        %1167 = vmatprep.subr.bf16.mxu0 0
        %1168 = vmatpush1.bf16.msra.mxu0 %v544
        %1169 = vmatprep.subr.bf16.mxu0 0
        %1170 = vmatpush1.bf16.msra.mxu0 %v543
        %1171 = vmatprep.subr.bf16.mxu0 0
        %1172 = vmatpush1.bf16.msra.mxu0 %v542
        %1173 = vmatprep.subr.bf16.mxu0 0
        %1174 = vmatpush1.bf16.msra.mxu0 %v541
        %1175 = vmatprep.subr.bf16.mxu0 0
        %1176 = vmatpush1.bf16.msra.mxu0 %v540
        %1177 = vmatprep.subr.bf16.mxu0 0
        %1178 = vmatpush1.bf16.msra.mxu0 %v539
        %1179 = vmatprep.subr.bf16.mxu0 0
        %1180 = vmatpush1.bf16.msra.mxu0 %v538
        %1181 = vmatprep.subr.bf16.mxu0 0
        %1182 = vmatpush2.bf16.msra.mxu0 %v553
        %1183 = vmatprep.subr.bf16.mxu0 0
        %1184 = vmatpush2.bf16.msra.mxu0 %v552
        %1185 = vmatprep.subr.bf16.mxu0 0
        %1186 = vmatpush2.bf16.msra.mxu0 %v551
        %1187 = vmatprep.subr.bf16.mxu0 0
        %1188 = vmatpush2.bf16.msra.mxu0 %v550
        %1189 = vmatprep.subr.bf16.mxu0 0
        %1190 = vmatpush2.bf16.msra.mxu0 %v549
        %1191 = vmatprep.subr.bf16.mxu0 0
        %1192 = vmatpush2.bf16.msra.mxu0 %v548
        %1193 = vmatprep.subr.bf16.mxu0 0
        %1194 = vmatpush2.bf16.msra.mxu0 %v547
        %1195 = vmatprep.subr.bf16.mxu0 0
        %1196 = vmatpush2.bf16.msra.mxu0 %v546
        %1197 = vmatprep.mubr.bf16.mxu0 %v753
        %1198 = vmatmul.mubr.bf16.gmra.mxu0 %v752
        %v1199 = vpop.f32.mrf.mxu0
        %v1200 = vadd.f32 %v1103, %v1199
        %v1201 = vpop.f32.mrf.mxu0
        %v1202 = vpop.f32.mrf.mxu0
        %v1203 = vadd.f32 %v1106, %v1202
        %v1204 = vpop.f32.mrf.mxu0
        %1205 = vmatprep.mubr.bf16.mxu0 %v761
        %1206 = vmatmul.mubr.bf16.gmra.mxu0 %v760
        %v1207 = vpop.f32.mrf.mxu0
        %v1208 = vadd.f32 %v1111, %v1207
        %v1209 = vpop.f32.mrf.mxu0
        %v1210 = vpop.f32.mrf.mxu0
        %v1211 = vadd.f32 %v1114, %v1210
        %v1212 = vpop.f32.mrf.mxu0
        %1213 = vmatprep.mubr.bf16.mxu0 %v769
        %1214 = vmatmul.mubr.bf16.gmra.mxu0 %v768
        %v1215 = vpop.f32.mrf.mxu0
        %v1216 = vadd.f32 %v1119, %v1215
        %v1217 = vpop.f32.mrf.mxu0
        %v1218 = vpop.f32.mrf.mxu0
        %v1219 = vadd.f32 %v1122, %v1218
        %v1220 = vpop.f32.mrf.mxu0
        %1221 = vmatprep.mubr.bf16.mxu0 %v777
        %1222 = vmatmul.mubr.bf16.gmra.mxu0 %v776
        %v1223 = vpop.f32.mrf.mxu0
        %v1224 = vadd.f32 %v1127, %v1223
        %v1225 = vpop.f32.mrf.mxu0
        %v1226 = vpop.f32.mrf.mxu0
        %v1227 = vadd.f32 %v1130, %v1226
        %v1228 = vpop.f32.mrf.mxu0
        %1229 = vmatprep.mubr.bf16.mxu0 %v785
        %1230 = vmatmul.mubr.bf16.gmra.mxu0 %v784
        %v1231 = vpop.f32.mrf.mxu0
        %v1232 = vadd.f32 %v1135, %v1231
        %v1233 = vpop.f32.mrf.mxu0
        %v1234 = vpop.f32.mrf.mxu0
        %v1235 = vadd.f32 %v1138, %v1234
        %v1236 = vpop.f32.mrf.mxu0
        %1237 = vmatprep.mubr.bf16.mxu0 %v793
        %1238 = vmatmul.mubr.bf16.gmra.mxu0 %v792
        %v1239 = vpop.f32.mrf.mxu0
        %v1240 = vadd.f32 %v1143, %v1239
        %v1241 = vpop.f32.mrf.mxu0
        %v1242 = vpop.f32.mrf.mxu0
        %v1243 = vadd.f32 %v1146, %v1242
        %v1244 = vpop.f32.mrf.mxu0
        %1245 = vmatprep.mubr.bf16.mxu0 %v801
        %1246 = vmatmul.mubr.bf16.gmra.mxu0 %v800
        %v1247 = vpop.f32.mrf.mxu0
        %v1248 = vadd.f32 %v1151, %v1247
        %v1249 = vpop.f32.mrf.mxu0
        %v1250 = vpop.f32.mrf.mxu0
        %v1251 = vadd.f32 %v1154, %v1250
        %v1252 = vpop.f32.mrf.mxu0
        %1253 = vmatprep.mubr.bf16.mxu0 %v809
        %1254 = vmatmul.mubr.bf16.gmra.mxu0 %v808
        %v1255 = vpop.f32.mrf.mxu0
        %v1256 = vadd.f32 %v1159, %v1255
        %v1257 = vpop.f32.mrf.mxu0
        %v1258 = vpop.f32.mrf.mxu0
        %v1259 = vadd.f32 %v1162, %v1258
        %v1260 = vpop.f32.mrf.mxu0
        %1261 = vdwg.mxu0
        %v1262 = vadd.f32 %v442, %v1200
        %v1263 = vadd.f32 %v443, %v1203
        %v1264 = vadd.f32 %v444, %v1208
        %v1265 = vadd.f32 %v445, %v1211
        %v1266 = vadd.f32 %v446, %v1216
        %v1267 = vadd.f32 %v447, %v1219
        %v1268 = vadd.f32 %v448, %v1224
        %v1269 = vadd.f32 %v449, %v1227
        %v1270 = vadd.f32 %v450, %v1232
        %v1271 = vadd.f32 %v451, %v1235
        %v1272 = vadd.f32 %v452, %v1240
        %v1273 = vadd.f32 %v453, %v1243
        %v1274 = vadd.f32 %v454, %v1248
        %v1275 = vadd.f32 %v455, %v1251
        %v1276 = vadd.f32 %v456, %v1256
        %v1277 = vadd.f32 %v457, %v1259
        %1278 = vst [vmem:[#allocation2] sm:$0xff] %v1262
        %1279 = vst [vmem:[#allocation2 + $0x8] sm:$0xff] %v1263
        %1280 = vst [vmem:[#allocation2 + $0x10] sm:$0xff] %v1264
        %1281 = vst [vmem:[#allocation2 + $0x18] sm:$0xff] %v1265
        %1282 = vst [vmem:[#allocation2 + $0x20] sm:$0xff] %v1266
        %1283 = vst [vmem:[#allocation2 + $0x28] sm:$0xff] %v1267
        %1284 = vst [vmem:[#allocation2 + $0x30] sm:$0xff] %v1268
        %1285 = vst [vmem:[#allocation2 + $0x38] sm:$0xff] %v1269
        %1286 = vst [vmem:[#allocation2 + $0x40] sm:$0xff] %v1270
        %1287 = vst [vmem:[#allocation2 + $0x48] sm:$0xff] %v1271
        %1288 = vst [vmem:[#allocation2 + $0x50] sm:$0xff] %v1272
        %1289 = vst [vmem:[#allocation2 + $0x58] sm:$0xff] %v1273
        %1290 = vst [vmem:[#allocation2 + $0x60] sm:$0xff] %v1274
        %1291 = vst [vmem:[#allocation2 + $0x68] sm:$0xff] %v1275
        %1292 = vst [vmem:[#allocation2 + $0x70] sm:$0xff] %v1276
        %1293 = vst [vmem:[#allocation2 + $0x78] sm:$0xff] %v1277
        // Predicated region
        $region41: #{forward.7} parent=35 // pred_check
          %p1294 = pneg %p353
        $region42: #{forward.7} parent=35 // pred_check_branch
          %1296 = sbr.rel (%p1294) target = $region44
        $region43: #{forward.7} parent=35 // pred_region
          %v1297 = vld [vmem:[#allocation2] sm:$0xff]
          %v1298 = vld [vmem:[#allocation2 + $0x8] sm:$0xff]
          %v1299 = vld [vmem:[#allocation2 + $0x10] sm:$0xff]
          %v1300 = vld [vmem:[#allocation2 + $0x18] sm:$0xff]
          %v1301 = vld [vmem:[#allocation2 + $0x20] sm:$0xff]
          %v1302 = vld [vmem:[#allocation2 + $0x28] sm:$0xff]
          %v1303 = vld [vmem:[#allocation2 + $0x30] sm:$0xff]
          %v1304 = vld [vmem:[#allocation2 + $0x38] sm:$0xff]
          %v1305 = vld [vmem:[#allocation2 + $0x40] sm:$0xff]
          %v1306 = vld [vmem:[#allocation2 + $0x48] sm:$0xff]
          %v1307 = vld [vmem:[#allocation2 + $0x50] sm:$0xff]
          %v1308 = vld [vmem:[#allocation2 + $0x58] sm:$0xff]
          %v1309 = vld [vmem:[#allocation2 + $0x60] sm:$0xff]
          %v1310 = vld [vmem:[#allocation2 + $0x68] sm:$0xff]
          %v1311 = vld [vmem:[#allocation2 + $0x70] sm:$0xff]
          %v1312 = vld [vmem:[#allocation2 + $0x78] sm:$0xff]
          %v1313 = vld [vmem:[%s343] sm:$0x1]
          %v1315 = vlaneseq
          %v1316 = vshrl.u32 %v1315, 7
          %v1317 = vsub.s32 0, %v1316
          %v1318 = vrot.slane %v1313, %v1317
          %v1320 = vmul.f32 %v1297, %v1318
          %v1321 = vmul.f32 %v1298, %v1318
          %v1322 = vmul.f32 %v1299, %v1318
          %v1323 = vmul.f32 %v1300, %v1318
          %v1324 = vmul.f32 %v1301, %v1318
          %v1325 = vmul.f32 %v1302, %v1318
          %v1326 = vmul.f32 %v1303, %v1318
          %v1327 = vmul.f32 %v1304, %v1318
          %v1328 = vmul.f32 %v1305, %v1318
          %v1329 = vmul.f32 %v1306, %v1318
          %v1330 = vmul.f32 %v1307, %v1318
          %v1331 = vmul.f32 %v1308, %v1318
          %v1332 = vmul.f32 %v1309, %v1318
          %v1333 = vmul.f32 %v1310, %v1318
          %v1334 = vmul.f32 %v1311, %v1318
          %v1335 = vmul.f32 %v1312, %v1318
          %v1336 = vld [vmem:[%s350] sm:$0x1]
          %v1338 = vlaneseq
          %v1339 = vshrl.u32 %v1338, 7
          %v1340 = vsub.s32 0, %v1339
          %v1341 = vrot.slane %v1336, %v1340
          %v1343 = vadd.f32 %v1320, %v1341
          %v1344 = vadd.f32 %v1321, %v1341
          %v1345 = vadd.f32 %v1322, %v1341
          %v1346 = vadd.f32 %v1323, %v1341
          %v1347 = vadd.f32 %v1324, %v1341
          %v1348 = vadd.f32 %v1325, %v1341
          %v1349 = vadd.f32 %v1326, %v1341
          %v1350 = vadd.f32 %v1327, %v1341
          %v1351 = vadd.f32 %v1328, %v1341
          %v1352 = vadd.f32 %v1329, %v1341
          %v1353 = vadd.f32 %v1330, %v1341
          %v1354 = vadd.f32 %v1331, %v1341
          %v1355 = vadd.f32 %v1332, %v1341
          %v1356 = vadd.f32 %v1333, %v1341
          %v1357 = vadd.f32 %v1334, %v1341
          %v1358 = vadd.f32 %v1335, %v1341
          %v1359 = vmax.f32 %v1343, 0.0
          %v1360 = vmax.f32 %v1344, 0.0
          %v1361 = vmax.f32 %v1345, 0.0
          %v1362 = vmax.f32 %v1346, 0.0
          %v1363 = vmax.f32 %v1347, 0.0
          %v1364 = vmax.f32 %v1348, 0.0
          %v1365 = vmax.f32 %v1349, 0.0
          %v1366 = vmax.f32 %v1350, 0.0
          %v1367 = vmax.f32 %v1351, 0.0
          %v1368 = vmax.f32 %v1352, 0.0
          %v1369 = vmax.f32 %v1353, 0.0
          %v1370 = vmax.f32 %v1354, 0.0
          %v1371 = vmax.f32 %v1355, 0.0
          %v1372 = vmax.f32 %v1356, 0.0
          %v1373 = vmax.f32 %v1357, 0.0
          %v1374 = vmax.f32 %v1358, 0.0
          %1375 = vst [vmem:[%s311] sm:$0xff] %v1359
          %1376 = vst [vmem:[%s311 + $0x8] sm:$0xff] %v1360
          %1377 = vst [vmem:[%s311 + $0x10] sm:$0xff] %v1361
          %1378 = vst [vmem:[%s311 + $0x18] sm:$0xff] %v1362
          %1379 = vst [vmem:[%s311 + $0x20] sm:$0xff] %v1363
          %1380 = vst [vmem:[%s311 + $0x28] sm:$0xff] %v1364
          %1381 = vst [vmem:[%s311 + $0x30] sm:$0xff] %v1365
          %1382 = vst [vmem:[%s311 + $0x38] sm:$0xff] %v1366
          %1383 = vst [vmem:[%s311 + $0x40] sm:$0xff] %v1367
          %1384 = vst [vmem:[%s311 + $0x48] sm:$0xff] %v1368
          %1385 = vst [vmem:[%s311 + $0x50] sm:$0xff] %v1369
          %1386 = vst [vmem:[%s311 + $0x58] sm:$0xff] %v1370
          %1387 = vst [vmem:[%s311 + $0x60] sm:$0xff] %v1371
          %1388 = vst [vmem:[%s311 + $0x68] sm:$0xff] %v1372
          %1389 = vst [vmem:[%s311 + $0x70] sm:$0xff] %v1373
          %1390 = vst [vmem:[%s311 + $0x78] sm:$0xff] %v1374
        $region44: #{forward.7} parent=35 // pred_fallthru
          _
        %s1391 = sand.u32 %s170, 1
        %s1392 = scalar_lea.sflag [#allocation4], %s1391
        %s1393 = sand.u32 %s170, 1
        %s1394 = smul.addr %s1393, 128
        %s1395 = scalar_lea.vmem [#allocation3], %s1394
        // Predicated region
        $region45: #{forward.7} parent=35 // pred_check
          %p1396 = pneg %p180
        $region46: #{forward.7} parent=35 // pred_check_branch
          %1398 = sbr.rel (%p1396) target = $region48
        $region47: #{forward.7} parent=35 // pred_region
          %s1399 = smul.u32 16, %s25
          %s1401 = ssub.s32 2048, 2048
          %1402 = vsyncadd %s1392, %s1401
          %s1403 = smul.addr %s1399, 2
          %s1404 = sadd.s32 %s26, %s1403
          %s1405 = smul.addr %s24, 32
          %s1406 = sadd.s32 %s1404, %s1405
          %s1407 = smul.addr %s1406, 128
          %s1408 = scalar_lea.hbm %s4, %s1407
          %s1409 = sshll.u32 %s1395, 4
          %s1410 = int_to_ptr.vmem [resolvable:$true] %s1409
          %1415 = dma.vmem_to_hbm [thread:$0]  %s1410, 2048, %s1408, %s1392, 128, 256, 8
        $region48: #{forward.7} parent=35 // pred_fallthru
          _
      $region36: #{forward.7} parent=5 // pred_fallthru
        _
      %p1416 = scmp.le.s32.totalorder 2, %s13
      // Predicated region
      $region49: #{forward.7} parent=5 // pred_check
        %p1417 = pneg %p1416
      $region50: #{forward.7} parent=5 // pred_check_branch
        %1419 = sbr.rel (%p1417) target = $region52
      $region51: #{forward.7} parent=5 // pred_region
        %s1420 = ssub.s32 %s13, 2
        // Predicated region
        $region53: #{forward.7} parent=51 // pred_check
          %p1421 = pneg %p186
        $region54: #{forward.7} parent=51 // pred_check_branch
          %1423 = sbr.rel (%p1421) target = $region56
        $region55: #{forward.7} parent=51 // pred_region
          %s1424 = sand.u32 %s171, 1
          %s1425 = scalar_lea.sflag [#allocation4], %s1424
          %s1426 = sand.u32 %s171, 1
          %s1427 = smul.addr %s1426, 128
          %s1428 = scalar_lea.vmem [#allocation3], %s1427
          %1429 = dma.done %s1425, 2048
        $region56: #{forward.7} parent=51 // pred_fallthru
          _
      $region52: #{forward.7} parent=5 // pred_fallthru
        _
    $region6: #{forward.7} parent=1 // loop_footer
      %s17 = sadd.s32 1, %s13
    $region7: #{forward.7} parent=1 // loop_footer_branch
      %12 = sbr.rel target = $region3
    $region8: #{forward.7} parent=1 // loop_exit
      _
    %1430 = vsyncpa [#allocation4], 1
    %s1431 = scalar_lea.sflag [#allocation4], 1
    %1432 = vsyncpa %s1431, 1

</llo_original>
